<compile_context>
chip_gen: v6e
topology: v6e:2x2x1
jax: 0.10.0
libtpu: 0.0.40
codegen_flags: <defaults>
</compile_context>

<pallas_src>
import functools

import jax
import jax.numpy as jnp
from jax.experimental import pallas as pl
from jax.experimental.pallas import tpu as pltpu


# ---------------------------------------------------------------------------
# Helpers
# ---------------------------------------------------------------------------
def _round_up(x, m):
    return ((x + m - 1) // m) * m


# ---------------------------------------------------------------------------
# Pallas kernel factory: direct conv (one batch element per grid step).
#   x_ref : (1, Hp, Wp, Cin)   padded NHWC input tile (compute dtype)
#   w_ref : (kmax, kmax, Cin, Coutp)  combined weight (compute dtype)
#   b_ref : (1, Coutp)         combined bias (f32)
#   o_ref : (1, Ho, Wo, Coutp) output tile
# ---------------------------------------------------------------------------
def _make_direct_conv_kernel(kmax, stride, Ho, Wo, Cin, Coutp):
    h_span = (Ho - 1) * stride + 1
    w_span = (Wo - 1) * stride + 1

    def kernel(x_ref, w_ref, b_ref, o_ref):
        xt = x_ref[0]                                   # (Hp, Wp, Cin) in VMEM
        acc = jnp.zeros((Ho * Wo, Coutp), jnp.float32)
        for kh in range(kmax):
            for kw in range(kmax):
                xs = xt[kh:kh + h_span:stride, kw:kw + w_span:stride, :]
                xs = xs.reshape(Ho * Wo, Cin)
                acc = acc + jnp.dot(xs, w_ref[kh, kw],
                                    preferred_element_type=jnp.float32)
        out = acc + b_ref[...]                          # broadcast (1, Coutp)
        o_ref[...] = out.reshape(1, Ho, Wo, Coutp).astype(o_ref.dtype)

    return kernel


# ---------------------------------------------------------------------------
# Forward implementation.  Kernel sizes / stride are STATIC Python ints so
# all padding / slicing is concrete under jit; arrays are traced.
# ---------------------------------------------------------------------------
@functools.partial(
    jax.jit,
    static_argnames=("ksizes", "stride", "ws_is_none", "compute_dtype"))
def _mixed_forward_impl(x_nchw, weights, biases, ws, *, ksizes, stride,
                        ws_is_none, compute_dtype):
    cdt = jnp.dtype(compute_dtype)
    B, Cin, H, W = x_nchw.shape

    if ws_is_none:                       # ws == None -> ops[0](x) only
        ksizes = ksizes[:1]
        weights = weights[:1]
        biases = biases[:1]

    n_ops = len(ksizes)
    Cout = weights[0].shape[-1]
    kmax = max(ksizes)
    pad = kmax // 2
    Ho = (H + 2 * pad - kmax) // stride + 1
    Wo = (W + 2 * pad - kmax) // stride + 1
    Hp, Wp = H + 2 * pad, W + 2 * pad

    # --- Combined weight / bias (ws folded outside the kernel; tiny XLA ops).
    w_embs = []
    for k, w in zip(ksizes, weights):
        off = (kmax - k) // 2
        w_embs.append(jnp.pad(
            w, ((off, kmax - k - off), (off, kmax - k - off), (0, 0), (0, 0))
        ).astype(jnp.float32))
    if ws_is_none:
        w_comb = w_embs[0]
        b_comb = biases[0].astype(jnp.float32)
    else:
        ws_f = ws.astype(jnp.float32)
        w_comb = sum(ws_f[i] * w_embs[i] for i in range(n_ops))
        b_comb = sum(ws_f[i] * biases[i].astype(jnp.float32)
                     for i in range(n_ops))

    Coutp = _round_up(Cout, 128)
    w_comb = jnp.pad(
        w_comb, ((0, 0), (0, 0), (0, 0), (0, Coutp - Cout))).astype(cdt)
    b_comb = jnp.pad(b_comb, ((0, Coutp - Cout),)).reshape(1, Coutp)

    # --- NCHW -> NHWC, cast to compute dtype, zero-pad spatially.  This is
    # the ONLY glue copy of the input (no kmax^2 im2col inflation).
    x_nhwc = jnp.transpose(x_nchw, (0, 2, 3, 1)).astype(cdt)
    xp = jnp.pad(x_nhwc, ((0, 0), (pad, pad), (pad, pad), (0, 0)))

    kernel = _make_direct_conv_kernel(kmax, stride, Ho, Wo, Cin, Coutp)

    # --- VMEM budget -> explicit limit (safe on v5e 16MiB scope / v7x 64MiB).
    itm = cdt.itemsize
    odt = x_nchw.dtype
    need = (2 * Hp * Wp * Cin * itm                        # x tile, 2 buffers
            + 2 * kmax * kmax * Cin * Coutp * itm          # weight (2 buffers)
            + 2 * Coutp * 4                                # bias
            + 2 * Ho * Wo * Coutp * odt.itemsize           # out tile, 2 buffers
            + Ho * Wo * Coutp * 4)                         # f32 acc spill room
    vmem_limit = int(min(max(2 * need + (4 << 20), 16 << 20), 64 << 20))

    cost = pl.CostEstimate(
        flops=2 * B * Ho * Wo * kmax * kmax * Cin * Coutp,
        transcendentals=0,
        bytes_accessed=(xp.size * itm + w_comb.size * itm + b_comb.size * 4
                        + B * Ho * Wo * Coutp * odt.itemsize))

    out = pl.pallas_call(
        kernel,
        out_shape=jax.ShapeDtypeStruct((B, Ho, Wo, Coutp), odt),
        grid=(B,),
        in_specs=[
            pl.BlockSpec((1, Hp, Wp, Cin), lambda b: (b, 0, 0, 0)),
            pl.BlockSpec((kmax, kmax, Cin, Coutp), lambda b: (0, 0, 0, 0)),
            pl.BlockSpec((1, Coutp), lambda b: (0, 0)),
        ],
        out_specs=pl.BlockSpec((1, Ho, Wo, Coutp), lambda b: (b, 0, 0, 0)),
        compiler_params=pltpu.CompilerParams(
            dimension_semantics=("parallel",),
            vmem_limit_bytes=vmem_limit),
        cost_estimate=cost,
    )(xp, w_comb, b_comb)

    # Slice padded Cout and go back to NCHW (single fused XLA op).
    out = out[..., :Cout]
    return jnp.transpose(out, (0, 3, 1, 2))


def mixed_forward(x_nchw, params, stride, ws=None, *, compute_dtype="bfloat16"):
    """params: list of (ksize:int, weight (K,K,Cin,Cout), bias (Cout,)) per op."""
    ksizes = tuple(int(k) for (k, _, _) in params)
    weights = tuple(w for (_, w, _) in params)
    biases = tuple(b for (_, _, b) in params)
    ws_is_none = ws is None
    ws_arr = (jnp.zeros((len(params),), jnp.float32) if ws_is_none
              else jnp.asarray(ws, jnp.float32))
    return _mixed_forward_impl(
        x_nchw, weights, biases, ws_arr,
        ksizes=ksizes, stride=int(stride),
        ws_is_none=ws_is_none, compute_dtype=str(compute_dtype))


# ---------------------------------------------------------------------------
# Plain-JAX reference (correctness check only).
# ---------------------------------------------------------------------------
def _ref_conv(x_nchw, ksize, w, b, stride):
    pad = ksize // 2
    x_nhwc = jnp.transpose(x_nchw, (0, 2, 3, 1))
    y = jax.lax.conv_general_dilated(
        x_nhwc, w, (stride, stride), [(pad, pad), (pad, pad)],
        dimension_numbers=("NHWC", "HWIO", "NHWC"))
    y = y + b[None, None, None, :]
    return jnp.transpose(y, (0, 3, 1, 2))


def _ref_mixed(x_nchw, params, stride, ws=None):
    if ws is None:
        k, w, b = params[0]
        return _ref_conv(x_nchw, k, w, b, stride)
    outs = [_ref_conv(x_nchw, k, w, b, stride) for (k, w, b) in params]
    return sum(wi * oi for wi, oi in zip(ws, outs))


if __name__ == "__main__":
    key = jax.random.PRNGKey(0)
    B, Cin, H, W = 2, 4, 16, 16
    Cout, stride = 8, 1

    kx, k1, k2, k3 = jax.random.split(key, 4)
    x = jax.random.normal(kx, (B, Cin, H, W), jnp.float32)

    # Deterministic synthetic parameters for the 3 candidate conv ops.
    params = []
    for kk, ksize in zip((k1, k2, k3), (1, 3, 5)):
        kw_key, kb_key = jax.random.split(kk)
        w = 0.1 * jax.random.normal(kw_key, (ksize, ksize, Cin, Cout), jnp.float32)
        b = 0.1 * jax.random.normal(kb_key, (Cout,), jnp.float32)
        params.append((ksize, w, b))

    ws = jnp.array([0.2, 0.5, 0.3], jnp.float32)   # architecture weights

    # Default bf16-operand path and full-f32 path, for both ws-weighted and
    # ws=None (first op only) forwards.
    out_mixed_bf16 = mixed_forward(x, params, stride, ws=ws)
    out_first_bf16 = mixed_forward(x, params, stride, ws=None)
    out_mixed_f32 = mixed_forward(x, params, stride, ws=ws, compute_dtype="float32")
    out_first_f32 = mixed_forward(x, params, stride, ws=None, compute_dtype="float32")
    jax.block_until_ready(
        (out_mixed_bf16, out_first_bf16, out_mixed_f32, out_first_f32))

    ref_mixed = _ref_mixed(x, params, stride, ws=ws)
    ref_first = _ref_mixed(x, params, stride, ws=None)

    for o in (out_mixed_bf16, out_first_bf16, out_mixed_f32, out_first_f32):
        assert o.shape == (B, Cout, H, W)

    # Tolerance covers bf16 operand rounding (f32 accumulation); structural
    # bugs (wrong shift/embedding) would be O(1) errors.
    TOL = 3e-2
    assert jnp.allclose(out_mixed_bf16, ref_mixed, rtol=TOL, atol=TOL)
    assert jnp.allclose(out_first_bf16, ref_first, rtol=TOL, atol=TOL)
    assert jnp.allclose(out_mixed_f32, ref_mixed, rtol=TOL, atol=TOL)
    assert jnp.allclose(out_first_f32, ref_first, rtol=TOL, atol=TOL)

    print("KERNEL_OK")
</pallas_src>

<mosaic_0001>
module attributes {stable_mosaic.version = 11 : i64} {
  func.func @kernel(%arg0: i32, %arg1: memref<1x20x20x4xbf16, #tpu.memory_space<vmem>>, %arg2: memref<5x5x4x128xbf16, #tpu.memory_space<vmem>>, %arg3: memref<1x128xf32, #tpu.memory_space<vmem>>, %arg4: memref<1x16x16x128xf32, #tpu.memory_space<vmem>>) attributes {dimension_semantics = [#tpu.dimension_semantics<parallel>], iteration_bounds = array<i64: 2>, scalar_prefetch = 0 : i64, scratch_operands = 0 : i64, tpu.core_type = #tpu.core_type<tc>, window_params = [{transform_indices = @transform_0, window_bounds = array<i64: 1, 20, 20, 4>}, {pipeline_mode = #tpu.pipeline_mode<synchronous>, transform_indices = @transform_1, window_bounds = array<i64: 5, 5, 4, 128>}, {pipeline_mode = #tpu.pipeline_mode<synchronous>, transform_indices = @transform_2, window_bounds = array<i64: 1, 128>}, {transform_indices = @transform_3, window_bounds = array<i64: 1, 16, 16, 128>}]} {
    %c0 = arith.constant 0 : index
    %c0_0 = arith.constant 0 : index
    %c0_1 = arith.constant 0 : index
    %c0_2 = arith.constant 0 : index
    %0 = vector.load %arg1[%c0, %c0_0, %c0_1, %c0_2] : memref<1x20x20x4xbf16, #tpu.memory_space<vmem>>, vector<1x20x20x4xbf16>
    %1 = vector.shape_cast %0 : vector<1x20x20x4xbf16> to vector<20x20x4xbf16>
    %cst = arith.constant 0.000000e+00 : f32
    %2 = vector.broadcast %cst : f32 to vector<256x128xf32>
    %3 = vector.extract_strided_slice %1 {offsets = [0, 0, 0], sizes = [16, 16, 4], strides = [1, 1, 1]} : vector<20x20x4xbf16> to vector<16x16x4xbf16>
    %4 = vector.shape_cast %3 : vector<16x16x4xbf16> to vector<256x4xbf16>
    %c0_3 = arith.constant 0 : index
    %c0_4 = arith.constant 0 : index
    %c0_5 = arith.constant 0 : index
    %c0_6 = arith.constant 0 : index
    %5 = vector.load %arg2[%c0_3, %c0_4, %c0_5, %c0_6] : memref<5x5x4x128xbf16, #tpu.memory_space<vmem>>, vector<1x1x4x128xbf16>
    %6 = vector.shape_cast %5 : vector<1x1x4x128xbf16> to vector<4x128xbf16>
    %cst_7 = arith.constant dense<0.000000e+00> : vector<256x128xf32>
    %7 = tpu.matmul %4, %6, %cst_7 {dimension_numbers = #tpu.dot_dimension_numbers<[1], [0], [0], [1], [0, 0, 1, 1], [], []>} : vector<256x4xbf16>, vector<4x128xbf16>, vector<256x128xf32> -> vector<256x128xf32>
    %8 = arith.addf %2, %7 : vector<256x128xf32>
    %9 = vector.extract_strided_slice %1 {offsets = [0, 1, 0], sizes = [16, 16, 4], strides = [1, 1, 1]} : vector<20x20x4xbf16> to vector<16x16x4xbf16>
    %10 = vector.shape_cast %9 : vector<16x16x4xbf16> to vector<256x4xbf16>
    %c0_8 = arith.constant 0 : index
    %c1 = arith.constant 1 : index
    %c0_9 = arith.constant 0 : index
    %c0_10 = arith.constant 0 : index
    %11 = vector.load %arg2[%c0_8, %c1, %c0_9, %c0_10] : memref<5x5x4x128xbf16, #tpu.memory_space<vmem>>, vector<1x1x4x128xbf16>
    %12 = vector.shape_cast %11 : vector<1x1x4x128xbf16> to vector<4x128xbf16>
    %cst_11 = arith.constant dense<0.000000e+00> : vector<256x128xf32>
    %13 = tpu.matmul %10, %12, %cst_11 {dimension_numbers = #tpu.dot_dimension_numbers<[1], [0], [0], [1], [0, 0, 1, 1], [], []>} : vector<256x4xbf16>, vector<4x128xbf16>, vector<256x128xf32> -> vector<256x128xf32>
    %14 = arith.addf %8, %13 : vector<256x128xf32>
    %15 = vector.extract_strided_slice %1 {offsets = [0, 2, 0], sizes = [16, 16, 4], strides = [1, 1, 1]} : vector<20x20x4xbf16> to vector<16x16x4xbf16>
    %16 = vector.shape_cast %15 : vector<16x16x4xbf16> to vector<256x4xbf16>
    %c0_12 = arith.constant 0 : index
    %c2 = arith.constant 2 : index
    %c0_13 = arith.constant 0 : index
    %c0_14 = arith.constant 0 : index
    %17 = vector.load %arg2[%c0_12, %c2, %c0_13, %c0_14] : memref<5x5x4x128xbf16, #tpu.memory_space<vmem>>, vector<1x1x4x128xbf16>
    %18 = vector.shape_cast %17 : vector<1x1x4x128xbf16> to vector<4x128xbf16>
    %cst_15 = arith.constant dense<0.000000e+00> : vector<256x128xf32>
    %19 = tpu.matmul %16, %18, %cst_15 {dimension_numbers = #tpu.dot_dimension_numbers<[1], [0], [0], [1], [0, 0, 1, 1], [], []>} : vector<256x4xbf16>, vector<4x128xbf16>, vector<256x128xf32> -> vector<256x128xf32>
    %20 = arith.addf %14, %19 : vector<256x128xf32>
    %21 = vector.extract_strided_slice %1 {offsets = [0, 3, 0], sizes = [16, 16, 4], strides = [1, 1, 1]} : vector<20x20x4xbf16> to vector<16x16x4xbf16>
    %22 = vector.shape_cast %21 : vector<16x16x4xbf16> to vector<256x4xbf16>
    %c0_16 = arith.constant 0 : index
    %c3 = arith.constant 3 : index
    %c0_17 = arith.constant 0 : index
    %c0_18 = arith.constant 0 : index
    %23 = vector.load %arg2[%c0_16, %c3, %c0_17, %c0_18] : memref<5x5x4x128xbf16, #tpu.memory_space<vmem>>, vector<1x1x4x128xbf16>
    %24 = vector.shape_cast %23 : vector<1x1x4x128xbf16> to vector<4x128xbf16>
    %cst_19 = arith.constant dense<0.000000e+00> : vector<256x128xf32>
    %25 = tpu.matmul %22, %24, %cst_19 {dimension_numbers = #tpu.dot_dimension_numbers<[1], [0], [0], [1], [0, 0, 1, 1], [], []>} : vector<256x4xbf16>, vector<4x128xbf16>, vector<256x128xf32> -> vector<256x128xf32>
    %26 = arith.addf %20, %25 : vector<256x128xf32>
    %27 = vector.extract_strided_slice %1 {offsets = [0, 4, 0], sizes = [16, 16, 4], strides = [1, 1, 1]} : vector<20x20x4xbf16> to vector<16x16x4xbf16>
    %28 = vector.shape_cast %27 : vector<16x16x4xbf16> to vector<256x4xbf16>
    %c0_20 = arith.constant 0 : index
    %c4 = arith.constant 4 : index
    %c0_21 = arith.constant 0 : index
    %c0_22 = arith.constant 0 : index
    %29 = vector.load %arg2[%c0_20, %c4, %c0_21, %c0_22] : memref<5x5x4x128xbf16, #tpu.memory_space<vmem>>, vector<1x1x4x128xbf16>
    %30 = vector.shape_cast %29 : vector<1x1x4x128xbf16> to vector<4x128xbf16>
    %cst_23 = arith.constant dense<0.000000e+00> : vector<256x128xf32>
    %31 = tpu.matmul %28, %30, %cst_23 {dimension_numbers = #tpu.dot_dimension_numbers<[1], [0], [0], [1], [0, 0, 1, 1], [], []>} : vector<256x4xbf16>, vector<4x128xbf16>, vector<256x128xf32> -> vector<256x128xf32>
    %32 = arith.addf %26, %31 : vector<256x128xf32>
    %33 = vector.extract_strided_slice %1 {offsets = [1, 0, 0], sizes = [16, 16, 4], strides = [1, 1, 1]} : vector<20x20x4xbf16> to vector<16x16x4xbf16>
    %34 = vector.shape_cast %33 : vector<16x16x4xbf16> to vector<256x4xbf16>
    %c1_24 = arith.constant 1 : index
    %c0_25 = arith.constant 0 : index
    %c0_26 = arith.constant 0 : index
    %c0_27 = arith.constant 0 : index
    %35 = vector.load %arg2[%c1_24, %c0_25, %c0_26, %c0_27] : memref<5x5x4x128xbf16, #tpu.memory_space<vmem>>, vector<1x1x4x128xbf16>
    %36 = vector.shape_cast %35 : vector<1x1x4x128xbf16> to vector<4x128xbf16>
    %cst_28 = arith.constant dense<0.000000e+00> : vector<256x128xf32>
    %37 = tpu.matmul %34, %36, %cst_28 {dimension_numbers = #tpu.dot_dimension_numbers<[1], [0], [0], [1], [0, 0, 1, 1], [], []>} : vector<256x4xbf16>, vector<4x128xbf16>, vector<256x128xf32> -> vector<256x128xf32>
    %38 = arith.addf %32, %37 : vector<256x128xf32>
    %39 = vector.extract_strided_slice %1 {offsets = [1, 1, 0], sizes = [16, 16, 4], strides = [1, 1, 1]} : vector<20x20x4xbf16> to vector<16x16x4xbf16>
    %40 = vector.shape_cast %39 : vector<16x16x4xbf16> to vector<256x4xbf16>
    %c1_29 = arith.constant 1 : index
    %c1_30 = arith.constant 1 : index
    %c0_31 = arith.constant 0 : index
    %c0_32 = arith.constant 0 : index
    %41 = vector.load %arg2[%c1_29, %c1_30, %c0_31, %c0_32] : memref<5x5x4x128xbf16, #tpu.memory_space<vmem>>, vector<1x1x4x128xbf16>
    %42 = vector.shape_cast %41 : vector<1x1x4x128xbf16> to vector<4x128xbf16>
    %cst_33 = arith.constant dense<0.000000e+00> : vector<256x128xf32>
    %43 = tpu.matmul %40, %42, %cst_33 {dimension_numbers = #tpu.dot_dimension_numbers<[1], [0], [0], [1], [0, 0, 1, 1], [], []>} : vector<256x4xbf16>, vector<4x128xbf16>, vector<256x128xf32> -> vector<256x128xf32>
    %44 = arith.addf %38, %43 : vector<256x128xf32>
    %45 = vector.extract_strided_slice %1 {offsets = [1, 2, 0], sizes = [16, 16, 4], strides = [1, 1, 1]} : vector<20x20x4xbf16> to vector<16x16x4xbf16>
    %46 = vector.shape_cast %45 : vector<16x16x4xbf16> to vector<256x4xbf16>
    %c1_34 = arith.constant 1 : index
    %c2_35 = arith.constant 2 : index
    %c0_36 = arith.constant 0 : index
    %c0_37 = arith.constant 0 : index
    %47 = vector.load %arg2[%c1_34, %c2_35, %c0_36, %c0_37] : memref<5x5x4x128xbf16, #tpu.memory_space<vmem>>, vector<1x1x4x128xbf16>
    %48 = vector.shape_cast %47 : vector<1x1x4x128xbf16> to vector<4x128xbf16>
    %cst_38 = arith.constant dense<0.000000e+00> : vector<256x128xf32>
    %49 = tpu.matmul %46, %48, %cst_38 {dimension_numbers = #tpu.dot_dimension_numbers<[1], [0], [0], [1], [0, 0, 1, 1], [], []>} : vector<256x4xbf16>, vector<4x128xbf16>, vector<256x128xf32> -> vector<256x128xf32>
    %50 = arith.addf %44, %49 : vector<256x128xf32>
    %51 = vector.extract_strided_slice %1 {offsets = [1, 3, 0], sizes = [16, 16, 4], strides = [1, 1, 1]} : vector<20x20x4xbf16> to vector<16x16x4xbf16>
    %52 = vector.shape_cast %51 : vector<16x16x4xbf16> to vector<256x4xbf16>
    %c1_39 = arith.constant 1 : index
    %c3_40 = arith.constant 3 : index
    %c0_41 = arith.constant 0 : index
    %c0_42 = arith.constant 0 : index
    %53 = vector.load %arg2[%c1_39, %c3_40, %c0_41, %c0_42] : memref<5x5x4x128xbf16, #tpu.memory_space<vmem>>, vector<1x1x4x128xbf16>
    %54 = vector.shape_cast %53 : vector<1x1x4x128xbf16> to vector<4x128xbf16>
    %cst_43 = arith.constant dense<0.000000e+00> : vector<256x128xf32>
    %55 = tpu.matmul %52, %54, %cst_43 {dimension_numbers = #tpu.dot_dimension_numbers<[1], [0], [0], [1], [0, 0, 1, 1], [], []>} : vector<256x4xbf16>, vector<4x128xbf16>, vector<256x128xf32> -> vector<256x128xf32>
    %56 = arith.addf %50, %55 : vector<256x128xf32>
    %57 = vector.extract_strided_slice %1 {offsets = [1, 4, 0], sizes = [16, 16, 4], strides = [1, 1, 1]} : vector<20x20x4xbf16> to vector<16x16x4xbf16>
    %58 = vector.shape_cast %57 : vector<16x16x4xbf16> to vector<256x4xbf16>
    %c1_44 = arith.constant 1 : index
    %c4_45 = arith.constant 4 : index
    %c0_46 = arith.constant 0 : index
    %c0_47 = arith.constant 0 : index
    %59 = vector.load %arg2[%c1_44, %c4_45, %c0_46, %c0_47] : memref<5x5x4x128xbf16, #tpu.memory_space<vmem>>, vector<1x1x4x128xbf16>
    %60 = vector.shape_cast %59 : vector<1x1x4x128xbf16> to vector<4x128xbf16>
    %cst_48 = arith.constant dense<0.000000e+00> : vector<256x128xf32>
    %61 = tpu.matmul %58, %60, %cst_48 {dimension_numbers = #tpu.dot_dimension_numbers<[1], [0], [0], [1], [0, 0, 1, 1], [], []>} : vector<256x4xbf16>, vector<4x128xbf16>, vector<256x128xf32> -> vector<256x128xf32>
    %62 = arith.addf %56, %61 : vector<256x128xf32>
    %63 = vector.extract_strided_slice %1 {offsets = [2, 0, 0], sizes = [16, 16, 4], strides = [1, 1, 1]} : vector<20x20x4xbf16> to vector<16x16x4xbf16>
    %64 = vector.shape_cast %63 : vector<16x16x4xbf16> to vector<256x4xbf16>
    %c2_49 = arith.constant 2 : index
    %c0_50 = arith.constant 0 : index
    %c0_51 = arith.constant 0 : index
    %c0_52 = arith.constant 0 : index
    %65 = vector.load %arg2[%c2_49, %c0_50, %c0_51, %c0_52] : memref<5x5x4x128xbf16, #tpu.memory_space<vmem>>, vector<1x1x4x128xbf16>
    %66 = vector.shape_cast %65 : vector<1x1x4x128xbf16> to vector<4x128xbf16>
    %cst_53 = arith.constant dense<0.000000e+00> : vector<256x128xf32>
    %67 = tpu.matmul %64, %66, %cst_53 {dimension_numbers = #tpu.dot_dimension_numbers<[1], [0], [0], [1], [0, 0, 1, 1], [], []>} : vector<256x4xbf16>, vector<4x128xbf16>, vector<256x128xf32> -> vector<256x128xf32>
    %68 = arith.addf %62, %67 : vector<256x128xf32>
    %69 = vector.extract_strided_slice %1 {offsets = [2, 1, 0], sizes = [16, 16, 4], strides = [1, 1, 1]} : vector<20x20x4xbf16> to vector<16x16x4xbf16>
    %70 = vector.shape_cast %69 : vector<16x16x4xbf16> to vector<256x4xbf16>
    %c2_54 = arith.constant 2 : index
    %c1_55 = arith.constant 1 : index
    %c0_56 = arith.constant 0 : index
    %c0_57 = arith.constant 0 : index
    %71 = vector.load %arg2[%c2_54, %c1_55, %c0_56, %c0_57] : memref<5x5x4x128xbf16, #tpu.memory_space<vmem>>, vector<1x1x4x128xbf16>
    %72 = vector.shape_cast %71 : vector<1x1x4x128xbf16> to vector<4x128xbf16>
    %cst_58 = arith.constant dense<0.000000e+00> : vector<256x128xf32>
    %73 = tpu.matmul %70, %72, %cst_58 {dimension_numbers = #tpu.dot_dimension_numbers<[1], [0], [0], [1], [0, 0, 1, 1], [], []>} : vector<256x4xbf16>, vector<4x128xbf16>, vector<256x128xf32> -> vector<256x128xf32>
    %74 = arith.addf %68, %73 : vector<256x128xf32>
    %75 = vector.extract_strided_slice %1 {offsets = [2, 2, 0], sizes = [16, 16, 4], strides = [1, 1, 1]} : vector<20x20x4xbf16> to vector<16x16x4xbf16>
    %76 = vector.shape_cast %75 : vector<16x16x4xbf16> to vector<256x4xbf16>
    %c2_59 = arith.constant 2 : index
    %c2_60 = arith.constant 2 : index
    %c0_61 = arith.constant 0 : index
    %c0_62 = arith.constant 0 : index
    %77 = vector.load %arg2[%c2_59, %c2_60, %c0_61, %c0_62] : memref<5x5x4x128xbf16, #tpu.memory_space<vmem>>, vector<1x1x4x128xbf16>
    %78 = vector.shape_cast %77 : vector<1x1x4x128xbf16> to vector<4x128xbf16>
    %cst_63 = arith.constant dense<0.000000e+00> : vector<256x128xf32>
    %79 = tpu.matmul %76, %78, %cst_63 {dimension_numbers = #tpu.dot_dimension_numbers<[1], [0], [0], [1], [0, 0, 1, 1], [], []>} : vector<256x4xbf16>, vector<4x128xbf16>, vector<256x128xf32> -> vector<256x128xf32>
    %80 = arith.addf %74, %79 : vector<256x128xf32>
    %81 = vector.extract_strided_slice %1 {offsets = [2, 3, 0], sizes = [16, 16, 4], strides = [1, 1, 1]} : vector<20x20x4xbf16> to vector<16x16x4xbf16>
    %82 = vector.shape_cast %81 : vector<16x16x4xbf16> to vector<256x4xbf16>
    %c2_64 = arith.constant 2 : index
    %c3_65 = arith.constant 3 : index
    %c0_66 = arith.constant 0 : index
    %c0_67 = arith.constant 0 : index
    %83 = vector.load %arg2[%c2_64, %c3_65, %c0_66, %c0_67] : memref<5x5x4x128xbf16, #tpu.memory_space<vmem>>, vector<1x1x4x128xbf16>
    %84 = vector.shape_cast %83 : vector<1x1x4x128xbf16> to vector<4x128xbf16>
    %cst_68 = arith.constant dense<0.000000e+00> : vector<256x128xf32>
    %85 = tpu.matmul %82, %84, %cst_68 {dimension_numbers = #tpu.dot_dimension_numbers<[1], [0], [0], [1], [0, 0, 1, 1], [], []>} : vector<256x4xbf16>, vector<4x128xbf16>, vector<256x128xf32> -> vector<256x128xf32>
    %86 = arith.addf %80, %85 : vector<256x128xf32>
    %87 = vector.extract_strided_slice %1 {offsets = [2, 4, 0], sizes = [16, 16, 4], strides = [1, 1, 1]} : vector<20x20x4xbf16> to vector<16x16x4xbf16>
    %88 = vector.shape_cast %87 : vector<16x16x4xbf16> to vector<256x4xbf16>
    %c2_69 = arith.constant 2 : index
    %c4_70 = arith.constant 4 : index
    %c0_71 = arith.constant 0 : index
    %c0_72 = arith.constant 0 : index
    %89 = vector.load %arg2[%c2_69, %c4_70, %c0_71, %c0_72] : memref<5x5x4x128xbf16, #tpu.memory_space<vmem>>, vector<1x1x4x128xbf16>
    %90 = vector.shape_cast %89 : vector<1x1x4x128xbf16> to vector<4x128xbf16>
    %cst_73 = arith.constant dense<0.000000e+00> : vector<256x128xf32>
    %91 = tpu.matmul %88, %90, %cst_73 {dimension_numbers = #tpu.dot_dimension_numbers<[1], [0], [0], [1], [0, 0, 1, 1], [], []>} : vector<256x4xbf16>, vector<4x128xbf16>, vector<256x128xf32> -> vector<256x128xf32>
    %92 = arith.addf %86, %91 : vector<256x128xf32>
    %93 = vector.extract_strided_slice %1 {offsets = [3, 0, 0], sizes = [16, 16, 4], strides = [1, 1, 1]} : vector<20x20x4xbf16> to vector<16x16x4xbf16>
    %94 = vector.shape_cast %93 : vector<16x16x4xbf16> to vector<256x4xbf16>
    %c3_74 = arith.constant 3 : index
    %c0_75 = arith.constant 0 : index
    %c0_76 = arith.constant 0 : index
    %c0_77 = arith.constant 0 : index
    %95 = vector.load %arg2[%c3_74, %c0_75, %c0_76, %c0_77] : memref<5x5x4x128xbf16, #tpu.memory_space<vmem>>, vector<1x1x4x128xbf16>
    %96 = vector.shape_cast %95 : vector<1x1x4x128xbf16> to vector<4x128xbf16>
    %cst_78 = arith.constant dense<0.000000e+00> : vector<256x128xf32>
    %97 = tpu.matmul %94, %96, %cst_78 {dimension_numbers = #tpu.dot_dimension_numbers<[1], [0], [0], [1], [0, 0, 1, 1], [], []>} : vector<256x4xbf16>, vector<4x128xbf16>, vector<256x128xf32> -> vector<256x128xf32>
    %98 = arith.addf %92, %97 : vector<256x128xf32>
    %99 = vector.extract_strided_slice %1 {offsets = [3, 1, 0], sizes = [16, 16, 4], strides = [1, 1, 1]} : vector<20x20x4xbf16> to vector<16x16x4xbf16>
    %100 = vector.shape_cast %99 : vector<16x16x4xbf16> to vector<256x4xbf16>
    %c3_79 = arith.constant 3 : index
    %c1_80 = arith.constant 1 : index
    %c0_81 = arith.constant 0 : index
    %c0_82 = arith.constant 0 : index
    %101 = vector.load %arg2[%c3_79, %c1_80, %c0_81, %c0_82] : memref<5x5x4x128xbf16, #tpu.memory_space<vmem>>, vector<1x1x4x128xbf16>
    %102 = vector.shape_cast %101 : vector<1x1x4x128xbf16> to vector<4x128xbf16>
    %cst_83 = arith.constant dense<0.000000e+00> : vector<256x128xf32>
    %103 = tpu.matmul %100, %102, %cst_83 {dimension_numbers = #tpu.dot_dimension_numbers<[1], [0], [0], [1], [0, 0, 1, 1], [], []>} : vector<256x4xbf16>, vector<4x128xbf16>, vector<256x128xf32> -> vector<256x128xf32>
    %104 = arith.addf %98, %103 : vector<256x128xf32>
    %105 = vector.extract_strided_slice %1 {offsets = [3, 2, 0], sizes = [16, 16, 4], strides = [1, 1, 1]} : vector<20x20x4xbf16> to vector<16x16x4xbf16>
    %106 = vector.shape_cast %105 : vector<16x16x4xbf16> to vector<256x4xbf16>
    %c3_84 = arith.constant 3 : index
    %c2_85 = arith.constant 2 : index
    %c0_86 = arith.constant 0 : index
    %c0_87 = arith.constant 0 : index
    %107 = vector.load %arg2[%c3_84, %c2_85, %c0_86, %c0_87] : memref<5x5x4x128xbf16, #tpu.memory_space<vmem>>, vector<1x1x4x128xbf16>
    %108 = vector.shape_cast %107 : vector<1x1x4x128xbf16> to vector<4x128xbf16>
    %cst_88 = arith.constant dense<0.000000e+00> : vector<256x128xf32>
    %109 = tpu.matmul %106, %108, %cst_88 {dimension_numbers = #tpu.dot_dimension_numbers<[1], [0], [0], [1], [0, 0, 1, 1], [], []>} : vector<256x4xbf16>, vector<4x128xbf16>, vector<256x128xf32> -> vector<256x128xf32>
    %110 = arith.addf %104, %109 : vector<256x128xf32>
    %111 = vector.extract_strided_slice %1 {offsets = [3, 3, 0], sizes = [16, 16, 4], strides = [1, 1, 1]} : vector<20x20x4xbf16> to vector<16x16x4xbf16>
    %112 = vector.shape_cast %111 : vector<16x16x4xbf16> to vector<256x4xbf16>
    %c3_89 = arith.constant 3 : index
    %c3_90 = arith.constant 3 : index
    %c0_91 = arith.constant 0 : index
    %c0_92 = arith.constant 0 : index
    %113 = vector.load %arg2[%c3_89, %c3_90, %c0_91, %c0_92] : memref<5x5x4x128xbf16, #tpu.memory_space<vmem>>, vector<1x1x4x128xbf16>
    %114 = vector.shape_cast %113 : vector<1x1x4x128xbf16> to vector<4x128xbf16>
    %cst_93 = arith.constant dense<0.000000e+00> : vector<256x128xf32>
    %115 = tpu.matmul %112, %114, %cst_93 {dimension_numbers = #tpu.dot_dimension_numbers<[1], [0], [0], [1], [0, 0, 1, 1], [], []>} : vector<256x4xbf16>, vector<4x128xbf16>, vector<256x128xf32> -> vector<256x128xf32>
    %116 = arith.addf %110, %115 : vector<256x128xf32>
    %117 = vector.extract_strided_slice %1 {offsets = [3, 4, 0], sizes = [16, 16, 4], strides = [1, 1, 1]} : vector<20x20x4xbf16> to vector<16x16x4xbf16>
    %118 = vector.shape_cast %117 : vector<16x16x4xbf16> to vector<256x4xbf16>
    %c3_94 = arith.constant 3 : index
    %c4_95 = arith.constant 4 : index
    %c0_96 = arith.constant 0 : index
    %c0_97 = arith.constant 0 : index
    %119 = vector.load %arg2[%c3_94, %c4_95, %c0_96, %c0_97] : memref<5x5x4x128xbf16, #tpu.memory_space<vmem>>, vector<1x1x4x128xbf16>
    %120 = vector.shape_cast %119 : vector<1x1x4x128xbf16> to vector<4x128xbf16>
    %cst_98 = arith.constant dense<0.000000e+00> : vector<256x128xf32>
    %121 = tpu.matmul %118, %120, %cst_98 {dimension_numbers = #tpu.dot_dimension_numbers<[1], [0], [0], [1], [0, 0, 1, 1], [], []>} : vector<256x4xbf16>, vector<4x128xbf16>, vector<256x128xf32> -> vector<256x128xf32>
    %122 = arith.addf %116, %121 : vector<256x128xf32>
    %123 = vector.extract_strided_slice %1 {offsets = [4, 0, 0], sizes = [16, 16, 4], strides = [1, 1, 1]} : vector<20x20x4xbf16> to vector<16x16x4xbf16>
    %124 = vector.shape_cast %123 : vector<16x16x4xbf16> to vector<256x4xbf16>
    %c4_99 = arith.constant 4 : index
    %c0_100 = arith.constant 0 : index
    %c0_101 = arith.constant 0 : index
    %c0_102 = arith.constant 0 : index
    %125 = vector.load %arg2[%c4_99, %c0_100, %c0_101, %c0_102] : memref<5x5x4x128xbf16, #tpu.memory_space<vmem>>, vector<1x1x4x128xbf16>
    %126 = vector.shape_cast %125 : vector<1x1x4x128xbf16> to vector<4x128xbf16>
    %cst_103 = arith.constant dense<0.000000e+00> : vector<256x128xf32>
    %127 = tpu.matmul %124, %126, %cst_103 {dimension_numbers = #tpu.dot_dimension_numbers<[1], [0], [0], [1], [0, 0, 1, 1], [], []>} : vector<256x4xbf16>, vector<4x128xbf16>, vector<256x128xf32> -> vector<256x128xf32>
    %128 = arith.addf %122, %127 : vector<256x128xf32>
    %129 = vector.extract_strided_slice %1 {offsets = [4, 1, 0], sizes = [16, 16, 4], strides = [1, 1, 1]} : vector<20x20x4xbf16> to vector<16x16x4xbf16>
    %130 = vector.shape_cast %129 : vector<16x16x4xbf16> to vector<256x4xbf16>
    %c4_104 = arith.constant 4 : index
    %c1_105 = arith.constant 1 : index
    %c0_106 = arith.constant 0 : index
    %c0_107 = arith.constant 0 : index
    %131 = vector.load %arg2[%c4_104, %c1_105, %c0_106, %c0_107] : memref<5x5x4x128xbf16, #tpu.memory_space<vmem>>, vector<1x1x4x128xbf16>
    %132 = vector.shape_cast %131 : vector<1x1x4x128xbf16> to vector<4x128xbf16>
    %cst_108 = arith.constant dense<0.000000e+00> : vector<256x128xf32>
    %133 = tpu.matmul %130, %132, %cst_108 {dimension_numbers = #tpu.dot_dimension_numbers<[1], [0], [0], [1], [0, 0, 1, 1], [], []>} : vector<256x4xbf16>, vector<4x128xbf16>, vector<256x128xf32> -> vector<256x128xf32>
    %134 = arith.addf %128, %133 : vector<256x128xf32>
    %135 = vector.extract_strided_slice %1 {offsets = [4, 2, 0], sizes = [16, 16, 4], strides = [1, 1, 1]} : vector<20x20x4xbf16> to vector<16x16x4xbf16>
    %136 = vector.shape_cast %135 : vector<16x16x4xbf16> to vector<256x4xbf16>
    %c4_109 = arith.constant 4 : index
    %c2_110 = arith.constant 2 : index
    %c0_111 = arith.constant 0 : index
    %c0_112 = arith.constant 0 : index
    %137 = vector.load %arg2[%c4_109, %c2_110, %c0_111, %c0_112] : memref<5x5x4x128xbf16, #tpu.memory_space<vmem>>, vector<1x1x4x128xbf16>
    %138 = vector.shape_cast %137 : vector<1x1x4x128xbf16> to vector<4x128xbf16>
    %cst_113 = arith.constant dense<0.000000e+00> : vector<256x128xf32>
    %139 = tpu.matmul %136, %138, %cst_113 {dimension_numbers = #tpu.dot_dimension_numbers<[1], [0], [0], [1], [0, 0, 1, 1], [], []>} : vector<256x4xbf16>, vector<4x128xbf16>, vector<256x128xf32> -> vector<256x128xf32>
    %140 = arith.addf %134, %139 : vector<256x128xf32>
    %141 = vector.extract_strided_slice %1 {offsets = [4, 3, 0], sizes = [16, 16, 4], strides = [1, 1, 1]} : vector<20x20x4xbf16> to vector<16x16x4xbf16>
    %142 = vector.shape_cast %141 : vector<16x16x4xbf16> to vector<256x4xbf16>
    %c4_114 = arith.constant 4 : index
    %c3_115 = arith.constant 3 : index
    %c0_116 = arith.constant 0 : index
    %c0_117 = arith.constant 0 : index
    %143 = vector.load %arg2[%c4_114, %c3_115, %c0_116, %c0_117] : memref<5x5x4x128xbf16, #tpu.memory_space<vmem>>, vector<1x1x4x128xbf16>
    %144 = vector.shape_cast %143 : vector<1x1x4x128xbf16> to vector<4x128xbf16>
    %cst_118 = arith.constant dense<0.000000e+00> : vector<256x128xf32>
    %145 = tpu.matmul %142, %144, %cst_118 {dimension_numbers = #tpu.dot_dimension_numbers<[1], [0], [0], [1], [0, 0, 1, 1], [], []>} : vector<256x4xbf16>, vector<4x128xbf16>, vector<256x128xf32> -> vector<256x128xf32>
    %146 = arith.addf %140, %145 : vector<256x128xf32>
    %147 = vector.extract_strided_slice %1 {offsets = [4, 4, 0], sizes = [16, 16, 4], strides = [1, 1, 1]} : vector<20x20x4xbf16> to vector<16x16x4xbf16>
    %148 = vector.shape_cast %147 : vector<16x16x4xbf16> to vector<256x4xbf16>
    %c4_119 = arith.constant 4 : index
    %c4_120 = arith.constant 4 : index
    %c0_121 = arith.constant 0 : index
    %c0_122 = arith.constant 0 : index
    %149 = vector.load %arg2[%c4_119, %c4_120, %c0_121, %c0_122] : memref<5x5x4x128xbf16, #tpu.memory_space<vmem>>, vector<1x1x4x128xbf16>
    %150 = vector.shape_cast %149 : vector<1x1x4x128xbf16> to vector<4x128xbf16>
    %cst_123 = arith.constant dense<0.000000e+00> : vector<256x128xf32>
    %151 = tpu.matmul %148, %150, %cst_123 {dimension_numbers = #tpu.dot_dimension_numbers<[1], [0], [0], [1], [0, 0, 1, 1], [], []>} : vector<256x4xbf16>, vector<4x128xbf16>, vector<256x128xf32> -> vector<256x128xf32>
    %152 = arith.addf %146, %151 : vector<256x128xf32>
    %c0_124 = arith.constant 0 : index
    %c0_125 = arith.constant 0 : index
    %153 = vector.load %arg3[%c0_124, %c0_125] : memref<1x128xf32, #tpu.memory_space<vmem>>, vector<1x128xf32>
    %154 = vector.broadcast %153 : vector<1x128xf32> to vector<256x128xf32>
    %155 = arith.addf %152, %154 : vector<256x128xf32>
    %156 = vector.shape_cast %155 : vector<256x128xf32> to vector<1x16x16x128xf32>
    %c0_126 = arith.constant 0 : index
    %c0_127 = arith.constant 0 : index
    %c0_128 = arith.constant 0 : index
    %c0_129 = arith.constant 0 : index
    %157 = vector.load %arg4[%c0_126, %c0_127, %c0_128, %c0_129] : memref<1x16x16x128xf32, #tpu.memory_space<vmem>>, vector<1x16x16x128xf32>
    tpu.vector_store %arg4[%c0_126, %c0_127, %c0_128, %c0_129], %156 {strides = array<i32>} : memref<1x16x16x128xf32, #tpu.memory_space<vmem>>, vector<1x16x16x128xf32>,
    return
  }
  func.func @transform_0(%arg0: i32) -> (i32, i32, i32, i32) {
    %c0_i32 = arith.constant 0 : i32
    %c0_i32_0 = arith.constant 0 : i32
    %c0_i32_1 = arith.constant 0 : i32
    %c0_i32_2 = arith.constant 0 : i32
    return %arg0, %c0_i32, %c0_i32_0, %c0_i32_1 : i32, i32, i32, i32
  }
  func.func @transform_1(%arg0: i32) -> (i32, i32, i32, i32) {
    %c0_i32 = arith.constant 0 : i32
    %c0_i32_0 = arith.constant 0 : i32
    %c0_i32_1 = arith.constant 0 : i32
    %c0_i32_2 = arith.constant 0 : i32
    %c0_i32_3 = arith.constant 0 : i32
    return %c0_i32, %c0_i32_0, %c0_i32_1, %c0_i32_2 : i32, i32, i32, i32
  }
  func.func @transform_2(%arg0: i32) -> (i32, i32) {
    %c0_i32 = arith.constant 0 : i32
    %c0_i32_0 = arith.constant 0 : i32
    %c0_i32_1 = arith.constant 0 : i32
    return %c0_i32, %c0_i32_0 : i32, i32
  }
  func.func @transform_3(%arg0: i32) -> (i32, i32, i32, i32) {
    %c0_i32 = arith.constant 0 : i32
    %c0_i32_0 = arith.constant 0 : i32
    %c0_i32_1 = arith.constant 0 : i32
    %c0_i32_2 = arith.constant 0 : i32
    return %arg0, %c0_i32, %c0_i32_0, %c0_i32_1 : i32, i32, i32, i32
  }
}

</mosaic_0001>

<llo_original>
// kernel: _mixed_forward_impl.1
$region0: #{_mixed_forward_impl.1}
  #allocation0 [shape = 'u32[]', space=smem, size = 0x4, offset = 0x4, fixed_abs, tag = 'smem constant byte address 0x4 - core index']
  #allocation1 [shape = 'u32[144,128]{1,0:T(1,128)}', space=vmem, size = 0x12000, scoped, tag = 'internal scratch']
  %s0 = inlined_call_operand.vmem [shape: bf16[2,20,20,4], index: 0, kind: input, shape index: {}]
  %s1 = inlined_call_operand.vmem [shape: bf16[5,5,4,128], index: 1, kind: input, shape index: {}]
  %s2 = inlined_call_operand.vmem [shape: f32[1,128], index: 2, kind: input, shape index: {}]
  %s3 = inlined_call_operand.vmem [shape: f32[2,16,16,128], index: 3, kind: output, shape index: {}]
  %s4 = sld [smem:[#allocation0]]
  $region45: #{_mixed_forward_impl.1} parent=0
    _
  %s6 = ssub.s32 1, %s4
  %s7 = scalar_select 0, %s6, %s4
  loop: start=0, step=1, limit=4
  $region2: #{_mixed_forward_impl.1} parent=0 // loop_pre_header
    _
  $region3: #{_mixed_forward_impl.1} parent=0 // loop_header
    %s9 = sphi 0, %s13
    %p10 = scmp.ge.s32.totalorder %s9, 4
    %s19 = sphi 0, %s21
    %s22 = sphi 0, %s19
    %s23 = sphi 0, %s22
    %s39 = sphi 0, %s23
    %s43 = sphi 0, %s43
    %s45 = sphi 0, %s43
    %s46 = sphi 0, %s45
    %s60 = sphi 0, %s46
    %s64 = sphi 0, %s64
    %s66 = sphi 0, %s64
    %s67 = sphi 0, %s66
    %s81 = sphi 0, %s67
    %s87 = sphi 0, %s89
    %s90 = sphi 0, %s87
    %s91 = sphi 0, %s90
    %s107 = sphi 0, %s91
  $region4: #{_mixed_forward_impl.1} parent=0 // loop_header_branch
    %12 = sbr.rel (%p10) target = $region8
  $region5: #{_mixed_forward_impl.1} parent=0 // loop_body
    %s14 = ssub.s32 %s9, 1
    %s15 = ssub.s32 %s9, 2
    %s16 = sadd.s32 %s9, 1
    %s17 = ssub.s32 %s9, %s16
    %p18 = scmp.eq.s32.totalorder %s17, 0
    %s20 = sadd.s32 %s19, 1
    %s21 = scalar_select %p18, %s19, %s20
    %p24 = pneg %p18
    %p25 = scmp.eq.s32.totalorder %s9, 1
    %p26 = por %p24, %p25
    %p27 = scmp.ne.s32.totalorder %s19, %s22
    %p28 = scmp.eq.s32.totalorder %s9, 0
    %p29 = por %p27, %p28
    %p30 = scmp.ne.s32.totalorder %s19, %s22
    %p31 = scmp.eq.s32.totalorder %s14, 1
    %p32 = por %p30, %p31
    %p33 = scmp.ne.s32.totalorder %s22, %s23
    %p34 = scmp.eq.s32.totalorder %s14, 0
    %p35 = por %p33, %p34
    %p36 = scmp.ne.s32.totalorder %s22, %s23
    %p37 = scmp.eq.s32.totalorder %s15, 1
    %p38 = por %p36, %p37
    %p40 = scmp.ne.s32.totalorder %s23, %s39
    %p41 = scmp.eq.s32.totalorder %s15, 0
    %p42 = por %p40, %p41
    %s44 = sadd.s32 %s43, 1
    %p47 = scmp.eq.s32.totalorder %s9, 1
    %p48 = scmp.ne.s32.totalorder %s43, %s45
    %p49 = scmp.eq.s32.totalorder %s9, 0
    %p50 = por %p48, %p49
    %p51 = scmp.ne.s32.totalorder %s43, %s45
    %p52 = scmp.eq.s32.totalorder %s14, 1
    %p53 = por %p51, %p52
    %p54 = scmp.ne.s32.totalorder %s45, %s46
    %p55 = scmp.eq.s32.totalorder %s14, 0
    %p56 = por %p54, %p55
    %p57 = scmp.ne.s32.totalorder %s45, %s46
    %p58 = scmp.eq.s32.totalorder %s15, 1
    %p59 = por %p57, %p58
    %p61 = scmp.ne.s32.totalorder %s46, %s60
    %p62 = scmp.eq.s32.totalorder %s15, 0
    %p63 = por %p61, %p62
    %s65 = sadd.s32 %s64, 1
    %p68 = scmp.eq.s32.totalorder %s9, 1
    %p69 = scmp.ne.s32.totalorder %s64, %s66
    %p70 = scmp.eq.s32.totalorder %s9, 0
    %p71 = por %p69, %p70
    %p72 = scmp.ne.s32.totalorder %s64, %s66
    %p73 = scmp.eq.s32.totalorder %s14, 1
    %p74 = por %p72, %p73
    %p75 = scmp.ne.s32.totalorder %s66, %s67
    %p76 = scmp.eq.s32.totalorder %s14, 0
    %p77 = por %p75, %p76
    %p78 = scmp.ne.s32.totalorder %s66, %s67
    %p79 = scmp.eq.s32.totalorder %s15, 1
    %p80 = por %p78, %p79
    %p82 = scmp.ne.s32.totalorder %s67, %s81
    %p83 = scmp.eq.s32.totalorder %s15, 0
    %p84 = por %p82, %p83
    %s85 = ssub.s32 %s9, %s16
    %p86 = scmp.eq.s32.totalorder %s85, 0
    %s88 = sadd.s32 %s87, 1
    %s89 = scalar_select %p86, %s87, %s88
    %p92 = pneg %p86
    %p93 = scmp.eq.s32.totalorder %s9, 1
    %p94 = por %p92, %p93
    %p95 = scmp.ne.s32.totalorder %s87, %s90
    %p96 = scmp.eq.s32.totalorder %s9, 0
    %p97 = por %p95, %p96
    %p98 = scmp.ne.s32.totalorder %s87, %s90
    %p99 = scmp.eq.s32.totalorder %s14, 1
    %p100 = por %p98, %p99
    %p101 = scmp.ne.s32.totalorder %s90, %s91
    %p102 = scmp.eq.s32.totalorder %s14, 0
    %p103 = por %p101, %p102
    %p104 = scmp.ne.s32.totalorder %s90, %s91
    %p105 = scmp.eq.s32.totalorder %s15, 1
    %p106 = por %p104, %p105
    %p108 = scmp.ne.s32.totalorder %s91, %s107
    %p109 = scmp.eq.s32.totalorder %s15, 0
    %p110 = por %p108, %p109
    %p111 = scmp.le.s32.totalorder 1, %s9
    %p112 = scmp.lt.s32.totalorder %s9, 3
    %p113 = pnand %p111, %p112
    %p114 = pneg %p113
    // Predicated region
    $region9: #{_mixed_forward_impl.1} parent=5 // pred_check
      _
    $region10: #{_mixed_forward_impl.1} parent=5 // pred_check_branch
      %116 = sbr.rel (%p113) target = $region12
    $region11: #{_mixed_forward_impl.1} parent=5 // pred_region
      %s117 = ssub.s32 %s9, 1
      // Predicated region
      $region13: #{_mixed_forward_impl.1} parent=11 // pred_check
        %p118 = pneg %p56
      $region14: #{_mixed_forward_impl.1} parent=11 // pred_check_branch
        %120 = sbr.rel (%p118) target = $region16
      $region15: #{_mixed_forward_impl.1} parent=11 // pred_region
        _
      $region16: #{_mixed_forward_impl.1} parent=11 // pred_fallthru
        _
      // Predicated region
      $region17: #{_mixed_forward_impl.1} parent=11 // pred_check
        %p121 = pneg %p77
      $region18: #{_mixed_forward_impl.1} parent=11 // pred_check_branch
        %123 = sbr.rel (%p121) target = $region20
      $region19: #{_mixed_forward_impl.1} parent=11 // pred_region
        _
      $region20: #{_mixed_forward_impl.1} parent=11 // pred_fallthru
        _
    $region12: #{_mixed_forward_impl.1} parent=5 // pred_fallthru
      _
    %p124 = scmp.lt.s32.totalorder %s9, 2
    // Predicated region
    $region21: #{_mixed_forward_impl.1} parent=5 // pred_check
      %p125 = pneg %p124
    $region22: #{_mixed_forward_impl.1} parent=5 // pred_check_branch
      %127 = sbr.rel (%p125) target = $region24
    $region23: #{_mixed_forward_impl.1} parent=5 // pred_region
      // Predicated region
      $region25: #{_mixed_forward_impl.1} parent=23 // pred_check
        %p128 = pneg %p29
      $region26: #{_mixed_forward_impl.1} parent=23 // pred_check_branch
        %130 = sbr.rel (%p128) target = $region28
      $region27: #{_mixed_forward_impl.1} parent=23 // pred_region
        %p131 = scmp.lt.s32.totalorder %s9, 1
        %s132 = scalar_select %p131, %s9, 1
        %s133 = smul.addr %s132, 60
        %s134 = smul.addr %s133, 4
        %s135 = scalar_lea.vmem %s0, %s134
      $region28: #{_mixed_forward_impl.1} parent=23 // pred_fallthru
        _
    $region24: #{_mixed_forward_impl.1} parent=5 // pred_fallthru
      _
    %p136 = scmp.le.s32.totalorder 1, %s9
    %p137 = scmp.lt.s32.totalorder %s9, 3
    %p138 = pnand %p136, %p137
    %p139 = pneg %p138
    // Predicated region
    $region29: #{_mixed_forward_impl.1} parent=5 // pred_check
      _
    $region30: #{_mixed_forward_impl.1} parent=5 // pred_check_branch
      %141 = sbr.rel (%p138) target = $region32
    $region31: #{_mixed_forward_impl.1} parent=5 // pred_region
      %s142 = ssub.s32 %s9, 1
      %p143 = scmp.lt.s32.totalorder %s14, 1
      %s144 = scalar_select %p143, %s14, 1
      %s145 = smul.addr %s144, 60
      %s146 = smul.addr %s145, 4
      %s147 = scalar_lea.vmem %s0, %s146
      %p148 = pneg %p35
      %p149 = pneg %p32
      %p150 = pneg %p56
      %p151 = pneg %p53
      %p152 = pneg %p77
      %p153 = pneg %p74
      %p154 = pneg %p103
      %p155 = pneg %p100
      %p156 = scmp.lt.s32.totalorder %s14, 1
      %s157 = scalar_select %p156, %s14, 1
      %s158 = smul.addr %s157, 32
      %s159 = smul.addr %s158, 8
      %s160 = scalar_lea.vmem %s3, %s159
      %p161 = scmp.lt.s32.totalorder %s14, 1
      %s162 = scalar_select %p161, %s14, 1
      %s163 = smul.addr %s162, 60
      %s164 = smul.addr %s163, 4
      %s165 = scalar_lea.vmem %s0, %s164
      %p166 = scmp.lt.s32.totalorder %s14, 1
      %s167 = scalar_select %p166, %s14, 1
      %s168 = smul.addr %s167, 32
      %s169 = smul.addr %s168, 8
      %s170 = scalar_lea.vmem %s3, %s169
      %v172 = vld [vmem:[%s165] sm:$0xf]
      %v173 = vld [vmem:[%s165 + $0x4] sm:$0xf]
      %v174 = vld [vmem:[%s165 + $0x8] sm:$0x3]
      %v175 = vld [vmem:[%s165 + $0xc] sm:$0xf]
      %v176 = vld [vmem:[%s165 + $0x10] sm:$0xf]
      %v177 = vld [vmem:[%s165 + $0x14] sm:$0x3]
      %v178 = vld [vmem:[%s165 + $0x18] sm:$0xf]
      %v179 = vld [vmem:[%s165 + $0x1c] sm:$0xf]
      %v180 = vld [vmem:[%s165 + $0x20] sm:$0x3]
      %v181 = vld [vmem:[%s165 + $0x24] sm:$0xf]
      %v182 = vld [vmem:[%s165 + $0x28] sm:$0xf]
      %v183 = vld [vmem:[%s165 + $0x2c] sm:$0x3]
      %v184 = vld [vmem:[%s165 + $0x30] sm:$0xf]
      %v185 = vld [vmem:[%s165 + $0x34] sm:$0xf]
      %v186 = vld [vmem:[%s165 + $0x38] sm:$0x3]
      %v187 = vld [vmem:[%s165 + $0x3c] sm:$0xf]
      %v188 = vld [vmem:[%s165 + $0x40] sm:$0xf]
      %v189 = vld [vmem:[%s165 + $0x44] sm:$0x3]
      %v190 = vld [vmem:[%s165 + $0x48] sm:$0xf]
      %v191 = vld [vmem:[%s165 + $0x4c] sm:$0xf]
      %v192 = vld [vmem:[%s165 + $0x50] sm:$0x3]
      %v193 = vld [vmem:[%s165 + $0x54] sm:$0xf]
      %v194 = vld [vmem:[%s165 + $0x58] sm:$0xf]
      %v195 = vld [vmem:[%s165 + $0x5c] sm:$0x3]
      %v196 = vld [vmem:[%s165 + $0x60] sm:$0xf]
      %v197 = vld [vmem:[%s165 + $0x64] sm:$0xf]
      %v198 = vld [vmem:[%s165 + $0x68] sm:$0x3]
      %v199 = vld [vmem:[%s165 + $0x6c] sm:$0xf]
      %v200 = vld [vmem:[%s165 + $0x70] sm:$0xf]
      %v201 = vld [vmem:[%s165 + $0x74] sm:$0x3]
      %v202 = vld [vmem:[%s165 + $0x78] sm:$0xf]
      %v203 = vld [vmem:[%s165 + $0x7c] sm:$0xf]
      %v204 = vld [vmem:[%s165 + $0x80] sm:$0x3]
      %v205 = vld [vmem:[%s165 + $0x84] sm:$0xf]
      %v206 = vld [vmem:[%s165 + $0x88] sm:$0xf]
      %v207 = vld [vmem:[%s165 + $0x8c] sm:$0x3]
      %v208 = vld [vmem:[%s165 + $0x90] sm:$0xf]
      %v209 = vld [vmem:[%s165 + $0x94] sm:$0xf]
      %v210 = vld [vmem:[%s165 + $0x98] sm:$0x3]
      %v211 = vld [vmem:[%s165 + $0x9c] sm:$0xf]
      %v212 = vld [vmem:[%s165 + $0xa0] sm:$0xf]
      %v213 = vld [vmem:[%s165 + $0xa4] sm:$0x3]
      %v214 = vld [vmem:[%s165 + $0xa8] sm:$0xf]
      %v215 = vld [vmem:[%s165 + $0xac] sm:$0xf]
      %v216 = vld [vmem:[%s165 + $0xb0] sm:$0x3]
      %v217 = vld [vmem:[%s165 + $0xb4] sm:$0xf]
      %v218 = vld [vmem:[%s165 + $0xb8] sm:$0xf]
      %v219 = vld [vmem:[%s165 + $0xbc] sm:$0x3]
      %v220 = vld [vmem:[%s165 + $0xc0] sm:$0xf]
      %v221 = vld [vmem:[%s165 + $0xc4] sm:$0xf]
      %v222 = vld [vmem:[%s165 + $0xc8] sm:$0x3]
      %v223 = vld [vmem:[%s165 + $0xcc] sm:$0xf]
      %v224 = vld [vmem:[%s165 + $0xd0] sm:$0xf]
      %v225 = vld [vmem:[%s165 + $0xd4] sm:$0x3]
      %v226 = vld [vmem:[%s165 + $0xd8] sm:$0xf]
      %v227 = vld [vmem:[%s165 + $0xdc] sm:$0xf]
      %v228 = vld [vmem:[%s165 + $0xe0] sm:$0x3]
      %v229 = vld [vmem:[%s165 + $0xe4] sm:$0xf]
      %v230 = vld [vmem:[%s165 + $0xe8] sm:$0xf]
      %v231 = vld [vmem:[%s165 + $0xec] sm:$0x3]
      %v232 = vld [vmem:[%s1] sm:$0x3]
      %vm233 = vsmask.f32 3328
      %vm234 = vsmask.f32 7440
      %vm235 = vmor %vm233, %vm234
      %v237 = vshrl.u32 %v172, 16
      %v239 = vrot.slane %v237, 4
      %v240 = vshll.u32 %v172, 16
      %v242 = vrot.slane %v240, 5
      %v243 = vor.u32 %v239, %v242
      %v244 = vrot.slane %v243, 4
      %v246 = vshll.u32 %v173, 16
      %v248 = vrot.slane %v246, 5
      %v249 = vsel %vm235, %v244, %v248
      %v250 = vshrl.u32 %v173, 16
      %v252 = vrot.slane %v250, 4
      %v253 = vor.u32 %v252, %v248
      %v254 = vrot.slane %v253, 4
      %v256 = vshll.u32 %v174, 16
      %v258 = vrot.slane %v256, 5
      %v259 = vsel %vm235, %v254, %v258
      %v261 = vshrl.u32 %v175, 16
      %v263 = vrot.slane %v261, 4
      %v264 = vshll.u32 %v175, 16
      %v266 = vrot.slane %v264, 5
      %v267 = vor.u32 %v263, %v266
      %v268 = vrot.slane %v267, 4
      %v270 = vshll.u32 %v176, 16
      %v272 = vrot.slane %v270, 5
      %v273 = vsel %vm235, %v268, %v272
      %v274 = vshrl.u32 %v176, 16
      %v276 = vrot.slane %v274, 4
      %v277 = vor.u32 %v276, %v272
      %v278 = vrot.slane %v277, 4
      %v280 = vshll.u32 %v177, 16
      %v282 = vrot.slane %v280, 5
      %v283 = vsel %vm235, %v278, %v282
      %v285 = vshrl.u32 %v178, 16
      %v287 = vrot.slane %v285, 4
      %v288 = vshll.u32 %v178, 16
      %v290 = vrot.slane %v288, 5
      %v291 = vor.u32 %v287, %v290
      %v292 = vrot.slane %v291, 4
      %v294 = vshll.u32 %v179, 16
      %v296 = vrot.slane %v294, 5
      %v297 = vsel %vm235, %v292, %v296
      %v298 = vshrl.u32 %v179, 16
      %v300 = vrot.slane %v298, 4
      %v301 = vor.u32 %v300, %v296
      %v302 = vrot.slane %v301, 4
      %v304 = vshll.u32 %v180, 16
      %v306 = vrot.slane %v304, 5
      %v307 = vsel %vm235, %v302, %v306
      %v309 = vshrl.u32 %v181, 16
      %v311 = vrot.slane %v309, 4
      %v312 = vshll.u32 %v181, 16
      %v314 = vrot.slane %v312, 5
      %v315 = vor.u32 %v311, %v314
      %v316 = vrot.slane %v315, 4
      %v318 = vshll.u32 %v182, 16
      %v320 = vrot.slane %v318, 5
      %v321 = vsel %vm235, %v316, %v320
      %v322 = vshrl.u32 %v182, 16
      %v324 = vrot.slane %v322, 4
      %v325 = vor.u32 %v324, %v320
      %v326 = vrot.slane %v325, 4
      %v328 = vshll.u32 %v183, 16
      %v330 = vrot.slane %v328, 5
      %v331 = vsel %vm235, %v326, %v330
      %v333 = vshrl.u32 %v184, 16
      %v335 = vrot.slane %v333, 4
      %v336 = vshll.u32 %v184, 16
      %v338 = vrot.slane %v336, 5
      %v339 = vor.u32 %v335, %v338
      %v340 = vrot.slane %v339, 4
      %v342 = vshll.u32 %v185, 16
      %v344 = vrot.slane %v342, 5
      %v345 = vsel %vm235, %v340, %v344
      %v346 = vshrl.u32 %v185, 16
      %v348 = vrot.slane %v346, 4
      %v349 = vor.u32 %v348, %v344
      %v350 = vrot.slane %v349, 4
      %v352 = vshll.u32 %v186, 16
      %v354 = vrot.slane %v352, 5
      %v355 = vsel %vm235, %v350, %v354
      %v357 = vshrl.u32 %v187, 16
      %v359 = vrot.slane %v357, 4
      %v360 = vshll.u32 %v187, 16
      %v362 = vrot.slane %v360, 5
      %v363 = vor.u32 %v359, %v362
      %v364 = vrot.slane %v363, 4
      %v366 = vshll.u32 %v188, 16
      %v368 = vrot.slane %v366, 5
      %v369 = vsel %vm235, %v364, %v368
      %v370 = vshrl.u32 %v188, 16
      %v372 = vrot.slane %v370, 4
      %v373 = vor.u32 %v372, %v368
      %v374 = vrot.slane %v373, 4
      %v376 = vshll.u32 %v189, 16
      %v378 = vrot.slane %v376, 5
      %v379 = vsel %vm235, %v374, %v378
      %v381 = vshrl.u32 %v190, 16
      %v383 = vrot.slane %v381, 4
      %v384 = vshll.u32 %v190, 16
      %v386 = vrot.slane %v384, 5
      %v387 = vor.u32 %v383, %v386
      %v388 = vrot.slane %v387, 4
      %v390 = vshll.u32 %v191, 16
      %v392 = vrot.slane %v390, 5
      %v393 = vsel %vm235, %v388, %v392
      %v394 = vshrl.u32 %v191, 16
      %v396 = vrot.slane %v394, 4
      %v397 = vor.u32 %v396, %v392
      %v398 = vrot.slane %v397, 4
      %v400 = vshll.u32 %v192, 16
      %v402 = vrot.slane %v400, 5
      %v403 = vsel %vm235, %v398, %v402
      %v405 = vshrl.u32 %v193, 16
      %v407 = vrot.slane %v405, 4
      %v408 = vshll.u32 %v193, 16
      %v410 = vrot.slane %v408, 5
      %v411 = vor.u32 %v407, %v410
      %v412 = vrot.slane %v411, 4
      %v414 = vshll.u32 %v194, 16
      %v416 = vrot.slane %v414, 5
      %v417 = vsel %vm235, %v412, %v416
      %v418 = vshrl.u32 %v194, 16
      %v420 = vrot.slane %v418, 4
      %v421 = vor.u32 %v420, %v416
      %v422 = vrot.slane %v421, 4
      %v424 = vshll.u32 %v195, 16
      %v426 = vrot.slane %v424, 5
      %v427 = vsel %vm235, %v422, %v426
      %v429 = vshrl.u32 %v196, 16
      %v431 = vrot.slane %v429, 4
      %v432 = vshll.u32 %v196, 16
      %v434 = vrot.slane %v432, 5
      %v435 = vor.u32 %v431, %v434
      %v436 = vrot.slane %v435, 4
      %v438 = vshll.u32 %v197, 16
      %v440 = vrot.slane %v438, 5
      %v441 = vsel %vm235, %v436, %v440
      %v442 = vshrl.u32 %v197, 16
      %v444 = vrot.slane %v442, 4
      %v445 = vor.u32 %v444, %v440
      %v446 = vrot.slane %v445, 4
      %v448 = vshll.u32 %v198, 16
      %v450 = vrot.slane %v448, 5
      %v451 = vsel %vm235, %v446, %v450
      %v453 = vshrl.u32 %v199, 16
      %v455 = vrot.slane %v453, 4
      %v456 = vshll.u32 %v199, 16
      %v458 = vrot.slane %v456, 5
      %v459 = vor.u32 %v455, %v458
      %v460 = vrot.slane %v459, 4
      %v462 = vshll.u32 %v200, 16
      %v464 = vrot.slane %v462, 5
      %v465 = vsel %vm235, %v460, %v464
      %v466 = vshrl.u32 %v200, 16
      %v468 = vrot.slane %v466, 4
      %v469 = vor.u32 %v468, %v464
      %v470 = vrot.slane %v469, 4
      %v472 = vshll.u32 %v201, 16
      %v474 = vrot.slane %v472, 5
      %v475 = vsel %vm235, %v470, %v474
      %v477 = vshrl.u32 %v202, 16
      %v479 = vrot.slane %v477, 4
      %v480 = vshll.u32 %v202, 16
      %v482 = vrot.slane %v480, 5
      %v483 = vor.u32 %v479, %v482
      %v484 = vrot.slane %v483, 4
      %v486 = vshll.u32 %v203, 16
      %v488 = vrot.slane %v486, 5
      %v489 = vsel %vm235, %v484, %v488
      %v490 = vshrl.u32 %v203, 16
      %v492 = vrot.slane %v490, 4
      %v493 = vor.u32 %v492, %v488
      %v494 = vrot.slane %v493, 4
      %v496 = vshll.u32 %v204, 16
      %v498 = vrot.slane %v496, 5
      %v499 = vsel %vm235, %v494, %v498
      %v501 = vshrl.u32 %v205, 16
      %v503 = vrot.slane %v501, 4
      %v504 = vshll.u32 %v205, 16
      %v506 = vrot.slane %v504, 5
      %v507 = vor.u32 %v503, %v506
      %v508 = vrot.slane %v507, 4
      %v510 = vshll.u32 %v206, 16
      %v512 = vrot.slane %v510, 5
      %v513 = vsel %vm235, %v508, %v512
      %v514 = vshrl.u32 %v206, 16
      %v516 = vrot.slane %v514, 4
      %v517 = vor.u32 %v516, %v512
      %v518 = vrot.slane %v517, 4
      %v520 = vshll.u32 %v207, 16
      %v522 = vrot.slane %v520, 5
      %v523 = vsel %vm235, %v518, %v522
      %v525 = vshrl.u32 %v208, 16
      %v527 = vrot.slane %v525, 4
      %v528 = vshll.u32 %v208, 16
      %v530 = vrot.slane %v528, 5
      %v531 = vor.u32 %v527, %v530
      %v532 = vrot.slane %v531, 4
      %v534 = vshll.u32 %v209, 16
      %v536 = vrot.slane %v534, 5
      %v537 = vsel %vm235, %v532, %v536
      %v538 = vshrl.u32 %v209, 16
      %v540 = vrot.slane %v538, 4
      %v541 = vor.u32 %v540, %v536
      %v542 = vrot.slane %v541, 4
      %v544 = vshll.u32 %v210, 16
      %v546 = vrot.slane %v544, 5
      %v547 = vsel %vm235, %v542, %v546
      %v549 = vshrl.u32 %v211, 16
      %v551 = vrot.slane %v549, 4
      %v552 = vshll.u32 %v211, 16
      %v554 = vrot.slane %v552, 5
      %v555 = vor.u32 %v551, %v554
      %v556 = vrot.slane %v555, 4
      %v558 = vshll.u32 %v212, 16
      %v560 = vrot.slane %v558, 5
      %v561 = vsel %vm235, %v556, %v560
      %v562 = vshrl.u32 %v212, 16
      %v564 = vrot.slane %v562, 4
      %v565 = vor.u32 %v564, %v560
      %v566 = vrot.slane %v565, 4
      %v568 = vshll.u32 %v213, 16
      %v570 = vrot.slane %v568, 5
      %v571 = vsel %vm235, %v566, %v570
      %v573 = vshrl.u32 %v214, 16
      %v575 = vrot.slane %v573, 4
      %v576 = vshll.u32 %v214, 16
      %v578 = vrot.slane %v576, 5
      %v579 = vor.u32 %v575, %v578
      %v580 = vrot.slane %v579, 4
      %v582 = vshll.u32 %v215, 16
      %v584 = vrot.slane %v582, 5
      %v585 = vsel %vm235, %v580, %v584
      %v586 = vshrl.u32 %v215, 16
      %v588 = vrot.slane %v586, 4
      %v589 = vor.u32 %v588, %v584
      %v590 = vrot.slane %v589, 4
      %v592 = vshll.u32 %v216, 16
      %v594 = vrot.slane %v592, 5
      %v595 = vsel %vm235, %v590, %v594
      %v597 = vshrl.u32 %v217, 16
      %v599 = vrot.slane %v597, 4
      %v600 = vshll.u32 %v217, 16
      %v602 = vrot.slane %v600, 5
      %v603 = vor.u32 %v599, %v602
      %v604 = vrot.slane %v603, 4
      %v606 = vshll.u32 %v218, 16
      %v608 = vrot.slane %v606, 5
      %v609 = vsel %vm235, %v604, %v608
      %v610 = vshrl.u32 %v218, 16
      %v612 = vrot.slane %v610, 4
      %v613 = vor.u32 %v612, %v608
      %v614 = vrot.slane %v613, 4
      %v616 = vshll.u32 %v219, 16
      %v618 = vrot.slane %v616, 5
      %v619 = vsel %vm235, %v614, %v618
      %s620 = scalar_lea.vmem %s1, 2
      %v621 = vld [vmem:[%s620] sm:$0x3]
      %v622 = vunpack.c.l.b16 %v249
      %v623 = vunpack.c.l.b16 %v259
      %v624 = vunpack.c.l.b16 %v273
      %v625 = vunpack.c.l.b16 %v283
      %v626 = vunpack.c.l.b16 %v297
      %v627 = vunpack.c.l.b16 %v307
      %v628 = vunpack.c.l.b16 %v321
      %v629 = vunpack.c.l.b16 %v331
      %v630 = vunpack.c.l.b16 %v345
      %v631 = vunpack.c.l.b16 %v355
      %v632 = vunpack.c.l.b16 %v369
      %v633 = vunpack.c.l.b16 %v379
      %v634 = vunpack.c.l.b16 %v393
      %v635 = vunpack.c.l.b16 %v403
      %v636 = vunpack.c.l.b16 %v417
      %v637 = vunpack.c.l.b16 %v427
      %v638 = vunpack.c.l.b16 %v441
      %v639 = vunpack.c.l.b16 %v451
      %v640 = vunpack.c.l.b16 %v465
      %v641 = vunpack.c.l.b16 %v475
      %v642 = vunpack.c.l.b16 %v489
      %v643 = vunpack.c.l.b16 %v499
      %v644 = vunpack.c.l.b16 %v513
      %v645 = vunpack.c.l.b16 %v523
      %v646 = vunpack.c.l.b16 %v537
      %v647 = vunpack.c.l.b16 %v547
      %v648 = vunpack.c.l.b16 %v561
      %v649 = vunpack.c.l.b16 %v571
      %v650 = vunpack.c.l.b16 %v585
      %v651 = vunpack.c.l.b16 %v595
      %v652 = vunpack.c.l.b16 %v609
      %v653 = vunpack.c.l.b16 %v619
      %v654 = vpack.c.b16 %v623, %v622
      %v655 = vpack.c.b16 %v625, %v624
      %v656 = vpack.c.b16 %v627, %v626
      %v657 = vpack.c.b16 %v629, %v628
      %v658 = vpack.c.b16 %v631, %v630
      %v659 = vpack.c.b16 %v633, %v632
      %v660 = vpack.c.b16 %v635, %v634
      %v661 = vpack.c.b16 %v637, %v636
      %v662 = vpack.c.b16 %v639, %v638
      %v663 = vpack.c.b16 %v641, %v640
      %v664 = vpack.c.b16 %v643, %v642
      %v665 = vpack.c.b16 %v645, %v644
      %v666 = vpack.c.b16 %v647, %v646
      %v667 = vpack.c.b16 %v649, %v648
      %v668 = vpack.c.b16 %v651, %v650
      %v669 = vpack.c.b16 %v653, %v652
      %vm670 = vcmask 31744
      %v672 = vsel %vm670, %v654, 0
      %v675 = vsel %vm670, %v655, 0
      %v678 = vsel %vm670, %v656, 0
      %v681 = vsel %vm670, %v657, 0
      %v684 = vsel %vm670, %v658, 0
      %v687 = vsel %vm670, %v659, 0
      %v690 = vsel %vm670, %v660, 0
      %v693 = vsel %vm670, %v661, 0
      %v696 = vsel %vm670, %v662, 0
      %v699 = vsel %vm670, %v663, 0
      %v702 = vsel %vm670, %v664, 0
      %v705 = vsel %vm670, %v665, 0
      %v708 = vsel %vm670, %v666, 0
      %v711 = vsel %vm670, %v667, 0
      %v714 = vsel %vm670, %v668, 0
      %v717 = vsel %vm670, %v669, 0
      %vm719 = vcmask 1041408
      %v721 = vsel %vm719, %v621, 0
      %723 = vmatprep.subr.bf16.mxu0 0
      %724 = vmatpush1.bf16.msra.mxu0 0
      %725 = vmatprep.subr.bf16.mxu0 0
      %726 = vmatpush1.bf16.msra.mxu0 0
      %727 = vmatprep.subr.bf16.mxu0 0
      %728 = vmatpush1.bf16.msra.mxu0 0
      %729 = vmatprep.subr.bf16.mxu0 0
      %730 = vmatpush1.bf16.msra.mxu0 0
      %731 = vmatprep.subr.bf16.mxu0 0
      %732 = vmatpush1.bf16.msra.mxu0 0
      %733 = vmatprep.subr.bf16.mxu0 0
      %734 = vmatpush1.bf16.msra.mxu0 0
      %735 = vmatprep.subr.bf16.mxu0 0
      %736 = vmatpush1.bf16.msra.mxu0 0
      %737 = vmatprep.subr.bf16.mxu0 0
      %738 = vmatpush1.bf16.msra.mxu0 %v721
      %739 = vmatprep.subr.bf16.mxu0 0
      %740 = vmatpush2.bf16.msra.mxu0 0
      %741 = vmatprep.subr.bf16.mxu0 0
      %742 = vmatpush2.bf16.msra.mxu0 0
      %743 = vmatprep.subr.bf16.mxu0 0
      %744 = vmatpush2.bf16.msra.mxu0 0
      %745 = vmatprep.subr.bf16.mxu0 0
      %746 = vmatpush2.bf16.msra.mxu0 0
      %747 = vmatprep.subr.bf16.mxu0 0
      %748 = vmatpush2.bf16.msra.mxu0 0
      %749 = vmatprep.subr.bf16.mxu0 0
      %750 = vmatpush2.bf16.msra.mxu0 0
      %751 = vmatprep.subr.bf16.mxu0 0
      %752 = vmatpush2.bf16.msra.mxu0 0
      %753 = vmatprep.subr.bf16.mxu0 0
      %754 = vmatpush2.bf16.msra.mxu0 0
      %755 = vmatprep.mubr.bf16.mxu0 0
      %756 = vmatmul.mubr.bf16.gmra.mxu0 %v672
      %v757 = vpop.f32.mrf.mxu0
      %v758 = vadd.f32 0.0, %v757
      %v759 = vpop.f32.mrf.mxu0
      %v760 = vpop.f32.mrf.mxu0
      %v761 = vadd.f32 0.0, %v760
      %v762 = vpop.f32.mrf.mxu0
      %763 = vmatprep.mubr.bf16.mxu0 0
      %764 = vmatmul.mubr.bf16.gmra.mxu0 %v675
      %v765 = vpop.f32.mrf.mxu0
      %v766 = vadd.f32 0.0, %v765
      %v767 = vpop.f32.mrf.mxu0
      %v768 = vpop.f32.mrf.mxu0
      %v769 = vadd.f32 0.0, %v768
      %v770 = vpop.f32.mrf.mxu0
      %771 = vmatprep.mubr.bf16.mxu0 0
      %772 = vmatmul.mubr.bf16.gmra.mxu0 %v678
      %v773 = vpop.f32.mrf.mxu0
      %v774 = vadd.f32 0.0, %v773
      %v775 = vpop.f32.mrf.mxu0
      %v776 = vpop.f32.mrf.mxu0
      %v777 = vadd.f32 0.0, %v776
      %v778 = vpop.f32.mrf.mxu0
      %779 = vmatprep.mubr.bf16.mxu0 0
      %780 = vmatmul.mubr.bf16.gmra.mxu0 %v681
      %v781 = vpop.f32.mrf.mxu0
      %v782 = vadd.f32 0.0, %v781
      %v783 = vpop.f32.mrf.mxu0
      %v784 = vpop.f32.mrf.mxu0
      %v785 = vadd.f32 0.0, %v784
      %v786 = vpop.f32.mrf.mxu0
      %787 = vmatprep.mubr.bf16.mxu0 0
      %788 = vmatmul.mubr.bf16.gmra.mxu0 %v684
      %v789 = vpop.f32.mrf.mxu0
      %v790 = vadd.f32 0.0, %v789
      %v791 = vpop.f32.mrf.mxu0
      %v792 = vpop.f32.mrf.mxu0
      %v793 = vadd.f32 0.0, %v792
      %v794 = vpop.f32.mrf.mxu0
      %795 = vmatprep.mubr.bf16.mxu0 0
      %796 = vmatmul.mubr.bf16.gmra.mxu0 %v687
      %v797 = vpop.f32.mrf.mxu0
      %v798 = vadd.f32 0.0, %v797
      %v799 = vpop.f32.mrf.mxu0
      %v800 = vpop.f32.mrf.mxu0
      %v801 = vadd.f32 0.0, %v800
      %v802 = vpop.f32.mrf.mxu0
      %803 = vmatprep.mubr.bf16.mxu0 0
      %804 = vmatmul.mubr.bf16.gmra.mxu0 %v690
      %v805 = vpop.f32.mrf.mxu0
      %v806 = vadd.f32 0.0, %v805
      %v807 = vpop.f32.mrf.mxu0
      %v808 = vpop.f32.mrf.mxu0
      %v809 = vadd.f32 0.0, %v808
      %v810 = vpop.f32.mrf.mxu0
      %811 = vmatprep.mubr.bf16.mxu0 0
      %812 = vmatmul.mubr.bf16.gmra.mxu0 %v693
      %v813 = vpop.f32.mrf.mxu0
      %v814 = vadd.f32 0.0, %v813
      %v815 = vpop.f32.mrf.mxu0
      %v816 = vpop.f32.mrf.mxu0
      %v817 = vadd.f32 0.0, %v816
      %v818 = vpop.f32.mrf.mxu0
      %819 = vmatprep.mubr.bf16.mxu0 0
      %820 = vmatmul.mubr.bf16.gmra.mxu0 %v696
      %v821 = vpop.f32.mrf.mxu0
      %v822 = vadd.f32 0.0, %v821
      %v823 = vpop.f32.mrf.mxu0
      %v824 = vpop.f32.mrf.mxu0
      %v825 = vadd.f32 0.0, %v824
      %v826 = vpop.f32.mrf.mxu0
      %827 = vmatprep.mubr.bf16.mxu0 0
      %828 = vmatmul.mubr.bf16.gmra.mxu0 %v699
      %v829 = vpop.f32.mrf.mxu0
      %v830 = vadd.f32 0.0, %v829
      %v831 = vpop.f32.mrf.mxu0
      %v832 = vpop.f32.mrf.mxu0
      %v833 = vadd.f32 0.0, %v832
      %v834 = vpop.f32.mrf.mxu0
      %835 = vmatprep.mubr.bf16.mxu0 0
      %836 = vmatmul.mubr.bf16.gmra.mxu0 %v702
      %v837 = vpop.f32.mrf.mxu0
      %v838 = vadd.f32 0.0, %v837
      %v839 = vpop.f32.mrf.mxu0
      %v840 = vpop.f32.mrf.mxu0
      %v841 = vadd.f32 0.0, %v840
      %v842 = vpop.f32.mrf.mxu0
      %843 = vmatprep.mubr.bf16.mxu0 0
      %844 = vmatmul.mubr.bf16.gmra.mxu0 %v705
      %v845 = vpop.f32.mrf.mxu0
      %v846 = vadd.f32 0.0, %v845
      %v847 = vpop.f32.mrf.mxu0
      %v848 = vpop.f32.mrf.mxu0
      %v849 = vadd.f32 0.0, %v848
      %v850 = vpop.f32.mrf.mxu0
      %851 = vmatprep.mubr.bf16.mxu0 0
      %852 = vmatmul.mubr.bf16.gmra.mxu0 %v708
      %v853 = vpop.f32.mrf.mxu0
      %v854 = vadd.f32 0.0, %v853
      %v855 = vpop.f32.mrf.mxu0
      %v856 = vpop.f32.mrf.mxu0
      %v857 = vadd.f32 0.0, %v856
      %v858 = vpop.f32.mrf.mxu0
      %859 = vmatprep.mubr.bf16.mxu0 0
      %860 = vmatmul.mubr.bf16.gmra.mxu0 %v711
      %v861 = vpop.f32.mrf.mxu0
      %v862 = vadd.f32 0.0, %v861
      %v863 = vpop.f32.mrf.mxu0
      %v864 = vpop.f32.mrf.mxu0
      %v865 = vadd.f32 0.0, %v864
      %v866 = vpop.f32.mrf.mxu0
      %867 = vmatprep.mubr.bf16.mxu0 0
      %868 = vmatmul.mubr.bf16.gmra.mxu0 %v714
      %v869 = vpop.f32.mrf.mxu0
      %v870 = vadd.f32 0.0, %v869
      %v871 = vpop.f32.mrf.mxu0
      %v872 = vpop.f32.mrf.mxu0
      %v873 = vadd.f32 0.0, %v872
      %v874 = vpop.f32.mrf.mxu0
      %875 = vmatprep.mubr.bf16.mxu0 0
      %876 = vmatmul.mubr.bf16.gmra.mxu0 %v717
      %v877 = vpop.f32.mrf.mxu0
      %v878 = vadd.f32 0.0, %v877
      %v879 = vpop.f32.mrf.mxu0
      %v880 = vpop.f32.mrf.mxu0
      %v881 = vadd.f32 0.0, %v880
      %v882 = vpop.f32.mrf.mxu0
      %883 = vdwg.mxu0
      %v916 = vunpack.c.l.b16 %v172
      %v917 = vunpack.c.l.b16 %v173
      %v918 = vunpack.c.l.b16 %v175
      %v919 = vunpack.c.l.b16 %v176
      %v920 = vunpack.c.l.b16 %v178
      %v921 = vunpack.c.l.b16 %v179
      %v922 = vunpack.c.l.b16 %v181
      %v923 = vunpack.c.l.b16 %v182
      %v924 = vunpack.c.l.b16 %v184
      %v925 = vunpack.c.l.b16 %v185
      %v926 = vunpack.c.l.b16 %v187
      %v927 = vunpack.c.l.b16 %v188
      %v928 = vunpack.c.l.b16 %v190
      %v929 = vunpack.c.l.b16 %v191
      %v930 = vunpack.c.l.b16 %v193
      %v931 = vunpack.c.l.b16 %v194
      %v932 = vunpack.c.l.b16 %v196
      %v933 = vunpack.c.l.b16 %v197
      %v934 = vunpack.c.l.b16 %v199
      %v935 = vunpack.c.l.b16 %v200
      %v936 = vunpack.c.l.b16 %v202
      %v937 = vunpack.c.l.b16 %v203
      %v938 = vunpack.c.l.b16 %v205
      %v939 = vunpack.c.l.b16 %v206
      %v940 = vunpack.c.l.b16 %v208
      %v941 = vunpack.c.l.b16 %v209
      %v942 = vunpack.c.l.b16 %v211
      %v943 = vunpack.c.l.b16 %v212
      %v944 = vunpack.c.l.b16 %v214
      %v945 = vunpack.c.l.b16 %v215
      %v946 = vunpack.c.l.b16 %v217
      %v947 = vunpack.c.l.b16 %v218
      %v948 = vpack.c.b16 %v917, %v916
      %v949 = vpack.c.b16 %v919, %v918
      %v950 = vpack.c.b16 %v921, %v920
      %v951 = vpack.c.b16 %v923, %v922
      %v952 = vpack.c.b16 %v925, %v924
      %v953 = vpack.c.b16 %v927, %v926
      %v954 = vpack.c.b16 %v929, %v928
      %v955 = vpack.c.b16 %v931, %v930
      %v956 = vpack.c.b16 %v933, %v932
      %v957 = vpack.c.b16 %v935, %v934
      %v958 = vpack.c.b16 %v937, %v936
      %v959 = vpack.c.b16 %v939, %v938
      %v960 = vpack.c.b16 %v941, %v940
      %v961 = vpack.c.b16 %v943, %v942
      %v962 = vpack.c.b16 %v945, %v944
      %v963 = vpack.c.b16 %v947, %v946
      %v965 = vsel %vm670, %v948, 0
      %v968 = vsel %vm670, %v949, 0
      %v971 = vsel %vm670, %v950, 0
      %v974 = vsel %vm670, %v951, 0
      %v977 = vsel %vm670, %v952, 0
      %v980 = vsel %vm670, %v953, 0
      %v983 = vsel %vm670, %v954, 0
      %v986 = vsel %vm670, %v955, 0
      %v989 = vsel %vm670, %v956, 0
      %v992 = vsel %vm670, %v957, 0
      %v995 = vsel %vm670, %v958, 0
      %v998 = vsel %vm670, %v959, 0
      %v1001 = vsel %vm670, %v960, 0
      %v1004 = vsel %vm670, %v961, 0
      %v1007 = vsel %vm670, %v962, 0
      %v1010 = vsel %vm670, %v963, 0
      %v1013 = vsel %vm719, %v232, 0
      %1015 = vmatprep.subr.bf16.mxu0 0
      %1016 = vmatpush1.bf16.msra.mxu0 0
      %1017 = vmatprep.subr.bf16.mxu0 0
      %1018 = vmatpush1.bf16.msra.mxu0 0
      %1019 = vmatprep.subr.bf16.mxu0 0
      %1020 = vmatpush1.bf16.msra.mxu0 0
      %1021 = vmatprep.subr.bf16.mxu0 0
      %1022 = vmatpush1.bf16.msra.mxu0 0
      %1023 = vmatprep.subr.bf16.mxu0 0
      %1024 = vmatpush1.bf16.msra.mxu0 0
      %1025 = vmatprep.subr.bf16.mxu0 0
      %1026 = vmatpush1.bf16.msra.mxu0 0
      %1027 = vmatprep.subr.bf16.mxu0 0
      %1028 = vmatpush1.bf16.msra.mxu0 0
      %1029 = vmatprep.subr.bf16.mxu0 0
      %1030 = vmatpush1.bf16.msra.mxu0 %v1013
      %1031 = vmatprep.subr.bf16.mxu0 0
      %1032 = vmatpush2.bf16.msra.mxu0 0
      %1033 = vmatprep.subr.bf16.mxu0 0
      %1034 = vmatpush2.bf16.msra.mxu0 0
      %1035 = vmatprep.subr.bf16.mxu0 0
      %1036 = vmatpush2.bf16.msra.mxu0 0
      %1037 = vmatprep.subr.bf16.mxu0 0
      %1038 = vmatpush2.bf16.msra.mxu0 0
      %1039 = vmatprep.subr.bf16.mxu0 0
      %1040 = vmatpush2.bf16.msra.mxu0 0
      %1041 = vmatprep.subr.bf16.mxu0 0
      %1042 = vmatpush2.bf16.msra.mxu0 0
      %1043 = vmatprep.subr.bf16.mxu0 0
      %1044 = vmatpush2.bf16.msra.mxu0 0
      %1045 = vmatprep.subr.bf16.mxu0 0
      %1046 = vmatpush2.bf16.msra.mxu0 0
      %1047 = vmatprep.mubr.bf16.mxu0 0
      %1048 = vmatmul.mubr.bf16.gmra.mxu0 %v965
      %v1049 = vpop.f32.mrf.mxu0
      %v1050 = vadd.f32 %v758, %v1049
      %v1051 = vpop.f32.mrf.mxu0
      %v1052 = vpop.f32.mrf.mxu0
      %v1053 = vadd.f32 %v761, %v1052
      %v1054 = vpop.f32.mrf.mxu0
      %1055 = vmatprep.mubr.bf16.mxu0 0
      %1056 = vmatmul.mubr.bf16.gmra.mxu0 %v968
      %v1057 = vpop.f32.mrf.mxu0
      %v1058 = vadd.f32 %v766, %v1057
      %v1059 = vpop.f32.mrf.mxu0
      %v1060 = vpop.f32.mrf.mxu0
      %v1061 = vadd.f32 %v769, %v1060
      %v1062 = vpop.f32.mrf.mxu0
      %1063 = vmatprep.mubr.bf16.mxu0 0
      %1064 = vmatmul.mubr.bf16.gmra.mxu0 %v971
      %v1065 = vpop.f32.mrf.mxu0
      %v1066 = vadd.f32 %v774, %v1065
      %v1067 = vpop.f32.mrf.mxu0
      %v1068 = vpop.f32.mrf.mxu0
      %v1069 = vadd.f32 %v777, %v1068
      %v1070 = vpop.f32.mrf.mxu0
      %1071 = vmatprep.mubr.bf16.mxu0 0
      %1072 = vmatmul.mubr.bf16.gmra.mxu0 %v974
      %v1073 = vpop.f32.mrf.mxu0
      %v1074 = vadd.f32 %v782, %v1073
      %v1075 = vpop.f32.mrf.mxu0
      %v1076 = vpop.f32.mrf.mxu0
      %v1077 = vadd.f32 %v785, %v1076
      %v1078 = vpop.f32.mrf.mxu0
      %1079 = vmatprep.mubr.bf16.mxu0 0
      %1080 = vmatmul.mubr.bf16.gmra.mxu0 %v977
      %v1081 = vpop.f32.mrf.mxu0
      %v1082 = vadd.f32 %v790, %v1081
      %v1083 = vpop.f32.mrf.mxu0
      %v1084 = vpop.f32.mrf.mxu0
      %v1085 = vadd.f32 %v793, %v1084
      %v1086 = vpop.f32.mrf.mxu0
      %1087 = vmatprep.mubr.bf16.mxu0 0
      %1088 = vmatmul.mubr.bf16.gmra.mxu0 %v980
      %v1089 = vpop.f32.mrf.mxu0
      %v1090 = vadd.f32 %v798, %v1089
      %v1091 = vpop.f32.mrf.mxu0
      %v1092 = vpop.f32.mrf.mxu0
      %v1093 = vadd.f32 %v801, %v1092
      %v1094 = vpop.f32.mrf.mxu0
      %1095 = vmatprep.mubr.bf16.mxu0 0
      %1096 = vmatmul.mubr.bf16.gmra.mxu0 %v983
      %v1097 = vpop.f32.mrf.mxu0
      %v1098 = vadd.f32 %v806, %v1097
      %v1099 = vpop.f32.mrf.mxu0
      %v1100 = vpop.f32.mrf.mxu0
      %v1101 = vadd.f32 %v809, %v1100
      %v1102 = vpop.f32.mrf.mxu0
      %1103 = vmatprep.mubr.bf16.mxu0 0
      %1104 = vmatmul.mubr.bf16.gmra.mxu0 %v986
      %v1105 = vpop.f32.mrf.mxu0
      %v1106 = vadd.f32 %v814, %v1105
      %v1107 = vpop.f32.mrf.mxu0
      %v1108 = vpop.f32.mrf.mxu0
      %v1109 = vadd.f32 %v817, %v1108
      %v1110 = vpop.f32.mrf.mxu0
      %1111 = vmatprep.mubr.bf16.mxu0 0
      %1112 = vmatmul.mubr.bf16.gmra.mxu0 %v989
      %v1113 = vpop.f32.mrf.mxu0
      %v1114 = vadd.f32 %v822, %v1113
      %v1115 = vpop.f32.mrf.mxu0
      %v1116 = vpop.f32.mrf.mxu0
      %v1117 = vadd.f32 %v825, %v1116
      %v1118 = vpop.f32.mrf.mxu0
      %1119 = vmatprep.mubr.bf16.mxu0 0
      %1120 = vmatmul.mubr.bf16.gmra.mxu0 %v992
      %v1121 = vpop.f32.mrf.mxu0
      %v1122 = vadd.f32 %v830, %v1121
      %v1123 = vpop.f32.mrf.mxu0
      %v1124 = vpop.f32.mrf.mxu0
      %v1125 = vadd.f32 %v833, %v1124
      %v1126 = vpop.f32.mrf.mxu0
      %1127 = vmatprep.mubr.bf16.mxu0 0
      %1128 = vmatmul.mubr.bf16.gmra.mxu0 %v995
      %v1129 = vpop.f32.mrf.mxu0
      %v1130 = vadd.f32 %v838, %v1129
      %v1131 = vpop.f32.mrf.mxu0
      %v1132 = vpop.f32.mrf.mxu0
      %v1133 = vadd.f32 %v841, %v1132
      %v1134 = vpop.f32.mrf.mxu0
      %1135 = vmatprep.mubr.bf16.mxu0 0
      %1136 = vmatmul.mubr.bf16.gmra.mxu0 %v998
      %v1137 = vpop.f32.mrf.mxu0
      %v1138 = vadd.f32 %v846, %v1137
      %v1139 = vpop.f32.mrf.mxu0
      %v1140 = vpop.f32.mrf.mxu0
      %v1141 = vadd.f32 %v849, %v1140
      %v1142 = vpop.f32.mrf.mxu0
      %1143 = vmatprep.mubr.bf16.mxu0 0
      %1144 = vmatmul.mubr.bf16.gmra.mxu0 %v1001
      %v1145 = vpop.f32.mrf.mxu0
      %v1146 = vadd.f32 %v854, %v1145
      %v1147 = vpop.f32.mrf.mxu0
      %v1148 = vpop.f32.mrf.mxu0
      %v1149 = vadd.f32 %v857, %v1148
      %v1150 = vpop.f32.mrf.mxu0
      %1151 = vmatprep.mubr.bf16.mxu0 0
      %1152 = vmatmul.mubr.bf16.gmra.mxu0 %v1004
      %v1153 = vpop.f32.mrf.mxu0
      %v1154 = vadd.f32 %v862, %v1153
      %v1155 = vpop.f32.mrf.mxu0
      %v1156 = vpop.f32.mrf.mxu0
      %v1157 = vadd.f32 %v865, %v1156
      %v1158 = vpop.f32.mrf.mxu0
      %1159 = vmatprep.mubr.bf16.mxu0 0
      %1160 = vmatmul.mubr.bf16.gmra.mxu0 %v1007
      %v1161 = vpop.f32.mrf.mxu0
      %v1162 = vadd.f32 %v870, %v1161
      %v1163 = vpop.f32.mrf.mxu0
      %v1164 = vpop.f32.mrf.mxu0
      %v1165 = vadd.f32 %v873, %v1164
      %v1166 = vpop.f32.mrf.mxu0
      %1167 = vmatprep.mubr.bf16.mxu0 0
      %1168 = vmatmul.mubr.bf16.gmra.mxu0 %v1010
      %v1169 = vpop.f32.mrf.mxu0
      %v1170 = vadd.f32 %v878, %v1169
      %v1171 = vpop.f32.mrf.mxu0
      %v1172 = vpop.f32.mrf.mxu0
      %v1173 = vadd.f32 %v881, %v1172
      %v1174 = vpop.f32.mrf.mxu0
      %1175 = vdwg.mxu0
      %vm1192 = vcmask 1042432
      %vm1193 = vcmask 1046532
      %vm1194 = vmor %vm1192, %vm1193
      %v1195 = vrot.slane %v172, 5
      %v1196 = vrot.slane %v1195, 4
      %v1197 = vrot.slane %v173, 5
      %v1198 = vsel %vm1194, %v1196, %v1197
      %v1199 = vrot.slane %v1197, 4
      %v1200 = vrot.slane %v174, 5
      %v1201 = vsel %vm1194, %v1199, %v1200
      %v1202 = vrot.slane %v175, 5
      %v1203 = vrot.slane %v1202, 4
      %v1204 = vrot.slane %v176, 5
      %v1205 = vsel %vm1194, %v1203, %v1204
      %v1206 = vrot.slane %v1204, 4
      %v1207 = vrot.slane %v177, 5
      %v1208 = vsel %vm1194, %v1206, %v1207
      %v1209 = vrot.slane %v178, 5
      %v1210 = vrot.slane %v1209, 4
      %v1211 = vrot.slane %v179, 5
      %v1212 = vsel %vm1194, %v1210, %v1211
      %v1213 = vrot.slane %v1211, 4
      %v1214 = vrot.slane %v180, 5
      %v1215 = vsel %vm1194, %v1213, %v1214
      %v1216 = vrot.slane %v181, 5
      %v1217 = vrot.slane %v1216, 4
      %v1218 = vrot.slane %v182, 5
      %v1219 = vsel %vm1194, %v1217, %v1218
      %v1220 = vrot.slane %v1218, 4
      %v1221 = vrot.slane %v183, 5
      %v1222 = vsel %vm1194, %v1220, %v1221
      %v1223 = vrot.slane %v184, 5
      %v1224 = vrot.slane %v1223, 4
      %v1225 = vrot.slane %v185, 5
      %v1226 = vsel %vm1194, %v1224, %v1225
      %v1227 = vrot.slane %v1225, 4
      %v1228 = vrot.slane %v186, 5
      %v1229 = vsel %vm1194, %v1227, %v1228
      %v1230 = vrot.slane %v187, 5
      %v1231 = vrot.slane %v1230, 4
      %v1232 = vrot.slane %v188, 5
      %v1233 = vsel %vm1194, %v1231, %v1232
      %v1234 = vrot.slane %v1232, 4
      %v1235 = vrot.slane %v189, 5
      %v1236 = vsel %vm1194, %v1234, %v1235
      %v1237 = vrot.slane %v190, 5
      %v1238 = vrot.slane %v1237, 4
      %v1239 = vrot.slane %v191, 5
      %v1240 = vsel %vm1194, %v1238, %v1239
      %v1241 = vrot.slane %v1239, 4
      %v1242 = vrot.slane %v192, 5
      %v1243 = vsel %vm1194, %v1241, %v1242
      %v1244 = vrot.slane %v193, 5
      %v1245 = vrot.slane %v1244, 4
      %v1246 = vrot.slane %v194, 5
      %v1247 = vsel %vm1194, %v1245, %v1246
      %v1248 = vrot.slane %v1246, 4
      %v1249 = vrot.slane %v195, 5
      %v1250 = vsel %vm1194, %v1248, %v1249
      %v1251 = vrot.slane %v196, 5
      %v1252 = vrot.slane %v1251, 4
      %v1253 = vrot.slane %v197, 5
      %v1254 = vsel %vm1194, %v1252, %v1253
      %v1255 = vrot.slane %v1253, 4
      %v1256 = vrot.slane %v198, 5
      %v1257 = vsel %vm1194, %v1255, %v1256
      %v1258 = vrot.slane %v199, 5
      %v1259 = vrot.slane %v1258, 4
      %v1260 = vrot.slane %v200, 5
      %v1261 = vsel %vm1194, %v1259, %v1260
      %v1262 = vrot.slane %v1260, 4
      %v1263 = vrot.slane %v201, 5
      %v1264 = vsel %vm1194, %v1262, %v1263
      %v1265 = vrot.slane %v202, 5
      %v1266 = vrot.slane %v1265, 4
      %v1267 = vrot.slane %v203, 5
      %v1268 = vsel %vm1194, %v1266, %v1267
      %v1269 = vrot.slane %v1267, 4
      %v1270 = vrot.slane %v204, 5
      %v1271 = vsel %vm1194, %v1269, %v1270
      %v1272 = vrot.slane %v205, 5
      %v1273 = vrot.slane %v1272, 4
      %v1274 = vrot.slane %v206, 5
      %v1275 = vsel %vm1194, %v1273, %v1274
      %v1276 = vrot.slane %v1274, 4
      %v1277 = vrot.slane %v207, 5
      %v1278 = vsel %vm1194, %v1276, %v1277
      %v1279 = vrot.slane %v208, 5
      %v1280 = vrot.slane %v1279, 4
      %v1281 = vrot.slane %v209, 5
      %v1282 = vsel %vm1194, %v1280, %v1281
      %v1283 = vrot.slane %v1281, 4
      %v1284 = vrot.slane %v210, 5
      %v1285 = vsel %vm1194, %v1283, %v1284
      %v1286 = vrot.slane %v211, 5
      %v1287 = vrot.slane %v1286, 4
      %v1288 = vrot.slane %v212, 5
      %v1289 = vsel %vm1194, %v1287, %v1288
      %v1290 = vrot.slane %v1288, 4
      %v1291 = vrot.slane %v213, 5
      %v1292 = vsel %vm1194, %v1290, %v1291
      %v1293 = vrot.slane %v214, 5
      %v1294 = vrot.slane %v1293, 4
      %v1295 = vrot.slane %v215, 5
      %v1296 = vsel %vm1194, %v1294, %v1295
      %v1297 = vrot.slane %v1295, 4
      %v1298 = vrot.slane %v216, 5
      %v1299 = vsel %vm1194, %v1297, %v1298
      %v1300 = vrot.slane %v217, 5
      %v1301 = vrot.slane %v1300, 4
      %v1302 = vrot.slane %v218, 5
      %v1303 = vsel %vm1194, %v1301, %v1302
      %v1304 = vrot.slane %v1302, 4
      %v1305 = vrot.slane %v219, 5
      %v1306 = vsel %vm1194, %v1304, %v1305
      %s1307 = scalar_lea.vmem %s1, 4
      %v1308 = vld [vmem:[%s1307] sm:$0x3]
      %v1309 = vunpack.c.l.b16 %v1198
      %v1310 = vunpack.c.l.b16 %v1201
      %v1311 = vunpack.c.l.b16 %v1205
      %v1312 = vunpack.c.l.b16 %v1208
      %v1313 = vunpack.c.l.b16 %v1212
      %v1314 = vunpack.c.l.b16 %v1215
      %v1315 = vunpack.c.l.b16 %v1219
      %v1316 = vunpack.c.l.b16 %v1222
      %v1317 = vunpack.c.l.b16 %v1226
      %v1318 = vunpack.c.l.b16 %v1229
      %v1319 = vunpack.c.l.b16 %v1233
      %v1320 = vunpack.c.l.b16 %v1236
      %v1321 = vunpack.c.l.b16 %v1240
      %v1322 = vunpack.c.l.b16 %v1243
      %v1323 = vunpack.c.l.b16 %v1247
      %v1324 = vunpack.c.l.b16 %v1250
      %v1325 = vunpack.c.l.b16 %v1254
      %v1326 = vunpack.c.l.b16 %v1257
      %v1327 = vunpack.c.l.b16 %v1261
      %v1328 = vunpack.c.l.b16 %v1264
      %v1329 = vunpack.c.l.b16 %v1268
      %v1330 = vunpack.c.l.b16 %v1271
      %v1331 = vunpack.c.l.b16 %v1275
      %v1332 = vunpack.c.l.b16 %v1278
      %v1333 = vunpack.c.l.b16 %v1282
      %v1334 = vunpack.c.l.b16 %v1285
      %v1335 = vunpack.c.l.b16 %v1289
      %v1336 = vunpack.c.l.b16 %v1292
      %v1337 = vunpack.c.l.b16 %v1296
      %v1338 = vunpack.c.l.b16 %v1299
      %v1339 = vunpack.c.l.b16 %v1303
      %v1340 = vunpack.c.l.b16 %v1306
      %v1341 = vpack.c.b16 %v1310, %v1309
      %v1342 = vpack.c.b16 %v1312, %v1311
      %v1343 = vpack.c.b16 %v1314, %v1313
      %v1344 = vpack.c.b16 %v1316, %v1315
      %v1345 = vpack.c.b16 %v1318, %v1317
      %v1346 = vpack.c.b16 %v1320, %v1319
      %v1347 = vpack.c.b16 %v1322, %v1321
      %v1348 = vpack.c.b16 %v1324, %v1323
      %v1349 = vpack.c.b16 %v1326, %v1325
      %v1350 = vpack.c.b16 %v1328, %v1327
      %v1351 = vpack.c.b16 %v1330, %v1329
      %v1352 = vpack.c.b16 %v1332, %v1331
      %v1353 = vpack.c.b16 %v1334, %v1333
      %v1354 = vpack.c.b16 %v1336, %v1335
      %v1355 = vpack.c.b16 %v1338, %v1337
      %v1356 = vpack.c.b16 %v1340, %v1339
      %v1358 = vsel %vm670, %v1341, 0
      %v1361 = vsel %vm670, %v1342, 0
      %v1364 = vsel %vm670, %v1343, 0
      %v1367 = vsel %vm670, %v1344, 0
      %v1370 = vsel %vm670, %v1345, 0
      %v1373 = vsel %vm670, %v1346, 0
      %v1376 = vsel %vm670, %v1347, 0
      %v1379 = vsel %vm670, %v1348, 0
      %v1382 = vsel %vm670, %v1349, 0
      %v1385 = vsel %vm670, %v1350, 0
      %v1388 = vsel %vm670, %v1351, 0
      %v1391 = vsel %vm670, %v1352, 0
      %v1394 = vsel %vm670, %v1353, 0
      %v1397 = vsel %vm670, %v1354, 0
      %v1400 = vsel %vm670, %v1355, 0
      %v1403 = vsel %vm670, %v1356, 0
      %v1406 = vsel %vm719, %v1308, 0
      %1408 = vmatprep.subr.bf16.mxu0 0
      %1409 = vmatpush1.bf16.msra.mxu0 0
      %1410 = vmatprep.subr.bf16.mxu0 0
      %1411 = vmatpush1.bf16.msra.mxu0 0
      %1412 = vmatprep.subr.bf16.mxu0 0
      %1413 = vmatpush1.bf16.msra.mxu0 0
      %1414 = vmatprep.subr.bf16.mxu0 0
      %1415 = vmatpush1.bf16.msra.mxu0 0
      %1416 = vmatprep.subr.bf16.mxu0 0
      %1417 = vmatpush1.bf16.msra.mxu0 0
      %1418 = vmatprep.subr.bf16.mxu0 0
      %1419 = vmatpush1.bf16.msra.mxu0 0
      %1420 = vmatprep.subr.bf16.mxu0 0
      %1421 = vmatpush1.bf16.msra.mxu0 0
      %1422 = vmatprep.subr.bf16.mxu0 0
      %1423 = vmatpush1.bf16.msra.mxu0 %v1406
      %1424 = vmatprep.subr.bf16.mxu0 0
      %1425 = vmatpush2.bf16.msra.mxu0 0
      %1426 = vmatprep.subr.bf16.mxu0 0
      %1427 = vmatpush2.bf16.msra.mxu0 0
      %1428 = vmatprep.subr.bf16.mxu0 0
      %1429 = vmatpush2.bf16.msra.mxu0 0
      %1430 = vmatprep.subr.bf16.mxu0 0
      %1431 = vmatpush2.bf16.msra.mxu0 0
      %1432 = vmatprep.subr.bf16.mxu0 0
      %1433 = vmatpush2.bf16.msra.mxu0 0
      %1434 = vmatprep.subr.bf16.mxu0 0
      %1435 = vmatpush2.bf16.msra.mxu0 0
      %1436 = vmatprep.subr.bf16.mxu0 0
      %1437 = vmatpush2.bf16.msra.mxu0 0
      %1438 = vmatprep.subr.bf16.mxu0 0
      %1439 = vmatpush2.bf16.msra.mxu0 0
      %1440 = vmatprep.mubr.bf16.mxu0 0
      %1441 = vmatmul.mubr.bf16.gmra.mxu0 %v1358
      %v1442 = vpop.f32.mrf.mxu0
      %v1443 = vadd.f32 0.0, %v1442
      %v1444 = vpop.f32.mrf.mxu0
      %v1445 = vpop.f32.mrf.mxu0
      %v1446 = vadd.f32 0.0, %v1445
      %v1447 = vpop.f32.mrf.mxu0
      %1448 = vmatprep.mubr.bf16.mxu0 0
      %1449 = vmatmul.mubr.bf16.gmra.mxu0 %v1361
      %v1450 = vpop.f32.mrf.mxu0
      %v1451 = vadd.f32 0.0, %v1450
      %v1452 = vpop.f32.mrf.mxu0
      %v1453 = vpop.f32.mrf.mxu0
      %v1454 = vadd.f32 0.0, %v1453
      %v1455 = vpop.f32.mrf.mxu0
      %1456 = vmatprep.mubr.bf16.mxu0 0
      %1457 = vmatmul.mubr.bf16.gmra.mxu0 %v1364
      %v1458 = vpop.f32.mrf.mxu0
      %v1459 = vadd.f32 0.0, %v1458
      %v1460 = vpop.f32.mrf.mxu0
      %v1461 = vpop.f32.mrf.mxu0
      %v1462 = vadd.f32 0.0, %v1461
      %v1463 = vpop.f32.mrf.mxu0
      %1464 = vmatprep.mubr.bf16.mxu0 0
      %1465 = vmatmul.mubr.bf16.gmra.mxu0 %v1367
      %v1466 = vpop.f32.mrf.mxu0
      %v1467 = vadd.f32 0.0, %v1466
      %v1468 = vpop.f32.mrf.mxu0
      %v1469 = vpop.f32.mrf.mxu0
      %v1470 = vadd.f32 0.0, %v1469
      %v1471 = vpop.f32.mrf.mxu0
      %1472 = vmatprep.mubr.bf16.mxu0 0
      %1473 = vmatmul.mubr.bf16.gmra.mxu0 %v1370
      %v1474 = vpop.f32.mrf.mxu0
      %v1475 = vadd.f32 0.0, %v1474
      %v1476 = vpop.f32.mrf.mxu0
      %v1477 = vpop.f32.mrf.mxu0
      %v1478 = vadd.f32 0.0, %v1477
      %v1479 = vpop.f32.mrf.mxu0
      %1480 = vmatprep.mubr.bf16.mxu0 0
      %1481 = vmatmul.mubr.bf16.gmra.mxu0 %v1373
      %v1482 = vpop.f32.mrf.mxu0
      %v1483 = vadd.f32 0.0, %v1482
      %v1484 = vpop.f32.mrf.mxu0
      %v1485 = vpop.f32.mrf.mxu0
      %v1486 = vadd.f32 0.0, %v1485
      %v1487 = vpop.f32.mrf.mxu0
      %1488 = vmatprep.mubr.bf16.mxu0 0
      %1489 = vmatmul.mubr.bf16.gmra.mxu0 %v1376
      %v1490 = vpop.f32.mrf.mxu0
      %v1491 = vadd.f32 0.0, %v1490
      %v1492 = vpop.f32.mrf.mxu0
      %v1493 = vpop.f32.mrf.mxu0
      %v1494 = vadd.f32 0.0, %v1493
      %v1495 = vpop.f32.mrf.mxu0
      %1496 = vmatprep.mubr.bf16.mxu0 0
      %1497 = vmatmul.mubr.bf16.gmra.mxu0 %v1379
      %v1498 = vpop.f32.mrf.mxu0
      %v1499 = vadd.f32 0.0, %v1498
      %v1500 = vpop.f32.mrf.mxu0
      %v1501 = vpop.f32.mrf.mxu0
      %v1502 = vadd.f32 0.0, %v1501
      %v1503 = vpop.f32.mrf.mxu0
      %1504 = vmatprep.mubr.bf16.mxu0 0
      %1505 = vmatmul.mubr.bf16.gmra.mxu0 %v1382
      %v1506 = vpop.f32.mrf.mxu0
      %v1507 = vadd.f32 0.0, %v1506
      %v1508 = vpop.f32.mrf.mxu0
      %v1509 = vpop.f32.mrf.mxu0
      %v1510 = vadd.f32 0.0, %v1509
      %v1511 = vpop.f32.mrf.mxu0
      %1512 = vmatprep.mubr.bf16.mxu0 0
      %1513 = vmatmul.mubr.bf16.gmra.mxu0 %v1385
      %v1514 = vpop.f32.mrf.mxu0
      %v1515 = vadd.f32 0.0, %v1514
      %v1516 = vpop.f32.mrf.mxu0
      %v1517 = vpop.f32.mrf.mxu0
      %v1518 = vadd.f32 0.0, %v1517
      %v1519 = vpop.f32.mrf.mxu0
      %1520 = vmatprep.mubr.bf16.mxu0 0
      %1521 = vmatmul.mubr.bf16.gmra.mxu0 %v1388
      %v1522 = vpop.f32.mrf.mxu0
      %v1523 = vadd.f32 0.0, %v1522
      %v1524 = vpop.f32.mrf.mxu0
      %v1525 = vpop.f32.mrf.mxu0
      %v1526 = vadd.f32 0.0, %v1525
      %v1527 = vpop.f32.mrf.mxu0
      %1528 = vmatprep.mubr.bf16.mxu0 0
      %1529 = vmatmul.mubr.bf16.gmra.mxu0 %v1391
      %v1530 = vpop.f32.mrf.mxu0
      %v1531 = vadd.f32 0.0, %v1530
      %v1532 = vpop.f32.mrf.mxu0
      %v1533 = vpop.f32.mrf.mxu0
      %v1534 = vadd.f32 0.0, %v1533
      %v1535 = vpop.f32.mrf.mxu0
      %1536 = vmatprep.mubr.bf16.mxu0 0
      %1537 = vmatmul.mubr.bf16.gmra.mxu0 %v1394
      %v1538 = vpop.f32.mrf.mxu0
      %v1539 = vadd.f32 0.0, %v1538
      %v1540 = vpop.f32.mrf.mxu0
      %v1541 = vpop.f32.mrf.mxu0
      %v1542 = vadd.f32 0.0, %v1541
      %v1543 = vpop.f32.mrf.mxu0
      %1544 = vmatprep.mubr.bf16.mxu0 0
      %1545 = vmatmul.mubr.bf16.gmra.mxu0 %v1397
      %v1546 = vpop.f32.mrf.mxu0
      %v1547 = vadd.f32 0.0, %v1546
      %v1548 = vpop.f32.mrf.mxu0
      %v1549 = vpop.f32.mrf.mxu0
      %v1550 = vadd.f32 0.0, %v1549
      %v1551 = vpop.f32.mrf.mxu0
      %1552 = vmatprep.mubr.bf16.mxu0 0
      %1553 = vmatmul.mubr.bf16.gmra.mxu0 %v1400
      %v1554 = vpop.f32.mrf.mxu0
      %v1555 = vadd.f32 0.0, %v1554
      %v1556 = vpop.f32.mrf.mxu0
      %v1557 = vpop.f32.mrf.mxu0
      %v1558 = vadd.f32 0.0, %v1557
      %v1559 = vpop.f32.mrf.mxu0
      %1560 = vmatprep.mubr.bf16.mxu0 0
      %1561 = vmatmul.mubr.bf16.gmra.mxu0 %v1403
      %v1562 = vpop.f32.mrf.mxu0
      %v1563 = vadd.f32 0.0, %v1562
      %v1564 = vpop.f32.mrf.mxu0
      %v1565 = vpop.f32.mrf.mxu0
      %v1566 = vadd.f32 0.0, %v1565
      %v1567 = vpop.f32.mrf.mxu0
      %1568 = vdwg.mxu0
      %v1569 = vadd.f32 %v1050, %v1443
      %v1570 = vadd.f32 %v1053, %v1446
      %v1571 = vadd.f32 %v1058, %v1451
      %v1572 = vadd.f32 %v1061, %v1454
      %v1573 = vadd.f32 %v1066, %v1459
      %v1574 = vadd.f32 %v1069, %v1462
      %v1575 = vadd.f32 %v1074, %v1467
      %v1576 = vadd.f32 %v1077, %v1470
      %v1577 = vadd.f32 %v1082, %v1475
      %v1578 = vadd.f32 %v1085, %v1478
      %v1579 = vadd.f32 %v1090, %v1483
      %v1580 = vadd.f32 %v1093, %v1486
      %v1581 = vadd.f32 %v1098, %v1491
      %v1582 = vadd.f32 %v1101, %v1494
      %v1583 = vadd.f32 %v1106, %v1499
      %v1584 = vadd.f32 %v1109, %v1502
      %v1585 = vadd.f32 %v1114, %v1507
      %v1586 = vadd.f32 %v1117, %v1510
      %v1587 = vadd.f32 %v1122, %v1515
      %v1588 = vadd.f32 %v1125, %v1518
      %v1589 = vadd.f32 %v1130, %v1523
      %v1590 = vadd.f32 %v1133, %v1526
      %v1591 = vadd.f32 %v1138, %v1531
      %v1592 = vadd.f32 %v1141, %v1534
      %v1593 = vadd.f32 %v1146, %v1539
      %v1594 = vadd.f32 %v1149, %v1542
      %v1595 = vadd.f32 %v1154, %v1547
      %v1596 = vadd.f32 %v1157, %v1550
      %v1597 = vadd.f32 %v1162, %v1555
      %v1598 = vadd.f32 %v1165, %v1558
      %v1599 = vadd.f32 %v1170, %v1563
      %v1600 = vadd.f32 %v1173, %v1566
      %vm1601 = vsmask.f32 2304
      %vm1602 = vsmask.f32 6416
      %vm1603 = vmor %vm1601, %vm1602
      %v1604 = vrot.slane %v237, 5
      %v1605 = vrot.slane %v240, 6
      %v1606 = vor.u32 %v1604, %v1605
      %v1607 = vrot.slane %v1606, 4
      %v1608 = vrot.slane %v250, 5
      %v1609 = vrot.slane %v246, 6
      %v1610 = vor.u32 %v1608, %v1609
      %v1611 = vsel %vm1603, %v1607, %v1610
      %v1612 = vrot.slane %v1610, 4
      %v1613 = vshrl.u32 %v174, 16
      %v1615 = vrot.slane %v1613, 5
      %v1616 = vrot.slane %v256, 6
      %v1617 = vor.u32 %v1615, %v1616
      %v1618 = vsel %vm1603, %v1612, %v1617
      %v1619 = vrot.slane %v261, 5
      %v1620 = vrot.slane %v264, 6
      %v1621 = vor.u32 %v1619, %v1620
      %v1622 = vrot.slane %v1621, 4
      %v1623 = vrot.slane %v274, 5
      %v1624 = vrot.slane %v270, 6
      %v1625 = vor.u32 %v1623, %v1624
      %v1626 = vsel %vm1603, %v1622, %v1625
      %v1627 = vrot.slane %v1625, 4
      %v1628 = vshrl.u32 %v177, 16
      %v1630 = vrot.slane %v1628, 5
      %v1631 = vrot.slane %v280, 6
      %v1632 = vor.u32 %v1630, %v1631
      %v1633 = vsel %vm1603, %v1627, %v1632
      %v1634 = vrot.slane %v285, 5
      %v1635 = vrot.slane %v288, 6
      %v1636 = vor.u32 %v1634, %v1635
      %v1637 = vrot.slane %v1636, 4
      %v1638 = vrot.slane %v298, 5
      %v1639 = vrot.slane %v294, 6
      %v1640 = vor.u32 %v1638, %v1639
      %v1641 = vsel %vm1603, %v1637, %v1640
      %v1642 = vrot.slane %v1640, 4
      %v1643 = vshrl.u32 %v180, 16
      %v1645 = vrot.slane %v1643, 5
      %v1646 = vrot.slane %v304, 6
      %v1647 = vor.u32 %v1645, %v1646
      %v1648 = vsel %vm1603, %v1642, %v1647
      %v1649 = vrot.slane %v309, 5
      %v1650 = vrot.slane %v312, 6
      %v1651 = vor.u32 %v1649, %v1650
      %v1652 = vrot.slane %v1651, 4
      %v1653 = vrot.slane %v322, 5
      %v1654 = vrot.slane %v318, 6
      %v1655 = vor.u32 %v1653, %v1654
      %v1656 = vsel %vm1603, %v1652, %v1655
      %v1657 = vrot.slane %v1655, 4
      %v1658 = vshrl.u32 %v183, 16
      %v1660 = vrot.slane %v1658, 5
      %v1661 = vrot.slane %v328, 6
      %v1662 = vor.u32 %v1660, %v1661
      %v1663 = vsel %vm1603, %v1657, %v1662
      %v1664 = vrot.slane %v333, 5
      %v1665 = vrot.slane %v336, 6
      %v1666 = vor.u32 %v1664, %v1665
      %v1667 = vrot.slane %v1666, 4
      %v1668 = vrot.slane %v346, 5
      %v1669 = vrot.slane %v342, 6
      %v1670 = vor.u32 %v1668, %v1669
      %v1671 = vsel %vm1603, %v1667, %v1670
      %v1672 = vrot.slane %v1670, 4
      %v1673 = vshrl.u32 %v186, 16
      %v1675 = vrot.slane %v1673, 5
      %v1676 = vrot.slane %v352, 6
      %v1677 = vor.u32 %v1675, %v1676
      %v1678 = vsel %vm1603, %v1672, %v1677
      %v1679 = vrot.slane %v357, 5
      %v1680 = vrot.slane %v360, 6
      %v1681 = vor.u32 %v1679, %v1680
      %v1682 = vrot.slane %v1681, 4
      %v1683 = vrot.slane %v370, 5
      %v1684 = vrot.slane %v366, 6
      %v1685 = vor.u32 %v1683, %v1684
      %v1686 = vsel %vm1603, %v1682, %v1685
      %v1687 = vrot.slane %v1685, 4
      %v1688 = vshrl.u32 %v189, 16
      %v1690 = vrot.slane %v1688, 5
      %v1691 = vrot.slane %v376, 6
      %v1692 = vor.u32 %v1690, %v1691
      %v1693 = vsel %vm1603, %v1687, %v1692
      %v1694 = vrot.slane %v381, 5
      %v1695 = vrot.slane %v384, 6
      %v1696 = vor.u32 %v1694, %v1695
      %v1697 = vrot.slane %v1696, 4
      %v1698 = vrot.slane %v394, 5
      %v1699 = vrot.slane %v390, 6
      %v1700 = vor.u32 %v1698, %v1699
      %v1701 = vsel %vm1603, %v1697, %v1700
      %v1702 = vrot.slane %v1700, 4
      %v1703 = vshrl.u32 %v192, 16
      %v1705 = vrot.slane %v1703, 5
      %v1706 = vrot.slane %v400, 6
      %v1707 = vor.u32 %v1705, %v1706
      %v1708 = vsel %vm1603, %v1702, %v1707
      %v1709 = vrot.slane %v405, 5
      %v1710 = vrot.slane %v408, 6
      %v1711 = vor.u32 %v1709, %v1710
      %v1712 = vrot.slane %v1711, 4
      %v1713 = vrot.slane %v418, 5
      %v1714 = vrot.slane %v414, 6
      %v1715 = vor.u32 %v1713, %v1714
      %v1716 = vsel %vm1603, %v1712, %v1715
      %v1717 = vrot.slane %v1715, 4
      %v1718 = vshrl.u32 %v195, 16
      %v1720 = vrot.slane %v1718, 5
      %v1721 = vrot.slane %v424, 6
      %v1722 = vor.u32 %v1720, %v1721
      %v1723 = vsel %vm1603, %v1717, %v1722
      %v1724 = vrot.slane %v429, 5
      %v1725 = vrot.slane %v432, 6
      %v1726 = vor.u32 %v1724, %v1725
      %v1727 = vrot.slane %v1726, 4
      %v1728 = vrot.slane %v442, 5
      %v1729 = vrot.slane %v438, 6
      %v1730 = vor.u32 %v1728, %v1729
      %v1731 = vsel %vm1603, %v1727, %v1730
      %v1732 = vrot.slane %v1730, 4
      %v1733 = vshrl.u32 %v198, 16
      %v1735 = vrot.slane %v1733, 5
      %v1736 = vrot.slane %v448, 6
      %v1737 = vor.u32 %v1735, %v1736
      %v1738 = vsel %vm1603, %v1732, %v1737
      %v1739 = vrot.slane %v453, 5
      %v1740 = vrot.slane %v456, 6
      %v1741 = vor.u32 %v1739, %v1740
      %v1742 = vrot.slane %v1741, 4
      %v1743 = vrot.slane %v466, 5
      %v1744 = vrot.slane %v462, 6
      %v1745 = vor.u32 %v1743, %v1744
      %v1746 = vsel %vm1603, %v1742, %v1745
      %v1747 = vrot.slane %v1745, 4
      %v1748 = vshrl.u32 %v201, 16
      %v1750 = vrot.slane %v1748, 5
      %v1751 = vrot.slane %v472, 6
      %v1752 = vor.u32 %v1750, %v1751
      %v1753 = vsel %vm1603, %v1747, %v1752
      %v1754 = vrot.slane %v477, 5
      %v1755 = vrot.slane %v480, 6
      %v1756 = vor.u32 %v1754, %v1755
      %v1757 = vrot.slane %v1756, 4
      %v1758 = vrot.slane %v490, 5
      %v1759 = vrot.slane %v486, 6
      %v1760 = vor.u32 %v1758, %v1759
      %v1761 = vsel %vm1603, %v1757, %v1760
      %v1762 = vrot.slane %v1760, 4
      %v1763 = vshrl.u32 %v204, 16
      %v1765 = vrot.slane %v1763, 5
      %v1766 = vrot.slane %v496, 6
      %v1767 = vor.u32 %v1765, %v1766
      %v1768 = vsel %vm1603, %v1762, %v1767
      %v1769 = vrot.slane %v501, 5
      %v1770 = vrot.slane %v504, 6
      %v1771 = vor.u32 %v1769, %v1770
      %v1772 = vrot.slane %v1771, 4
      %v1773 = vrot.slane %v514, 5
      %v1774 = vrot.slane %v510, 6
      %v1775 = vor.u32 %v1773, %v1774
      %v1776 = vsel %vm1603, %v1772, %v1775
      %v1777 = vrot.slane %v1775, 4
      %v1778 = vshrl.u32 %v207, 16
      %v1780 = vrot.slane %v1778, 5
      %v1781 = vrot.slane %v520, 6
      %v1782 = vor.u32 %v1780, %v1781
      %v1783 = vsel %vm1603, %v1777, %v1782
      %v1784 = vrot.slane %v525, 5
      %v1785 = vrot.slane %v528, 6
      %v1786 = vor.u32 %v1784, %v1785
      %v1787 = vrot.slane %v1786, 4
      %v1788 = vrot.slane %v538, 5
      %v1789 = vrot.slane %v534, 6
      %v1790 = vor.u32 %v1788, %v1789
      %v1791 = vsel %vm1603, %v1787, %v1790
      %v1792 = vrot.slane %v1790, 4
      %v1793 = vshrl.u32 %v210, 16
      %v1795 = vrot.slane %v1793, 5
      %v1796 = vrot.slane %v544, 6
      %v1797 = vor.u32 %v1795, %v1796
      %v1798 = vsel %vm1603, %v1792, %v1797
      %v1799 = vrot.slane %v549, 5
      %v1800 = vrot.slane %v552, 6
      %v1801 = vor.u32 %v1799, %v1800
      %v1802 = vrot.slane %v1801, 4
      %v1803 = vrot.slane %v562, 5
      %v1804 = vrot.slane %v558, 6
      %v1805 = vor.u32 %v1803, %v1804
      %v1806 = vsel %vm1603, %v1802, %v1805
      %v1807 = vrot.slane %v1805, 4
      %v1808 = vshrl.u32 %v213, 16
      %v1810 = vrot.slane %v1808, 5
      %v1811 = vrot.slane %v568, 6
      %v1812 = vor.u32 %v1810, %v1811
      %v1813 = vsel %vm1603, %v1807, %v1812
      %v1814 = vrot.slane %v573, 5
      %v1815 = vrot.slane %v576, 6
      %v1816 = vor.u32 %v1814, %v1815
      %v1817 = vrot.slane %v1816, 4
      %v1818 = vrot.slane %v586, 5
      %v1819 = vrot.slane %v582, 6
      %v1820 = vor.u32 %v1818, %v1819
      %v1821 = vsel %vm1603, %v1817, %v1820
      %v1822 = vrot.slane %v1820, 4
      %v1823 = vshrl.u32 %v216, 16
      %v1825 = vrot.slane %v1823, 5
      %v1826 = vrot.slane %v592, 6
      %v1827 = vor.u32 %v1825, %v1826
      %v1828 = vsel %vm1603, %v1822, %v1827
      %v1829 = vrot.slane %v597, 5
      %v1830 = vrot.slane %v600, 6
      %v1831 = vor.u32 %v1829, %v1830
      %v1832 = vrot.slane %v1831, 4
      %v1833 = vrot.slane %v610, 5
      %v1834 = vrot.slane %v606, 6
      %v1835 = vor.u32 %v1833, %v1834
      %v1836 = vsel %vm1603, %v1832, %v1835
      %v1837 = vrot.slane %v1835, 4
      %v1838 = vshrl.u32 %v219, 16
      %v1840 = vrot.slane %v1838, 5
      %v1841 = vrot.slane %v616, 6
      %v1842 = vor.u32 %v1840, %v1841
      %v1843 = vsel %vm1603, %v1837, %v1842
      %s1844 = scalar_lea.vmem %s1, 6
      %v1845 = vld [vmem:[%s1844] sm:$0x3]
      %v1846 = vunpack.c.l.b16 %v1611
      %v1847 = vunpack.c.l.b16 %v1618
      %v1848 = vunpack.c.l.b16 %v1626
      %v1849 = vunpack.c.l.b16 %v1633
      %v1850 = vunpack.c.l.b16 %v1641
      %v1851 = vunpack.c.l.b16 %v1648
      %v1852 = vunpack.c.l.b16 %v1656
      %v1853 = vunpack.c.l.b16 %v1663
      %v1854 = vunpack.c.l.b16 %v1671
      %v1855 = vunpack.c.l.b16 %v1678
      %v1856 = vunpack.c.l.b16 %v1686
      %v1857 = vunpack.c.l.b16 %v1693
      %v1858 = vunpack.c.l.b16 %v1701
      %v1859 = vunpack.c.l.b16 %v1708
      %v1860 = vunpack.c.l.b16 %v1716
      %v1861 = vunpack.c.l.b16 %v1723
      %v1862 = vunpack.c.l.b16 %v1731
      %v1863 = vunpack.c.l.b16 %v1738
      %v1864 = vunpack.c.l.b16 %v1746
      %v1865 = vunpack.c.l.b16 %v1753
      %v1866 = vunpack.c.l.b16 %v1761
      %v1867 = vunpack.c.l.b16 %v1768
      %v1868 = vunpack.c.l.b16 %v1776
      %v1869 = vunpack.c.l.b16 %v1783
      %v1870 = vunpack.c.l.b16 %v1791
      %v1871 = vunpack.c.l.b16 %v1798
      %v1872 = vunpack.c.l.b16 %v1806
      %v1873 = vunpack.c.l.b16 %v1813
      %v1874 = vunpack.c.l.b16 %v1821
      %v1875 = vunpack.c.l.b16 %v1828
      %v1876 = vunpack.c.l.b16 %v1836
      %v1877 = vunpack.c.l.b16 %v1843
      %v1878 = vpack.c.b16 %v1847, %v1846
      %v1879 = vpack.c.b16 %v1849, %v1848
      %v1880 = vpack.c.b16 %v1851, %v1850
      %v1881 = vpack.c.b16 %v1853, %v1852
      %v1882 = vpack.c.b16 %v1855, %v1854
      %v1883 = vpack.c.b16 %v1857, %v1856
      %v1884 = vpack.c.b16 %v1859, %v1858
      %v1885 = vpack.c.b16 %v1861, %v1860
      %v1886 = vpack.c.b16 %v1863, %v1862
      %v1887 = vpack.c.b16 %v1865, %v1864
      %v1888 = vpack.c.b16 %v1867, %v1866
      %v1889 = vpack.c.b16 %v1869, %v1868
      %v1890 = vpack.c.b16 %v1871, %v1870
      %v1891 = vpack.c.b16 %v1873, %v1872
      %v1892 = vpack.c.b16 %v1875, %v1874
      %v1893 = vpack.c.b16 %v1877, %v1876
      %v1895 = vsel %vm670, %v1878, 0
      %v1898 = vsel %vm670, %v1879, 0
      %v1901 = vsel %vm670, %v1880, 0
      %v1904 = vsel %vm670, %v1881, 0
      %v1907 = vsel %vm670, %v1882, 0
      %v1910 = vsel %vm670, %v1883, 0
      %v1913 = vsel %vm670, %v1884, 0
      %v1916 = vsel %vm670, %v1885, 0
      %v1919 = vsel %vm670, %v1886, 0
      %v1922 = vsel %vm670, %v1887, 0
      %v1925 = vsel %vm670, %v1888, 0
      %v1928 = vsel %vm670, %v1889, 0
      %v1931 = vsel %vm670, %v1890, 0
      %v1934 = vsel %vm670, %v1891, 0
      %v1937 = vsel %vm670, %v1892, 0
      %v1940 = vsel %vm670, %v1893, 0
      %v1943 = vsel %vm719, %v1845, 0
      %1945 = vmatprep.subr.bf16.mxu0 0
      %1946 = vmatpush1.bf16.msra.mxu0 0
      %1947 = vmatprep.subr.bf16.mxu0 0
      %1948 = vmatpush1.bf16.msra.mxu0 0
      %1949 = vmatprep.subr.bf16.mxu0 0
      %1950 = vmatpush1.bf16.msra.mxu0 0
      %1951 = vmatprep.subr.bf16.mxu0 0
      %1952 = vmatpush1.bf16.msra.mxu0 0
      %1953 = vmatprep.subr.bf16.mxu0 0
      %1954 = vmatpush1.bf16.msra.mxu0 0
      %1955 = vmatprep.subr.bf16.mxu0 0
      %1956 = vmatpush1.bf16.msra.mxu0 0
      %1957 = vmatprep.subr.bf16.mxu0 0
      %1958 = vmatpush1.bf16.msra.mxu0 0
      %1959 = vmatprep.subr.bf16.mxu0 0
      %1960 = vmatpush1.bf16.msra.mxu0 %v1943
      %1961 = vmatprep.subr.bf16.mxu0 0
      %1962 = vmatpush2.bf16.msra.mxu0 0
      %1963 = vmatprep.subr.bf16.mxu0 0
      %1964 = vmatpush2.bf16.msra.mxu0 0
      %1965 = vmatprep.subr.bf16.mxu0 0
      %1966 = vmatpush2.bf16.msra.mxu0 0
      %1967 = vmatprep.subr.bf16.mxu0 0
      %1968 = vmatpush2.bf16.msra.mxu0 0
      %1969 = vmatprep.subr.bf16.mxu0 0
      %1970 = vmatpush2.bf16.msra.mxu0 0
      %1971 = vmatprep.subr.bf16.mxu0 0
      %1972 = vmatpush2.bf16.msra.mxu0 0
      %1973 = vmatprep.subr.bf16.mxu0 0
      %1974 = vmatpush2.bf16.msra.mxu0 0
      %1975 = vmatprep.subr.bf16.mxu0 0
      %1976 = vmatpush2.bf16.msra.mxu0 0
      %1977 = vmatprep.mubr.bf16.mxu0 0
      %1978 = vmatmul.mubr.bf16.gmra.mxu0 %v1895
      %v1979 = vpop.f32.mrf.mxu0
      %v1980 = vadd.f32 0.0, %v1979
      %v1981 = vpop.f32.mrf.mxu0
      %v1982 = vpop.f32.mrf.mxu0
      %v1983 = vadd.f32 0.0, %v1982
      %v1984 = vpop.f32.mrf.mxu0
      %1985 = vmatprep.mubr.bf16.mxu0 0
      %1986 = vmatmul.mubr.bf16.gmra.mxu0 %v1898
      %v1987 = vpop.f32.mrf.mxu0
      %v1988 = vadd.f32 0.0, %v1987
      %v1989 = vpop.f32.mrf.mxu0
      %v1990 = vpop.f32.mrf.mxu0
      %v1991 = vadd.f32 0.0, %v1990
      %v1992 = vpop.f32.mrf.mxu0
      %1993 = vmatprep.mubr.bf16.mxu0 0
      %1994 = vmatmul.mubr.bf16.gmra.mxu0 %v1901
      %v1995 = vpop.f32.mrf.mxu0
      %v1996 = vadd.f32 0.0, %v1995
      %v1997 = vpop.f32.mrf.mxu0
      %v1998 = vpop.f32.mrf.mxu0
      %v1999 = vadd.f32 0.0, %v1998
      %v2000 = vpop.f32.mrf.mxu0
      %2001 = vmatprep.mubr.bf16.mxu0 0
      %2002 = vmatmul.mubr.bf16.gmra.mxu0 %v1904
      %v2003 = vpop.f32.mrf.mxu0
      %v2004 = vadd.f32 0.0, %v2003
      %v2005 = vpop.f32.mrf.mxu0
      %v2006 = vpop.f32.mrf.mxu0
      %v2007 = vadd.f32 0.0, %v2006
      %v2008 = vpop.f32.mrf.mxu0
      %2009 = vmatprep.mubr.bf16.mxu0 0
      %2010 = vmatmul.mubr.bf16.gmra.mxu0 %v1907
      %v2011 = vpop.f32.mrf.mxu0
      %v2012 = vadd.f32 0.0, %v2011
      %v2013 = vpop.f32.mrf.mxu0
      %v2014 = vpop.f32.mrf.mxu0
      %v2015 = vadd.f32 0.0, %v2014
      %v2016 = vpop.f32.mrf.mxu0
      %2017 = vmatprep.mubr.bf16.mxu0 0
      %2018 = vmatmul.mubr.bf16.gmra.mxu0 %v1910
      %v2019 = vpop.f32.mrf.mxu0
      %v2020 = vadd.f32 0.0, %v2019
      %v2021 = vpop.f32.mrf.mxu0
      %v2022 = vpop.f32.mrf.mxu0
      %v2023 = vadd.f32 0.0, %v2022
      %v2024 = vpop.f32.mrf.mxu0
      %2025 = vmatprep.mubr.bf16.mxu0 0
      %2026 = vmatmul.mubr.bf16.gmra.mxu0 %v1913
      %v2027 = vpop.f32.mrf.mxu0
      %v2028 = vadd.f32 0.0, %v2027
      %v2029 = vpop.f32.mrf.mxu0
      %v2030 = vpop.f32.mrf.mxu0
      %v2031 = vadd.f32 0.0, %v2030
      %v2032 = vpop.f32.mrf.mxu0
      %2033 = vmatprep.mubr.bf16.mxu0 0
      %2034 = vmatmul.mubr.bf16.gmra.mxu0 %v1916
      %v2035 = vpop.f32.mrf.mxu0
      %v2036 = vadd.f32 0.0, %v2035
      %v2037 = vpop.f32.mrf.mxu0
      %v2038 = vpop.f32.mrf.mxu0
      %v2039 = vadd.f32 0.0, %v2038
      %v2040 = vpop.f32.mrf.mxu0
      %2041 = vmatprep.mubr.bf16.mxu0 0
      %2042 = vmatmul.mubr.bf16.gmra.mxu0 %v1919
      %v2043 = vpop.f32.mrf.mxu0
      %v2044 = vadd.f32 0.0, %v2043
      %v2045 = vpop.f32.mrf.mxu0
      %v2046 = vpop.f32.mrf.mxu0
      %v2047 = vadd.f32 0.0, %v2046
      %v2048 = vpop.f32.mrf.mxu0
      %2049 = vmatprep.mubr.bf16.mxu0 0
      %2050 = vmatmul.mubr.bf16.gmra.mxu0 %v1922
      %v2051 = vpop.f32.mrf.mxu0
      %v2052 = vadd.f32 0.0, %v2051
      %v2053 = vpop.f32.mrf.mxu0
      %v2054 = vpop.f32.mrf.mxu0
      %v2055 = vadd.f32 0.0, %v2054
      %v2056 = vpop.f32.mrf.mxu0
      %2057 = vmatprep.mubr.bf16.mxu0 0
      %2058 = vmatmul.mubr.bf16.gmra.mxu0 %v1925
      %v2059 = vpop.f32.mrf.mxu0
      %v2060 = vadd.f32 0.0, %v2059
      %v2061 = vpop.f32.mrf.mxu0
      %v2062 = vpop.f32.mrf.mxu0
      %v2063 = vadd.f32 0.0, %v2062
      %v2064 = vpop.f32.mrf.mxu0
      %2065 = vmatprep.mubr.bf16.mxu0 0
      %2066 = vmatmul.mubr.bf16.gmra.mxu0 %v1928
      %v2067 = vpop.f32.mrf.mxu0
      %v2068 = vadd.f32 0.0, %v2067
      %v2069 = vpop.f32.mrf.mxu0
      %v2070 = vpop.f32.mrf.mxu0
      %v2071 = vadd.f32 0.0, %v2070
      %v2072 = vpop.f32.mrf.mxu0
      %2073 = vmatprep.mubr.bf16.mxu0 0
      %2074 = vmatmul.mubr.bf16.gmra.mxu0 %v1931
      %v2075 = vpop.f32.mrf.mxu0
      %v2076 = vadd.f32 0.0, %v2075
      %v2077 = vpop.f32.mrf.mxu0
      %v2078 = vpop.f32.mrf.mxu0
      %v2079 = vadd.f32 0.0, %v2078
      %v2080 = vpop.f32.mrf.mxu0
      %2081 = vmatprep.mubr.bf16.mxu0 0
      %2082 = vmatmul.mubr.bf16.gmra.mxu0 %v1934
      %v2083 = vpop.f32.mrf.mxu0
      %v2084 = vadd.f32 0.0, %v2083
      %v2085 = vpop.f32.mrf.mxu0
      %v2086 = vpop.f32.mrf.mxu0
      %v2087 = vadd.f32 0.0, %v2086
      %v2088 = vpop.f32.mrf.mxu0
      %2089 = vmatprep.mubr.bf16.mxu0 0
      %2090 = vmatmul.mubr.bf16.gmra.mxu0 %v1937
      %v2091 = vpop.f32.mrf.mxu0
      %v2092 = vadd.f32 0.0, %v2091
      %v2093 = vpop.f32.mrf.mxu0
      %v2094 = vpop.f32.mrf.mxu0
      %v2095 = vadd.f32 0.0, %v2094
      %v2096 = vpop.f32.mrf.mxu0
      %2097 = vmatprep.mubr.bf16.mxu0 0
      %2098 = vmatmul.mubr.bf16.gmra.mxu0 %v1940
      %v2099 = vpop.f32.mrf.mxu0
      %v2100 = vadd.f32 0.0, %v2099
      %v2101 = vpop.f32.mrf.mxu0
      %v2102 = vpop.f32.mrf.mxu0
      %v2103 = vadd.f32 0.0, %v2102
      %v2104 = vpop.f32.mrf.mxu0
      %2105 = vdwg.mxu0
      %v2106 = vadd.f32 %v1569, %v1980
      %v2107 = vadd.f32 %v1570, %v1983
      %v2108 = vadd.f32 %v1571, %v1988
      %v2109 = vadd.f32 %v1572, %v1991
      %v2110 = vadd.f32 %v1573, %v1996
      %v2111 = vadd.f32 %v1574, %v1999
      %v2112 = vadd.f32 %v1575, %v2004
      %v2113 = vadd.f32 %v1576, %v2007
      %v2114 = vadd.f32 %v1577, %v2012
      %v2115 = vadd.f32 %v1578, %v2015
      %v2116 = vadd.f32 %v1579, %v2020
      %v2117 = vadd.f32 %v1580, %v2023
      %v2118 = vadd.f32 %v1581, %v2028
      %v2119 = vadd.f32 %v1582, %v2031
      %v2120 = vadd.f32 %v1583, %v2036
      %v2121 = vadd.f32 %v1584, %v2039
      %v2122 = vadd.f32 %v1585, %v2044
      %v2123 = vadd.f32 %v1586, %v2047
      %v2124 = vadd.f32 %v1587, %v2052
      %v2125 = vadd.f32 %v1588, %v2055
      %v2126 = vadd.f32 %v1589, %v2060
      %v2127 = vadd.f32 %v1590, %v2063
      %v2128 = vadd.f32 %v1591, %v2068
      %v2129 = vadd.f32 %v1592, %v2071
      %v2130 = vadd.f32 %v1593, %v2076
      %v2131 = vadd.f32 %v1594, %v2079
      %v2132 = vadd.f32 %v1595, %v2084
      %v2133 = vadd.f32 %v1596, %v2087
      %v2134 = vadd.f32 %v1597, %v2092
      %v2135 = vadd.f32 %v1598, %v2095
      %v2136 = vadd.f32 %v1599, %v2100
      %v2137 = vadd.f32 %v1600, %v2103
      %vm2138 = vcmask 1041408
      %vm2139 = vcmask 1045508
      %vm2140 = vmor %vm2138, %vm2139
      %v2141 = vrot.slane %v172, 6
      %v2142 = vrot.slane %v2141, 4
      %v2143 = vrot.slane %v173, 6
      %v2144 = vsel %vm2140, %v2142, %v2143
      %v2145 = vrot.slane %v2143, 4
      %v2146 = vrot.slane %v174, 6
      %v2147 = vsel %vm2140, %v2145, %v2146
      %v2148 = vrot.slane %v175, 6
      %v2149 = vrot.slane %v2148, 4
      %v2150 = vrot.slane %v176, 6
      %v2151 = vsel %vm2140, %v2149, %v2150
      %v2152 = vrot.slane %v2150, 4
      %v2153 = vrot.slane %v177, 6
      %v2154 = vsel %vm2140, %v2152, %v2153
      %v2155 = vrot.slane %v178, 6
      %v2156 = vrot.slane %v2155, 4
      %v2157 = vrot.slane %v179, 6
      %v2158 = vsel %vm2140, %v2156, %v2157
      %v2159 = vrot.slane %v2157, 4
      %v2160 = vrot.slane %v180, 6
      %v2161 = vsel %vm2140, %v2159, %v2160
      %v2162 = vrot.slane %v181, 6
      %v2163 = vrot.slane %v2162, 4
      %v2164 = vrot.slane %v182, 6
      %v2165 = vsel %vm2140, %v2163, %v2164
      %v2166 = vrot.slane %v2164, 4
      %v2167 = vrot.slane %v183, 6
      %v2168 = vsel %vm2140, %v2166, %v2167
      %v2169 = vrot.slane %v184, 6
      %v2170 = vrot.slane %v2169, 4
      %v2171 = vrot.slane %v185, 6
      %v2172 = vsel %vm2140, %v2170, %v2171
      %v2173 = vrot.slane %v2171, 4
      %v2174 = vrot.slane %v186, 6
      %v2175 = vsel %vm2140, %v2173, %v2174
      %v2176 = vrot.slane %v187, 6
      %v2177 = vrot.slane %v2176, 4
      %v2178 = vrot.slane %v188, 6
      %v2179 = vsel %vm2140, %v2177, %v2178
      %v2180 = vrot.slane %v2178, 4
      %v2181 = vrot.slane %v189, 6
      %v2182 = vsel %vm2140, %v2180, %v2181
      %v2183 = vrot.slane %v190, 6
      %v2184 = vrot.slane %v2183, 4
      %v2185 = vrot.slane %v191, 6
      %v2186 = vsel %vm2140, %v2184, %v2185
      %v2187 = vrot.slane %v2185, 4
      %v2188 = vrot.slane %v192, 6
      %v2189 = vsel %vm2140, %v2187, %v2188
      %v2190 = vrot.slane %v193, 6
      %v2191 = vrot.slane %v2190, 4
      %v2192 = vrot.slane %v194, 6
      %v2193 = vsel %vm2140, %v2191, %v2192
      %v2194 = vrot.slane %v2192, 4
      %v2195 = vrot.slane %v195, 6
      %v2196 = vsel %vm2140, %v2194, %v2195
      %v2197 = vrot.slane %v196, 6
      %v2198 = vrot.slane %v2197, 4
      %v2199 = vrot.slane %v197, 6
      %v2200 = vsel %vm2140, %v2198, %v2199
      %v2201 = vrot.slane %v2199, 4
      %v2202 = vrot.slane %v198, 6
      %v2203 = vsel %vm2140, %v2201, %v2202
      %v2204 = vrot.slane %v199, 6
      %v2205 = vrot.slane %v2204, 4
      %v2206 = vrot.slane %v200, 6
      %v2207 = vsel %vm2140, %v2205, %v2206
      %v2208 = vrot.slane %v2206, 4
      %v2209 = vrot.slane %v201, 6
      %v2210 = vsel %vm2140, %v2208, %v2209
      %v2211 = vrot.slane %v202, 6
      %v2212 = vrot.slane %v2211, 4
      %v2213 = vrot.slane %v203, 6
      %v2214 = vsel %vm2140, %v2212, %v2213
      %v2215 = vrot.slane %v2213, 4
      %v2216 = vrot.slane %v204, 6
      %v2217 = vsel %vm2140, %v2215, %v2216
      %v2218 = vrot.slane %v205, 6
      %v2219 = vrot.slane %v2218, 4
      %v2220 = vrot.slane %v206, 6
      %v2221 = vsel %vm2140, %v2219, %v2220
      %v2222 = vrot.slane %v2220, 4
      %v2223 = vrot.slane %v207, 6
      %v2224 = vsel %vm2140, %v2222, %v2223
      %v2225 = vrot.slane %v208, 6
      %v2226 = vrot.slane %v2225, 4
      %v2227 = vrot.slane %v209, 6
      %v2228 = vsel %vm2140, %v2226, %v2227
      %v2229 = vrot.slane %v2227, 4
      %v2230 = vrot.slane %v210, 6
      %v2231 = vsel %vm2140, %v2229, %v2230
      %v2232 = vrot.slane %v211, 6
      %v2233 = vrot.slane %v2232, 4
      %v2234 = vrot.slane %v212, 6
      %v2235 = vsel %vm2140, %v2233, %v2234
      %v2236 = vrot.slane %v2234, 4
      %v2237 = vrot.slane %v213, 6
      %v2238 = vsel %vm2140, %v2236, %v2237
      %v2239 = vrot.slane %v214, 6
      %v2240 = vrot.slane %v2239, 4
      %v2241 = vrot.slane %v215, 6
      %v2242 = vsel %vm2140, %v2240, %v2241
      %v2243 = vrot.slane %v2241, 4
      %v2244 = vrot.slane %v216, 6
      %v2245 = vsel %vm2140, %v2243, %v2244
      %v2246 = vrot.slane %v217, 6
      %v2247 = vrot.slane %v2246, 4
      %v2248 = vrot.slane %v218, 6
      %v2249 = vsel %vm2140, %v2247, %v2248
      %v2250 = vrot.slane %v2248, 4
      %v2251 = vrot.slane %v219, 6
      %v2252 = vsel %vm2140, %v2250, %v2251
      %s2253 = scalar_lea.vmem %s1, 8
      %v2254 = vld [vmem:[%s2253] sm:$0x3]
      %v2255 = vunpack.c.l.b16 %v2144
      %v2256 = vunpack.c.l.b16 %v2147
      %v2257 = vunpack.c.l.b16 %v2151
      %v2258 = vunpack.c.l.b16 %v2154
      %v2259 = vunpack.c.l.b16 %v2158
      %v2260 = vunpack.c.l.b16 %v2161
      %v2261 = vunpack.c.l.b16 %v2165
      %v2262 = vunpack.c.l.b16 %v2168
      %v2263 = vunpack.c.l.b16 %v2172
      %v2264 = vunpack.c.l.b16 %v2175
      %v2265 = vunpack.c.l.b16 %v2179
      %v2266 = vunpack.c.l.b16 %v2182
      %v2267 = vunpack.c.l.b16 %v2186
      %v2268 = vunpack.c.l.b16 %v2189
      %v2269 = vunpack.c.l.b16 %v2193
      %v2270 = vunpack.c.l.b16 %v2196
      %v2271 = vunpack.c.l.b16 %v2200
      %v2272 = vunpack.c.l.b16 %v2203
      %v2273 = vunpack.c.l.b16 %v2207
      %v2274 = vunpack.c.l.b16 %v2210
      %v2275 = vunpack.c.l.b16 %v2214
      %v2276 = vunpack.c.l.b16 %v2217
      %v2277 = vunpack.c.l.b16 %v2221
      %v2278 = vunpack.c.l.b16 %v2224
      %v2279 = vunpack.c.l.b16 %v2228
      %v2280 = vunpack.c.l.b16 %v2231
      %v2281 = vunpack.c.l.b16 %v2235
      %v2282 = vunpack.c.l.b16 %v2238
      %v2283 = vunpack.c.l.b16 %v2242
      %v2284 = vunpack.c.l.b16 %v2245
      %v2285 = vunpack.c.l.b16 %v2249
      %v2286 = vunpack.c.l.b16 %v2252
      %v2287 = vpack.c.b16 %v2256, %v2255
      %v2288 = vpack.c.b16 %v2258, %v2257
      %v2289 = vpack.c.b16 %v2260, %v2259
      %v2290 = vpack.c.b16 %v2262, %v2261
      %v2291 = vpack.c.b16 %v2264, %v2263
      %v2292 = vpack.c.b16 %v2266, %v2265
      %v2293 = vpack.c.b16 %v2268, %v2267
      %v2294 = vpack.c.b16 %v2270, %v2269
      %v2295 = vpack.c.b16 %v2272, %v2271
      %v2296 = vpack.c.b16 %v2274, %v2273
      %v2297 = vpack.c.b16 %v2276, %v2275
      %v2298 = vpack.c.b16 %v2278, %v2277
      %v2299 = vpack.c.b16 %v2280, %v2279
      %v2300 = vpack.c.b16 %v2282, %v2281
      %v2301 = vpack.c.b16 %v2284, %v2283
      %v2302 = vpack.c.b16 %v2286, %v2285
      %v2304 = vsel %vm670, %v2287, 0
      %v2307 = vsel %vm670, %v2288, 0
      %v2310 = vsel %vm670, %v2289, 0
      %v2313 = vsel %vm670, %v2290, 0
      %v2316 = vsel %vm670, %v2291, 0
      %v2319 = vsel %vm670, %v2292, 0
      %v2322 = vsel %vm670, %v2293, 0
      %v2325 = vsel %vm670, %v2294, 0
      %v2328 = vsel %vm670, %v2295, 0
      %v2331 = vsel %vm670, %v2296, 0
      %v2334 = vsel %vm670, %v2297, 0
      %v2337 = vsel %vm670, %v2298, 0
      %v2340 = vsel %vm670, %v2299, 0
      %v2343 = vsel %vm670, %v2300, 0
      %v2346 = vsel %vm670, %v2301, 0
      %v2349 = vsel %vm670, %v2302, 0
      %v2352 = vsel %vm719, %v2254, 0
      %2354 = vmatprep.subr.bf16.mxu0 0
      %2355 = vmatpush1.bf16.msra.mxu0 0
      %2356 = vmatprep.subr.bf16.mxu0 0
      %2357 = vmatpush1.bf16.msra.mxu0 0
      %2358 = vmatprep.subr.bf16.mxu0 0
      %2359 = vmatpush1.bf16.msra.mxu0 0
      %2360 = vmatprep.subr.bf16.mxu0 0
      %2361 = vmatpush1.bf16.msra.mxu0 0
      %2362 = vmatprep.subr.bf16.mxu0 0
      %2363 = vmatpush1.bf16.msra.mxu0 0
      %2364 = vmatprep.subr.bf16.mxu0 0
      %2365 = vmatpush1.bf16.msra.mxu0 0
      %2366 = vmatprep.subr.bf16.mxu0 0
      %2367 = vmatpush1.bf16.msra.mxu0 0
      %2368 = vmatprep.subr.bf16.mxu0 0
      %2369 = vmatpush1.bf16.msra.mxu0 %v2352
      %2370 = vmatprep.subr.bf16.mxu0 0
      %2371 = vmatpush2.bf16.msra.mxu0 0
      %2372 = vmatprep.subr.bf16.mxu0 0
      %2373 = vmatpush2.bf16.msra.mxu0 0
      %2374 = vmatprep.subr.bf16.mxu0 0
      %2375 = vmatpush2.bf16.msra.mxu0 0
      %2376 = vmatprep.subr.bf16.mxu0 0
      %2377 = vmatpush2.bf16.msra.mxu0 0
      %2378 = vmatprep.subr.bf16.mxu0 0
      %2379 = vmatpush2.bf16.msra.mxu0 0
      %2380 = vmatprep.subr.bf16.mxu0 0
      %2381 = vmatpush2.bf16.msra.mxu0 0
      %2382 = vmatprep.subr.bf16.mxu0 0
      %2383 = vmatpush2.bf16.msra.mxu0 0
      %2384 = vmatprep.subr.bf16.mxu0 0
      %2385 = vmatpush2.bf16.msra.mxu0 0
      %2386 = vmatprep.mubr.bf16.mxu0 0
      %2387 = vmatmul.mubr.bf16.gmra.mxu0 %v2304
      %v2388 = vpop.f32.mrf.mxu0
      %v2389 = vadd.f32 0.0, %v2388
      %v2390 = vpop.f32.mrf.mxu0
      %v2391 = vpop.f32.mrf.mxu0
      %v2392 = vadd.f32 0.0, %v2391
      %v2393 = vpop.f32.mrf.mxu0
      %2394 = vmatprep.mubr.bf16.mxu0 0
      %2395 = vmatmul.mubr.bf16.gmra.mxu0 %v2307
      %v2396 = vpop.f32.mrf.mxu0
      %v2397 = vadd.f32 0.0, %v2396
      %v2398 = vpop.f32.mrf.mxu0
      %v2399 = vpop.f32.mrf.mxu0
      %v2400 = vadd.f32 0.0, %v2399
      %v2401 = vpop.f32.mrf.mxu0
      %2402 = vmatprep.mubr.bf16.mxu0 0
      %2403 = vmatmul.mubr.bf16.gmra.mxu0 %v2310
      %v2404 = vpop.f32.mrf.mxu0
      %v2405 = vadd.f32 0.0, %v2404
      %v2406 = vpop.f32.mrf.mxu0
      %v2407 = vpop.f32.mrf.mxu0
      %v2408 = vadd.f32 0.0, %v2407
      %v2409 = vpop.f32.mrf.mxu0
      %2410 = vmatprep.mubr.bf16.mxu0 0
      %2411 = vmatmul.mubr.bf16.gmra.mxu0 %v2313
      %v2412 = vpop.f32.mrf.mxu0
      %v2413 = vadd.f32 0.0, %v2412
      %v2414 = vpop.f32.mrf.mxu0
      %v2415 = vpop.f32.mrf.mxu0
      %v2416 = vadd.f32 0.0, %v2415
      %v2417 = vpop.f32.mrf.mxu0
      %2418 = vmatprep.mubr.bf16.mxu0 0
      %2419 = vmatmul.mubr.bf16.gmra.mxu0 %v2316
      %v2420 = vpop.f32.mrf.mxu0
      %v2421 = vadd.f32 0.0, %v2420
      %v2422 = vpop.f32.mrf.mxu0
      %v2423 = vpop.f32.mrf.mxu0
      %v2424 = vadd.f32 0.0, %v2423
      %v2425 = vpop.f32.mrf.mxu0
      %2426 = vmatprep.mubr.bf16.mxu0 0
      %2427 = vmatmul.mubr.bf16.gmra.mxu0 %v2319
      %v2428 = vpop.f32.mrf.mxu0
      %v2429 = vadd.f32 0.0, %v2428
      %v2430 = vpop.f32.mrf.mxu0
      %v2431 = vpop.f32.mrf.mxu0
      %v2432 = vadd.f32 0.0, %v2431
      %v2433 = vpop.f32.mrf.mxu0
      %2434 = vmatprep.mubr.bf16.mxu0 0
      %2435 = vmatmul.mubr.bf16.gmra.mxu0 %v2322
      %v2436 = vpop.f32.mrf.mxu0
      %v2437 = vadd.f32 0.0, %v2436
      %v2438 = vpop.f32.mrf.mxu0
      %v2439 = vpop.f32.mrf.mxu0
      %v2440 = vadd.f32 0.0, %v2439
      %v2441 = vpop.f32.mrf.mxu0
      %2442 = vmatprep.mubr.bf16.mxu0 0
      %2443 = vmatmul.mubr.bf16.gmra.mxu0 %v2325
      %v2444 = vpop.f32.mrf.mxu0
      %v2445 = vadd.f32 0.0, %v2444
      %v2446 = vpop.f32.mrf.mxu0
      %v2447 = vpop.f32.mrf.mxu0
      %v2448 = vadd.f32 0.0, %v2447
      %v2449 = vpop.f32.mrf.mxu0
      %2450 = vmatprep.mubr.bf16.mxu0 0
      %2451 = vmatmul.mubr.bf16.gmra.mxu0 %v2328
      %v2452 = vpop.f32.mrf.mxu0
      %v2453 = vadd.f32 0.0, %v2452
      %v2454 = vpop.f32.mrf.mxu0
      %v2455 = vpop.f32.mrf.mxu0
      %v2456 = vadd.f32 0.0, %v2455
      %v2457 = vpop.f32.mrf.mxu0
      %2458 = vmatprep.mubr.bf16.mxu0 0
      %2459 = vmatmul.mubr.bf16.gmra.mxu0 %v2331
      %v2460 = vpop.f32.mrf.mxu0
      %v2461 = vadd.f32 0.0, %v2460
      %v2462 = vpop.f32.mrf.mxu0
      %v2463 = vpop.f32.mrf.mxu0
      %v2464 = vadd.f32 0.0, %v2463
      %v2465 = vpop.f32.mrf.mxu0
      %2466 = vmatprep.mubr.bf16.mxu0 0
      %2467 = vmatmul.mubr.bf16.gmra.mxu0 %v2334
      %v2468 = vpop.f32.mrf.mxu0
      %v2469 = vadd.f32 0.0, %v2468
      %v2470 = vpop.f32.mrf.mxu0
      %v2471 = vpop.f32.mrf.mxu0
      %v2472 = vadd.f32 0.0, %v2471
      %v2473 = vpop.f32.mrf.mxu0
      %2474 = vmatprep.mubr.bf16.mxu0 0
      %2475 = vmatmul.mubr.bf16.gmra.mxu0 %v2337
      %v2476 = vpop.f32.mrf.mxu0
      %v2477 = vadd.f32 0.0, %v2476
      %v2478 = vpop.f32.mrf.mxu0
      %v2479 = vpop.f32.mrf.mxu0
      %v2480 = vadd.f32 0.0, %v2479
      %v2481 = vpop.f32.mrf.mxu0
      %2482 = vmatprep.mubr.bf16.mxu0 0
      %2483 = vmatmul.mubr.bf16.gmra.mxu0 %v2340
      %v2484 = vpop.f32.mrf.mxu0
      %v2485 = vadd.f32 0.0, %v2484
      %v2486 = vpop.f32.mrf.mxu0
      %v2487 = vpop.f32.mrf.mxu0
      %v2488 = vadd.f32 0.0, %v2487
      %v2489 = vpop.f32.mrf.mxu0
      %2490 = vmatprep.mubr.bf16.mxu0 0
      %2491 = vmatmul.mubr.bf16.gmra.mxu0 %v2343
      %v2492 = vpop.f32.mrf.mxu0
      %v2493 = vadd.f32 0.0, %v2492
      %v2494 = vpop.f32.mrf.mxu0
      %v2495 = vpop.f32.mrf.mxu0
      %v2496 = vadd.f32 0.0, %v2495
      %v2497 = vpop.f32.mrf.mxu0
      %2498 = vmatprep.mubr.bf16.mxu0 0
      %2499 = vmatmul.mubr.bf16.gmra.mxu0 %v2346
      %v2500 = vpop.f32.mrf.mxu0
      %v2501 = vadd.f32 0.0, %v2500
      %v2502 = vpop.f32.mrf.mxu0
      %v2503 = vpop.f32.mrf.mxu0
      %v2504 = vadd.f32 0.0, %v2503
      %v2505 = vpop.f32.mrf.mxu0
      %2506 = vmatprep.mubr.bf16.mxu0 0
      %2507 = vmatmul.mubr.bf16.gmra.mxu0 %v2349
      %v2508 = vpop.f32.mrf.mxu0
      %v2509 = vadd.f32 0.0, %v2508
      %v2510 = vpop.f32.mrf.mxu0
      %v2511 = vpop.f32.mrf.mxu0
      %v2512 = vadd.f32 0.0, %v2511
      %v2513 = vpop.f32.mrf.mxu0
      %2514 = vdwg.mxu0
      %v2515 = vadd.f32 %v2106, %v2389
      %v2516 = vadd.f32 %v2107, %v2392
      %v2517 = vadd.f32 %v2108, %v2397
      %v2518 = vadd.f32 %v2109, %v2400
      %v2519 = vadd.f32 %v2110, %v2405
      %v2520 = vadd.f32 %v2111, %v2408
      %v2521 = vadd.f32 %v2112, %v2413
      %v2522 = vadd.f32 %v2113, %v2416
      %v2523 = vadd.f32 %v2114, %v2421
      %v2524 = vadd.f32 %v2115, %v2424
      %v2525 = vadd.f32 %v2116, %v2429
      %v2526 = vadd.f32 %v2117, %v2432
      %v2527 = vadd.f32 %v2118, %v2437
      %v2528 = vadd.f32 %v2119, %v2440
      %v2529 = vadd.f32 %v2120, %v2445
      %v2530 = vadd.f32 %v2121, %v2448
      %v2531 = vadd.f32 %v2122, %v2453
      %v2532 = vadd.f32 %v2123, %v2456
      %v2533 = vadd.f32 %v2124, %v2461
      %v2534 = vadd.f32 %v2125, %v2464
      %v2535 = vadd.f32 %v2126, %v2469
      %v2536 = vadd.f32 %v2127, %v2472
      %v2537 = vadd.f32 %v2128, %v2477
      %v2538 = vadd.f32 %v2129, %v2480
      %v2539 = vadd.f32 %v2130, %v2485
      %v2540 = vadd.f32 %v2131, %v2488
      %v2541 = vadd.f32 %v2132, %v2493
      %v2542 = vadd.f32 %v2133, %v2496
      %v2543 = vadd.f32 %v2134, %v2501
      %v2544 = vadd.f32 %v2135, %v2504
      %v2545 = vadd.f32 %v2136, %v2509
      %v2546 = vadd.f32 %v2137, %v2512
      %s2547 = scalar_lea.vmem %s1, 10
      %v2548 = vld [vmem:[%s2547] sm:$0x3]
      %v2551 = vunpack.c.l.b16 %v220
      %v2552 = vunpack.c.l.b16 %v221
      %v2553 = vpack.c.b16 %v2552, %v2551
      %v2555 = vsel %vm670, %v2553, 0
      %v2558 = vsel %vm719, %v2548, 0
      %2560 = vmatprep.subr.bf16.mxu0 0
      %2561 = vmatpush1.bf16.msra.mxu0 0
      %2562 = vmatprep.subr.bf16.mxu0 0
      %2563 = vmatpush1.bf16.msra.mxu0 0
      %2564 = vmatprep.subr.bf16.mxu0 0
      %2565 = vmatpush1.bf16.msra.mxu0 0
      %2566 = vmatprep.subr.bf16.mxu0 0
      %2567 = vmatpush1.bf16.msra.mxu0 0
      %2568 = vmatprep.subr.bf16.mxu0 0
      %2569 = vmatpush1.bf16.msra.mxu0 0
      %2570 = vmatprep.subr.bf16.mxu0 0
      %2571 = vmatpush1.bf16.msra.mxu0 0
      %2572 = vmatprep.subr.bf16.mxu0 0
      %2573 = vmatpush1.bf16.msra.mxu0 0
      %2574 = vmatprep.subr.bf16.mxu0 0
      %2575 = vmatpush1.bf16.msra.mxu0 %v2558
      %2576 = vmatprep.subr.bf16.mxu0 0
      %2577 = vmatpush2.bf16.msra.mxu0 0
      %2578 = vmatprep.subr.bf16.mxu0 0
      %2579 = vmatpush2.bf16.msra.mxu0 0
      %2580 = vmatprep.subr.bf16.mxu0 0
      %2581 = vmatpush2.bf16.msra.mxu0 0
      %2582 = vmatprep.subr.bf16.mxu0 0
      %2583 = vmatpush2.bf16.msra.mxu0 0
      %2584 = vmatprep.subr.bf16.mxu0 0
      %2585 = vmatpush2.bf16.msra.mxu0 0
      %2586 = vmatprep.subr.bf16.mxu0 0
      %2587 = vmatpush2.bf16.msra.mxu0 0
      %2588 = vmatprep.subr.bf16.mxu0 0
      %2589 = vmatpush2.bf16.msra.mxu0 0
      %2590 = vmatprep.subr.bf16.mxu0 0
      %2591 = vmatpush2.bf16.msra.mxu0 0
      %2592 = vmatprep.mubr.bf16.mxu0 0
      %2593 = vmatmul.mubr.bf16.gmra.mxu0 %v968
      %v2594 = vpop.f32.mrf.mxu0
      %v2595 = vadd.f32 0.0, %v2594
      %v2596 = vpop.f32.mrf.mxu0
      %v2597 = vpop.f32.mrf.mxu0
      %v2598 = vadd.f32 0.0, %v2597
      %v2599 = vpop.f32.mrf.mxu0
      %2600 = vmatprep.mubr.bf16.mxu0 0
      %2601 = vmatmul.mubr.bf16.gmra.mxu0 %v971
      %v2602 = vpop.f32.mrf.mxu0
      %v2603 = vadd.f32 0.0, %v2602
      %v2604 = vpop.f32.mrf.mxu0
      %v2605 = vpop.f32.mrf.mxu0
      %v2606 = vadd.f32 0.0, %v2605
      %v2607 = vpop.f32.mrf.mxu0
      %2608 = vmatprep.mubr.bf16.mxu0 0
      %2609 = vmatmul.mubr.bf16.gmra.mxu0 %v974
      %v2610 = vpop.f32.mrf.mxu0
      %v2611 = vadd.f32 0.0, %v2610
      %v2612 = vpop.f32.mrf.mxu0
      %v2613 = vpop.f32.mrf.mxu0
      %v2614 = vadd.f32 0.0, %v2613
      %v2615 = vpop.f32.mrf.mxu0
      %2616 = vmatprep.mubr.bf16.mxu0 0
      %2617 = vmatmul.mubr.bf16.gmra.mxu0 %v977
      %v2618 = vpop.f32.mrf.mxu0
      %v2619 = vadd.f32 0.0, %v2618
      %v2620 = vpop.f32.mrf.mxu0
      %v2621 = vpop.f32.mrf.mxu0
      %v2622 = vadd.f32 0.0, %v2621
      %v2623 = vpop.f32.mrf.mxu0
      %2624 = vmatprep.mubr.bf16.mxu0 0
      %2625 = vmatmul.mubr.bf16.gmra.mxu0 %v980
      %v2626 = vpop.f32.mrf.mxu0
      %v2627 = vadd.f32 0.0, %v2626
      %v2628 = vpop.f32.mrf.mxu0
      %v2629 = vpop.f32.mrf.mxu0
      %v2630 = vadd.f32 0.0, %v2629
      %v2631 = vpop.f32.mrf.mxu0
      %2632 = vmatprep.mubr.bf16.mxu0 0
      %2633 = vmatmul.mubr.bf16.gmra.mxu0 %v983
      %v2634 = vpop.f32.mrf.mxu0
      %v2635 = vadd.f32 0.0, %v2634
      %v2636 = vpop.f32.mrf.mxu0
      %v2637 = vpop.f32.mrf.mxu0
      %v2638 = vadd.f32 0.0, %v2637
      %v2639 = vpop.f32.mrf.mxu0
      %2640 = vmatprep.mubr.bf16.mxu0 0
      %2641 = vmatmul.mubr.bf16.gmra.mxu0 %v986
      %v2642 = vpop.f32.mrf.mxu0
      %v2643 = vadd.f32 0.0, %v2642
      %v2644 = vpop.f32.mrf.mxu0
      %v2645 = vpop.f32.mrf.mxu0
      %v2646 = vadd.f32 0.0, %v2645
      %v2647 = vpop.f32.mrf.mxu0
      %2648 = vmatprep.mubr.bf16.mxu0 0
      %2649 = vmatmul.mubr.bf16.gmra.mxu0 %v989
      %v2650 = vpop.f32.mrf.mxu0
      %v2651 = vadd.f32 0.0, %v2650
      %v2652 = vpop.f32.mrf.mxu0
      %v2653 = vpop.f32.mrf.mxu0
      %v2654 = vadd.f32 0.0, %v2653
      %v2655 = vpop.f32.mrf.mxu0
      %2656 = vmatprep.mubr.bf16.mxu0 0
      %2657 = vmatmul.mubr.bf16.gmra.mxu0 %v992
      %v2658 = vpop.f32.mrf.mxu0
      %v2659 = vadd.f32 0.0, %v2658
      %v2660 = vpop.f32.mrf.mxu0
      %v2661 = vpop.f32.mrf.mxu0
      %v2662 = vadd.f32 0.0, %v2661
      %v2663 = vpop.f32.mrf.mxu0
      %2664 = vmatprep.mubr.bf16.mxu0 0
      %2665 = vmatmul.mubr.bf16.gmra.mxu0 %v995
      %v2666 = vpop.f32.mrf.mxu0
      %v2667 = vadd.f32 0.0, %v2666
      %v2668 = vpop.f32.mrf.mxu0
      %v2669 = vpop.f32.mrf.mxu0
      %v2670 = vadd.f32 0.0, %v2669
      %v2671 = vpop.f32.mrf.mxu0
      %2672 = vmatprep.mubr.bf16.mxu0 0
      %2673 = vmatmul.mubr.bf16.gmra.mxu0 %v998
      %v2674 = vpop.f32.mrf.mxu0
      %v2675 = vadd.f32 0.0, %v2674
      %v2676 = vpop.f32.mrf.mxu0
      %v2677 = vpop.f32.mrf.mxu0
      %v2678 = vadd.f32 0.0, %v2677
      %v2679 = vpop.f32.mrf.mxu0
      %2680 = vmatprep.mubr.bf16.mxu0 0
      %2681 = vmatmul.mubr.bf16.gmra.mxu0 %v1001
      %v2682 = vpop.f32.mrf.mxu0
      %v2683 = vadd.f32 0.0, %v2682
      %v2684 = vpop.f32.mrf.mxu0
      %v2685 = vpop.f32.mrf.mxu0
      %v2686 = vadd.f32 0.0, %v2685
      %v2687 = vpop.f32.mrf.mxu0
      %2688 = vmatprep.mubr.bf16.mxu0 0
      %2689 = vmatmul.mubr.bf16.gmra.mxu0 %v1004
      %v2690 = vpop.f32.mrf.mxu0
      %v2691 = vadd.f32 0.0, %v2690
      %v2692 = vpop.f32.mrf.mxu0
      %v2693 = vpop.f32.mrf.mxu0
      %v2694 = vadd.f32 0.0, %v2693
      %v2695 = vpop.f32.mrf.mxu0
      %2696 = vmatprep.mubr.bf16.mxu0 0
      %2697 = vmatmul.mubr.bf16.gmra.mxu0 %v1007
      %v2698 = vpop.f32.mrf.mxu0
      %v2699 = vadd.f32 0.0, %v2698
      %v2700 = vpop.f32.mrf.mxu0
      %v2701 = vpop.f32.mrf.mxu0
      %v2702 = vadd.f32 0.0, %v2701
      %v2703 = vpop.f32.mrf.mxu0
      %2704 = vmatprep.mubr.bf16.mxu0 0
      %2705 = vmatmul.mubr.bf16.gmra.mxu0 %v1010
      %v2706 = vpop.f32.mrf.mxu0
      %v2707 = vadd.f32 0.0, %v2706
      %v2708 = vpop.f32.mrf.mxu0
      %v2709 = vpop.f32.mrf.mxu0
      %v2710 = vadd.f32 0.0, %v2709
      %v2711 = vpop.f32.mrf.mxu0
      %2712 = vmatprep.mubr.bf16.mxu0 0
      %2713 = vmatmul.mubr.bf16.gmra.mxu0 %v2555
      %v2714 = vpop.f32.mrf.mxu0
      %v2715 = vadd.f32 0.0, %v2714
      %v2716 = vpop.f32.mrf.mxu0
      %v2717 = vpop.f32.mrf.mxu0
      %v2718 = vadd.f32 0.0, %v2717
      %v2719 = vpop.f32.mrf.mxu0
      %2720 = vdwg.mxu0
      %v2721 = vadd.f32 %v2515, %v2595
      %v2722 = vadd.f32 %v2516, %v2598
      %v2723 = vadd.f32 %v2517, %v2603
      %v2724 = vadd.f32 %v2518, %v2606
      %v2725 = vadd.f32 %v2519, %v2611
      %v2726 = vadd.f32 %v2520, %v2614
      %v2727 = vadd.f32 %v2521, %v2619
      %v2728 = vadd.f32 %v2522, %v2622
      %v2729 = vadd.f32 %v2523, %v2627
      %v2730 = vadd.f32 %v2524, %v2630
      %v2731 = vadd.f32 %v2525, %v2635
      %v2732 = vadd.f32 %v2526, %v2638
      %v2733 = vadd.f32 %v2527, %v2643
      %v2734 = vadd.f32 %v2528, %v2646
      %v2735 = vadd.f32 %v2529, %v2651
      %v2736 = vadd.f32 %v2530, %v2654
      %v2737 = vadd.f32 %v2531, %v2659
      %v2738 = vadd.f32 %v2532, %v2662
      %v2739 = vadd.f32 %v2533, %v2667
      %v2740 = vadd.f32 %v2534, %v2670
      %v2741 = vadd.f32 %v2535, %v2675
      %v2742 = vadd.f32 %v2536, %v2678
      %v2743 = vadd.f32 %v2537, %v2683
      %v2744 = vadd.f32 %v2538, %v2686
      %v2745 = vadd.f32 %v2539, %v2691
      %v2746 = vadd.f32 %v2540, %v2694
      %v2747 = vadd.f32 %v2541, %v2699
      %v2748 = vadd.f32 %v2542, %v2702
      %v2749 = vadd.f32 %v2543, %v2707
      %v2750 = vadd.f32 %v2544, %v2710
      %v2751 = vadd.f32 %v2545, %v2715
      %v2752 = vadd.f32 %v2546, %v2718
      %v2754 = vshrl.u32 %v220, 16
      %v2756 = vrot.slane %v2754, 4
      %v2757 = vshll.u32 %v220, 16
      %v2759 = vrot.slane %v2757, 5
      %v2760 = vor.u32 %v2756, %v2759
      %v2761 = vrot.slane %v2760, 4
      %v2763 = vshll.u32 %v221, 16
      %v2765 = vrot.slane %v2763, 5
      %v2766 = vsel %vm235, %v2761, %v2765
      %v2767 = vshrl.u32 %v221, 16
      %v2769 = vrot.slane %v2767, 4
      %v2770 = vor.u32 %v2769, %v2765
      %v2771 = vrot.slane %v2770, 4
      %v2773 = vshll.u32 %v222, 16
      %v2775 = vrot.slane %v2773, 5
      %v2776 = vsel %vm235, %v2771, %v2775
      %s2777 = scalar_lea.vmem %s1, 12
      %v2778 = vld [vmem:[%s2777] sm:$0x3]
      %v2779 = vunpack.c.l.b16 %v2766
      %v2780 = vunpack.c.l.b16 %v2776
      %v2781 = vpack.c.b16 %v2780, %v2779
      %v2783 = vsel %vm670, %v2781, 0
      %v2786 = vsel %vm719, %v2778, 0
      %2788 = vmatprep.subr.bf16.mxu0 0
      %2789 = vmatpush1.bf16.msra.mxu0 0
      %2790 = vmatprep.subr.bf16.mxu0 0
      %2791 = vmatpush1.bf16.msra.mxu0 0
      %2792 = vmatprep.subr.bf16.mxu0 0
      %2793 = vmatpush1.bf16.msra.mxu0 0
      %2794 = vmatprep.subr.bf16.mxu0 0
      %2795 = vmatpush1.bf16.msra.mxu0 0
      %2796 = vmatprep.subr.bf16.mxu0 0
      %2797 = vmatpush1.bf16.msra.mxu0 0
      %2798 = vmatprep.subr.bf16.mxu0 0
      %2799 = vmatpush1.bf16.msra.mxu0 0
      %2800 = vmatprep.subr.bf16.mxu0 0
      %2801 = vmatpush1.bf16.msra.mxu0 0
      %2802 = vmatprep.subr.bf16.mxu0 0
      %2803 = vmatpush1.bf16.msra.mxu0 %v2786
      %2804 = vmatprep.subr.bf16.mxu0 0
      %2805 = vmatpush2.bf16.msra.mxu0 0
      %2806 = vmatprep.subr.bf16.mxu0 0
      %2807 = vmatpush2.bf16.msra.mxu0 0
      %2808 = vmatprep.subr.bf16.mxu0 0
      %2809 = vmatpush2.bf16.msra.mxu0 0
      %2810 = vmatprep.subr.bf16.mxu0 0
      %2811 = vmatpush2.bf16.msra.mxu0 0
      %2812 = vmatprep.subr.bf16.mxu0 0
      %2813 = vmatpush2.bf16.msra.mxu0 0
      %2814 = vmatprep.subr.bf16.mxu0 0
      %2815 = vmatpush2.bf16.msra.mxu0 0
      %2816 = vmatprep.subr.bf16.mxu0 0
      %2817 = vmatpush2.bf16.msra.mxu0 0
      %2818 = vmatprep.subr.bf16.mxu0 0
      %2819 = vmatpush2.bf16.msra.mxu0 0
      %2820 = vmatprep.mubr.bf16.mxu0 0
      %2821 = vmatmul.mubr.bf16.gmra.mxu0 %v675
      %v2822 = vpop.f32.mrf.mxu0
      %v2823 = vadd.f32 0.0, %v2822
      %v2824 = vpop.f32.mrf.mxu0
      %v2825 = vpop.f32.mrf.mxu0
      %v2826 = vadd.f32 0.0, %v2825
      %v2827 = vpop.f32.mrf.mxu0
      %2828 = vmatprep.mubr.bf16.mxu0 0
      %2829 = vmatmul.mubr.bf16.gmra.mxu0 %v678
      %v2830 = vpop.f32.mrf.mxu0
      %v2831 = vadd.f32 0.0, %v2830
      %v2832 = vpop.f32.mrf.mxu0
      %v2833 = vpop.f32.mrf.mxu0
      %v2834 = vadd.f32 0.0, %v2833
      %v2835 = vpop.f32.mrf.mxu0
      %2836 = vmatprep.mubr.bf16.mxu0 0
      %2837 = vmatmul.mubr.bf16.gmra.mxu0 %v681
      %v2838 = vpop.f32.mrf.mxu0
      %v2839 = vadd.f32 0.0, %v2838
      %v2840 = vpop.f32.mrf.mxu0
      %v2841 = vpop.f32.mrf.mxu0
      %v2842 = vadd.f32 0.0, %v2841
      %v2843 = vpop.f32.mrf.mxu0
      %2844 = vmatprep.mubr.bf16.mxu0 0
      %2845 = vmatmul.mubr.bf16.gmra.mxu0 %v684
      %v2846 = vpop.f32.mrf.mxu0
      %v2847 = vadd.f32 0.0, %v2846
      %v2848 = vpop.f32.mrf.mxu0
      %v2849 = vpop.f32.mrf.mxu0
      %v2850 = vadd.f32 0.0, %v2849
      %v2851 = vpop.f32.mrf.mxu0
      %2852 = vmatprep.mubr.bf16.mxu0 0
      %2853 = vmatmul.mubr.bf16.gmra.mxu0 %v687
      %v2854 = vpop.f32.mrf.mxu0
      %v2855 = vadd.f32 0.0, %v2854
      %v2856 = vpop.f32.mrf.mxu0
      %v2857 = vpop.f32.mrf.mxu0
      %v2858 = vadd.f32 0.0, %v2857
      %v2859 = vpop.f32.mrf.mxu0
      %2860 = vmatprep.mubr.bf16.mxu0 0
      %2861 = vmatmul.mubr.bf16.gmra.mxu0 %v690
      %v2862 = vpop.f32.mrf.mxu0
      %v2863 = vadd.f32 0.0, %v2862
      %v2864 = vpop.f32.mrf.mxu0
      %v2865 = vpop.f32.mrf.mxu0
      %v2866 = vadd.f32 0.0, %v2865
      %v2867 = vpop.f32.mrf.mxu0
      %2868 = vmatprep.mubr.bf16.mxu0 0
      %2869 = vmatmul.mubr.bf16.gmra.mxu0 %v693
      %v2870 = vpop.f32.mrf.mxu0
      %v2871 = vadd.f32 0.0, %v2870
      %v2872 = vpop.f32.mrf.mxu0
      %v2873 = vpop.f32.mrf.mxu0
      %v2874 = vadd.f32 0.0, %v2873
      %v2875 = vpop.f32.mrf.mxu0
      %2876 = vmatprep.mubr.bf16.mxu0 0
      %2877 = vmatmul.mubr.bf16.gmra.mxu0 %v696
      %v2878 = vpop.f32.mrf.mxu0
      %v2879 = vadd.f32 0.0, %v2878
      %v2880 = vpop.f32.mrf.mxu0
      %v2881 = vpop.f32.mrf.mxu0
      %v2882 = vadd.f32 0.0, %v2881
      %v2883 = vpop.f32.mrf.mxu0
      %2884 = vmatprep.mubr.bf16.mxu0 0
      %2885 = vmatmul.mubr.bf16.gmra.mxu0 %v699
      %v2886 = vpop.f32.mrf.mxu0
      %v2887 = vadd.f32 0.0, %v2886
      %v2888 = vpop.f32.mrf.mxu0
      %v2889 = vpop.f32.mrf.mxu0
      %v2890 = vadd.f32 0.0, %v2889
      %v2891 = vpop.f32.mrf.mxu0
      %2892 = vmatprep.mubr.bf16.mxu0 0
      %2893 = vmatmul.mubr.bf16.gmra.mxu0 %v702
      %v2894 = vpop.f32.mrf.mxu0
      %v2895 = vadd.f32 0.0, %v2894
      %v2896 = vpop.f32.mrf.mxu0
      %v2897 = vpop.f32.mrf.mxu0
      %v2898 = vadd.f32 0.0, %v2897
      %v2899 = vpop.f32.mrf.mxu0
      %2900 = vmatprep.mubr.bf16.mxu0 0
      %2901 = vmatmul.mubr.bf16.gmra.mxu0 %v705
      %v2902 = vpop.f32.mrf.mxu0
      %v2903 = vadd.f32 0.0, %v2902
      %v2904 = vpop.f32.mrf.mxu0
      %v2905 = vpop.f32.mrf.mxu0
      %v2906 = vadd.f32 0.0, %v2905
      %v2907 = vpop.f32.mrf.mxu0
      %2908 = vmatprep.mubr.bf16.mxu0 0
      %2909 = vmatmul.mubr.bf16.gmra.mxu0 %v708
      %v2910 = vpop.f32.mrf.mxu0
      %v2911 = vadd.f32 0.0, %v2910
      %v2912 = vpop.f32.mrf.mxu0
      %v2913 = vpop.f32.mrf.mxu0
      %v2914 = vadd.f32 0.0, %v2913
      %v2915 = vpop.f32.mrf.mxu0
      %2916 = vmatprep.mubr.bf16.mxu0 0
      %2917 = vmatmul.mubr.bf16.gmra.mxu0 %v711
      %v2918 = vpop.f32.mrf.mxu0
      %v2919 = vadd.f32 0.0, %v2918
      %v2920 = vpop.f32.mrf.mxu0
      %v2921 = vpop.f32.mrf.mxu0
      %v2922 = vadd.f32 0.0, %v2921
      %v2923 = vpop.f32.mrf.mxu0
      %2924 = vmatprep.mubr.bf16.mxu0 0
      %2925 = vmatmul.mubr.bf16.gmra.mxu0 %v714
      %v2926 = vpop.f32.mrf.mxu0
      %v2927 = vadd.f32 0.0, %v2926
      %v2928 = vpop.f32.mrf.mxu0
      %v2929 = vpop.f32.mrf.mxu0
      %v2930 = vadd.f32 0.0, %v2929
      %v2931 = vpop.f32.mrf.mxu0
      %2932 = vmatprep.mubr.bf16.mxu0 0
      %2933 = vmatmul.mubr.bf16.gmra.mxu0 %v717
      %v2934 = vpop.f32.mrf.mxu0
      %v2935 = vadd.f32 0.0, %v2934
      %v2936 = vpop.f32.mrf.mxu0
      %v2937 = vpop.f32.mrf.mxu0
      %v2938 = vadd.f32 0.0, %v2937
      %v2939 = vpop.f32.mrf.mxu0
      %2940 = vmatprep.mubr.bf16.mxu0 0
      %2941 = vmatmul.mubr.bf16.gmra.mxu0 %v2783
      %v2942 = vpop.f32.mrf.mxu0
      %v2943 = vadd.f32 0.0, %v2942
      %v2944 = vpop.f32.mrf.mxu0
      %v2945 = vpop.f32.mrf.mxu0
      %v2946 = vadd.f32 0.0, %v2945
      %v2947 = vpop.f32.mrf.mxu0
      %2948 = vdwg.mxu0
      %v2949 = vadd.f32 %v2721, %v2823
      %v2950 = vadd.f32 %v2722, %v2826
      %v2951 = vadd.f32 %v2723, %v2831
      %v2952 = vadd.f32 %v2724, %v2834
      %v2953 = vadd.f32 %v2725, %v2839
      %v2954 = vadd.f32 %v2726, %v2842
      %v2955 = vadd.f32 %v2727, %v2847
      %v2956 = vadd.f32 %v2728, %v2850
      %v2957 = vadd.f32 %v2729, %v2855
      %v2958 = vadd.f32 %v2730, %v2858
      %v2959 = vadd.f32 %v2731, %v2863
      %v2960 = vadd.f32 %v2732, %v2866
      %v2961 = vadd.f32 %v2733, %v2871
      %v2962 = vadd.f32 %v2734, %v2874
      %v2963 = vadd.f32 %v2735, %v2879
      %v2964 = vadd.f32 %v2736, %v2882
      %v2965 = vadd.f32 %v2737, %v2887
      %v2966 = vadd.f32 %v2738, %v2890
      %v2967 = vadd.f32 %v2739, %v2895
      %v2968 = vadd.f32 %v2740, %v2898
      %v2969 = vadd.f32 %v2741, %v2903
      %v2970 = vadd.f32 %v2742, %v2906
      %v2971 = vadd.f32 %v2743, %v2911
      %v2972 = vadd.f32 %v2744, %v2914
      %v2973 = vadd.f32 %v2745, %v2919
      %v2974 = vadd.f32 %v2746, %v2922
      %v2975 = vadd.f32 %v2747, %v2927
      %v2976 = vadd.f32 %v2748, %v2930
      %v2977 = vadd.f32 %v2749, %v2935
      %v2978 = vadd.f32 %v2750, %v2938
      %v2979 = vadd.f32 %v2751, %v2943
      %v2980 = vadd.f32 %v2752, %v2946
      %v2982 = vrot.slane %v220, 5
      %v2983 = vrot.slane %v2982, 4
      %v2984 = vrot.slane %v221, 5
      %v2985 = vsel %vm1194, %v2983, %v2984
      %v2986 = vrot.slane %v2984, 4
      %v2987 = vrot.slane %v222, 5
      %v2988 = vsel %vm1194, %v2986, %v2987
      %s2989 = scalar_lea.vmem %s1, 14
      %v2990 = vld [vmem:[%s2989] sm:$0x3]
      %v2991 = vunpack.c.l.b16 %v2985
      %v2992 = vunpack.c.l.b16 %v2988
      %v2993 = vpack.c.b16 %v2992, %v2991
      %v2995 = vsel %vm670, %v2993, 0
      %v2998 = vsel %vm719, %v2990, 0
      %3000 = vmatprep.subr.bf16.mxu0 0
      %3001 = vmatpush1.bf16.msra.mxu0 0
      %3002 = vmatprep.subr.bf16.mxu0 0
      %3003 = vmatpush1.bf16.msra.mxu0 0
      %3004 = vmatprep.subr.bf16.mxu0 0
      %3005 = vmatpush1.bf16.msra.mxu0 0
      %3006 = vmatprep.subr.bf16.mxu0 0
      %3007 = vmatpush1.bf16.msra.mxu0 0
      %3008 = vmatprep.subr.bf16.mxu0 0
      %3009 = vmatpush1.bf16.msra.mxu0 0
      %3010 = vmatprep.subr.bf16.mxu0 0
      %3011 = vmatpush1.bf16.msra.mxu0 0
      %3012 = vmatprep.subr.bf16.mxu0 0
      %3013 = vmatpush1.bf16.msra.mxu0 0
      %3014 = vmatprep.subr.bf16.mxu0 0
      %3015 = vmatpush1.bf16.msra.mxu0 %v2998
      %3016 = vmatprep.subr.bf16.mxu0 0
      %3017 = vmatpush2.bf16.msra.mxu0 0
      %3018 = vmatprep.subr.bf16.mxu0 0
      %3019 = vmatpush2.bf16.msra.mxu0 0
      %3020 = vmatprep.subr.bf16.mxu0 0
      %3021 = vmatpush2.bf16.msra.mxu0 0
      %3022 = vmatprep.subr.bf16.mxu0 0
      %3023 = vmatpush2.bf16.msra.mxu0 0
      %3024 = vmatprep.subr.bf16.mxu0 0
      %3025 = vmatpush2.bf16.msra.mxu0 0
      %3026 = vmatprep.subr.bf16.mxu0 0
      %3027 = vmatpush2.bf16.msra.mxu0 0
      %3028 = vmatprep.subr.bf16.mxu0 0
      %3029 = vmatpush2.bf16.msra.mxu0 0
      %3030 = vmatprep.subr.bf16.mxu0 0
      %3031 = vmatpush2.bf16.msra.mxu0 0
      %3032 = vmatprep.mubr.bf16.mxu0 0
      %3033 = vmatmul.mubr.bf16.gmra.mxu0 %v1361
      %v3034 = vpop.f32.mrf.mxu0
      %v3035 = vadd.f32 0.0, %v3034
      %v3036 = vpop.f32.mrf.mxu0
      %v3037 = vpop.f32.mrf.mxu0
      %v3038 = vadd.f32 0.0, %v3037
      %v3039 = vpop.f32.mrf.mxu0
      %3040 = vmatprep.mubr.bf16.mxu0 0
      %3041 = vmatmul.mubr.bf16.gmra.mxu0 %v1364
      %v3042 = vpop.f32.mrf.mxu0
      %v3043 = vadd.f32 0.0, %v3042
      %v3044 = vpop.f32.mrf.mxu0
      %v3045 = vpop.f32.mrf.mxu0
      %v3046 = vadd.f32 0.0, %v3045
      %v3047 = vpop.f32.mrf.mxu0
      %3048 = vmatprep.mubr.bf16.mxu0 0
      %3049 = vmatmul.mubr.bf16.gmra.mxu0 %v1367
      %v3050 = vpop.f32.mrf.mxu0
      %v3051 = vadd.f32 0.0, %v3050
      %v3052 = vpop.f32.mrf.mxu0
      %v3053 = vpop.f32.mrf.mxu0
      %v3054 = vadd.f32 0.0, %v3053
      %v3055 = vpop.f32.mrf.mxu0
      %3056 = vmatprep.mubr.bf16.mxu0 0
      %3057 = vmatmul.mubr.bf16.gmra.mxu0 %v1370
      %v3058 = vpop.f32.mrf.mxu0
      %v3059 = vadd.f32 0.0, %v3058
      %v3060 = vpop.f32.mrf.mxu0
      %v3061 = vpop.f32.mrf.mxu0
      %v3062 = vadd.f32 0.0, %v3061
      %v3063 = vpop.f32.mrf.mxu0
      %3064 = vmatprep.mubr.bf16.mxu0 0
      %3065 = vmatmul.mubr.bf16.gmra.mxu0 %v1373
      %v3066 = vpop.f32.mrf.mxu0
      %v3067 = vadd.f32 0.0, %v3066
      %v3068 = vpop.f32.mrf.mxu0
      %v3069 = vpop.f32.mrf.mxu0
      %v3070 = vadd.f32 0.0, %v3069
      %v3071 = vpop.f32.mrf.mxu0
      %3072 = vmatprep.mubr.bf16.mxu0 0
      %3073 = vmatmul.mubr.bf16.gmra.mxu0 %v1376
      %v3074 = vpop.f32.mrf.mxu0
      %v3075 = vadd.f32 0.0, %v3074
      %v3076 = vpop.f32.mrf.mxu0
      %v3077 = vpop.f32.mrf.mxu0
      %v3078 = vadd.f32 0.0, %v3077
      %v3079 = vpop.f32.mrf.mxu0
      %3080 = vmatprep.mubr.bf16.mxu0 0
      %3081 = vmatmul.mubr.bf16.gmra.mxu0 %v1379
      %v3082 = vpop.f32.mrf.mxu0
      %v3083 = vadd.f32 0.0, %v3082
      %v3084 = vpop.f32.mrf.mxu0
      %v3085 = vpop.f32.mrf.mxu0
      %v3086 = vadd.f32 0.0, %v3085
      %v3087 = vpop.f32.mrf.mxu0
      %3088 = vmatprep.mubr.bf16.mxu0 0
      %3089 = vmatmul.mubr.bf16.gmra.mxu0 %v1382
      %v3090 = vpop.f32.mrf.mxu0
      %v3091 = vadd.f32 0.0, %v3090
      %v3092 = vpop.f32.mrf.mxu0
      %v3093 = vpop.f32.mrf.mxu0
      %v3094 = vadd.f32 0.0, %v3093
      %v3095 = vpop.f32.mrf.mxu0
      %3096 = vmatprep.mubr.bf16.mxu0 0
      %3097 = vmatmul.mubr.bf16.gmra.mxu0 %v1385
      %v3098 = vpop.f32.mrf.mxu0
      %v3099 = vadd.f32 0.0, %v3098
      %v3100 = vpop.f32.mrf.mxu0
      %v3101 = vpop.f32.mrf.mxu0
      %v3102 = vadd.f32 0.0, %v3101
      %v3103 = vpop.f32.mrf.mxu0
      %3104 = vmatprep.mubr.bf16.mxu0 0
      %3105 = vmatmul.mubr.bf16.gmra.mxu0 %v1388
      %v3106 = vpop.f32.mrf.mxu0
      %v3107 = vadd.f32 0.0, %v3106
      %v3108 = vpop.f32.mrf.mxu0
      %v3109 = vpop.f32.mrf.mxu0
      %v3110 = vadd.f32 0.0, %v3109
      %v3111 = vpop.f32.mrf.mxu0
      %3112 = vmatprep.mubr.bf16.mxu0 0
      %3113 = vmatmul.mubr.bf16.gmra.mxu0 %v1391
      %v3114 = vpop.f32.mrf.mxu0
      %v3115 = vadd.f32 0.0, %v3114
      %v3116 = vpop.f32.mrf.mxu0
      %v3117 = vpop.f32.mrf.mxu0
      %v3118 = vadd.f32 0.0, %v3117
      %v3119 = vpop.f32.mrf.mxu0
      %3120 = vmatprep.mubr.bf16.mxu0 0
      %3121 = vmatmul.mubr.bf16.gmra.mxu0 %v1394
      %v3122 = vpop.f32.mrf.mxu0
      %v3123 = vadd.f32 0.0, %v3122
      %v3124 = vpop.f32.mrf.mxu0
      %v3125 = vpop.f32.mrf.mxu0
      %v3126 = vadd.f32 0.0, %v3125
      %v3127 = vpop.f32.mrf.mxu0
      %3128 = vmatprep.mubr.bf16.mxu0 0
      %3129 = vmatmul.mubr.bf16.gmra.mxu0 %v1397
      %v3130 = vpop.f32.mrf.mxu0
      %v3131 = vadd.f32 0.0, %v3130
      %v3132 = vpop.f32.mrf.mxu0
      %v3133 = vpop.f32.mrf.mxu0
      %v3134 = vadd.f32 0.0, %v3133
      %v3135 = vpop.f32.mrf.mxu0
      %3136 = vmatprep.mubr.bf16.mxu0 0
      %3137 = vmatmul.mubr.bf16.gmra.mxu0 %v1400
      %v3138 = vpop.f32.mrf.mxu0
      %v3139 = vadd.f32 0.0, %v3138
      %v3140 = vpop.f32.mrf.mxu0
      %v3141 = vpop.f32.mrf.mxu0
      %v3142 = vadd.f32 0.0, %v3141
      %v3143 = vpop.f32.mrf.mxu0
      %3144 = vmatprep.mubr.bf16.mxu0 0
      %3145 = vmatmul.mubr.bf16.gmra.mxu0 %v1403
      %v3146 = vpop.f32.mrf.mxu0
      %v3147 = vadd.f32 0.0, %v3146
      %v3148 = vpop.f32.mrf.mxu0
      %v3149 = vpop.f32.mrf.mxu0
      %v3150 = vadd.f32 0.0, %v3149
      %v3151 = vpop.f32.mrf.mxu0
      %3152 = vmatprep.mubr.bf16.mxu0 0
      %3153 = vmatmul.mubr.bf16.gmra.mxu0 %v2995
      %v3154 = vpop.f32.mrf.mxu0
      %v3155 = vadd.f32 0.0, %v3154
      %v3156 = vpop.f32.mrf.mxu0
      %v3157 = vpop.f32.mrf.mxu0
      %v3158 = vadd.f32 0.0, %v3157
      %v3159 = vpop.f32.mrf.mxu0
      %3160 = vdwg.mxu0
      %v3161 = vadd.f32 %v2949, %v3035
      %v3162 = vadd.f32 %v2950, %v3038
      %v3163 = vadd.f32 %v2951, %v3043
      %v3164 = vadd.f32 %v2952, %v3046
      %v3165 = vadd.f32 %v2953, %v3051
      %v3166 = vadd.f32 %v2954, %v3054
      %v3167 = vadd.f32 %v2955, %v3059
      %v3168 = vadd.f32 %v2956, %v3062
      %v3169 = vadd.f32 %v2957, %v3067
      %v3170 = vadd.f32 %v2958, %v3070
      %v3171 = vadd.f32 %v2959, %v3075
      %v3172 = vadd.f32 %v2960, %v3078
      %v3173 = vadd.f32 %v2961, %v3083
      %v3174 = vadd.f32 %v2962, %v3086
      %v3175 = vadd.f32 %v2963, %v3091
      %v3176 = vadd.f32 %v2964, %v3094
      %v3177 = vadd.f32 %v2965, %v3099
      %v3178 = vadd.f32 %v2966, %v3102
      %v3179 = vadd.f32 %v2967, %v3107
      %v3180 = vadd.f32 %v2968, %v3110
      %v3181 = vadd.f32 %v2969, %v3115
      %v3182 = vadd.f32 %v2970, %v3118
      %v3183 = vadd.f32 %v2971, %v3123
      %v3184 = vadd.f32 %v2972, %v3126
      %v3185 = vadd.f32 %v2973, %v3131
      %v3186 = vadd.f32 %v2974, %v3134
      %v3187 = vadd.f32 %v2975, %v3139
      %v3188 = vadd.f32 %v2976, %v3142
      %v3189 = vadd.f32 %v2977, %v3147
      %v3190 = vadd.f32 %v2978, %v3150
      %v3191 = vadd.f32 %v2979, %v3155
      %v3192 = vadd.f32 %v2980, %v3158
      %v3193 = vrot.slane %v2754, 5
      %v3194 = vrot.slane %v2757, 6
      %v3195 = vor.u32 %v3193, %v3194
      %v3196 = vrot.slane %v3195, 4
      %v3197 = vrot.slane %v2767, 5
      %v3198 = vrot.slane %v2763, 6
      %v3199 = vor.u32 %v3197, %v3198
      %v3200 = vsel %vm1603, %v3196, %v3199
      %v3201 = vrot.slane %v3199, 4
      %v3202 = vshrl.u32 %v222, 16
      %v3204 = vrot.slane %v3202, 5
      %v3205 = vrot.slane %v2773, 6
      %v3206 = vor.u32 %v3204, %v3205
      %v3207 = vsel %vm1603, %v3201, %v3206
      %s3208 = scalar_lea.vmem %s1, 16
      %v3209 = vld [vmem:[%s3208] sm:$0x3]
      %v3210 = vunpack.c.l.b16 %v3200
      %v3211 = vunpack.c.l.b16 %v3207
      %v3212 = vpack.c.b16 %v3211, %v3210
      %v3214 = vsel %vm670, %v3212, 0
      %v3217 = vsel %vm719, %v3209, 0
      %3219 = vmatprep.subr.bf16.mxu0 0
      %3220 = vmatpush1.bf16.msra.mxu0 0
      %3221 = vmatprep.subr.bf16.mxu0 0
      %3222 = vmatpush1.bf16.msra.mxu0 0
      %3223 = vmatprep.subr.bf16.mxu0 0
      %3224 = vmatpush1.bf16.msra.mxu0 0
      %3225 = vmatprep.subr.bf16.mxu0 0
      %3226 = vmatpush1.bf16.msra.mxu0 0
      %3227 = vmatprep.subr.bf16.mxu0 0
      %3228 = vmatpush1.bf16.msra.mxu0 0
      %3229 = vmatprep.subr.bf16.mxu0 0
      %3230 = vmatpush1.bf16.msra.mxu0 0
      %3231 = vmatprep.subr.bf16.mxu0 0
      %3232 = vmatpush1.bf16.msra.mxu0 0
      %3233 = vmatprep.subr.bf16.mxu0 0
      %3234 = vmatpush1.bf16.msra.mxu0 %v3217
      %3235 = vmatprep.subr.bf16.mxu0 0
      %3236 = vmatpush2.bf16.msra.mxu0 0
      %3237 = vmatprep.subr.bf16.mxu0 0
      %3238 = vmatpush2.bf16.msra.mxu0 0
      %3239 = vmatprep.subr.bf16.mxu0 0
      %3240 = vmatpush2.bf16.msra.mxu0 0
      %3241 = vmatprep.subr.bf16.mxu0 0
      %3242 = vmatpush2.bf16.msra.mxu0 0
      %3243 = vmatprep.subr.bf16.mxu0 0
      %3244 = vmatpush2.bf16.msra.mxu0 0
      %3245 = vmatprep.subr.bf16.mxu0 0
      %3246 = vmatpush2.bf16.msra.mxu0 0
      %3247 = vmatprep.subr.bf16.mxu0 0
      %3248 = vmatpush2.bf16.msra.mxu0 0
      %3249 = vmatprep.subr.bf16.mxu0 0
      %3250 = vmatpush2.bf16.msra.mxu0 0
      %3251 = vmatprep.mubr.bf16.mxu0 0
      %3252 = vmatmul.mubr.bf16.gmra.mxu0 %v1898
      %v3253 = vpop.f32.mrf.mxu0
      %v3254 = vadd.f32 0.0, %v3253
      %v3255 = vpop.f32.mrf.mxu0
      %v3256 = vpop.f32.mrf.mxu0
      %v3257 = vadd.f32 0.0, %v3256
      %v3258 = vpop.f32.mrf.mxu0
      %3259 = vmatprep.mubr.bf16.mxu0 0
      %3260 = vmatmul.mubr.bf16.gmra.mxu0 %v1901
      %v3261 = vpop.f32.mrf.mxu0
      %v3262 = vadd.f32 0.0, %v3261
      %v3263 = vpop.f32.mrf.mxu0
      %v3264 = vpop.f32.mrf.mxu0
      %v3265 = vadd.f32 0.0, %v3264
      %v3266 = vpop.f32.mrf.mxu0
      %3267 = vmatprep.mubr.bf16.mxu0 0
      %3268 = vmatmul.mubr.bf16.gmra.mxu0 %v1904
      %v3269 = vpop.f32.mrf.mxu0
      %v3270 = vadd.f32 0.0, %v3269
      %v3271 = vpop.f32.mrf.mxu0
      %v3272 = vpop.f32.mrf.mxu0
      %v3273 = vadd.f32 0.0, %v3272
      %v3274 = vpop.f32.mrf.mxu0
      %3275 = vmatprep.mubr.bf16.mxu0 0
      %3276 = vmatmul.mubr.bf16.gmra.mxu0 %v1907
      %v3277 = vpop.f32.mrf.mxu0
      %v3278 = vadd.f32 0.0, %v3277
      %v3279 = vpop.f32.mrf.mxu0
      %v3280 = vpop.f32.mrf.mxu0
      %v3281 = vadd.f32 0.0, %v3280
      %v3282 = vpop.f32.mrf.mxu0
      %3283 = vmatprep.mubr.bf16.mxu0 0
      %3284 = vmatmul.mubr.bf16.gmra.mxu0 %v1910
      %v3285 = vpop.f32.mrf.mxu0
      %v3286 = vadd.f32 0.0, %v3285
      %v3287 = vpop.f32.mrf.mxu0
      %v3288 = vpop.f32.mrf.mxu0
      %v3289 = vadd.f32 0.0, %v3288
      %v3290 = vpop.f32.mrf.mxu0
      %3291 = vmatprep.mubr.bf16.mxu0 0
      %3292 = vmatmul.mubr.bf16.gmra.mxu0 %v1913
      %v3293 = vpop.f32.mrf.mxu0
      %v3294 = vadd.f32 0.0, %v3293
      %v3295 = vpop.f32.mrf.mxu0
      %v3296 = vpop.f32.mrf.mxu0
      %v3297 = vadd.f32 0.0, %v3296
      %v3298 = vpop.f32.mrf.mxu0
      %3299 = vmatprep.mubr.bf16.mxu0 0
      %3300 = vmatmul.mubr.bf16.gmra.mxu0 %v1916
      %v3301 = vpop.f32.mrf.mxu0
      %v3302 = vadd.f32 0.0, %v3301
      %v3303 = vpop.f32.mrf.mxu0
      %v3304 = vpop.f32.mrf.mxu0
      %v3305 = vadd.f32 0.0, %v3304
      %v3306 = vpop.f32.mrf.mxu0
      %3307 = vmatprep.mubr.bf16.mxu0 0
      %3308 = vmatmul.mubr.bf16.gmra.mxu0 %v1919
      %v3309 = vpop.f32.mrf.mxu0
      %v3310 = vadd.f32 0.0, %v3309
      %v3311 = vpop.f32.mrf.mxu0
      %v3312 = vpop.f32.mrf.mxu0
      %v3313 = vadd.f32 0.0, %v3312
      %v3314 = vpop.f32.mrf.mxu0
      %3315 = vmatprep.mubr.bf16.mxu0 0
      %3316 = vmatmul.mubr.bf16.gmra.mxu0 %v1922
      %v3317 = vpop.f32.mrf.mxu0
      %v3318 = vadd.f32 0.0, %v3317
      %v3319 = vpop.f32.mrf.mxu0
      %v3320 = vpop.f32.mrf.mxu0
      %v3321 = vadd.f32 0.0, %v3320
      %v3322 = vpop.f32.mrf.mxu0
      %3323 = vmatprep.mubr.bf16.mxu0 0
      %3324 = vmatmul.mubr.bf16.gmra.mxu0 %v1925
      %v3325 = vpop.f32.mrf.mxu0
      %v3326 = vadd.f32 0.0, %v3325
      %v3327 = vpop.f32.mrf.mxu0
      %v3328 = vpop.f32.mrf.mxu0
      %v3329 = vadd.f32 0.0, %v3328
      %v3330 = vpop.f32.mrf.mxu0
      %3331 = vmatprep.mubr.bf16.mxu0 0
      %3332 = vmatmul.mubr.bf16.gmra.mxu0 %v1928
      %v3333 = vpop.f32.mrf.mxu0
      %v3334 = vadd.f32 0.0, %v3333
      %v3335 = vpop.f32.mrf.mxu0
      %v3336 = vpop.f32.mrf.mxu0
      %v3337 = vadd.f32 0.0, %v3336
      %v3338 = vpop.f32.mrf.mxu0
      %3339 = vmatprep.mubr.bf16.mxu0 0
      %3340 = vmatmul.mubr.bf16.gmra.mxu0 %v1931
      %v3341 = vpop.f32.mrf.mxu0
      %v3342 = vadd.f32 0.0, %v3341
      %v3343 = vpop.f32.mrf.mxu0
      %v3344 = vpop.f32.mrf.mxu0
      %v3345 = vadd.f32 0.0, %v3344
      %v3346 = vpop.f32.mrf.mxu0
      %3347 = vmatprep.mubr.bf16.mxu0 0
      %3348 = vmatmul.mubr.bf16.gmra.mxu0 %v1934
      %v3349 = vpop.f32.mrf.mxu0
      %v3350 = vadd.f32 0.0, %v3349
      %v3351 = vpop.f32.mrf.mxu0
      %v3352 = vpop.f32.mrf.mxu0
      %v3353 = vadd.f32 0.0, %v3352
      %v3354 = vpop.f32.mrf.mxu0
      %3355 = vmatprep.mubr.bf16.mxu0 0
      %3356 = vmatmul.mubr.bf16.gmra.mxu0 %v1937
      %v3357 = vpop.f32.mrf.mxu0
      %v3358 = vadd.f32 0.0, %v3357
      %v3359 = vpop.f32.mrf.mxu0
      %v3360 = vpop.f32.mrf.mxu0
      %v3361 = vadd.f32 0.0, %v3360
      %v3362 = vpop.f32.mrf.mxu0
      %3363 = vmatprep.mubr.bf16.mxu0 0
      %3364 = vmatmul.mubr.bf16.gmra.mxu0 %v1940
      %v3365 = vpop.f32.mrf.mxu0
      %v3366 = vadd.f32 0.0, %v3365
      %v3367 = vpop.f32.mrf.mxu0
      %v3368 = vpop.f32.mrf.mxu0
      %v3369 = vadd.f32 0.0, %v3368
      %v3370 = vpop.f32.mrf.mxu0
      %3371 = vmatprep.mubr.bf16.mxu0 0
      %3372 = vmatmul.mubr.bf16.gmra.mxu0 %v3214
      %v3373 = vpop.f32.mrf.mxu0
      %v3374 = vadd.f32 0.0, %v3373
      %v3375 = vpop.f32.mrf.mxu0
      %v3376 = vpop.f32.mrf.mxu0
      %v3377 = vadd.f32 0.0, %v3376
      %v3378 = vpop.f32.mrf.mxu0
      %3379 = vdwg.mxu0
      %v3380 = vadd.f32 %v3161, %v3254
      %v3381 = vadd.f32 %v3162, %v3257
      %v3382 = vadd.f32 %v3163, %v3262
      %v3383 = vadd.f32 %v3164, %v3265
      %v3384 = vadd.f32 %v3165, %v3270
      %v3385 = vadd.f32 %v3166, %v3273
      %v3386 = vadd.f32 %v3167, %v3278
      %v3387 = vadd.f32 %v3168, %v3281
      %v3388 = vadd.f32 %v3169, %v3286
      %v3389 = vadd.f32 %v3170, %v3289
      %v3390 = vadd.f32 %v3171, %v3294
      %v3391 = vadd.f32 %v3172, %v3297
      %v3392 = vadd.f32 %v3173, %v3302
      %v3393 = vadd.f32 %v3174, %v3305
      %v3394 = vadd.f32 %v3175, %v3310
      %v3395 = vadd.f32 %v3176, %v3313
      %v3396 = vadd.f32 %v3177, %v3318
      %v3397 = vadd.f32 %v3178, %v3321
      %v3398 = vadd.f32 %v3179, %v3326
      %v3399 = vadd.f32 %v3180, %v3329
      %v3400 = vadd.f32 %v3181, %v3334
      %v3401 = vadd.f32 %v3182, %v3337
      %v3402 = vadd.f32 %v3183, %v3342
      %v3403 = vadd.f32 %v3184, %v3345
      %v3404 = vadd.f32 %v3185, %v3350
      %v3405 = vadd.f32 %v3186, %v3353
      %v3406 = vadd.f32 %v3187, %v3358
      %v3407 = vadd.f32 %v3188, %v3361
      %v3408 = vadd.f32 %v3189, %v3366
      %v3409 = vadd.f32 %v3190, %v3369
      %v3410 = vadd.f32 %v3191, %v3374
      %v3411 = vadd.f32 %v3192, %v3377
      %v3412 = vrot.slane %v220, 6
      %v3413 = vrot.slane %v3412, 4
      %v3414 = vrot.slane %v221, 6
      %v3415 = vsel %vm2140, %v3413, %v3414
      %v3416 = vrot.slane %v3414, 4
      %v3417 = vrot.slane %v222, 6
      %v3418 = vsel %vm2140, %v3416, %v3417
      %s3419 = scalar_lea.vmem %s1, 18
      %v3420 = vld [vmem:[%s3419] sm:$0x3]
      %v3421 = vunpack.c.l.b16 %v3415
      %v3422 = vunpack.c.l.b16 %v3418
      %v3423 = vpack.c.b16 %v3422, %v3421
      %v3425 = vsel %vm670, %v3423, 0
      %v3428 = vsel %vm719, %v3420, 0
      %3430 = vmatprep.subr.bf16.mxu0 0
      %3431 = vmatpush1.bf16.msra.mxu0 0
      %3432 = vmatprep.subr.bf16.mxu0 0
      %3433 = vmatpush1.bf16.msra.mxu0 0
      %3434 = vmatprep.subr.bf16.mxu0 0
      %3435 = vmatpush1.bf16.msra.mxu0 0
      %3436 = vmatprep.subr.bf16.mxu0 0
      %3437 = vmatpush1.bf16.msra.mxu0 0
      %3438 = vmatprep.subr.bf16.mxu0 0
      %3439 = vmatpush1.bf16.msra.mxu0 0
      %3440 = vmatprep.subr.bf16.mxu0 0
      %3441 = vmatpush1.bf16.msra.mxu0 0
      %3442 = vmatprep.subr.bf16.mxu0 0
      %3443 = vmatpush1.bf16.msra.mxu0 0
      %3444 = vmatprep.subr.bf16.mxu0 0
      %3445 = vmatpush1.bf16.msra.mxu0 %v3428
      %3446 = vmatprep.subr.bf16.mxu0 0
      %3447 = vmatpush2.bf16.msra.mxu0 0
      %3448 = vmatprep.subr.bf16.mxu0 0
      %3449 = vmatpush2.bf16.msra.mxu0 0
      %3450 = vmatprep.subr.bf16.mxu0 0
      %3451 = vmatpush2.bf16.msra.mxu0 0
      %3452 = vmatprep.subr.bf16.mxu0 0
      %3453 = vmatpush2.bf16.msra.mxu0 0
      %3454 = vmatprep.subr.bf16.mxu0 0
      %3455 = vmatpush2.bf16.msra.mxu0 0
      %3456 = vmatprep.subr.bf16.mxu0 0
      %3457 = vmatpush2.bf16.msra.mxu0 0
      %3458 = vmatprep.subr.bf16.mxu0 0
      %3459 = vmatpush2.bf16.msra.mxu0 0
      %3460 = vmatprep.subr.bf16.mxu0 0
      %3461 = vmatpush2.bf16.msra.mxu0 0
      %3462 = vmatprep.mubr.bf16.mxu0 0
      %3463 = vmatmul.mubr.bf16.gmra.mxu0 %v2307
      %v3464 = vpop.f32.mrf.mxu0
      %v3465 = vadd.f32 0.0, %v3464
      %v3466 = vpop.f32.mrf.mxu0
      %v3467 = vpop.f32.mrf.mxu0
      %v3468 = vadd.f32 0.0, %v3467
      %v3469 = vpop.f32.mrf.mxu0
      %3470 = vmatprep.mubr.bf16.mxu0 0
      %3471 = vmatmul.mubr.bf16.gmra.mxu0 %v2310
      %v3472 = vpop.f32.mrf.mxu0
      %v3473 = vadd.f32 0.0, %v3472
      %v3474 = vpop.f32.mrf.mxu0
      %v3475 = vpop.f32.mrf.mxu0
      %v3476 = vadd.f32 0.0, %v3475
      %v3477 = vpop.f32.mrf.mxu0
      %3478 = vmatprep.mubr.bf16.mxu0 0
      %3479 = vmatmul.mubr.bf16.gmra.mxu0 %v2313
      %v3480 = vpop.f32.mrf.mxu0
      %v3481 = vadd.f32 0.0, %v3480
      %v3482 = vpop.f32.mrf.mxu0
      %v3483 = vpop.f32.mrf.mxu0
      %v3484 = vadd.f32 0.0, %v3483
      %v3485 = vpop.f32.mrf.mxu0
      %3486 = vmatprep.mubr.bf16.mxu0 0
      %3487 = vmatmul.mubr.bf16.gmra.mxu0 %v2316
      %v3488 = vpop.f32.mrf.mxu0
      %v3489 = vadd.f32 0.0, %v3488
      %v3490 = vpop.f32.mrf.mxu0
      %v3491 = vpop.f32.mrf.mxu0
      %v3492 = vadd.f32 0.0, %v3491
      %v3493 = vpop.f32.mrf.mxu0
      %3494 = vmatprep.mubr.bf16.mxu0 0
      %3495 = vmatmul.mubr.bf16.gmra.mxu0 %v2319
      %v3496 = vpop.f32.mrf.mxu0
      %v3497 = vadd.f32 0.0, %v3496
      %v3498 = vpop.f32.mrf.mxu0
      %v3499 = vpop.f32.mrf.mxu0
      %v3500 = vadd.f32 0.0, %v3499
      %v3501 = vpop.f32.mrf.mxu0
      %3502 = vmatprep.mubr.bf16.mxu0 0
      %3503 = vmatmul.mubr.bf16.gmra.mxu0 %v2322
      %v3504 = vpop.f32.mrf.mxu0
      %v3505 = vadd.f32 0.0, %v3504
      %v3506 = vpop.f32.mrf.mxu0
      %v3507 = vpop.f32.mrf.mxu0
      %v3508 = vadd.f32 0.0, %v3507
      %v3509 = vpop.f32.mrf.mxu0
      %3510 = vmatprep.mubr.bf16.mxu0 0
      %3511 = vmatmul.mubr.bf16.gmra.mxu0 %v2325
      %v3512 = vpop.f32.mrf.mxu0
      %v3513 = vadd.f32 0.0, %v3512
      %v3514 = vpop.f32.mrf.mxu0
      %v3515 = vpop.f32.mrf.mxu0
      %v3516 = vadd.f32 0.0, %v3515
      %v3517 = vpop.f32.mrf.mxu0
      %3518 = vmatprep.mubr.bf16.mxu0 0
      %3519 = vmatmul.mubr.bf16.gmra.mxu0 %v2328
      %v3520 = vpop.f32.mrf.mxu0
      %v3521 = vadd.f32 0.0, %v3520
      %v3522 = vpop.f32.mrf.mxu0
      %v3523 = vpop.f32.mrf.mxu0
      %v3524 = vadd.f32 0.0, %v3523
      %v3525 = vpop.f32.mrf.mxu0
      %3526 = vmatprep.mubr.bf16.mxu0 0
      %3527 = vmatmul.mubr.bf16.gmra.mxu0 %v2331
      %v3528 = vpop.f32.mrf.mxu0
      %v3529 = vadd.f32 0.0, %v3528
      %v3530 = vpop.f32.mrf.mxu0
      %v3531 = vpop.f32.mrf.mxu0
      %v3532 = vadd.f32 0.0, %v3531
      %v3533 = vpop.f32.mrf.mxu0
      %3534 = vmatprep.mubr.bf16.mxu0 0
      %3535 = vmatmul.mubr.bf16.gmra.mxu0 %v2334
      %v3536 = vpop.f32.mrf.mxu0
      %v3537 = vadd.f32 0.0, %v3536
      %v3538 = vpop.f32.mrf.mxu0
      %v3539 = vpop.f32.mrf.mxu0
      %v3540 = vadd.f32 0.0, %v3539
      %v3541 = vpop.f32.mrf.mxu0
      %3542 = vmatprep.mubr.bf16.mxu0 0
      %3543 = vmatmul.mubr.bf16.gmra.mxu0 %v2337
      %v3544 = vpop.f32.mrf.mxu0
      %v3545 = vadd.f32 0.0, %v3544
      %v3546 = vpop.f32.mrf.mxu0
      %v3547 = vpop.f32.mrf.mxu0
      %v3548 = vadd.f32 0.0, %v3547
      %v3549 = vpop.f32.mrf.mxu0
      %3550 = vmatprep.mubr.bf16.mxu0 0
      %3551 = vmatmul.mubr.bf16.gmra.mxu0 %v2340
      %v3552 = vpop.f32.mrf.mxu0
      %v3553 = vadd.f32 0.0, %v3552
      %v3554 = vpop.f32.mrf.mxu0
      %v3555 = vpop.f32.mrf.mxu0
      %v3556 = vadd.f32 0.0, %v3555
      %v3557 = vpop.f32.mrf.mxu0
      %3558 = vmatprep.mubr.bf16.mxu0 0
      %3559 = vmatmul.mubr.bf16.gmra.mxu0 %v2343
      %v3560 = vpop.f32.mrf.mxu0
      %v3561 = vadd.f32 0.0, %v3560
      %v3562 = vpop.f32.mrf.mxu0
      %v3563 = vpop.f32.mrf.mxu0
      %v3564 = vadd.f32 0.0, %v3563
      %v3565 = vpop.f32.mrf.mxu0
      %3566 = vmatprep.mubr.bf16.mxu0 0
      %3567 = vmatmul.mubr.bf16.gmra.mxu0 %v2346
      %v3568 = vpop.f32.mrf.mxu0
      %v3569 = vadd.f32 0.0, %v3568
      %v3570 = vpop.f32.mrf.mxu0
      %v3571 = vpop.f32.mrf.mxu0
      %v3572 = vadd.f32 0.0, %v3571
      %v3573 = vpop.f32.mrf.mxu0
      %3574 = vmatprep.mubr.bf16.mxu0 0
      %3575 = vmatmul.mubr.bf16.gmra.mxu0 %v2349
      %v3576 = vpop.f32.mrf.mxu0
      %v3577 = vadd.f32 0.0, %v3576
      %v3578 = vpop.f32.mrf.mxu0
      %v3579 = vpop.f32.mrf.mxu0
      %v3580 = vadd.f32 0.0, %v3579
      %v3581 = vpop.f32.mrf.mxu0
      %3582 = vmatprep.mubr.bf16.mxu0 0
      %3583 = vmatmul.mubr.bf16.gmra.mxu0 %v3425
      %v3584 = vpop.f32.mrf.mxu0
      %v3585 = vadd.f32 0.0, %v3584
      %v3586 = vpop.f32.mrf.mxu0
      %v3587 = vpop.f32.mrf.mxu0
      %v3588 = vadd.f32 0.0, %v3587
      %v3589 = vpop.f32.mrf.mxu0
      %3590 = vdwg.mxu0
      %v3591 = vadd.f32 %v3380, %v3465
      %v3592 = vadd.f32 %v3381, %v3468
      %v3593 = vadd.f32 %v3382, %v3473
      %v3594 = vadd.f32 %v3383, %v3476
      %v3595 = vadd.f32 %v3384, %v3481
      %v3596 = vadd.f32 %v3385, %v3484
      %v3597 = vadd.f32 %v3386, %v3489
      %v3598 = vadd.f32 %v3387, %v3492
      %v3599 = vadd.f32 %v3388, %v3497
      %v3600 = vadd.f32 %v3389, %v3500
      %v3601 = vadd.f32 %v3390, %v3505
      %v3602 = vadd.f32 %v3391, %v3508
      %v3603 = vadd.f32 %v3392, %v3513
      %v3604 = vadd.f32 %v3393, %v3516
      %v3605 = vadd.f32 %v3394, %v3521
      %v3606 = vadd.f32 %v3395, %v3524
      %v3607 = vadd.f32 %v3396, %v3529
      %v3608 = vadd.f32 %v3397, %v3532
      %v3609 = vadd.f32 %v3398, %v3537
      %v3610 = vadd.f32 %v3399, %v3540
      %v3611 = vadd.f32 %v3400, %v3545
      %v3612 = vadd.f32 %v3401, %v3548
      %v3613 = vadd.f32 %v3402, %v3553
      %v3614 = vadd.f32 %v3403, %v3556
      %v3615 = vadd.f32 %v3404, %v3561
      %v3616 = vadd.f32 %v3405, %v3564
      %v3617 = vadd.f32 %v3406, %v3569
      %v3618 = vadd.f32 %v3407, %v3572
      %v3619 = vadd.f32 %v3408, %v3577
      %v3620 = vadd.f32 %v3409, %v3580
      %v3621 = vadd.f32 %v3410, %v3585
      %v3622 = vadd.f32 %v3411, %v3588
      %s3623 = scalar_lea.vmem %s1, 20
      %v3624 = vld [vmem:[%s3623] sm:$0x3]
      %v3627 = vunpack.c.l.b16 %v223
      %v3628 = vunpack.c.l.b16 %v224
      %v3629 = vpack.c.b16 %v3628, %v3627
      %v3631 = vsel %vm670, %v3629, 0
      %v3634 = vsel %vm719, %v3624, 0
      %3636 = vmatprep.subr.bf16.mxu0 0
      %3637 = vmatpush1.bf16.msra.mxu0 0
      %3638 = vmatprep.subr.bf16.mxu0 0
      %3639 = vmatpush1.bf16.msra.mxu0 0
      %3640 = vmatprep.subr.bf16.mxu0 0
      %3641 = vmatpush1.bf16.msra.mxu0 0
      %3642 = vmatprep.subr.bf16.mxu0 0
      %3643 = vmatpush1.bf16.msra.mxu0 0
      %3644 = vmatprep.subr.bf16.mxu0 0
      %3645 = vmatpush1.bf16.msra.mxu0 0
      %3646 = vmatprep.subr.bf16.mxu0 0
      %3647 = vmatpush1.bf16.msra.mxu0 0
      %3648 = vmatprep.subr.bf16.mxu0 0
      %3649 = vmatpush1.bf16.msra.mxu0 0
      %3650 = vmatprep.subr.bf16.mxu0 0
      %3651 = vmatpush1.bf16.msra.mxu0 %v3634
      %3652 = vmatprep.subr.bf16.mxu0 0
      %3653 = vmatpush2.bf16.msra.mxu0 0
      %3654 = vmatprep.subr.bf16.mxu0 0
      %3655 = vmatpush2.bf16.msra.mxu0 0
      %3656 = vmatprep.subr.bf16.mxu0 0
      %3657 = vmatpush2.bf16.msra.mxu0 0
      %3658 = vmatprep.subr.bf16.mxu0 0
      %3659 = vmatpush2.bf16.msra.mxu0 0
      %3660 = vmatprep.subr.bf16.mxu0 0
      %3661 = vmatpush2.bf16.msra.mxu0 0
      %3662 = vmatprep.subr.bf16.mxu0 0
      %3663 = vmatpush2.bf16.msra.mxu0 0
      %3664 = vmatprep.subr.bf16.mxu0 0
      %3665 = vmatpush2.bf16.msra.mxu0 0
      %3666 = vmatprep.subr.bf16.mxu0 0
      %3667 = vmatpush2.bf16.msra.mxu0 0
      %3668 = vmatprep.mubr.bf16.mxu0 0
      %3669 = vmatmul.mubr.bf16.gmra.mxu0 %v971
      %v3670 = vpop.f32.mrf.mxu0
      %v3671 = vadd.f32 0.0, %v3670
      %v3672 = vpop.f32.mrf.mxu0
      %v3673 = vpop.f32.mrf.mxu0
      %v3674 = vadd.f32 0.0, %v3673
      %v3675 = vpop.f32.mrf.mxu0
      %3676 = vmatprep.mubr.bf16.mxu0 0
      %3677 = vmatmul.mubr.bf16.gmra.mxu0 %v974
      %v3678 = vpop.f32.mrf.mxu0
      %v3679 = vadd.f32 0.0, %v3678
      %v3680 = vpop.f32.mrf.mxu0
      %v3681 = vpop.f32.mrf.mxu0
      %v3682 = vadd.f32 0.0, %v3681
      %v3683 = vpop.f32.mrf.mxu0
      %3684 = vmatprep.mubr.bf16.mxu0 0
      %3685 = vmatmul.mubr.bf16.gmra.mxu0 %v977
      %v3686 = vpop.f32.mrf.mxu0
      %v3687 = vadd.f32 0.0, %v3686
      %v3688 = vpop.f32.mrf.mxu0
      %v3689 = vpop.f32.mrf.mxu0
      %v3690 = vadd.f32 0.0, %v3689
      %v3691 = vpop.f32.mrf.mxu0
      %3692 = vmatprep.mubr.bf16.mxu0 0
      %3693 = vmatmul.mubr.bf16.gmra.mxu0 %v980
      %v3694 = vpop.f32.mrf.mxu0
      %v3695 = vadd.f32 0.0, %v3694
      %v3696 = vpop.f32.mrf.mxu0
      %v3697 = vpop.f32.mrf.mxu0
      %v3698 = vadd.f32 0.0, %v3697
      %v3699 = vpop.f32.mrf.mxu0
      %3700 = vmatprep.mubr.bf16.mxu0 0
      %3701 = vmatmul.mubr.bf16.gmra.mxu0 %v983
      %v3702 = vpop.f32.mrf.mxu0
      %v3703 = vadd.f32 0.0, %v3702
      %v3704 = vpop.f32.mrf.mxu0
      %v3705 = vpop.f32.mrf.mxu0
      %v3706 = vadd.f32 0.0, %v3705
      %v3707 = vpop.f32.mrf.mxu0
      %3708 = vmatprep.mubr.bf16.mxu0 0
      %3709 = vmatmul.mubr.bf16.gmra.mxu0 %v986
      %v3710 = vpop.f32.mrf.mxu0
      %v3711 = vadd.f32 0.0, %v3710
      %v3712 = vpop.f32.mrf.mxu0
      %v3713 = vpop.f32.mrf.mxu0
      %v3714 = vadd.f32 0.0, %v3713
      %v3715 = vpop.f32.mrf.mxu0
      %3716 = vmatprep.mubr.bf16.mxu0 0
      %3717 = vmatmul.mubr.bf16.gmra.mxu0 %v989
      %v3718 = vpop.f32.mrf.mxu0
      %v3719 = vadd.f32 0.0, %v3718
      %v3720 = vpop.f32.mrf.mxu0
      %v3721 = vpop.f32.mrf.mxu0
      %v3722 = vadd.f32 0.0, %v3721
      %v3723 = vpop.f32.mrf.mxu0
      %3724 = vmatprep.mubr.bf16.mxu0 0
      %3725 = vmatmul.mubr.bf16.gmra.mxu0 %v992
      %v3726 = vpop.f32.mrf.mxu0
      %v3727 = vadd.f32 0.0, %v3726
      %v3728 = vpop.f32.mrf.mxu0
      %v3729 = vpop.f32.mrf.mxu0
      %v3730 = vadd.f32 0.0, %v3729
      %v3731 = vpop.f32.mrf.mxu0
      %3732 = vmatprep.mubr.bf16.mxu0 0
      %3733 = vmatmul.mubr.bf16.gmra.mxu0 %v995
      %v3734 = vpop.f32.mrf.mxu0
      %v3735 = vadd.f32 0.0, %v3734
      %v3736 = vpop.f32.mrf.mxu0
      %v3737 = vpop.f32.mrf.mxu0
      %v3738 = vadd.f32 0.0, %v3737
      %v3739 = vpop.f32.mrf.mxu0
      %3740 = vmatprep.mubr.bf16.mxu0 0
      %3741 = vmatmul.mubr.bf16.gmra.mxu0 %v998
      %v3742 = vpop.f32.mrf.mxu0
      %v3743 = vadd.f32 0.0, %v3742
      %v3744 = vpop.f32.mrf.mxu0
      %v3745 = vpop.f32.mrf.mxu0
      %v3746 = vadd.f32 0.0, %v3745
      %v3747 = vpop.f32.mrf.mxu0
      %3748 = vmatprep.mubr.bf16.mxu0 0
      %3749 = vmatmul.mubr.bf16.gmra.mxu0 %v1001
      %v3750 = vpop.f32.mrf.mxu0
      %v3751 = vadd.f32 0.0, %v3750
      %v3752 = vpop.f32.mrf.mxu0
      %v3753 = vpop.f32.mrf.mxu0
      %v3754 = vadd.f32 0.0, %v3753
      %v3755 = vpop.f32.mrf.mxu0
      %3756 = vmatprep.mubr.bf16.mxu0 0
      %3757 = vmatmul.mubr.bf16.gmra.mxu0 %v1004
      %v3758 = vpop.f32.mrf.mxu0
      %v3759 = vadd.f32 0.0, %v3758
      %v3760 = vpop.f32.mrf.mxu0
      %v3761 = vpop.f32.mrf.mxu0
      %v3762 = vadd.f32 0.0, %v3761
      %v3763 = vpop.f32.mrf.mxu0
      %3764 = vmatprep.mubr.bf16.mxu0 0
      %3765 = vmatmul.mubr.bf16.gmra.mxu0 %v1007
      %v3766 = vpop.f32.mrf.mxu0
      %v3767 = vadd.f32 0.0, %v3766
      %v3768 = vpop.f32.mrf.mxu0
      %v3769 = vpop.f32.mrf.mxu0
      %v3770 = vadd.f32 0.0, %v3769
      %v3771 = vpop.f32.mrf.mxu0
      %3772 = vmatprep.mubr.bf16.mxu0 0
      %3773 = vmatmul.mubr.bf16.gmra.mxu0 %v1010
      %v3774 = vpop.f32.mrf.mxu0
      %v3775 = vadd.f32 0.0, %v3774
      %v3776 = vpop.f32.mrf.mxu0
      %v3777 = vpop.f32.mrf.mxu0
      %v3778 = vadd.f32 0.0, %v3777
      %v3779 = vpop.f32.mrf.mxu0
      %3780 = vmatprep.mubr.bf16.mxu0 0
      %3781 = vmatmul.mubr.bf16.gmra.mxu0 %v2555
      %v3782 = vpop.f32.mrf.mxu0
      %v3783 = vadd.f32 0.0, %v3782
      %v3784 = vpop.f32.mrf.mxu0
      %v3785 = vpop.f32.mrf.mxu0
      %v3786 = vadd.f32 0.0, %v3785
      %v3787 = vpop.f32.mrf.mxu0
      %3788 = vmatprep.mubr.bf16.mxu0 0
      %3789 = vmatmul.mubr.bf16.gmra.mxu0 %v3631
      %v3790 = vpop.f32.mrf.mxu0
      %v3791 = vadd.f32 0.0, %v3790
      %v3792 = vpop.f32.mrf.mxu0
      %v3793 = vpop.f32.mrf.mxu0
      %v3794 = vadd.f32 0.0, %v3793
      %v3795 = vpop.f32.mrf.mxu0
      %3796 = vdwg.mxu0
      %v3797 = vadd.f32 %v3591, %v3671
      %v3798 = vadd.f32 %v3592, %v3674
      %v3799 = vadd.f32 %v3593, %v3679
      %v3800 = vadd.f32 %v3594, %v3682
      %v3801 = vadd.f32 %v3595, %v3687
      %v3802 = vadd.f32 %v3596, %v3690
      %v3803 = vadd.f32 %v3597, %v3695
      %v3804 = vadd.f32 %v3598, %v3698
      %v3805 = vadd.f32 %v3599, %v3703
      %v3806 = vadd.f32 %v3600, %v3706
      %v3807 = vadd.f32 %v3601, %v3711
      %v3808 = vadd.f32 %v3602, %v3714
      %v3809 = vadd.f32 %v3603, %v3719
      %v3810 = vadd.f32 %v3604, %v3722
      %v3811 = vadd.f32 %v3605, %v3727
      %v3812 = vadd.f32 %v3606, %v3730
      %v3813 = vadd.f32 %v3607, %v3735
      %v3814 = vadd.f32 %v3608, %v3738
      %v3815 = vadd.f32 %v3609, %v3743
      %v3816 = vadd.f32 %v3610, %v3746
      %v3817 = vadd.f32 %v3611, %v3751
      %v3818 = vadd.f32 %v3612, %v3754
      %v3819 = vadd.f32 %v3613, %v3759
      %v3820 = vadd.f32 %v3614, %v3762
      %v3821 = vadd.f32 %v3615, %v3767
      %v3822 = vadd.f32 %v3616, %v3770
      %v3823 = vadd.f32 %v3617, %v3775
      %v3824 = vadd.f32 %v3618, %v3778
      %v3825 = vadd.f32 %v3619, %v3783
      %v3826 = vadd.f32 %v3620, %v3786
      %v3827 = vadd.f32 %v3621, %v3791
      %v3828 = vadd.f32 %v3622, %v3794
      %v3830 = vshrl.u32 %v223, 16
      %v3832 = vrot.slane %v3830, 4
      %v3833 = vshll.u32 %v223, 16
      %v3835 = vrot.slane %v3833, 5
      %v3836 = vor.u32 %v3832, %v3835
      %v3837 = vrot.slane %v3836, 4
      %v3839 = vshll.u32 %v224, 16
      %v3841 = vrot.slane %v3839, 5
      %v3842 = vsel %vm235, %v3837, %v3841
      %v3843 = vshrl.u32 %v224, 16
      %v3845 = vrot.slane %v3843, 4
      %v3846 = vor.u32 %v3845, %v3841
      %v3847 = vrot.slane %v3846, 4
      %v3849 = vshll.u32 %v225, 16
      %v3851 = vrot.slane %v3849, 5
      %v3852 = vsel %vm235, %v3847, %v3851
      %s3853 = scalar_lea.vmem %s1, 22
      %v3854 = vld [vmem:[%s3853] sm:$0x3]
      %v3855 = vunpack.c.l.b16 %v3842
      %v3856 = vunpack.c.l.b16 %v3852
      %v3857 = vpack.c.b16 %v3856, %v3855
      %v3859 = vsel %vm670, %v3857, 0
      %v3862 = vsel %vm719, %v3854, 0
      %3864 = vmatprep.subr.bf16.mxu0 0
      %3865 = vmatpush1.bf16.msra.mxu0 0
      %3866 = vmatprep.subr.bf16.mxu0 0
      %3867 = vmatpush1.bf16.msra.mxu0 0
      %3868 = vmatprep.subr.bf16.mxu0 0
      %3869 = vmatpush1.bf16.msra.mxu0 0
      %3870 = vmatprep.subr.bf16.mxu0 0
      %3871 = vmatpush1.bf16.msra.mxu0 0
      %3872 = vmatprep.subr.bf16.mxu0 0
      %3873 = vmatpush1.bf16.msra.mxu0 0
      %3874 = vmatprep.subr.bf16.mxu0 0
      %3875 = vmatpush1.bf16.msra.mxu0 0
      %3876 = vmatprep.subr.bf16.mxu0 0
      %3877 = vmatpush1.bf16.msra.mxu0 0
      %3878 = vmatprep.subr.bf16.mxu0 0
      %3879 = vmatpush1.bf16.msra.mxu0 %v3862
      %3880 = vmatprep.subr.bf16.mxu0 0
      %3881 = vmatpush2.bf16.msra.mxu0 0
      %3882 = vmatprep.subr.bf16.mxu0 0
      %3883 = vmatpush2.bf16.msra.mxu0 0
      %3884 = vmatprep.subr.bf16.mxu0 0
      %3885 = vmatpush2.bf16.msra.mxu0 0
      %3886 = vmatprep.subr.bf16.mxu0 0
      %3887 = vmatpush2.bf16.msra.mxu0 0
      %3888 = vmatprep.subr.bf16.mxu0 0
      %3889 = vmatpush2.bf16.msra.mxu0 0
      %3890 = vmatprep.subr.bf16.mxu0 0
      %3891 = vmatpush2.bf16.msra.mxu0 0
      %3892 = vmatprep.subr.bf16.mxu0 0
      %3893 = vmatpush2.bf16.msra.mxu0 0
      %3894 = vmatprep.subr.bf16.mxu0 0
      %3895 = vmatpush2.bf16.msra.mxu0 0
      %3896 = vmatprep.mubr.bf16.mxu0 0
      %3897 = vmatmul.mubr.bf16.gmra.mxu0 %v678
      %v3898 = vpop.f32.mrf.mxu0
      %v3899 = vadd.f32 0.0, %v3898
      %v3900 = vpop.f32.mrf.mxu0
      %v3901 = vpop.f32.mrf.mxu0
      %v3902 = vadd.f32 0.0, %v3901
      %v3903 = vpop.f32.mrf.mxu0
      %3904 = vmatprep.mubr.bf16.mxu0 0
      %3905 = vmatmul.mubr.bf16.gmra.mxu0 %v681
      %v3906 = vpop.f32.mrf.mxu0
      %v3907 = vadd.f32 0.0, %v3906
      %v3908 = vpop.f32.mrf.mxu0
      %v3909 = vpop.f32.mrf.mxu0
      %v3910 = vadd.f32 0.0, %v3909
      %v3911 = vpop.f32.mrf.mxu0
      %3912 = vmatprep.mubr.bf16.mxu0 0
      %3913 = vmatmul.mubr.bf16.gmra.mxu0 %v684
      %v3914 = vpop.f32.mrf.mxu0
      %v3915 = vadd.f32 0.0, %v3914
      %v3916 = vpop.f32.mrf.mxu0
      %v3917 = vpop.f32.mrf.mxu0
      %v3918 = vadd.f32 0.0, %v3917
      %v3919 = vpop.f32.mrf.mxu0
      %3920 = vmatprep.mubr.bf16.mxu0 0
      %3921 = vmatmul.mubr.bf16.gmra.mxu0 %v687
      %v3922 = vpop.f32.mrf.mxu0
      %v3923 = vadd.f32 0.0, %v3922
      %v3924 = vpop.f32.mrf.mxu0
      %v3925 = vpop.f32.mrf.mxu0
      %v3926 = vadd.f32 0.0, %v3925
      %v3927 = vpop.f32.mrf.mxu0
      %3928 = vmatprep.mubr.bf16.mxu0 0
      %3929 = vmatmul.mubr.bf16.gmra.mxu0 %v690
      %v3930 = vpop.f32.mrf.mxu0
      %v3931 = vadd.f32 0.0, %v3930
      %v3932 = vpop.f32.mrf.mxu0
      %v3933 = vpop.f32.mrf.mxu0
      %v3934 = vadd.f32 0.0, %v3933
      %v3935 = vpop.f32.mrf.mxu0
      %3936 = vmatprep.mubr.bf16.mxu0 0
      %3937 = vmatmul.mubr.bf16.gmra.mxu0 %v693
      %v3938 = vpop.f32.mrf.mxu0
      %v3939 = vadd.f32 0.0, %v3938
      %v3940 = vpop.f32.mrf.mxu0
      %v3941 = vpop.f32.mrf.mxu0
      %v3942 = vadd.f32 0.0, %v3941
      %v3943 = vpop.f32.mrf.mxu0
      %3944 = vmatprep.mubr.bf16.mxu0 0
      %3945 = vmatmul.mubr.bf16.gmra.mxu0 %v696
      %v3946 = vpop.f32.mrf.mxu0
      %v3947 = vadd.f32 0.0, %v3946
      %v3948 = vpop.f32.mrf.mxu0
      %v3949 = vpop.f32.mrf.mxu0
      %v3950 = vadd.f32 0.0, %v3949
      %v3951 = vpop.f32.mrf.mxu0
      %3952 = vmatprep.mubr.bf16.mxu0 0
      %3953 = vmatmul.mubr.bf16.gmra.mxu0 %v699
      %v3954 = vpop.f32.mrf.mxu0
      %v3955 = vadd.f32 0.0, %v3954
      %v3956 = vpop.f32.mrf.mxu0
      %v3957 = vpop.f32.mrf.mxu0
      %v3958 = vadd.f32 0.0, %v3957
      %v3959 = vpop.f32.mrf.mxu0
      %3960 = vmatprep.mubr.bf16.mxu0 0
      %3961 = vmatmul.mubr.bf16.gmra.mxu0 %v702
      %v3962 = vpop.f32.mrf.mxu0
      %v3963 = vadd.f32 0.0, %v3962
      %v3964 = vpop.f32.mrf.mxu0
      %v3965 = vpop.f32.mrf.mxu0
      %v3966 = vadd.f32 0.0, %v3965
      %v3967 = vpop.f32.mrf.mxu0
      %3968 = vmatprep.mubr.bf16.mxu0 0
      %3969 = vmatmul.mubr.bf16.gmra.mxu0 %v705
      %v3970 = vpop.f32.mrf.mxu0
      %v3971 = vadd.f32 0.0, %v3970
      %v3972 = vpop.f32.mrf.mxu0
      %v3973 = vpop.f32.mrf.mxu0
      %v3974 = vadd.f32 0.0, %v3973
      %v3975 = vpop.f32.mrf.mxu0
      %3976 = vmatprep.mubr.bf16.mxu0 0
      %3977 = vmatmul.mubr.bf16.gmra.mxu0 %v708
      %v3978 = vpop.f32.mrf.mxu0
      %v3979 = vadd.f32 0.0, %v3978
      %v3980 = vpop.f32.mrf.mxu0
      %v3981 = vpop.f32.mrf.mxu0
      %v3982 = vadd.f32 0.0, %v3981
      %v3983 = vpop.f32.mrf.mxu0
      %3984 = vmatprep.mubr.bf16.mxu0 0
      %3985 = vmatmul.mubr.bf16.gmra.mxu0 %v711
      %v3986 = vpop.f32.mrf.mxu0
      %v3987 = vadd.f32 0.0, %v3986
      %v3988 = vpop.f32.mrf.mxu0
      %v3989 = vpop.f32.mrf.mxu0
      %v3990 = vadd.f32 0.0, %v3989
      %v3991 = vpop.f32.mrf.mxu0
      %3992 = vmatprep.mubr.bf16.mxu0 0
      %3993 = vmatmul.mubr.bf16.gmra.mxu0 %v714
      %v3994 = vpop.f32.mrf.mxu0
      %v3995 = vadd.f32 0.0, %v3994
      %v3996 = vpop.f32.mrf.mxu0
      %v3997 = vpop.f32.mrf.mxu0
      %v3998 = vadd.f32 0.0, %v3997
      %v3999 = vpop.f32.mrf.mxu0
      %4000 = vmatprep.mubr.bf16.mxu0 0
      %4001 = vmatmul.mubr.bf16.gmra.mxu0 %v717
      %v4002 = vpop.f32.mrf.mxu0
      %v4003 = vadd.f32 0.0, %v4002
      %v4004 = vpop.f32.mrf.mxu0
      %v4005 = vpop.f32.mrf.mxu0
      %v4006 = vadd.f32 0.0, %v4005
      %v4007 = vpop.f32.mrf.mxu0
      %4008 = vmatprep.mubr.bf16.mxu0 0
      %4009 = vmatmul.mubr.bf16.gmra.mxu0 %v2783
      %v4010 = vpop.f32.mrf.mxu0
      %v4011 = vadd.f32 0.0, %v4010
      %v4012 = vpop.f32.mrf.mxu0
      %v4013 = vpop.f32.mrf.mxu0
      %v4014 = vadd.f32 0.0, %v4013
      %v4015 = vpop.f32.mrf.mxu0
      %4016 = vmatprep.mubr.bf16.mxu0 0
      %4017 = vmatmul.mubr.bf16.gmra.mxu0 %v3859
      %v4018 = vpop.f32.mrf.mxu0
      %v4019 = vadd.f32 0.0, %v4018
      %v4020 = vpop.f32.mrf.mxu0
      %v4021 = vpop.f32.mrf.mxu0
      %v4022 = vadd.f32 0.0, %v4021
      %v4023 = vpop.f32.mrf.mxu0
      %4024 = vdwg.mxu0
      %v4025 = vadd.f32 %v3797, %v3899
      %v4026 = vadd.f32 %v3798, %v3902
      %v4027 = vadd.f32 %v3799, %v3907
      %v4028 = vadd.f32 %v3800, %v3910
      %v4029 = vadd.f32 %v3801, %v3915
      %v4030 = vadd.f32 %v3802, %v3918
      %v4031 = vadd.f32 %v3803, %v3923
      %v4032 = vadd.f32 %v3804, %v3926
      %v4033 = vadd.f32 %v3805, %v3931
      %v4034 = vadd.f32 %v3806, %v3934
      %v4035 = vadd.f32 %v3807, %v3939
      %v4036 = vadd.f32 %v3808, %v3942
      %v4037 = vadd.f32 %v3809, %v3947
      %v4038 = vadd.f32 %v3810, %v3950
      %v4039 = vadd.f32 %v3811, %v3955
      %v4040 = vadd.f32 %v3812, %v3958
      %v4041 = vadd.f32 %v3813, %v3963
      %v4042 = vadd.f32 %v3814, %v3966
      %v4043 = vadd.f32 %v3815, %v3971
      %v4044 = vadd.f32 %v3816, %v3974
      %v4045 = vadd.f32 %v3817, %v3979
      %v4046 = vadd.f32 %v3818, %v3982
      %v4047 = vadd.f32 %v3819, %v3987
      %v4048 = vadd.f32 %v3820, %v3990
      %v4049 = vadd.f32 %v3821, %v3995
      %v4050 = vadd.f32 %v3822, %v3998
      %v4051 = vadd.f32 %v3823, %v4003
      %v4052 = vadd.f32 %v3824, %v4006
      %v4053 = vadd.f32 %v3825, %v4011
      %v4054 = vadd.f32 %v3826, %v4014
      %v4055 = vadd.f32 %v3827, %v4019
      %v4056 = vadd.f32 %v3828, %v4022
      %v4058 = vrot.slane %v223, 5
      %v4059 = vrot.slane %v4058, 4
      %v4060 = vrot.slane %v224, 5
      %v4061 = vsel %vm1194, %v4059, %v4060
      %v4062 = vrot.slane %v4060, 4
      %v4063 = vrot.slane %v225, 5
      %v4064 = vsel %vm1194, %v4062, %v4063
      %s4065 = scalar_lea.vmem %s1, 24
      %v4066 = vld [vmem:[%s4065] sm:$0x3]
      %v4067 = vunpack.c.l.b16 %v4061
      %v4068 = vunpack.c.l.b16 %v4064
      %v4069 = vpack.c.b16 %v4068, %v4067
      %v4071 = vsel %vm670, %v4069, 0
      %v4074 = vsel %vm719, %v4066, 0
      %4076 = vmatprep.subr.bf16.mxu0 0
      %4077 = vmatpush1.bf16.msra.mxu0 0
      %4078 = vmatprep.subr.bf16.mxu0 0
      %4079 = vmatpush1.bf16.msra.mxu0 0
      %4080 = vmatprep.subr.bf16.mxu0 0
      %4081 = vmatpush1.bf16.msra.mxu0 0
      %4082 = vmatprep.subr.bf16.mxu0 0
      %4083 = vmatpush1.bf16.msra.mxu0 0
      %4084 = vmatprep.subr.bf16.mxu0 0
      %4085 = vmatpush1.bf16.msra.mxu0 0
      %4086 = vmatprep.subr.bf16.mxu0 0
      %4087 = vmatpush1.bf16.msra.mxu0 0
      %4088 = vmatprep.subr.bf16.mxu0 0
      %4089 = vmatpush1.bf16.msra.mxu0 0
      %4090 = vmatprep.subr.bf16.mxu0 0
      %4091 = vmatpush1.bf16.msra.mxu0 %v4074
      %4092 = vmatprep.subr.bf16.mxu0 0
      %4093 = vmatpush2.bf16.msra.mxu0 0
      %4094 = vmatprep.subr.bf16.mxu0 0
      %4095 = vmatpush2.bf16.msra.mxu0 0
      %4096 = vmatprep.subr.bf16.mxu0 0
      %4097 = vmatpush2.bf16.msra.mxu0 0
      %4098 = vmatprep.subr.bf16.mxu0 0
      %4099 = vmatpush2.bf16.msra.mxu0 0
      %4100 = vmatprep.subr.bf16.mxu0 0
      %4101 = vmatpush2.bf16.msra.mxu0 0
      %4102 = vmatprep.subr.bf16.mxu0 0
      %4103 = vmatpush2.bf16.msra.mxu0 0
      %4104 = vmatprep.subr.bf16.mxu0 0
      %4105 = vmatpush2.bf16.msra.mxu0 0
      %4106 = vmatprep.subr.bf16.mxu0 0
      %4107 = vmatpush2.bf16.msra.mxu0 0
      %4108 = vmatprep.mubr.bf16.mxu0 0
      %4109 = vmatmul.mubr.bf16.gmra.mxu0 %v1364
      %v4110 = vpop.f32.mrf.mxu0
      %v4111 = vadd.f32 0.0, %v4110
      %v4112 = vpop.f32.mrf.mxu0
      %v4113 = vpop.f32.mrf.mxu0
      %v4114 = vadd.f32 0.0, %v4113
      %v4115 = vpop.f32.mrf.mxu0
      %4116 = vmatprep.mubr.bf16.mxu0 0
      %4117 = vmatmul.mubr.bf16.gmra.mxu0 %v1367
      %v4118 = vpop.f32.mrf.mxu0
      %v4119 = vadd.f32 0.0, %v4118
      %v4120 = vpop.f32.mrf.mxu0
      %v4121 = vpop.f32.mrf.mxu0
      %v4122 = vadd.f32 0.0, %v4121
      %v4123 = vpop.f32.mrf.mxu0
      %4124 = vmatprep.mubr.bf16.mxu0 0
      %4125 = vmatmul.mubr.bf16.gmra.mxu0 %v1370
      %v4126 = vpop.f32.mrf.mxu0
      %v4127 = vadd.f32 0.0, %v4126
      %v4128 = vpop.f32.mrf.mxu0
      %v4129 = vpop.f32.mrf.mxu0
      %v4130 = vadd.f32 0.0, %v4129
      %v4131 = vpop.f32.mrf.mxu0
      %4132 = vmatprep.mubr.bf16.mxu0 0
      %4133 = vmatmul.mubr.bf16.gmra.mxu0 %v1373
      %v4134 = vpop.f32.mrf.mxu0
      %v4135 = vadd.f32 0.0, %v4134
      %v4136 = vpop.f32.mrf.mxu0
      %v4137 = vpop.f32.mrf.mxu0
      %v4138 = vadd.f32 0.0, %v4137
      %v4139 = vpop.f32.mrf.mxu0
      %4140 = vmatprep.mubr.bf16.mxu0 0
      %4141 = vmatmul.mubr.bf16.gmra.mxu0 %v1376
      %v4142 = vpop.f32.mrf.mxu0
      %v4143 = vadd.f32 0.0, %v4142
      %v4144 = vpop.f32.mrf.mxu0
      %v4145 = vpop.f32.mrf.mxu0
      %v4146 = vadd.f32 0.0, %v4145
      %v4147 = vpop.f32.mrf.mxu0
      %4148 = vmatprep.mubr.bf16.mxu0 0
      %4149 = vmatmul.mubr.bf16.gmra.mxu0 %v1379
      %v4150 = vpop.f32.mrf.mxu0
      %v4151 = vadd.f32 0.0, %v4150
      %v4152 = vpop.f32.mrf.mxu0
      %v4153 = vpop.f32.mrf.mxu0
      %v4154 = vadd.f32 0.0, %v4153
      %v4155 = vpop.f32.mrf.mxu0
      %4156 = vmatprep.mubr.bf16.mxu0 0
      %4157 = vmatmul.mubr.bf16.gmra.mxu0 %v1382
      %v4158 = vpop.f32.mrf.mxu0
      %v4159 = vadd.f32 0.0, %v4158
      %v4160 = vpop.f32.mrf.mxu0
      %v4161 = vpop.f32.mrf.mxu0
      %v4162 = vadd.f32 0.0, %v4161
      %v4163 = vpop.f32.mrf.mxu0
      %4164 = vmatprep.mubr.bf16.mxu0 0
      %4165 = vmatmul.mubr.bf16.gmra.mxu0 %v1385
      %v4166 = vpop.f32.mrf.mxu0
      %v4167 = vadd.f32 0.0, %v4166
      %v4168 = vpop.f32.mrf.mxu0
      %v4169 = vpop.f32.mrf.mxu0
      %v4170 = vadd.f32 0.0, %v4169
      %v4171 = vpop.f32.mrf.mxu0
      %4172 = vmatprep.mubr.bf16.mxu0 0
      %4173 = vmatmul.mubr.bf16.gmra.mxu0 %v1388
      %v4174 = vpop.f32.mrf.mxu0
      %v4175 = vadd.f32 0.0, %v4174
      %v4176 = vpop.f32.mrf.mxu0
      %v4177 = vpop.f32.mrf.mxu0
      %v4178 = vadd.f32 0.0, %v4177
      %v4179 = vpop.f32.mrf.mxu0
      %4180 = vmatprep.mubr.bf16.mxu0 0
      %4181 = vmatmul.mubr.bf16.gmra.mxu0 %v1391
      %v4182 = vpop.f32.mrf.mxu0
      %v4183 = vadd.f32 0.0, %v4182
      %v4184 = vpop.f32.mrf.mxu0
      %v4185 = vpop.f32.mrf.mxu0
      %v4186 = vadd.f32 0.0, %v4185
      %v4187 = vpop.f32.mrf.mxu0
      %4188 = vmatprep.mubr.bf16.mxu0 0
      %4189 = vmatmul.mubr.bf16.gmra.mxu0 %v1394
      %v4190 = vpop.f32.mrf.mxu0
      %v4191 = vadd.f32 0.0, %v4190
      %v4192 = vpop.f32.mrf.mxu0
      %v4193 = vpop.f32.mrf.mxu0
      %v4194 = vadd.f32 0.0, %v4193
      %v4195 = vpop.f32.mrf.mxu0
      %4196 = vmatprep.mubr.bf16.mxu0 0
      %4197 = vmatmul.mubr.bf16.gmra.mxu0 %v1397
      %v4198 = vpop.f32.mrf.mxu0
      %v4199 = vadd.f32 0.0, %v4198
      %v4200 = vpop.f32.mrf.mxu0
      %v4201 = vpop.f32.mrf.mxu0
      %v4202 = vadd.f32 0.0, %v4201
      %v4203 = vpop.f32.mrf.mxu0
      %4204 = vmatprep.mubr.bf16.mxu0 0
      %4205 = vmatmul.mubr.bf16.gmra.mxu0 %v1400
      %v4206 = vpop.f32.mrf.mxu0
      %v4207 = vadd.f32 0.0, %v4206
      %v4208 = vpop.f32.mrf.mxu0
      %v4209 = vpop.f32.mrf.mxu0
      %v4210 = vadd.f32 0.0, %v4209
      %v4211 = vpop.f32.mrf.mxu0
      %4212 = vmatprep.mubr.bf16.mxu0 0
      %4213 = vmatmul.mubr.bf16.gmra.mxu0 %v1403
      %v4214 = vpop.f32.mrf.mxu0
      %v4215 = vadd.f32 0.0, %v4214
      %v4216 = vpop.f32.mrf.mxu0
      %v4217 = vpop.f32.mrf.mxu0
      %v4218 = vadd.f32 0.0, %v4217
      %v4219 = vpop.f32.mrf.mxu0
      %4220 = vmatprep.mubr.bf16.mxu0 0
      %4221 = vmatmul.mubr.bf16.gmra.mxu0 %v2995
      %v4222 = vpop.f32.mrf.mxu0
      %v4223 = vadd.f32 0.0, %v4222
      %v4224 = vpop.f32.mrf.mxu0
      %v4225 = vpop.f32.mrf.mxu0
      %v4226 = vadd.f32 0.0, %v4225
      %v4227 = vpop.f32.mrf.mxu0
      %4228 = vmatprep.mubr.bf16.mxu0 0
      %4229 = vmatmul.mubr.bf16.gmra.mxu0 %v4071
      %v4230 = vpop.f32.mrf.mxu0
      %v4231 = vadd.f32 0.0, %v4230
      %v4232 = vpop.f32.mrf.mxu0
      %v4233 = vpop.f32.mrf.mxu0
      %v4234 = vadd.f32 0.0, %v4233
      %v4235 = vpop.f32.mrf.mxu0
      %4236 = vdwg.mxu0
      %v4237 = vadd.f32 %v4025, %v4111
      %v4238 = vadd.f32 %v4026, %v4114
      %v4239 = vadd.f32 %v4027, %v4119
      %v4240 = vadd.f32 %v4028, %v4122
      %v4241 = vadd.f32 %v4029, %v4127
      %v4242 = vadd.f32 %v4030, %v4130
      %v4243 = vadd.f32 %v4031, %v4135
      %v4244 = vadd.f32 %v4032, %v4138
      %v4245 = vadd.f32 %v4033, %v4143
      %v4246 = vadd.f32 %v4034, %v4146
      %v4247 = vadd.f32 %v4035, %v4151
      %v4248 = vadd.f32 %v4036, %v4154
      %v4249 = vadd.f32 %v4037, %v4159
      %v4250 = vadd.f32 %v4038, %v4162
      %v4251 = vadd.f32 %v4039, %v4167
      %v4252 = vadd.f32 %v4040, %v4170
      %v4253 = vadd.f32 %v4041, %v4175
      %v4254 = vadd.f32 %v4042, %v4178
      %v4255 = vadd.f32 %v4043, %v4183
      %v4256 = vadd.f32 %v4044, %v4186
      %v4257 = vadd.f32 %v4045, %v4191
      %v4258 = vadd.f32 %v4046, %v4194
      %v4259 = vadd.f32 %v4047, %v4199
      %v4260 = vadd.f32 %v4048, %v4202
      %v4261 = vadd.f32 %v4049, %v4207
      %v4262 = vadd.f32 %v4050, %v4210
      %v4263 = vadd.f32 %v4051, %v4215
      %v4264 = vadd.f32 %v4052, %v4218
      %v4265 = vadd.f32 %v4053, %v4223
      %v4266 = vadd.f32 %v4054, %v4226
      %v4267 = vadd.f32 %v4055, %v4231
      %v4268 = vadd.f32 %v4056, %v4234
      %v4269 = vrot.slane %v3830, 5
      %v4270 = vrot.slane %v3833, 6
      %v4271 = vor.u32 %v4269, %v4270
      %v4272 = vrot.slane %v4271, 4
      %v4273 = vrot.slane %v3843, 5
      %v4274 = vrot.slane %v3839, 6
      %v4275 = vor.u32 %v4273, %v4274
      %v4276 = vsel %vm1603, %v4272, %v4275
      %v4277 = vrot.slane %v4275, 4
      %v4278 = vshrl.u32 %v225, 16
      %v4280 = vrot.slane %v4278, 5
      %v4281 = vrot.slane %v3849, 6
      %v4282 = vor.u32 %v4280, %v4281
      %v4283 = vsel %vm1603, %v4277, %v4282
      %s4284 = scalar_lea.vmem %s1, 26
      %v4285 = vld [vmem:[%s4284] sm:$0x3]
      %v4286 = vunpack.c.l.b16 %v4276
      %v4287 = vunpack.c.l.b16 %v4283
      %v4288 = vpack.c.b16 %v4287, %v4286
      %v4290 = vsel %vm670, %v4288, 0
      %v4293 = vsel %vm719, %v4285, 0
      %4295 = vmatprep.subr.bf16.mxu0 0
      %4296 = vmatpush1.bf16.msra.mxu0 0
      %4297 = vmatprep.subr.bf16.mxu0 0
      %4298 = vmatpush1.bf16.msra.mxu0 0
      %4299 = vmatprep.subr.bf16.mxu0 0
      %4300 = vmatpush1.bf16.msra.mxu0 0
      %4301 = vmatprep.subr.bf16.mxu0 0
      %4302 = vmatpush1.bf16.msra.mxu0 0
      %4303 = vmatprep.subr.bf16.mxu0 0
      %4304 = vmatpush1.bf16.msra.mxu0 0
      %4305 = vmatprep.subr.bf16.mxu0 0
      %4306 = vmatpush1.bf16.msra.mxu0 0
      %4307 = vmatprep.subr.bf16.mxu0 0
      %4308 = vmatpush1.bf16.msra.mxu0 0
      %4309 = vmatprep.subr.bf16.mxu0 0
      %4310 = vmatpush1.bf16.msra.mxu0 %v4293
      %4311 = vmatprep.subr.bf16.mxu0 0
      %4312 = vmatpush2.bf16.msra.mxu0 0
      %4313 = vmatprep.subr.bf16.mxu0 0
      %4314 = vmatpush2.bf16.msra.mxu0 0
      %4315 = vmatprep.subr.bf16.mxu0 0
      %4316 = vmatpush2.bf16.msra.mxu0 0
      %4317 = vmatprep.subr.bf16.mxu0 0
      %4318 = vmatpush2.bf16.msra.mxu0 0
      %4319 = vmatprep.subr.bf16.mxu0 0
      %4320 = vmatpush2.bf16.msra.mxu0 0
      %4321 = vmatprep.subr.bf16.mxu0 0
      %4322 = vmatpush2.bf16.msra.mxu0 0
      %4323 = vmatprep.subr.bf16.mxu0 0
      %4324 = vmatpush2.bf16.msra.mxu0 0
      %4325 = vmatprep.subr.bf16.mxu0 0
      %4326 = vmatpush2.bf16.msra.mxu0 0
      %4327 = vmatprep.mubr.bf16.mxu0 0
      %4328 = vmatmul.mubr.bf16.gmra.mxu0 %v1901
      %v4329 = vpop.f32.mrf.mxu0
      %v4330 = vadd.f32 0.0, %v4329
      %v4331 = vpop.f32.mrf.mxu0
      %v4332 = vpop.f32.mrf.mxu0
      %v4333 = vadd.f32 0.0, %v4332
      %v4334 = vpop.f32.mrf.mxu0
      %4335 = vmatprep.mubr.bf16.mxu0 0
      %4336 = vmatmul.mubr.bf16.gmra.mxu0 %v1904
      %v4337 = vpop.f32.mrf.mxu0
      %v4338 = vadd.f32 0.0, %v4337
      %v4339 = vpop.f32.mrf.mxu0
      %v4340 = vpop.f32.mrf.mxu0
      %v4341 = vadd.f32 0.0, %v4340
      %v4342 = vpop.f32.mrf.mxu0
      %4343 = vmatprep.mubr.bf16.mxu0 0
      %4344 = vmatmul.mubr.bf16.gmra.mxu0 %v1907
      %v4345 = vpop.f32.mrf.mxu0
      %v4346 = vadd.f32 0.0, %v4345
      %v4347 = vpop.f32.mrf.mxu0
      %v4348 = vpop.f32.mrf.mxu0
      %v4349 = vadd.f32 0.0, %v4348
      %v4350 = vpop.f32.mrf.mxu0
      %4351 = vmatprep.mubr.bf16.mxu0 0
      %4352 = vmatmul.mubr.bf16.gmra.mxu0 %v1910
      %v4353 = vpop.f32.mrf.mxu0
      %v4354 = vadd.f32 0.0, %v4353
      %v4355 = vpop.f32.mrf.mxu0
      %v4356 = vpop.f32.mrf.mxu0
      %v4357 = vadd.f32 0.0, %v4356
      %v4358 = vpop.f32.mrf.mxu0
      %4359 = vmatprep.mubr.bf16.mxu0 0
      %4360 = vmatmul.mubr.bf16.gmra.mxu0 %v1913
      %v4361 = vpop.f32.mrf.mxu0
      %v4362 = vadd.f32 0.0, %v4361
      %v4363 = vpop.f32.mrf.mxu0
      %v4364 = vpop.f32.mrf.mxu0
      %v4365 = vadd.f32 0.0, %v4364
      %v4366 = vpop.f32.mrf.mxu0
      %4367 = vmatprep.mubr.bf16.mxu0 0
      %4368 = vmatmul.mubr.bf16.gmra.mxu0 %v1916
      %v4369 = vpop.f32.mrf.mxu0
      %v4370 = vadd.f32 0.0, %v4369
      %v4371 = vpop.f32.mrf.mxu0
      %v4372 = vpop.f32.mrf.mxu0
      %v4373 = vadd.f32 0.0, %v4372
      %v4374 = vpop.f32.mrf.mxu0
      %4375 = vmatprep.mubr.bf16.mxu0 0
      %4376 = vmatmul.mubr.bf16.gmra.mxu0 %v1919
      %v4377 = vpop.f32.mrf.mxu0
      %v4378 = vadd.f32 0.0, %v4377
      %v4379 = vpop.f32.mrf.mxu0
      %v4380 = vpop.f32.mrf.mxu0
      %v4381 = vadd.f32 0.0, %v4380
      %v4382 = vpop.f32.mrf.mxu0
      %4383 = vmatprep.mubr.bf16.mxu0 0
      %4384 = vmatmul.mubr.bf16.gmra.mxu0 %v1922
      %v4385 = vpop.f32.mrf.mxu0
      %v4386 = vadd.f32 0.0, %v4385
      %v4387 = vpop.f32.mrf.mxu0
      %v4388 = vpop.f32.mrf.mxu0
      %v4389 = vadd.f32 0.0, %v4388
      %v4390 = vpop.f32.mrf.mxu0
      %4391 = vmatprep.mubr.bf16.mxu0 0
      %4392 = vmatmul.mubr.bf16.gmra.mxu0 %v1925
      %v4393 = vpop.f32.mrf.mxu0
      %v4394 = vadd.f32 0.0, %v4393
      %v4395 = vpop.f32.mrf.mxu0
      %v4396 = vpop.f32.mrf.mxu0
      %v4397 = vadd.f32 0.0, %v4396
      %v4398 = vpop.f32.mrf.mxu0
      %4399 = vmatprep.mubr.bf16.mxu0 0
      %4400 = vmatmul.mubr.bf16.gmra.mxu0 %v1928
      %v4401 = vpop.f32.mrf.mxu0
      %v4402 = vadd.f32 0.0, %v4401
      %v4403 = vpop.f32.mrf.mxu0
      %v4404 = vpop.f32.mrf.mxu0
      %v4405 = vadd.f32 0.0, %v4404
      %v4406 = vpop.f32.mrf.mxu0
      %4407 = vmatprep.mubr.bf16.mxu0 0
      %4408 = vmatmul.mubr.bf16.gmra.mxu0 %v1931
      %v4409 = vpop.f32.mrf.mxu0
      %v4410 = vadd.f32 0.0, %v4409
      %v4411 = vpop.f32.mrf.mxu0
      %v4412 = vpop.f32.mrf.mxu0
      %v4413 = vadd.f32 0.0, %v4412
      %v4414 = vpop.f32.mrf.mxu0
      %4415 = vmatprep.mubr.bf16.mxu0 0
      %4416 = vmatmul.mubr.bf16.gmra.mxu0 %v1934
      %v4417 = vpop.f32.mrf.mxu0
      %v4418 = vadd.f32 0.0, %v4417
      %v4419 = vpop.f32.mrf.mxu0
      %v4420 = vpop.f32.mrf.mxu0
      %v4421 = vadd.f32 0.0, %v4420
      %v4422 = vpop.f32.mrf.mxu0
      %4423 = vmatprep.mubr.bf16.mxu0 0
      %4424 = vmatmul.mubr.bf16.gmra.mxu0 %v1937
      %v4425 = vpop.f32.mrf.mxu0
      %v4426 = vadd.f32 0.0, %v4425
      %v4427 = vpop.f32.mrf.mxu0
      %v4428 = vpop.f32.mrf.mxu0
      %v4429 = vadd.f32 0.0, %v4428
      %v4430 = vpop.f32.mrf.mxu0
      %4431 = vmatprep.mubr.bf16.mxu0 0
      %4432 = vmatmul.mubr.bf16.gmra.mxu0 %v1940
      %v4433 = vpop.f32.mrf.mxu0
      %v4434 = vadd.f32 0.0, %v4433
      %v4435 = vpop.f32.mrf.mxu0
      %v4436 = vpop.f32.mrf.mxu0
      %v4437 = vadd.f32 0.0, %v4436
      %v4438 = vpop.f32.mrf.mxu0
      %4439 = vmatprep.mubr.bf16.mxu0 0
      %4440 = vmatmul.mubr.bf16.gmra.mxu0 %v3214
      %v4441 = vpop.f32.mrf.mxu0
      %v4442 = vadd.f32 0.0, %v4441
      %v4443 = vpop.f32.mrf.mxu0
      %v4444 = vpop.f32.mrf.mxu0
      %v4445 = vadd.f32 0.0, %v4444
      %v4446 = vpop.f32.mrf.mxu0
      %4447 = vmatprep.mubr.bf16.mxu0 0
      %4448 = vmatmul.mubr.bf16.gmra.mxu0 %v4290
      %v4449 = vpop.f32.mrf.mxu0
      %v4450 = vadd.f32 0.0, %v4449
      %v4451 = vpop.f32.mrf.mxu0
      %v4452 = vpop.f32.mrf.mxu0
      %v4453 = vadd.f32 0.0, %v4452
      %v4454 = vpop.f32.mrf.mxu0
      %4455 = vdwg.mxu0
      %v4456 = vadd.f32 %v4237, %v4330
      %v4457 = vadd.f32 %v4238, %v4333
      %v4458 = vadd.f32 %v4239, %v4338
      %v4459 = vadd.f32 %v4240, %v4341
      %v4460 = vadd.f32 %v4241, %v4346
      %v4461 = vadd.f32 %v4242, %v4349
      %v4462 = vadd.f32 %v4243, %v4354
      %v4463 = vadd.f32 %v4244, %v4357
      %v4464 = vadd.f32 %v4245, %v4362
      %v4465 = vadd.f32 %v4246, %v4365
      %v4466 = vadd.f32 %v4247, %v4370
      %v4467 = vadd.f32 %v4248, %v4373
      %v4468 = vadd.f32 %v4249, %v4378
      %v4469 = vadd.f32 %v4250, %v4381
      %v4470 = vadd.f32 %v4251, %v4386
      %v4471 = vadd.f32 %v4252, %v4389
      %v4472 = vadd.f32 %v4253, %v4394
      %v4473 = vadd.f32 %v4254, %v4397
      %v4474 = vadd.f32 %v4255, %v4402
      %v4475 = vadd.f32 %v4256, %v4405
      %v4476 = vadd.f32 %v4257, %v4410
      %v4477 = vadd.f32 %v4258, %v4413
      %v4478 = vadd.f32 %v4259, %v4418
      %v4479 = vadd.f32 %v4260, %v4421
      %v4480 = vadd.f32 %v4261, %v4426
      %v4481 = vadd.f32 %v4262, %v4429
      %v4482 = vadd.f32 %v4263, %v4434
      %v4483 = vadd.f32 %v4264, %v4437
      %v4484 = vadd.f32 %v4265, %v4442
      %v4485 = vadd.f32 %v4266, %v4445
      %v4486 = vadd.f32 %v4267, %v4450
      %v4487 = vadd.f32 %v4268, %v4453
      %v4488 = vrot.slane %v223, 6
      %v4489 = vrot.slane %v4488, 4
      %v4490 = vrot.slane %v224, 6
      %v4491 = vsel %vm2140, %v4489, %v4490
      %v4492 = vrot.slane %v4490, 4
      %v4493 = vrot.slane %v225, 6
      %v4494 = vsel %vm2140, %v4492, %v4493
      %s4495 = scalar_lea.vmem %s1, 28
      %v4496 = vld [vmem:[%s4495] sm:$0x3]
      %v4497 = vunpack.c.l.b16 %v4491
      %v4498 = vunpack.c.l.b16 %v4494
      %v4499 = vpack.c.b16 %v4498, %v4497
      %v4501 = vsel %vm670, %v4499, 0
      %v4504 = vsel %vm719, %v4496, 0
      %4506 = vmatprep.subr.bf16.mxu0 0
      %4507 = vmatpush1.bf16.msra.mxu0 0
      %4508 = vmatprep.subr.bf16.mxu0 0
      %4509 = vmatpush1.bf16.msra.mxu0 0
      %4510 = vmatprep.subr.bf16.mxu0 0
      %4511 = vmatpush1.bf16.msra.mxu0 0
      %4512 = vmatprep.subr.bf16.mxu0 0
      %4513 = vmatpush1.bf16.msra.mxu0 0
      %4514 = vmatprep.subr.bf16.mxu0 0
      %4515 = vmatpush1.bf16.msra.mxu0 0
      %4516 = vmatprep.subr.bf16.mxu0 0
      %4517 = vmatpush1.bf16.msra.mxu0 0
      %4518 = vmatprep.subr.bf16.mxu0 0
      %4519 = vmatpush1.bf16.msra.mxu0 0
      %4520 = vmatprep.subr.bf16.mxu0 0
      %4521 = vmatpush1.bf16.msra.mxu0 %v4504
      %4522 = vmatprep.subr.bf16.mxu0 0
      %4523 = vmatpush2.bf16.msra.mxu0 0
      %4524 = vmatprep.subr.bf16.mxu0 0
      %4525 = vmatpush2.bf16.msra.mxu0 0
      %4526 = vmatprep.subr.bf16.mxu0 0
      %4527 = vmatpush2.bf16.msra.mxu0 0
      %4528 = vmatprep.subr.bf16.mxu0 0
      %4529 = vmatpush2.bf16.msra.mxu0 0
      %4530 = vmatprep.subr.bf16.mxu0 0
      %4531 = vmatpush2.bf16.msra.mxu0 0
      %4532 = vmatprep.subr.bf16.mxu0 0
      %4533 = vmatpush2.bf16.msra.mxu0 0
      %4534 = vmatprep.subr.bf16.mxu0 0
      %4535 = vmatpush2.bf16.msra.mxu0 0
      %4536 = vmatprep.subr.bf16.mxu0 0
      %4537 = vmatpush2.bf16.msra.mxu0 0
      %4538 = vmatprep.mubr.bf16.mxu0 0
      %4539 = vmatmul.mubr.bf16.gmra.mxu0 %v2310
      %v4540 = vpop.f32.mrf.mxu0
      %v4541 = vadd.f32 0.0, %v4540
      %v4542 = vpop.f32.mrf.mxu0
      %v4543 = vpop.f32.mrf.mxu0
      %v4544 = vadd.f32 0.0, %v4543
      %v4545 = vpop.f32.mrf.mxu0
      %4546 = vmatprep.mubr.bf16.mxu0 0
      %4547 = vmatmul.mubr.bf16.gmra.mxu0 %v2313
      %v4548 = vpop.f32.mrf.mxu0
      %v4549 = vadd.f32 0.0, %v4548
      %v4550 = vpop.f32.mrf.mxu0
      %v4551 = vpop.f32.mrf.mxu0
      %v4552 = vadd.f32 0.0, %v4551
      %v4553 = vpop.f32.mrf.mxu0
      %4554 = vmatprep.mubr.bf16.mxu0 0
      %4555 = vmatmul.mubr.bf16.gmra.mxu0 %v2316
      %v4556 = vpop.f32.mrf.mxu0
      %v4557 = vadd.f32 0.0, %v4556
      %v4558 = vpop.f32.mrf.mxu0
      %v4559 = vpop.f32.mrf.mxu0
      %v4560 = vadd.f32 0.0, %v4559
      %v4561 = vpop.f32.mrf.mxu0
      %4562 = vmatprep.mubr.bf16.mxu0 0
      %4563 = vmatmul.mubr.bf16.gmra.mxu0 %v2319
      %v4564 = vpop.f32.mrf.mxu0
      %v4565 = vadd.f32 0.0, %v4564
      %v4566 = vpop.f32.mrf.mxu0
      %v4567 = vpop.f32.mrf.mxu0
      %v4568 = vadd.f32 0.0, %v4567
      %v4569 = vpop.f32.mrf.mxu0
      %4570 = vmatprep.mubr.bf16.mxu0 0
      %4571 = vmatmul.mubr.bf16.gmra.mxu0 %v2322
      %v4572 = vpop.f32.mrf.mxu0
      %v4573 = vadd.f32 0.0, %v4572
      %v4574 = vpop.f32.mrf.mxu0
      %v4575 = vpop.f32.mrf.mxu0
      %v4576 = vadd.f32 0.0, %v4575
      %v4577 = vpop.f32.mrf.mxu0
      %4578 = vmatprep.mubr.bf16.mxu0 0
      %4579 = vmatmul.mubr.bf16.gmra.mxu0 %v2325
      %v4580 = vpop.f32.mrf.mxu0
      %v4581 = vadd.f32 0.0, %v4580
      %v4582 = vpop.f32.mrf.mxu0
      %v4583 = vpop.f32.mrf.mxu0
      %v4584 = vadd.f32 0.0, %v4583
      %v4585 = vpop.f32.mrf.mxu0
      %4586 = vmatprep.mubr.bf16.mxu0 0
      %4587 = vmatmul.mubr.bf16.gmra.mxu0 %v2328
      %v4588 = vpop.f32.mrf.mxu0
      %v4589 = vadd.f32 0.0, %v4588
      %v4590 = vpop.f32.mrf.mxu0
      %v4591 = vpop.f32.mrf.mxu0
      %v4592 = vadd.f32 0.0, %v4591
      %v4593 = vpop.f32.mrf.mxu0
      %4594 = vmatprep.mubr.bf16.mxu0 0
      %4595 = vmatmul.mubr.bf16.gmra.mxu0 %v2331
      %v4596 = vpop.f32.mrf.mxu0
      %v4597 = vadd.f32 0.0, %v4596
      %v4598 = vpop.f32.mrf.mxu0
      %v4599 = vpop.f32.mrf.mxu0
      %v4600 = vadd.f32 0.0, %v4599
      %v4601 = vpop.f32.mrf.mxu0
      %4602 = vmatprep.mubr.bf16.mxu0 0
      %4603 = vmatmul.mubr.bf16.gmra.mxu0 %v2334
      %v4604 = vpop.f32.mrf.mxu0
      %v4605 = vadd.f32 0.0, %v4604
      %v4606 = vpop.f32.mrf.mxu0
      %v4607 = vpop.f32.mrf.mxu0
      %v4608 = vadd.f32 0.0, %v4607
      %v4609 = vpop.f32.mrf.mxu0
      %4610 = vmatprep.mubr.bf16.mxu0 0
      %4611 = vmatmul.mubr.bf16.gmra.mxu0 %v2337
      %v4612 = vpop.f32.mrf.mxu0
      %v4613 = vadd.f32 0.0, %v4612
      %v4614 = vpop.f32.mrf.mxu0
      %v4615 = vpop.f32.mrf.mxu0
      %v4616 = vadd.f32 0.0, %v4615
      %v4617 = vpop.f32.mrf.mxu0
      %4618 = vmatprep.mubr.bf16.mxu0 0
      %4619 = vmatmul.mubr.bf16.gmra.mxu0 %v2340
      %v4620 = vpop.f32.mrf.mxu0
      %v4621 = vadd.f32 0.0, %v4620
      %v4622 = vpop.f32.mrf.mxu0
      %v4623 = vpop.f32.mrf.mxu0
      %v4624 = vadd.f32 0.0, %v4623
      %v4625 = vpop.f32.mrf.mxu0
      %4626 = vmatprep.mubr.bf16.mxu0 0
      %4627 = vmatmul.mubr.bf16.gmra.mxu0 %v2343
      %v4628 = vpop.f32.mrf.mxu0
      %v4629 = vadd.f32 0.0, %v4628
      %v4630 = vpop.f32.mrf.mxu0
      %v4631 = vpop.f32.mrf.mxu0
      %v4632 = vadd.f32 0.0, %v4631
      %v4633 = vpop.f32.mrf.mxu0
      %4634 = vmatprep.mubr.bf16.mxu0 0
      %4635 = vmatmul.mubr.bf16.gmra.mxu0 %v2346
      %v4636 = vpop.f32.mrf.mxu0
      %v4637 = vadd.f32 0.0, %v4636
      %v4638 = vpop.f32.mrf.mxu0
      %v4639 = vpop.f32.mrf.mxu0
      %v4640 = vadd.f32 0.0, %v4639
      %v4641 = vpop.f32.mrf.mxu0
      %4642 = vmatprep.mubr.bf16.mxu0 0
      %4643 = vmatmul.mubr.bf16.gmra.mxu0 %v2349
      %v4644 = vpop.f32.mrf.mxu0
      %v4645 = vadd.f32 0.0, %v4644
      %v4646 = vpop.f32.mrf.mxu0
      %v4647 = vpop.f32.mrf.mxu0
      %v4648 = vadd.f32 0.0, %v4647
      %v4649 = vpop.f32.mrf.mxu0
      %4650 = vmatprep.mubr.bf16.mxu0 0
      %4651 = vmatmul.mubr.bf16.gmra.mxu0 %v3425
      %v4652 = vpop.f32.mrf.mxu0
      %v4653 = vadd.f32 0.0, %v4652
      %v4654 = vpop.f32.mrf.mxu0
      %v4655 = vpop.f32.mrf.mxu0
      %v4656 = vadd.f32 0.0, %v4655
      %v4657 = vpop.f32.mrf.mxu0
      %4658 = vmatprep.mubr.bf16.mxu0 0
      %4659 = vmatmul.mubr.bf16.gmra.mxu0 %v4501
      %v4660 = vpop.f32.mrf.mxu0
      %v4661 = vadd.f32 0.0, %v4660
      %v4662 = vpop.f32.mrf.mxu0
      %v4663 = vpop.f32.mrf.mxu0
      %v4664 = vadd.f32 0.0, %v4663
      %v4665 = vpop.f32.mrf.mxu0
      %4666 = vdwg.mxu0
      %v4667 = vadd.f32 %v4456, %v4541
      %v4668 = vadd.f32 %v4457, %v4544
      %v4669 = vadd.f32 %v4458, %v4549
      %v4670 = vadd.f32 %v4459, %v4552
      %v4671 = vadd.f32 %v4460, %v4557
      %v4672 = vadd.f32 %v4461, %v4560
      %v4673 = vadd.f32 %v4462, %v4565
      %v4674 = vadd.f32 %v4463, %v4568
      %v4675 = vadd.f32 %v4464, %v4573
      %v4676 = vadd.f32 %v4465, %v4576
      %v4677 = vadd.f32 %v4466, %v4581
      %v4678 = vadd.f32 %v4467, %v4584
      %v4679 = vadd.f32 %v4468, %v4589
      %v4680 = vadd.f32 %v4469, %v4592
      %v4681 = vadd.f32 %v4470, %v4597
      %v4682 = vadd.f32 %v4471, %v4600
      %v4683 = vadd.f32 %v4472, %v4605
      %v4684 = vadd.f32 %v4473, %v4608
      %v4685 = vadd.f32 %v4474, %v4613
      %v4686 = vadd.f32 %v4475, %v4616
      %v4687 = vadd.f32 %v4476, %v4621
      %v4688 = vadd.f32 %v4477, %v4624
      %v4689 = vadd.f32 %v4478, %v4629
      %v4690 = vadd.f32 %v4479, %v4632
      %v4691 = vadd.f32 %v4480, %v4637
      %v4692 = vadd.f32 %v4481, %v4640
      %v4693 = vadd.f32 %v4482, %v4645
      %v4694 = vadd.f32 %v4483, %v4648
      %v4695 = vadd.f32 %v4484, %v4653
      %v4696 = vadd.f32 %v4485, %v4656
      %v4697 = vadd.f32 %v4486, %v4661
      %v4698 = vadd.f32 %v4487, %v4664
      %s4699 = scalar_lea.vmem %s1, 30
      %v4700 = vld [vmem:[%s4699] sm:$0x3]
      %v4703 = vunpack.c.l.b16 %v226
      %v4704 = vunpack.c.l.b16 %v227
      %v4705 = vpack.c.b16 %v4704, %v4703
      %v4707 = vsel %vm670, %v4705, 0
      %v4710 = vsel %vm719, %v4700, 0
      %4712 = vmatprep.subr.bf16.mxu0 0
      %4713 = vmatpush1.bf16.msra.mxu0 0
      %4714 = vmatprep.subr.bf16.mxu0 0
      %4715 = vmatpush1.bf16.msra.mxu0 0
      %4716 = vmatprep.subr.bf16.mxu0 0
      %4717 = vmatpush1.bf16.msra.mxu0 0
      %4718 = vmatprep.subr.bf16.mxu0 0
      %4719 = vmatpush1.bf16.msra.mxu0 0
      %4720 = vmatprep.subr.bf16.mxu0 0
      %4721 = vmatpush1.bf16.msra.mxu0 0
      %4722 = vmatprep.subr.bf16.mxu0 0
      %4723 = vmatpush1.bf16.msra.mxu0 0
      %4724 = vmatprep.subr.bf16.mxu0 0
      %4725 = vmatpush1.bf16.msra.mxu0 0
      %4726 = vmatprep.subr.bf16.mxu0 0
      %4727 = vmatpush1.bf16.msra.mxu0 %v4710
      %4728 = vmatprep.subr.bf16.mxu0 0
      %4729 = vmatpush2.bf16.msra.mxu0 0
      %4730 = vmatprep.subr.bf16.mxu0 0
      %4731 = vmatpush2.bf16.msra.mxu0 0
      %4732 = vmatprep.subr.bf16.mxu0 0
      %4733 = vmatpush2.bf16.msra.mxu0 0
      %4734 = vmatprep.subr.bf16.mxu0 0
      %4735 = vmatpush2.bf16.msra.mxu0 0
      %4736 = vmatprep.subr.bf16.mxu0 0
      %4737 = vmatpush2.bf16.msra.mxu0 0
      %4738 = vmatprep.subr.bf16.mxu0 0
      %4739 = vmatpush2.bf16.msra.mxu0 0
      %4740 = vmatprep.subr.bf16.mxu0 0
      %4741 = vmatpush2.bf16.msra.mxu0 0
      %4742 = vmatprep.subr.bf16.mxu0 0
      %4743 = vmatpush2.bf16.msra.mxu0 0
      %4744 = vmatprep.mubr.bf16.mxu0 0
      %4745 = vmatmul.mubr.bf16.gmra.mxu0 %v974
      %v4746 = vpop.f32.mrf.mxu0
      %v4747 = vadd.f32 0.0, %v4746
      %v4748 = vpop.f32.mrf.mxu0
      %v4749 = vpop.f32.mrf.mxu0
      %v4750 = vadd.f32 0.0, %v4749
      %v4751 = vpop.f32.mrf.mxu0
      %4752 = vmatprep.mubr.bf16.mxu0 0
      %4753 = vmatmul.mubr.bf16.gmra.mxu0 %v977
      %v4754 = vpop.f32.mrf.mxu0
      %v4755 = vadd.f32 0.0, %v4754
      %v4756 = vpop.f32.mrf.mxu0
      %v4757 = vpop.f32.mrf.mxu0
      %v4758 = vadd.f32 0.0, %v4757
      %v4759 = vpop.f32.mrf.mxu0
      %4760 = vmatprep.mubr.bf16.mxu0 0
      %4761 = vmatmul.mubr.bf16.gmra.mxu0 %v980
      %v4762 = vpop.f32.mrf.mxu0
      %v4763 = vadd.f32 0.0, %v4762
      %v4764 = vpop.f32.mrf.mxu0
      %v4765 = vpop.f32.mrf.mxu0
      %v4766 = vadd.f32 0.0, %v4765
      %v4767 = vpop.f32.mrf.mxu0
      %4768 = vmatprep.mubr.bf16.mxu0 0
      %4769 = vmatmul.mubr.bf16.gmra.mxu0 %v983
      %v4770 = vpop.f32.mrf.mxu0
      %v4771 = vadd.f32 0.0, %v4770
      %v4772 = vpop.f32.mrf.mxu0
      %v4773 = vpop.f32.mrf.mxu0
      %v4774 = vadd.f32 0.0, %v4773
      %v4775 = vpop.f32.mrf.mxu0
      %4776 = vmatprep.mubr.bf16.mxu0 0
      %4777 = vmatmul.mubr.bf16.gmra.mxu0 %v986
      %v4778 = vpop.f32.mrf.mxu0
      %v4779 = vadd.f32 0.0, %v4778
      %v4780 = vpop.f32.mrf.mxu0
      %v4781 = vpop.f32.mrf.mxu0
      %v4782 = vadd.f32 0.0, %v4781
      %v4783 = vpop.f32.mrf.mxu0
      %4784 = vmatprep.mubr.bf16.mxu0 0
      %4785 = vmatmul.mubr.bf16.gmra.mxu0 %v989
      %v4786 = vpop.f32.mrf.mxu0
      %v4787 = vadd.f32 0.0, %v4786
      %v4788 = vpop.f32.mrf.mxu0
      %v4789 = vpop.f32.mrf.mxu0
      %v4790 = vadd.f32 0.0, %v4789
      %v4791 = vpop.f32.mrf.mxu0
      %4792 = vmatprep.mubr.bf16.mxu0 0
      %4793 = vmatmul.mubr.bf16.gmra.mxu0 %v992
      %v4794 = vpop.f32.mrf.mxu0
      %v4795 = vadd.f32 0.0, %v4794
      %v4796 = vpop.f32.mrf.mxu0
      %v4797 = vpop.f32.mrf.mxu0
      %v4798 = vadd.f32 0.0, %v4797
      %v4799 = vpop.f32.mrf.mxu0
      %4800 = vmatprep.mubr.bf16.mxu0 0
      %4801 = vmatmul.mubr.bf16.gmra.mxu0 %v995
      %v4802 = vpop.f32.mrf.mxu0
      %v4803 = vadd.f32 0.0, %v4802
      %v4804 = vpop.f32.mrf.mxu0
      %v4805 = vpop.f32.mrf.mxu0
      %v4806 = vadd.f32 0.0, %v4805
      %v4807 = vpop.f32.mrf.mxu0
      %4808 = vmatprep.mubr.bf16.mxu0 0
      %4809 = vmatmul.mubr.bf16.gmra.mxu0 %v998
      %v4810 = vpop.f32.mrf.mxu0
      %v4811 = vadd.f32 0.0, %v4810
      %v4812 = vpop.f32.mrf.mxu0
      %v4813 = vpop.f32.mrf.mxu0
      %v4814 = vadd.f32 0.0, %v4813
      %v4815 = vpop.f32.mrf.mxu0
      %4816 = vmatprep.mubr.bf16.mxu0 0
      %4817 = vmatmul.mubr.bf16.gmra.mxu0 %v1001
      %v4818 = vpop.f32.mrf.mxu0
      %v4819 = vadd.f32 0.0, %v4818
      %v4820 = vpop.f32.mrf.mxu0
      %v4821 = vpop.f32.mrf.mxu0
      %v4822 = vadd.f32 0.0, %v4821
      %v4823 = vpop.f32.mrf.mxu0
      %4824 = vmatprep.mubr.bf16.mxu0 0
      %4825 = vmatmul.mubr.bf16.gmra.mxu0 %v1004
      %v4826 = vpop.f32.mrf.mxu0
      %v4827 = vadd.f32 0.0, %v4826
      %v4828 = vpop.f32.mrf.mxu0
      %v4829 = vpop.f32.mrf.mxu0
      %v4830 = vadd.f32 0.0, %v4829
      %v4831 = vpop.f32.mrf.mxu0
      %4832 = vmatprep.mubr.bf16.mxu0 0
      %4833 = vmatmul.mubr.bf16.gmra.mxu0 %v1007
      %v4834 = vpop.f32.mrf.mxu0
      %v4835 = vadd.f32 0.0, %v4834
      %v4836 = vpop.f32.mrf.mxu0
      %v4837 = vpop.f32.mrf.mxu0
      %v4838 = vadd.f32 0.0, %v4837
      %v4839 = vpop.f32.mrf.mxu0
      %4840 = vmatprep.mubr.bf16.mxu0 0
      %4841 = vmatmul.mubr.bf16.gmra.mxu0 %v1010
      %v4842 = vpop.f32.mrf.mxu0
      %v4843 = vadd.f32 0.0, %v4842
      %v4844 = vpop.f32.mrf.mxu0
      %v4845 = vpop.f32.mrf.mxu0
      %v4846 = vadd.f32 0.0, %v4845
      %v4847 = vpop.f32.mrf.mxu0
      %4848 = vmatprep.mubr.bf16.mxu0 0
      %4849 = vmatmul.mubr.bf16.gmra.mxu0 %v2555
      %v4850 = vpop.f32.mrf.mxu0
      %v4851 = vadd.f32 0.0, %v4850
      %v4852 = vpop.f32.mrf.mxu0
      %v4853 = vpop.f32.mrf.mxu0
      %v4854 = vadd.f32 0.0, %v4853
      %v4855 = vpop.f32.mrf.mxu0
      %4856 = vmatprep.mubr.bf16.mxu0 0
      %4857 = vmatmul.mubr.bf16.gmra.mxu0 %v3631
      %v4858 = vpop.f32.mrf.mxu0
      %v4859 = vadd.f32 0.0, %v4858
      %v4860 = vpop.f32.mrf.mxu0
      %v4861 = vpop.f32.mrf.mxu0
      %v4862 = vadd.f32 0.0, %v4861
      %v4863 = vpop.f32.mrf.mxu0
      %4864 = vmatprep.mubr.bf16.mxu0 0
      %4865 = vmatmul.mubr.bf16.gmra.mxu0 %v4707
      %v4866 = vpop.f32.mrf.mxu0
      %v4867 = vadd.f32 0.0, %v4866
      %v4868 = vpop.f32.mrf.mxu0
      %v4869 = vpop.f32.mrf.mxu0
      %v4870 = vadd.f32 0.0, %v4869
      %v4871 = vpop.f32.mrf.mxu0
      %4872 = vdwg.mxu0
      %v4873 = vadd.f32 %v4667, %v4747
      %v4874 = vadd.f32 %v4668, %v4750
      %v4875 = vadd.f32 %v4669, %v4755
      %v4876 = vadd.f32 %v4670, %v4758
      %v4877 = vadd.f32 %v4671, %v4763
      %v4878 = vadd.f32 %v4672, %v4766
      %v4879 = vadd.f32 %v4673, %v4771
      %v4880 = vadd.f32 %v4674, %v4774
      %v4881 = vadd.f32 %v4675, %v4779
      %v4882 = vadd.f32 %v4676, %v4782
      %v4883 = vadd.f32 %v4677, %v4787
      %v4884 = vadd.f32 %v4678, %v4790
      %v4885 = vadd.f32 %v4679, %v4795
      %v4886 = vadd.f32 %v4680, %v4798
      %v4887 = vadd.f32 %v4681, %v4803
      %v4888 = vadd.f32 %v4682, %v4806
      %v4889 = vadd.f32 %v4683, %v4811
      %v4890 = vadd.f32 %v4684, %v4814
      %v4891 = vadd.f32 %v4685, %v4819
      %v4892 = vadd.f32 %v4686, %v4822
      %v4893 = vadd.f32 %v4687, %v4827
      %v4894 = vadd.f32 %v4688, %v4830
      %v4895 = vadd.f32 %v4689, %v4835
      %v4896 = vadd.f32 %v4690, %v4838
      %v4897 = vadd.f32 %v4691, %v4843
      %v4898 = vadd.f32 %v4692, %v4846
      %v4899 = vadd.f32 %v4693, %v4851
      %v4900 = vadd.f32 %v4694, %v4854
      %v4901 = vadd.f32 %v4695, %v4859
      %v4902 = vadd.f32 %v4696, %v4862
      %v4903 = vadd.f32 %v4697, %v4867
      %v4904 = vadd.f32 %v4698, %v4870
      %v4906 = vshrl.u32 %v226, 16
      %v4908 = vrot.slane %v4906, 4
      %v4909 = vshll.u32 %v226, 16
      %v4911 = vrot.slane %v4909, 5
      %v4912 = vor.u32 %v4908, %v4911
      %v4913 = vrot.slane %v4912, 4
      %v4915 = vshll.u32 %v227, 16
      %v4917 = vrot.slane %v4915, 5
      %v4918 = vsel %vm235, %v4913, %v4917
      %v4919 = vshrl.u32 %v227, 16
      %v4921 = vrot.slane %v4919, 4
      %v4922 = vor.u32 %v4921, %v4917
      %v4923 = vrot.slane %v4922, 4
      %v4925 = vshll.u32 %v228, 16
      %v4927 = vrot.slane %v4925, 5
      %v4928 = vsel %vm235, %v4923, %v4927
      %s4929 = scalar_lea.vmem %s1, 32
      %v4930 = vld [vmem:[%s4929] sm:$0x3]
      %v4931 = vunpack.c.l.b16 %v4918
      %v4932 = vunpack.c.l.b16 %v4928
      %v4933 = vpack.c.b16 %v4932, %v4931
      %v4935 = vsel %vm670, %v4933, 0
      %v4938 = vsel %vm719, %v4930, 0
      %4940 = vmatprep.subr.bf16.mxu0 0
      %4941 = vmatpush1.bf16.msra.mxu0 0
      %4942 = vmatprep.subr.bf16.mxu0 0
      %4943 = vmatpush1.bf16.msra.mxu0 0
      %4944 = vmatprep.subr.bf16.mxu0 0
      %4945 = vmatpush1.bf16.msra.mxu0 0
      %4946 = vmatprep.subr.bf16.mxu0 0
      %4947 = vmatpush1.bf16.msra.mxu0 0
      %4948 = vmatprep.subr.bf16.mxu0 0
      %4949 = vmatpush1.bf16.msra.mxu0 0
      %4950 = vmatprep.subr.bf16.mxu0 0
      %4951 = vmatpush1.bf16.msra.mxu0 0
      %4952 = vmatprep.subr.bf16.mxu0 0
      %4953 = vmatpush1.bf16.msra.mxu0 0
      %4954 = vmatprep.subr.bf16.mxu0 0
      %4955 = vmatpush1.bf16.msra.mxu0 %v4938
      %4956 = vmatprep.subr.bf16.mxu0 0
      %4957 = vmatpush2.bf16.msra.mxu0 0
      %4958 = vmatprep.subr.bf16.mxu0 0
      %4959 = vmatpush2.bf16.msra.mxu0 0
      %4960 = vmatprep.subr.bf16.mxu0 0
      %4961 = vmatpush2.bf16.msra.mxu0 0
      %4962 = vmatprep.subr.bf16.mxu0 0
      %4963 = vmatpush2.bf16.msra.mxu0 0
      %4964 = vmatprep.subr.bf16.mxu0 0
      %4965 = vmatpush2.bf16.msra.mxu0 0
      %4966 = vmatprep.subr.bf16.mxu0 0
      %4967 = vmatpush2.bf16.msra.mxu0 0
      %4968 = vmatprep.subr.bf16.mxu0 0
      %4969 = vmatpush2.bf16.msra.mxu0 0
      %4970 = vmatprep.subr.bf16.mxu0 0
      %4971 = vmatpush2.bf16.msra.mxu0 0
      %4972 = vmatprep.mubr.bf16.mxu0 0
      %4973 = vmatmul.mubr.bf16.gmra.mxu0 %v681
      %v4974 = vpop.f32.mrf.mxu0
      %v4975 = vadd.f32 0.0, %v4974
      %v4976 = vpop.f32.mrf.mxu0
      %v4977 = vpop.f32.mrf.mxu0
      %v4978 = vadd.f32 0.0, %v4977
      %v4979 = vpop.f32.mrf.mxu0
      %4980 = vmatprep.mubr.bf16.mxu0 0
      %4981 = vmatmul.mubr.bf16.gmra.mxu0 %v684
      %v4982 = vpop.f32.mrf.mxu0
      %v4983 = vadd.f32 0.0, %v4982
      %v4984 = vpop.f32.mrf.mxu0
      %v4985 = vpop.f32.mrf.mxu0
      %v4986 = vadd.f32 0.0, %v4985
      %v4987 = vpop.f32.mrf.mxu0
      %4988 = vmatprep.mubr.bf16.mxu0 0
      %4989 = vmatmul.mubr.bf16.gmra.mxu0 %v687
      %v4990 = vpop.f32.mrf.mxu0
      %v4991 = vadd.f32 0.0, %v4990
      %v4992 = vpop.f32.mrf.mxu0
      %v4993 = vpop.f32.mrf.mxu0
      %v4994 = vadd.f32 0.0, %v4993
      %v4995 = vpop.f32.mrf.mxu0
      %4996 = vmatprep.mubr.bf16.mxu0 0
      %4997 = vmatmul.mubr.bf16.gmra.mxu0 %v690
      %v4998 = vpop.f32.mrf.mxu0
      %v4999 = vadd.f32 0.0, %v4998
      %v5000 = vpop.f32.mrf.mxu0
      %v5001 = vpop.f32.mrf.mxu0
      %v5002 = vadd.f32 0.0, %v5001
      %v5003 = vpop.f32.mrf.mxu0
      %5004 = vmatprep.mubr.bf16.mxu0 0
      %5005 = vmatmul.mubr.bf16.gmra.mxu0 %v693
      %v5006 = vpop.f32.mrf.mxu0
      %v5007 = vadd.f32 0.0, %v5006
      %v5008 = vpop.f32.mrf.mxu0
      %v5009 = vpop.f32.mrf.mxu0
      %v5010 = vadd.f32 0.0, %v5009
      %v5011 = vpop.f32.mrf.mxu0
      %5012 = vmatprep.mubr.bf16.mxu0 0
      %5013 = vmatmul.mubr.bf16.gmra.mxu0 %v696
      %v5014 = vpop.f32.mrf.mxu0
      %v5015 = vadd.f32 0.0, %v5014
      %v5016 = vpop.f32.mrf.mxu0
      %v5017 = vpop.f32.mrf.mxu0
      %v5018 = vadd.f32 0.0, %v5017
      %v5019 = vpop.f32.mrf.mxu0
      %5020 = vmatprep.mubr.bf16.mxu0 0
      %5021 = vmatmul.mubr.bf16.gmra.mxu0 %v699
      %v5022 = vpop.f32.mrf.mxu0
      %v5023 = vadd.f32 0.0, %v5022
      %v5024 = vpop.f32.mrf.mxu0
      %v5025 = vpop.f32.mrf.mxu0
      %v5026 = vadd.f32 0.0, %v5025
      %v5027 = vpop.f32.mrf.mxu0
      %5028 = vmatprep.mubr.bf16.mxu0 0
      %5029 = vmatmul.mubr.bf16.gmra.mxu0 %v702
      %v5030 = vpop.f32.mrf.mxu0
      %v5031 = vadd.f32 0.0, %v5030
      %v5032 = vpop.f32.mrf.mxu0
      %v5033 = vpop.f32.mrf.mxu0
      %v5034 = vadd.f32 0.0, %v5033
      %v5035 = vpop.f32.mrf.mxu0
      %5036 = vmatprep.mubr.bf16.mxu0 0
      %5037 = vmatmul.mubr.bf16.gmra.mxu0 %v705
      %v5038 = vpop.f32.mrf.mxu0
      %v5039 = vadd.f32 0.0, %v5038
      %v5040 = vpop.f32.mrf.mxu0
      %v5041 = vpop.f32.mrf.mxu0
      %v5042 = vadd.f32 0.0, %v5041
      %v5043 = vpop.f32.mrf.mxu0
      %5044 = vmatprep.mubr.bf16.mxu0 0
      %5045 = vmatmul.mubr.bf16.gmra.mxu0 %v708
      %v5046 = vpop.f32.mrf.mxu0
      %v5047 = vadd.f32 0.0, %v5046
      %v5048 = vpop.f32.mrf.mxu0
      %v5049 = vpop.f32.mrf.mxu0
      %v5050 = vadd.f32 0.0, %v5049
      %v5051 = vpop.f32.mrf.mxu0
      %5052 = vmatprep.mubr.bf16.mxu0 0
      %5053 = vmatmul.mubr.bf16.gmra.mxu0 %v711
      %v5054 = vpop.f32.mrf.mxu0
      %v5055 = vadd.f32 0.0, %v5054
      %v5056 = vpop.f32.mrf.mxu0
      %v5057 = vpop.f32.mrf.mxu0
      %v5058 = vadd.f32 0.0, %v5057
      %v5059 = vpop.f32.mrf.mxu0
      %5060 = vmatprep.mubr.bf16.mxu0 0
      %5061 = vmatmul.mubr.bf16.gmra.mxu0 %v714
      %v5062 = vpop.f32.mrf.mxu0
      %v5063 = vadd.f32 0.0, %v5062
      %v5064 = vpop.f32.mrf.mxu0
      %v5065 = vpop.f32.mrf.mxu0
      %v5066 = vadd.f32 0.0, %v5065
      %v5067 = vpop.f32.mrf.mxu0
      %5068 = vmatprep.mubr.bf16.mxu0 0
      %5069 = vmatmul.mubr.bf16.gmra.mxu0 %v717
      %v5070 = vpop.f32.mrf.mxu0
      %v5071 = vadd.f32 0.0, %v5070
      %v5072 = vpop.f32.mrf.mxu0
      %v5073 = vpop.f32.mrf.mxu0
      %v5074 = vadd.f32 0.0, %v5073
      %v5075 = vpop.f32.mrf.mxu0
      %5076 = vmatprep.mubr.bf16.mxu0 0
      %5077 = vmatmul.mubr.bf16.gmra.mxu0 %v2783
      %v5078 = vpop.f32.mrf.mxu0
      %v5079 = vadd.f32 0.0, %v5078
      %v5080 = vpop.f32.mrf.mxu0
      %v5081 = vpop.f32.mrf.mxu0
      %v5082 = vadd.f32 0.0, %v5081
      %v5083 = vpop.f32.mrf.mxu0
      %5084 = vmatprep.mubr.bf16.mxu0 0
      %5085 = vmatmul.mubr.bf16.gmra.mxu0 %v3859
      %v5086 = vpop.f32.mrf.mxu0
      %v5087 = vadd.f32 0.0, %v5086
      %v5088 = vpop.f32.mrf.mxu0
      %v5089 = vpop.f32.mrf.mxu0
      %v5090 = vadd.f32 0.0, %v5089
      %v5091 = vpop.f32.mrf.mxu0
      %5092 = vmatprep.mubr.bf16.mxu0 0
      %5093 = vmatmul.mubr.bf16.gmra.mxu0 %v4935
      %v5094 = vpop.f32.mrf.mxu0
      %v5095 = vadd.f32 0.0, %v5094
      %v5096 = vpop.f32.mrf.mxu0
      %v5097 = vpop.f32.mrf.mxu0
      %v5098 = vadd.f32 0.0, %v5097
      %v5099 = vpop.f32.mrf.mxu0
      %5100 = vdwg.mxu0
      %v5101 = vadd.f32 %v4873, %v4975
      %v5102 = vadd.f32 %v4874, %v4978
      %v5103 = vadd.f32 %v4875, %v4983
      %v5104 = vadd.f32 %v4876, %v4986
      %v5105 = vadd.f32 %v4877, %v4991
      %v5106 = vadd.f32 %v4878, %v4994
      %v5107 = vadd.f32 %v4879, %v4999
      %v5108 = vadd.f32 %v4880, %v5002
      %v5109 = vadd.f32 %v4881, %v5007
      %v5110 = vadd.f32 %v4882, %v5010
      %v5111 = vadd.f32 %v4883, %v5015
      %v5112 = vadd.f32 %v4884, %v5018
      %v5113 = vadd.f32 %v4885, %v5023
      %v5114 = vadd.f32 %v4886, %v5026
      %v5115 = vadd.f32 %v4887, %v5031
      %v5116 = vadd.f32 %v4888, %v5034
      %v5117 = vadd.f32 %v4889, %v5039
      %v5118 = vadd.f32 %v4890, %v5042
      %v5119 = vadd.f32 %v4891, %v5047
      %v5120 = vadd.f32 %v4892, %v5050
      %v5121 = vadd.f32 %v4893, %v5055
      %v5122 = vadd.f32 %v4894, %v5058
      %v5123 = vadd.f32 %v4895, %v5063
      %v5124 = vadd.f32 %v4896, %v5066
      %v5125 = vadd.f32 %v4897, %v5071
      %v5126 = vadd.f32 %v4898, %v5074
      %v5127 = vadd.f32 %v4899, %v5079
      %v5128 = vadd.f32 %v4900, %v5082
      %v5129 = vadd.f32 %v4901, %v5087
      %v5130 = vadd.f32 %v4902, %v5090
      %v5131 = vadd.f32 %v4903, %v5095
      %v5132 = vadd.f32 %v4904, %v5098
      %v5134 = vrot.slane %v226, 5
      %v5135 = vrot.slane %v5134, 4
      %v5136 = vrot.slane %v227, 5
      %v5137 = vsel %vm1194, %v5135, %v5136
      %v5138 = vrot.slane %v5136, 4
      %v5139 = vrot.slane %v228, 5
      %v5140 = vsel %vm1194, %v5138, %v5139
      %s5141 = scalar_lea.vmem %s1, 34
      %v5142 = vld [vmem:[%s5141] sm:$0x3]
      %v5143 = vunpack.c.l.b16 %v5137
      %v5144 = vunpack.c.l.b16 %v5140
      %v5145 = vpack.c.b16 %v5144, %v5143
      %v5147 = vsel %vm670, %v5145, 0
      %v5150 = vsel %vm719, %v5142, 0
      %5152 = vmatprep.subr.bf16.mxu0 0
      %5153 = vmatpush1.bf16.msra.mxu0 0
      %5154 = vmatprep.subr.bf16.mxu0 0
      %5155 = vmatpush1.bf16.msra.mxu0 0
      %5156 = vmatprep.subr.bf16.mxu0 0
      %5157 = vmatpush1.bf16.msra.mxu0 0
      %5158 = vmatprep.subr.bf16.mxu0 0
      %5159 = vmatpush1.bf16.msra.mxu0 0
      %5160 = vmatprep.subr.bf16.mxu0 0
      %5161 = vmatpush1.bf16.msra.mxu0 0
      %5162 = vmatprep.subr.bf16.mxu0 0
      %5163 = vmatpush1.bf16.msra.mxu0 0
      %5164 = vmatprep.subr.bf16.mxu0 0
      %5165 = vmatpush1.bf16.msra.mxu0 0
      %5166 = vmatprep.subr.bf16.mxu0 0
      %5167 = vmatpush1.bf16.msra.mxu0 %v5150
      %5168 = vmatprep.subr.bf16.mxu0 0
      %5169 = vmatpush2.bf16.msra.mxu0 0
      %5170 = vmatprep.subr.bf16.mxu0 0
      %5171 = vmatpush2.bf16.msra.mxu0 0
      %5172 = vmatprep.subr.bf16.mxu0 0
      %5173 = vmatpush2.bf16.msra.mxu0 0
      %5174 = vmatprep.subr.bf16.mxu0 0
      %5175 = vmatpush2.bf16.msra.mxu0 0
      %5176 = vmatprep.subr.bf16.mxu0 0
      %5177 = vmatpush2.bf16.msra.mxu0 0
      %5178 = vmatprep.subr.bf16.mxu0 0
      %5179 = vmatpush2.bf16.msra.mxu0 0
      %5180 = vmatprep.subr.bf16.mxu0 0
      %5181 = vmatpush2.bf16.msra.mxu0 0
      %5182 = vmatprep.subr.bf16.mxu0 0
      %5183 = vmatpush2.bf16.msra.mxu0 0
      %5184 = vmatprep.mubr.bf16.mxu0 0
      %5185 = vmatmul.mubr.bf16.gmra.mxu0 %v1367
      %v5186 = vpop.f32.mrf.mxu0
      %v5187 = vadd.f32 0.0, %v5186
      %v5188 = vpop.f32.mrf.mxu0
      %v5189 = vpop.f32.mrf.mxu0
      %v5190 = vadd.f32 0.0, %v5189
      %v5191 = vpop.f32.mrf.mxu0
      %5192 = vmatprep.mubr.bf16.mxu0 0
      %5193 = vmatmul.mubr.bf16.gmra.mxu0 %v1370
      %v5194 = vpop.f32.mrf.mxu0
      %v5195 = vadd.f32 0.0, %v5194
      %v5196 = vpop.f32.mrf.mxu0
      %v5197 = vpop.f32.mrf.mxu0
      %v5198 = vadd.f32 0.0, %v5197
      %v5199 = vpop.f32.mrf.mxu0
      %5200 = vmatprep.mubr.bf16.mxu0 0
      %5201 = vmatmul.mubr.bf16.gmra.mxu0 %v1373
      %v5202 = vpop.f32.mrf.mxu0
      %v5203 = vadd.f32 0.0, %v5202
      %v5204 = vpop.f32.mrf.mxu0
      %v5205 = vpop.f32.mrf.mxu0
      %v5206 = vadd.f32 0.0, %v5205
      %v5207 = vpop.f32.mrf.mxu0
      %5208 = vmatprep.mubr.bf16.mxu0 0
      %5209 = vmatmul.mubr.bf16.gmra.mxu0 %v1376
      %v5210 = vpop.f32.mrf.mxu0
      %v5211 = vadd.f32 0.0, %v5210
      %v5212 = vpop.f32.mrf.mxu0
      %v5213 = vpop.f32.mrf.mxu0
      %v5214 = vadd.f32 0.0, %v5213
      %v5215 = vpop.f32.mrf.mxu0
      %5216 = vmatprep.mubr.bf16.mxu0 0
      %5217 = vmatmul.mubr.bf16.gmra.mxu0 %v1379
      %v5218 = vpop.f32.mrf.mxu0
      %v5219 = vadd.f32 0.0, %v5218
      %v5220 = vpop.f32.mrf.mxu0
      %v5221 = vpop.f32.mrf.mxu0
      %v5222 = vadd.f32 0.0, %v5221
      %v5223 = vpop.f32.mrf.mxu0
      %5224 = vmatprep.mubr.bf16.mxu0 0
      %5225 = vmatmul.mubr.bf16.gmra.mxu0 %v1382
      %v5226 = vpop.f32.mrf.mxu0
      %v5227 = vadd.f32 0.0, %v5226
      %v5228 = vpop.f32.mrf.mxu0
      %v5229 = vpop.f32.mrf.mxu0
      %v5230 = vadd.f32 0.0, %v5229
      %v5231 = vpop.f32.mrf.mxu0
      %5232 = vmatprep.mubr.bf16.mxu0 0
      %5233 = vmatmul.mubr.bf16.gmra.mxu0 %v1385
      %v5234 = vpop.f32.mrf.mxu0
      %v5235 = vadd.f32 0.0, %v5234
      %v5236 = vpop.f32.mrf.mxu0
      %v5237 = vpop.f32.mrf.mxu0
      %v5238 = vadd.f32 0.0, %v5237
      %v5239 = vpop.f32.mrf.mxu0
      %5240 = vmatprep.mubr.bf16.mxu0 0
      %5241 = vmatmul.mubr.bf16.gmra.mxu0 %v1388
      %v5242 = vpop.f32.mrf.mxu0
      %v5243 = vadd.f32 0.0, %v5242
      %v5244 = vpop.f32.mrf.mxu0
      %v5245 = vpop.f32.mrf.mxu0
      %v5246 = vadd.f32 0.0, %v5245
      %v5247 = vpop.f32.mrf.mxu0
      %5248 = vmatprep.mubr.bf16.mxu0 0
      %5249 = vmatmul.mubr.bf16.gmra.mxu0 %v1391
      %v5250 = vpop.f32.mrf.mxu0
      %v5251 = vadd.f32 0.0, %v5250
      %v5252 = vpop.f32.mrf.mxu0
      %v5253 = vpop.f32.mrf.mxu0
      %v5254 = vadd.f32 0.0, %v5253
      %v5255 = vpop.f32.mrf.mxu0
      %5256 = vmatprep.mubr.bf16.mxu0 0
      %5257 = vmatmul.mubr.bf16.gmra.mxu0 %v1394
      %v5258 = vpop.f32.mrf.mxu0
      %v5259 = vadd.f32 0.0, %v5258
      %v5260 = vpop.f32.mrf.mxu0
      %v5261 = vpop.f32.mrf.mxu0
      %v5262 = vadd.f32 0.0, %v5261
      %v5263 = vpop.f32.mrf.mxu0
      %5264 = vmatprep.mubr.bf16.mxu0 0
      %5265 = vmatmul.mubr.bf16.gmra.mxu0 %v1397
      %v5266 = vpop.f32.mrf.mxu0
      %v5267 = vadd.f32 0.0, %v5266
      %v5268 = vpop.f32.mrf.mxu0
      %v5269 = vpop.f32.mrf.mxu0
      %v5270 = vadd.f32 0.0, %v5269
      %v5271 = vpop.f32.mrf.mxu0
      %5272 = vmatprep.mubr.bf16.mxu0 0
      %5273 = vmatmul.mubr.bf16.gmra.mxu0 %v1400
      %v5274 = vpop.f32.mrf.mxu0
      %v5275 = vadd.f32 0.0, %v5274
      %v5276 = vpop.f32.mrf.mxu0
      %v5277 = vpop.f32.mrf.mxu0
      %v5278 = vadd.f32 0.0, %v5277
      %v5279 = vpop.f32.mrf.mxu0
      %5280 = vmatprep.mubr.bf16.mxu0 0
      %5281 = vmatmul.mubr.bf16.gmra.mxu0 %v1403
      %v5282 = vpop.f32.mrf.mxu0
      %v5283 = vadd.f32 0.0, %v5282
      %v5284 = vpop.f32.mrf.mxu0
      %v5285 = vpop.f32.mrf.mxu0
      %v5286 = vadd.f32 0.0, %v5285
      %v5287 = vpop.f32.mrf.mxu0
      %5288 = vmatprep.mubr.bf16.mxu0 0
      %5289 = vmatmul.mubr.bf16.gmra.mxu0 %v2995
      %v5290 = vpop.f32.mrf.mxu0
      %v5291 = vadd.f32 0.0, %v5290
      %v5292 = vpop.f32.mrf.mxu0
      %v5293 = vpop.f32.mrf.mxu0
      %v5294 = vadd.f32 0.0, %v5293
      %v5295 = vpop.f32.mrf.mxu0
      %5296 = vmatprep.mubr.bf16.mxu0 0
      %5297 = vmatmul.mubr.bf16.gmra.mxu0 %v4071
      %v5298 = vpop.f32.mrf.mxu0
      %v5299 = vadd.f32 0.0, %v5298
      %v5300 = vpop.f32.mrf.mxu0
      %v5301 = vpop.f32.mrf.mxu0
      %v5302 = vadd.f32 0.0, %v5301
      %v5303 = vpop.f32.mrf.mxu0
      %5304 = vmatprep.mubr.bf16.mxu0 0
      %5305 = vmatmul.mubr.bf16.gmra.mxu0 %v5147
      %v5306 = vpop.f32.mrf.mxu0
      %v5307 = vadd.f32 0.0, %v5306
      %v5308 = vpop.f32.mrf.mxu0
      %v5309 = vpop.f32.mrf.mxu0
      %v5310 = vadd.f32 0.0, %v5309
      %v5311 = vpop.f32.mrf.mxu0
      %5312 = vdwg.mxu0
      %v5313 = vadd.f32 %v5101, %v5187
      %v5314 = vadd.f32 %v5102, %v5190
      %v5315 = vadd.f32 %v5103, %v5195
      %v5316 = vadd.f32 %v5104, %v5198
      %v5317 = vadd.f32 %v5105, %v5203
      %v5318 = vadd.f32 %v5106, %v5206
      %v5319 = vadd.f32 %v5107, %v5211
      %v5320 = vadd.f32 %v5108, %v5214
      %v5321 = vadd.f32 %v5109, %v5219
      %v5322 = vadd.f32 %v5110, %v5222
      %v5323 = vadd.f32 %v5111, %v5227
      %v5324 = vadd.f32 %v5112, %v5230
      %v5325 = vadd.f32 %v5113, %v5235
      %v5326 = vadd.f32 %v5114, %v5238
      %v5327 = vadd.f32 %v5115, %v5243
      %v5328 = vadd.f32 %v5116, %v5246
      %v5329 = vadd.f32 %v5117, %v5251
      %v5330 = vadd.f32 %v5118, %v5254
      %v5331 = vadd.f32 %v5119, %v5259
      %v5332 = vadd.f32 %v5120, %v5262
      %v5333 = vadd.f32 %v5121, %v5267
      %v5334 = vadd.f32 %v5122, %v5270
      %v5335 = vadd.f32 %v5123, %v5275
      %v5336 = vadd.f32 %v5124, %v5278
      %v5337 = vadd.f32 %v5125, %v5283
      %v5338 = vadd.f32 %v5126, %v5286
      %v5339 = vadd.f32 %v5127, %v5291
      %v5340 = vadd.f32 %v5128, %v5294
      %v5341 = vadd.f32 %v5129, %v5299
      %v5342 = vadd.f32 %v5130, %v5302
      %v5343 = vadd.f32 %v5131, %v5307
      %v5344 = vadd.f32 %v5132, %v5310
      %v5345 = vrot.slane %v4906, 5
      %v5346 = vrot.slane %v4909, 6
      %v5347 = vor.u32 %v5345, %v5346
      %v5348 = vrot.slane %v5347, 4
      %v5349 = vrot.slane %v4919, 5
      %v5350 = vrot.slane %v4915, 6
      %v5351 = vor.u32 %v5349, %v5350
      %v5352 = vsel %vm1603, %v5348, %v5351
      %v5353 = vrot.slane %v5351, 4
      %v5354 = vshrl.u32 %v228, 16
      %v5356 = vrot.slane %v5354, 5
      %v5357 = vrot.slane %v4925, 6
      %v5358 = vor.u32 %v5356, %v5357
      %v5359 = vsel %vm1603, %v5353, %v5358
      %s5360 = scalar_lea.vmem %s1, 36
      %v5361 = vld [vmem:[%s5360] sm:$0x3]
      %v5362 = vunpack.c.l.b16 %v5352
      %v5363 = vunpack.c.l.b16 %v5359
      %v5364 = vpack.c.b16 %v5363, %v5362
      %v5366 = vsel %vm670, %v5364, 0
      %v5369 = vsel %vm719, %v5361, 0
      %5371 = vmatprep.subr.bf16.mxu0 0
      %5372 = vmatpush1.bf16.msra.mxu0 0
      %5373 = vmatprep.subr.bf16.mxu0 0
      %5374 = vmatpush1.bf16.msra.mxu0 0
      %5375 = vmatprep.subr.bf16.mxu0 0
      %5376 = vmatpush1.bf16.msra.mxu0 0
      %5377 = vmatprep.subr.bf16.mxu0 0
      %5378 = vmatpush1.bf16.msra.mxu0 0
      %5379 = vmatprep.subr.bf16.mxu0 0
      %5380 = vmatpush1.bf16.msra.mxu0 0
      %5381 = vmatprep.subr.bf16.mxu0 0
      %5382 = vmatpush1.bf16.msra.mxu0 0
      %5383 = vmatprep.subr.bf16.mxu0 0
      %5384 = vmatpush1.bf16.msra.mxu0 0
      %5385 = vmatprep.subr.bf16.mxu0 0
      %5386 = vmatpush1.bf16.msra.mxu0 %v5369
      %5387 = vmatprep.subr.bf16.mxu0 0
      %5388 = vmatpush2.bf16.msra.mxu0 0
      %5389 = vmatprep.subr.bf16.mxu0 0
      %5390 = vmatpush2.bf16.msra.mxu0 0
      %5391 = vmatprep.subr.bf16.mxu0 0
      %5392 = vmatpush2.bf16.msra.mxu0 0
      %5393 = vmatprep.subr.bf16.mxu0 0
      %5394 = vmatpush2.bf16.msra.mxu0 0
      %5395 = vmatprep.subr.bf16.mxu0 0
      %5396 = vmatpush2.bf16.msra.mxu0 0
      %5397 = vmatprep.subr.bf16.mxu0 0
      %5398 = vmatpush2.bf16.msra.mxu0 0
      %5399 = vmatprep.subr.bf16.mxu0 0
      %5400 = vmatpush2.bf16.msra.mxu0 0
      %5401 = vmatprep.subr.bf16.mxu0 0
      %5402 = vmatpush2.bf16.msra.mxu0 0
      %5403 = vmatprep.mubr.bf16.mxu0 0
      %5404 = vmatmul.mubr.bf16.gmra.mxu0 %v1904
      %v5405 = vpop.f32.mrf.mxu0
      %v5406 = vadd.f32 0.0, %v5405
      %v5407 = vpop.f32.mrf.mxu0
      %v5408 = vpop.f32.mrf.mxu0
      %v5409 = vadd.f32 0.0, %v5408
      %v5410 = vpop.f32.mrf.mxu0
      %5411 = vmatprep.mubr.bf16.mxu0 0
      %5412 = vmatmul.mubr.bf16.gmra.mxu0 %v1907
      %v5413 = vpop.f32.mrf.mxu0
      %v5414 = vadd.f32 0.0, %v5413
      %v5415 = vpop.f32.mrf.mxu0
      %v5416 = vpop.f32.mrf.mxu0
      %v5417 = vadd.f32 0.0, %v5416
      %v5418 = vpop.f32.mrf.mxu0
      %5419 = vmatprep.mubr.bf16.mxu0 0
      %5420 = vmatmul.mubr.bf16.gmra.mxu0 %v1910
      %v5421 = vpop.f32.mrf.mxu0
      %v5422 = vadd.f32 0.0, %v5421
      %v5423 = vpop.f32.mrf.mxu0
      %v5424 = vpop.f32.mrf.mxu0
      %v5425 = vadd.f32 0.0, %v5424
      %v5426 = vpop.f32.mrf.mxu0
      %5427 = vmatprep.mubr.bf16.mxu0 0
      %5428 = vmatmul.mubr.bf16.gmra.mxu0 %v1913
      %v5429 = vpop.f32.mrf.mxu0
      %v5430 = vadd.f32 0.0, %v5429
      %v5431 = vpop.f32.mrf.mxu0
      %v5432 = vpop.f32.mrf.mxu0
      %v5433 = vadd.f32 0.0, %v5432
      %v5434 = vpop.f32.mrf.mxu0
      %5435 = vmatprep.mubr.bf16.mxu0 0
      %5436 = vmatmul.mubr.bf16.gmra.mxu0 %v1916
      %v5437 = vpop.f32.mrf.mxu0
      %v5438 = vadd.f32 0.0, %v5437
      %v5439 = vpop.f32.mrf.mxu0
      %v5440 = vpop.f32.mrf.mxu0
      %v5441 = vadd.f32 0.0, %v5440
      %v5442 = vpop.f32.mrf.mxu0
      %5443 = vmatprep.mubr.bf16.mxu0 0
      %5444 = vmatmul.mubr.bf16.gmra.mxu0 %v1919
      %v5445 = vpop.f32.mrf.mxu0
      %v5446 = vadd.f32 0.0, %v5445
      %v5447 = vpop.f32.mrf.mxu0
      %v5448 = vpop.f32.mrf.mxu0
      %v5449 = vadd.f32 0.0, %v5448
      %v5450 = vpop.f32.mrf.mxu0
      %5451 = vmatprep.mubr.bf16.mxu0 0
      %5452 = vmatmul.mubr.bf16.gmra.mxu0 %v1922
      %v5453 = vpop.f32.mrf.mxu0
      %v5454 = vadd.f32 0.0, %v5453
      %v5455 = vpop.f32.mrf.mxu0
      %v5456 = vpop.f32.mrf.mxu0
      %v5457 = vadd.f32 0.0, %v5456
      %v5458 = vpop.f32.mrf.mxu0
      %5459 = vmatprep.mubr.bf16.mxu0 0
      %5460 = vmatmul.mubr.bf16.gmra.mxu0 %v1925
      %v5461 = vpop.f32.mrf.mxu0
      %v5462 = vadd.f32 0.0, %v5461
      %v5463 = vpop.f32.mrf.mxu0
      %v5464 = vpop.f32.mrf.mxu0
      %v5465 = vadd.f32 0.0, %v5464
      %v5466 = vpop.f32.mrf.mxu0
      %5467 = vmatprep.mubr.bf16.mxu0 0
      %5468 = vmatmul.mubr.bf16.gmra.mxu0 %v1928
      %v5469 = vpop.f32.mrf.mxu0
      %v5470 = vadd.f32 0.0, %v5469
      %v5471 = vpop.f32.mrf.mxu0
      %v5472 = vpop.f32.mrf.mxu0
      %v5473 = vadd.f32 0.0, %v5472
      %v5474 = vpop.f32.mrf.mxu0
      %5475 = vmatprep.mubr.bf16.mxu0 0
      %5476 = vmatmul.mubr.bf16.gmra.mxu0 %v1931
      %v5477 = vpop.f32.mrf.mxu0
      %v5478 = vadd.f32 0.0, %v5477
      %v5479 = vpop.f32.mrf.mxu0
      %v5480 = vpop.f32.mrf.mxu0
      %v5481 = vadd.f32 0.0, %v5480
      %v5482 = vpop.f32.mrf.mxu0
      %5483 = vmatprep.mubr.bf16.mxu0 0
      %5484 = vmatmul.mubr.bf16.gmra.mxu0 %v1934
      %v5485 = vpop.f32.mrf.mxu0
      %v5486 = vadd.f32 0.0, %v5485
      %v5487 = vpop.f32.mrf.mxu0
      %v5488 = vpop.f32.mrf.mxu0
      %v5489 = vadd.f32 0.0, %v5488
      %v5490 = vpop.f32.mrf.mxu0
      %5491 = vmatprep.mubr.bf16.mxu0 0
      %5492 = vmatmul.mubr.bf16.gmra.mxu0 %v1937
      %v5493 = vpop.f32.mrf.mxu0
      %v5494 = vadd.f32 0.0, %v5493
      %v5495 = vpop.f32.mrf.mxu0
      %v5496 = vpop.f32.mrf.mxu0
      %v5497 = vadd.f32 0.0, %v5496
      %v5498 = vpop.f32.mrf.mxu0
      %5499 = vmatprep.mubr.bf16.mxu0 0
      %5500 = vmatmul.mubr.bf16.gmra.mxu0 %v1940
      %v5501 = vpop.f32.mrf.mxu0
      %v5502 = vadd.f32 0.0, %v5501
      %v5503 = vpop.f32.mrf.mxu0
      %v5504 = vpop.f32.mrf.mxu0
      %v5505 = vadd.f32 0.0, %v5504
      %v5506 = vpop.f32.mrf.mxu0
      %5507 = vmatprep.mubr.bf16.mxu0 0
      %5508 = vmatmul.mubr.bf16.gmra.mxu0 %v3214
      %v5509 = vpop.f32.mrf.mxu0
      %v5510 = vadd.f32 0.0, %v5509
      %v5511 = vpop.f32.mrf.mxu0
      %v5512 = vpop.f32.mrf.mxu0
      %v5513 = vadd.f32 0.0, %v5512
      %v5514 = vpop.f32.mrf.mxu0
      %5515 = vmatprep.mubr.bf16.mxu0 0
      %5516 = vmatmul.mubr.bf16.gmra.mxu0 %v4290
      %v5517 = vpop.f32.mrf.mxu0
      %v5518 = vadd.f32 0.0, %v5517
      %v5519 = vpop.f32.mrf.mxu0
      %v5520 = vpop.f32.mrf.mxu0
      %v5521 = vadd.f32 0.0, %v5520
      %v5522 = vpop.f32.mrf.mxu0
      %5523 = vmatprep.mubr.bf16.mxu0 0
      %5524 = vmatmul.mubr.bf16.gmra.mxu0 %v5366
      %v5525 = vpop.f32.mrf.mxu0
      %v5526 = vadd.f32 0.0, %v5525
      %v5527 = vpop.f32.mrf.mxu0
      %v5528 = vpop.f32.mrf.mxu0
      %v5529 = vadd.f32 0.0, %v5528
      %v5530 = vpop.f32.mrf.mxu0
      %5531 = vdwg.mxu0
      %v5532 = vadd.f32 %v5313, %v5406
      %v5533 = vadd.f32 %v5314, %v5409
      %v5534 = vadd.f32 %v5315, %v5414
      %v5535 = vadd.f32 %v5316, %v5417
      %v5536 = vadd.f32 %v5317, %v5422
      %v5537 = vadd.f32 %v5318, %v5425
      %v5538 = vadd.f32 %v5319, %v5430
      %v5539 = vadd.f32 %v5320, %v5433
      %v5540 = vadd.f32 %v5321, %v5438
      %v5541 = vadd.f32 %v5322, %v5441
      %v5542 = vadd.f32 %v5323, %v5446
      %v5543 = vadd.f32 %v5324, %v5449
      %v5544 = vadd.f32 %v5325, %v5454
      %v5545 = vadd.f32 %v5326, %v5457
      %v5546 = vadd.f32 %v5327, %v5462
      %v5547 = vadd.f32 %v5328, %v5465
      %v5548 = vadd.f32 %v5329, %v5470
      %v5549 = vadd.f32 %v5330, %v5473
      %v5550 = vadd.f32 %v5331, %v5478
      %v5551 = vadd.f32 %v5332, %v5481
      %v5552 = vadd.f32 %v5333, %v5486
      %v5553 = vadd.f32 %v5334, %v5489
      %v5554 = vadd.f32 %v5335, %v5494
      %v5555 = vadd.f32 %v5336, %v5497
      %v5556 = vadd.f32 %v5337, %v5502
      %v5557 = vadd.f32 %v5338, %v5505
      %v5558 = vadd.f32 %v5339, %v5510
      %v5559 = vadd.f32 %v5340, %v5513
      %v5560 = vadd.f32 %v5341, %v5518
      %v5561 = vadd.f32 %v5342, %v5521
      %v5562 = vadd.f32 %v5343, %v5526
      %v5563 = vadd.f32 %v5344, %v5529
      %v5564 = vrot.slane %v226, 6
      %v5565 = vrot.slane %v5564, 4
      %v5566 = vrot.slane %v227, 6
      %v5567 = vsel %vm2140, %v5565, %v5566
      %v5568 = vrot.slane %v5566, 4
      %v5569 = vrot.slane %v228, 6
      %v5570 = vsel %vm2140, %v5568, %v5569
      %s5571 = scalar_lea.vmem %s1, 38
      %v5572 = vld [vmem:[%s5571] sm:$0x3]
      %v5573 = vunpack.c.l.b16 %v5567
      %v5574 = vunpack.c.l.b16 %v5570
      %v5575 = vpack.c.b16 %v5574, %v5573
      %v5577 = vsel %vm670, %v5575, 0
      %v5580 = vsel %vm719, %v5572, 0
      %5582 = vmatprep.subr.bf16.mxu0 0
      %5583 = vmatpush1.bf16.msra.mxu0 0
      %5584 = vmatprep.subr.bf16.mxu0 0
      %5585 = vmatpush1.bf16.msra.mxu0 0
      %5586 = vmatprep.subr.bf16.mxu0 0
      %5587 = vmatpush1.bf16.msra.mxu0 0
      %5588 = vmatprep.subr.bf16.mxu0 0
      %5589 = vmatpush1.bf16.msra.mxu0 0
      %5590 = vmatprep.subr.bf16.mxu0 0
      %5591 = vmatpush1.bf16.msra.mxu0 0
      %5592 = vmatprep.subr.bf16.mxu0 0
      %5593 = vmatpush1.bf16.msra.mxu0 0
      %5594 = vmatprep.subr.bf16.mxu0 0
      %5595 = vmatpush1.bf16.msra.mxu0 0
      %5596 = vmatprep.subr.bf16.mxu0 0
      %5597 = vmatpush1.bf16.msra.mxu0 %v5580
      %5598 = vmatprep.subr.bf16.mxu0 0
      %5599 = vmatpush2.bf16.msra.mxu0 0
      %5600 = vmatprep.subr.bf16.mxu0 0
      %5601 = vmatpush2.bf16.msra.mxu0 0
      %5602 = vmatprep.subr.bf16.mxu0 0
      %5603 = vmatpush2.bf16.msra.mxu0 0
      %5604 = vmatprep.subr.bf16.mxu0 0
      %5605 = vmatpush2.bf16.msra.mxu0 0
      %5606 = vmatprep.subr.bf16.mxu0 0
      %5607 = vmatpush2.bf16.msra.mxu0 0
      %5608 = vmatprep.subr.bf16.mxu0 0
      %5609 = vmatpush2.bf16.msra.mxu0 0
      %5610 = vmatprep.subr.bf16.mxu0 0
      %5611 = vmatpush2.bf16.msra.mxu0 0
      %5612 = vmatprep.subr.bf16.mxu0 0
      %5613 = vmatpush2.bf16.msra.mxu0 0
      %5614 = vmatprep.mubr.bf16.mxu0 0
      %5615 = vmatmul.mubr.bf16.gmra.mxu0 %v2313
      %v5616 = vpop.f32.mrf.mxu0
      %v5617 = vadd.f32 0.0, %v5616
      %v5618 = vpop.f32.mrf.mxu0
      %v5619 = vpop.f32.mrf.mxu0
      %v5620 = vadd.f32 0.0, %v5619
      %v5621 = vpop.f32.mrf.mxu0
      %5622 = vmatprep.mubr.bf16.mxu0 0
      %5623 = vmatmul.mubr.bf16.gmra.mxu0 %v2316
      %v5624 = vpop.f32.mrf.mxu0
      %v5625 = vadd.f32 0.0, %v5624
      %v5626 = vpop.f32.mrf.mxu0
      %v5627 = vpop.f32.mrf.mxu0
      %v5628 = vadd.f32 0.0, %v5627
      %v5629 = vpop.f32.mrf.mxu0
      %5630 = vmatprep.mubr.bf16.mxu0 0
      %5631 = vmatmul.mubr.bf16.gmra.mxu0 %v2319
      %v5632 = vpop.f32.mrf.mxu0
      %v5633 = vadd.f32 0.0, %v5632
      %v5634 = vpop.f32.mrf.mxu0
      %v5635 = vpop.f32.mrf.mxu0
      %v5636 = vadd.f32 0.0, %v5635
      %v5637 = vpop.f32.mrf.mxu0
      %5638 = vmatprep.mubr.bf16.mxu0 0
      %5639 = vmatmul.mubr.bf16.gmra.mxu0 %v2322
      %v5640 = vpop.f32.mrf.mxu0
      %v5641 = vadd.f32 0.0, %v5640
      %v5642 = vpop.f32.mrf.mxu0
      %v5643 = vpop.f32.mrf.mxu0
      %v5644 = vadd.f32 0.0, %v5643
      %v5645 = vpop.f32.mrf.mxu0
      %5646 = vmatprep.mubr.bf16.mxu0 0
      %5647 = vmatmul.mubr.bf16.gmra.mxu0 %v2325
      %v5648 = vpop.f32.mrf.mxu0
      %v5649 = vadd.f32 0.0, %v5648
      %v5650 = vpop.f32.mrf.mxu0
      %v5651 = vpop.f32.mrf.mxu0
      %v5652 = vadd.f32 0.0, %v5651
      %v5653 = vpop.f32.mrf.mxu0
      %5654 = vmatprep.mubr.bf16.mxu0 0
      %5655 = vmatmul.mubr.bf16.gmra.mxu0 %v2328
      %v5656 = vpop.f32.mrf.mxu0
      %v5657 = vadd.f32 0.0, %v5656
      %v5658 = vpop.f32.mrf.mxu0
      %v5659 = vpop.f32.mrf.mxu0
      %v5660 = vadd.f32 0.0, %v5659
      %v5661 = vpop.f32.mrf.mxu0
      %5662 = vmatprep.mubr.bf16.mxu0 0
      %5663 = vmatmul.mubr.bf16.gmra.mxu0 %v2331
      %v5664 = vpop.f32.mrf.mxu0
      %v5665 = vadd.f32 0.0, %v5664
      %v5666 = vpop.f32.mrf.mxu0
      %v5667 = vpop.f32.mrf.mxu0
      %v5668 = vadd.f32 0.0, %v5667
      %v5669 = vpop.f32.mrf.mxu0
      %5670 = vmatprep.mubr.bf16.mxu0 0
      %5671 = vmatmul.mubr.bf16.gmra.mxu0 %v2334
      %v5672 = vpop.f32.mrf.mxu0
      %v5673 = vadd.f32 0.0, %v5672
      %v5674 = vpop.f32.mrf.mxu0
      %v5675 = vpop.f32.mrf.mxu0
      %v5676 = vadd.f32 0.0, %v5675
      %v5677 = vpop.f32.mrf.mxu0
      %5678 = vmatprep.mubr.bf16.mxu0 0
      %5679 = vmatmul.mubr.bf16.gmra.mxu0 %v2337
      %v5680 = vpop.f32.mrf.mxu0
      %v5681 = vadd.f32 0.0, %v5680
      %v5682 = vpop.f32.mrf.mxu0
      %v5683 = vpop.f32.mrf.mxu0
      %v5684 = vadd.f32 0.0, %v5683
      %v5685 = vpop.f32.mrf.mxu0
      %5686 = vmatprep.mubr.bf16.mxu0 0
      %5687 = vmatmul.mubr.bf16.gmra.mxu0 %v2340
      %v5688 = vpop.f32.mrf.mxu0
      %v5689 = vadd.f32 0.0, %v5688
      %v5690 = vpop.f32.mrf.mxu0
      %v5691 = vpop.f32.mrf.mxu0
      %v5692 = vadd.f32 0.0, %v5691
      %v5693 = vpop.f32.mrf.mxu0
      %5694 = vmatprep.mubr.bf16.mxu0 0
      %5695 = vmatmul.mubr.bf16.gmra.mxu0 %v2343
      %v5696 = vpop.f32.mrf.mxu0
      %v5697 = vadd.f32 0.0, %v5696
      %v5698 = vpop.f32.mrf.mxu0
      %v5699 = vpop.f32.mrf.mxu0
      %v5700 = vadd.f32 0.0, %v5699
      %v5701 = vpop.f32.mrf.mxu0
      %5702 = vmatprep.mubr.bf16.mxu0 0
      %5703 = vmatmul.mubr.bf16.gmra.mxu0 %v2346
      %v5704 = vpop.f32.mrf.mxu0
      %v5705 = vadd.f32 0.0, %v5704
      %v5706 = vpop.f32.mrf.mxu0
      %v5707 = vpop.f32.mrf.mxu0
      %v5708 = vadd.f32 0.0, %v5707
      %v5709 = vpop.f32.mrf.mxu0
      %5710 = vmatprep.mubr.bf16.mxu0 0
      %5711 = vmatmul.mubr.bf16.gmra.mxu0 %v2349
      %v5712 = vpop.f32.mrf.mxu0
      %v5713 = vadd.f32 0.0, %v5712
      %v5714 = vpop.f32.mrf.mxu0
      %v5715 = vpop.f32.mrf.mxu0
      %v5716 = vadd.f32 0.0, %v5715
      %v5717 = vpop.f32.mrf.mxu0
      %5718 = vmatprep.mubr.bf16.mxu0 0
      %5719 = vmatmul.mubr.bf16.gmra.mxu0 %v3425
      %v5720 = vpop.f32.mrf.mxu0
      %v5721 = vadd.f32 0.0, %v5720
      %v5722 = vpop.f32.mrf.mxu0
      %v5723 = vpop.f32.mrf.mxu0
      %v5724 = vadd.f32 0.0, %v5723
      %v5725 = vpop.f32.mrf.mxu0
      %5726 = vmatprep.mubr.bf16.mxu0 0
      %5727 = vmatmul.mubr.bf16.gmra.mxu0 %v4501
      %v5728 = vpop.f32.mrf.mxu0
      %v5729 = vadd.f32 0.0, %v5728
      %v5730 = vpop.f32.mrf.mxu0
      %v5731 = vpop.f32.mrf.mxu0
      %v5732 = vadd.f32 0.0, %v5731
      %v5733 = vpop.f32.mrf.mxu0
      %5734 = vmatprep.mubr.bf16.mxu0 0
      %5735 = vmatmul.mubr.bf16.gmra.mxu0 %v5577
      %v5736 = vpop.f32.mrf.mxu0
      %v5737 = vadd.f32 0.0, %v5736
      %v5738 = vpop.f32.mrf.mxu0
      %v5739 = vpop.f32.mrf.mxu0
      %v5740 = vadd.f32 0.0, %v5739
      %v5741 = vpop.f32.mrf.mxu0
      %5742 = vdwg.mxu0
      %v5743 = vadd.f32 %v5532, %v5617
      %v5744 = vadd.f32 %v5533, %v5620
      %v5745 = vadd.f32 %v5534, %v5625
      %v5746 = vadd.f32 %v5535, %v5628
      %v5747 = vadd.f32 %v5536, %v5633
      %v5748 = vadd.f32 %v5537, %v5636
      %v5749 = vadd.f32 %v5538, %v5641
      %v5750 = vadd.f32 %v5539, %v5644
      %v5751 = vadd.f32 %v5540, %v5649
      %v5752 = vadd.f32 %v5541, %v5652
      %v5753 = vadd.f32 %v5542, %v5657
      %v5754 = vadd.f32 %v5543, %v5660
      %v5755 = vadd.f32 %v5544, %v5665
      %v5756 = vadd.f32 %v5545, %v5668
      %v5757 = vadd.f32 %v5546, %v5673
      %v5758 = vadd.f32 %v5547, %v5676
      %v5759 = vadd.f32 %v5548, %v5681
      %v5760 = vadd.f32 %v5549, %v5684
      %v5761 = vadd.f32 %v5550, %v5689
      %v5762 = vadd.f32 %v5551, %v5692
      %v5763 = vadd.f32 %v5552, %v5697
      %v5764 = vadd.f32 %v5553, %v5700
      %v5765 = vadd.f32 %v5554, %v5705
      %v5766 = vadd.f32 %v5555, %v5708
      %v5767 = vadd.f32 %v5556, %v5713
      %v5768 = vadd.f32 %v5557, %v5716
      %v5769 = vadd.f32 %v5558, %v5721
      %v5770 = vadd.f32 %v5559, %v5724
      %v5771 = vadd.f32 %v5560, %v5729
      %v5772 = vadd.f32 %v5561, %v5732
      %v5773 = vadd.f32 %v5562, %v5737
      %v5774 = vadd.f32 %v5563, %v5740
      %s5775 = scalar_lea.vmem %s1, 40
      %v5776 = vld [vmem:[%s5775] sm:$0x3]
      %v5779 = vunpack.c.l.b16 %v229
      %v5780 = vunpack.c.l.b16 %v230
      %v5781 = vpack.c.b16 %v5780, %v5779
      %v5783 = vsel %vm670, %v5781, 0
      %v5786 = vsel %vm719, %v5776, 0
      %5788 = vmatprep.subr.bf16.mxu0 0
      %5789 = vmatpush1.bf16.msra.mxu0 0
      %5790 = vmatprep.subr.bf16.mxu0 0
      %5791 = vmatpush1.bf16.msra.mxu0 0
      %5792 = vmatprep.subr.bf16.mxu0 0
      %5793 = vmatpush1.bf16.msra.mxu0 0
      %5794 = vmatprep.subr.bf16.mxu0 0
      %5795 = vmatpush1.bf16.msra.mxu0 0
      %5796 = vmatprep.subr.bf16.mxu0 0
      %5797 = vmatpush1.bf16.msra.mxu0 0
      %5798 = vmatprep.subr.bf16.mxu0 0
      %5799 = vmatpush1.bf16.msra.mxu0 0
      %5800 = vmatprep.subr.bf16.mxu0 0
      %5801 = vmatpush1.bf16.msra.mxu0 0
      %5802 = vmatprep.subr.bf16.mxu0 0
      %5803 = vmatpush1.bf16.msra.mxu0 %v5786
      %5804 = vmatprep.subr.bf16.mxu0 0
      %5805 = vmatpush2.bf16.msra.mxu0 0
      %5806 = vmatprep.subr.bf16.mxu0 0
      %5807 = vmatpush2.bf16.msra.mxu0 0
      %5808 = vmatprep.subr.bf16.mxu0 0
      %5809 = vmatpush2.bf16.msra.mxu0 0
      %5810 = vmatprep.subr.bf16.mxu0 0
      %5811 = vmatpush2.bf16.msra.mxu0 0
      %5812 = vmatprep.subr.bf16.mxu0 0
      %5813 = vmatpush2.bf16.msra.mxu0 0
      %5814 = vmatprep.subr.bf16.mxu0 0
      %5815 = vmatpush2.bf16.msra.mxu0 0
      %5816 = vmatprep.subr.bf16.mxu0 0
      %5817 = vmatpush2.bf16.msra.mxu0 0
      %5818 = vmatprep.subr.bf16.mxu0 0
      %5819 = vmatpush2.bf16.msra.mxu0 0
      %5820 = vmatprep.mubr.bf16.mxu0 0
      %5821 = vmatmul.mubr.bf16.gmra.mxu0 %v977
      %v5822 = vpop.f32.mrf.mxu0
      %v5823 = vadd.f32 0.0, %v5822
      %v5824 = vpop.f32.mrf.mxu0
      %v5825 = vpop.f32.mrf.mxu0
      %v5826 = vadd.f32 0.0, %v5825
      %v5827 = vpop.f32.mrf.mxu0
      %5828 = vmatprep.mubr.bf16.mxu0 0
      %5829 = vmatmul.mubr.bf16.gmra.mxu0 %v980
      %v5830 = vpop.f32.mrf.mxu0
      %v5831 = vadd.f32 0.0, %v5830
      %v5832 = vpop.f32.mrf.mxu0
      %v5833 = vpop.f32.mrf.mxu0
      %v5834 = vadd.f32 0.0, %v5833
      %v5835 = vpop.f32.mrf.mxu0
      %5836 = vmatprep.mubr.bf16.mxu0 0
      %5837 = vmatmul.mubr.bf16.gmra.mxu0 %v983
      %v5838 = vpop.f32.mrf.mxu0
      %v5839 = vadd.f32 0.0, %v5838
      %v5840 = vpop.f32.mrf.mxu0
      %v5841 = vpop.f32.mrf.mxu0
      %v5842 = vadd.f32 0.0, %v5841
      %v5843 = vpop.f32.mrf.mxu0
      %5844 = vmatprep.mubr.bf16.mxu0 0
      %5845 = vmatmul.mubr.bf16.gmra.mxu0 %v986
      %v5846 = vpop.f32.mrf.mxu0
      %v5847 = vadd.f32 0.0, %v5846
      %v5848 = vpop.f32.mrf.mxu0
      %v5849 = vpop.f32.mrf.mxu0
      %v5850 = vadd.f32 0.0, %v5849
      %v5851 = vpop.f32.mrf.mxu0
      %5852 = vmatprep.mubr.bf16.mxu0 0
      %5853 = vmatmul.mubr.bf16.gmra.mxu0 %v989
      %v5854 = vpop.f32.mrf.mxu0
      %v5855 = vadd.f32 0.0, %v5854
      %v5856 = vpop.f32.mrf.mxu0
      %v5857 = vpop.f32.mrf.mxu0
      %v5858 = vadd.f32 0.0, %v5857
      %v5859 = vpop.f32.mrf.mxu0
      %5860 = vmatprep.mubr.bf16.mxu0 0
      %5861 = vmatmul.mubr.bf16.gmra.mxu0 %v992
      %v5862 = vpop.f32.mrf.mxu0
      %v5863 = vadd.f32 0.0, %v5862
      %v5864 = vpop.f32.mrf.mxu0
      %v5865 = vpop.f32.mrf.mxu0
      %v5866 = vadd.f32 0.0, %v5865
      %v5867 = vpop.f32.mrf.mxu0
      %5868 = vmatprep.mubr.bf16.mxu0 0
      %5869 = vmatmul.mubr.bf16.gmra.mxu0 %v995
      %v5870 = vpop.f32.mrf.mxu0
      %v5871 = vadd.f32 0.0, %v5870
      %v5872 = vpop.f32.mrf.mxu0
      %v5873 = vpop.f32.mrf.mxu0
      %v5874 = vadd.f32 0.0, %v5873
      %v5875 = vpop.f32.mrf.mxu0
      %5876 = vmatprep.mubr.bf16.mxu0 0
      %5877 = vmatmul.mubr.bf16.gmra.mxu0 %v998
      %v5878 = vpop.f32.mrf.mxu0
      %v5879 = vadd.f32 0.0, %v5878
      %v5880 = vpop.f32.mrf.mxu0
      %v5881 = vpop.f32.mrf.mxu0
      %v5882 = vadd.f32 0.0, %v5881
      %v5883 = vpop.f32.mrf.mxu0
      %5884 = vmatprep.mubr.bf16.mxu0 0
      %5885 = vmatmul.mubr.bf16.gmra.mxu0 %v1001
      %v5886 = vpop.f32.mrf.mxu0
      %v5887 = vadd.f32 0.0, %v5886
      %v5888 = vpop.f32.mrf.mxu0
      %v5889 = vpop.f32.mrf.mxu0
      %v5890 = vadd.f32 0.0, %v5889
      %v5891 = vpop.f32.mrf.mxu0
      %5892 = vmatprep.mubr.bf16.mxu0 0
      %5893 = vmatmul.mubr.bf16.gmra.mxu0 %v1004
      %v5894 = vpop.f32.mrf.mxu0
      %v5895 = vadd.f32 0.0, %v5894
      %v5896 = vpop.f32.mrf.mxu0
      %v5897 = vpop.f32.mrf.mxu0
      %v5898 = vadd.f32 0.0, %v5897
      %v5899 = vpop.f32.mrf.mxu0
      %5900 = vmatprep.mubr.bf16.mxu0 0
      %5901 = vmatmul.mubr.bf16.gmra.mxu0 %v1007
      %v5902 = vpop.f32.mrf.mxu0
      %v5903 = vadd.f32 0.0, %v5902
      %v5904 = vpop.f32.mrf.mxu0
      %v5905 = vpop.f32.mrf.mxu0
      %v5906 = vadd.f32 0.0, %v5905
      %v5907 = vpop.f32.mrf.mxu0
      %5908 = vmatprep.mubr.bf16.mxu0 0
      %5909 = vmatmul.mubr.bf16.gmra.mxu0 %v1010
      %v5910 = vpop.f32.mrf.mxu0
      %v5911 = vadd.f32 0.0, %v5910
      %v5912 = vpop.f32.mrf.mxu0
      %v5913 = vpop.f32.mrf.mxu0
      %v5914 = vadd.f32 0.0, %v5913
      %v5915 = vpop.f32.mrf.mxu0
      %5916 = vmatprep.mubr.bf16.mxu0 0
      %5917 = vmatmul.mubr.bf16.gmra.mxu0 %v2555
      %v5918 = vpop.f32.mrf.mxu0
      %v5919 = vadd.f32 0.0, %v5918
      %v5920 = vpop.f32.mrf.mxu0
      %v5921 = vpop.f32.mrf.mxu0
      %v5922 = vadd.f32 0.0, %v5921
      %v5923 = vpop.f32.mrf.mxu0
      %5924 = vmatprep.mubr.bf16.mxu0 0
      %5925 = vmatmul.mubr.bf16.gmra.mxu0 %v3631
      %v5926 = vpop.f32.mrf.mxu0
      %v5927 = vadd.f32 0.0, %v5926
      %v5928 = vpop.f32.mrf.mxu0
      %v5929 = vpop.f32.mrf.mxu0
      %v5930 = vadd.f32 0.0, %v5929
      %v5931 = vpop.f32.mrf.mxu0
      %5932 = vmatprep.mubr.bf16.mxu0 0
      %5933 = vmatmul.mubr.bf16.gmra.mxu0 %v4707
      %v5934 = vpop.f32.mrf.mxu0
      %v5935 = vadd.f32 0.0, %v5934
      %v5936 = vpop.f32.mrf.mxu0
      %v5937 = vpop.f32.mrf.mxu0
      %v5938 = vadd.f32 0.0, %v5937
      %v5939 = vpop.f32.mrf.mxu0
      %5940 = vmatprep.mubr.bf16.mxu0 0
      %5941 = vmatmul.mubr.bf16.gmra.mxu0 %v5783
      %v5942 = vpop.f32.mrf.mxu0
      %v5943 = vadd.f32 0.0, %v5942
      %v5944 = vpop.f32.mrf.mxu0
      %v5945 = vpop.f32.mrf.mxu0
      %v5946 = vadd.f32 0.0, %v5945
      %v5947 = vpop.f32.mrf.mxu0
      %5948 = vdwg.mxu0
      %v5949 = vadd.f32 %v5743, %v5823
      %v5950 = vadd.f32 %v5744, %v5826
      %v5951 = vadd.f32 %v5745, %v5831
      %v5952 = vadd.f32 %v5746, %v5834
      %v5953 = vadd.f32 %v5747, %v5839
      %v5954 = vadd.f32 %v5748, %v5842
      %v5955 = vadd.f32 %v5749, %v5847
      %v5956 = vadd.f32 %v5750, %v5850
      %v5957 = vadd.f32 %v5751, %v5855
      %v5958 = vadd.f32 %v5752, %v5858
      %v5959 = vadd.f32 %v5753, %v5863
      %v5960 = vadd.f32 %v5754, %v5866
      %v5961 = vadd.f32 %v5755, %v5871
      %v5962 = vadd.f32 %v5756, %v5874
      %v5963 = vadd.f32 %v5757, %v5879
      %v5964 = vadd.f32 %v5758, %v5882
      %v5965 = vadd.f32 %v5759, %v5887
      %v5966 = vadd.f32 %v5760, %v5890
      %v5967 = vadd.f32 %v5761, %v5895
      %v5968 = vadd.f32 %v5762, %v5898
      %v5969 = vadd.f32 %v5763, %v5903
      %v5970 = vadd.f32 %v5764, %v5906
      %v5971 = vadd.f32 %v5765, %v5911
      %v5972 = vadd.f32 %v5766, %v5914
      %v5973 = vadd.f32 %v5767, %v5919
      %v5974 = vadd.f32 %v5768, %v5922
      %v5975 = vadd.f32 %v5769, %v5927
      %v5976 = vadd.f32 %v5770, %v5930
      %v5977 = vadd.f32 %v5771, %v5935
      %v5978 = vadd.f32 %v5772, %v5938
      %v5979 = vadd.f32 %v5773, %v5943
      %v5980 = vadd.f32 %v5774, %v5946
      %v5982 = vshrl.u32 %v229, 16
      %v5984 = vrot.slane %v5982, 4
      %v5985 = vshll.u32 %v229, 16
      %v5987 = vrot.slane %v5985, 5
      %v5988 = vor.u32 %v5984, %v5987
      %v5989 = vrot.slane %v5988, 4
      %v5991 = vshll.u32 %v230, 16
      %v5993 = vrot.slane %v5991, 5
      %v5994 = vsel %vm235, %v5989, %v5993
      %v5995 = vshrl.u32 %v230, 16
      %v5997 = vrot.slane %v5995, 4
      %v5998 = vor.u32 %v5997, %v5993
      %v5999 = vrot.slane %v5998, 4
      %v6001 = vshll.u32 %v231, 16
      %v6003 = vrot.slane %v6001, 5
      %v6004 = vsel %vm235, %v5999, %v6003
      %s6005 = scalar_lea.vmem %s1, 42
      %v6006 = vld [vmem:[%s6005] sm:$0x3]
      %v6007 = vunpack.c.l.b16 %v5994
      %v6008 = vunpack.c.l.b16 %v6004
      %v6009 = vpack.c.b16 %v6008, %v6007
      %v6011 = vsel %vm670, %v6009, 0
      %v6014 = vsel %vm719, %v6006, 0
      %6016 = vmatprep.subr.bf16.mxu0 0
      %6017 = vmatpush1.bf16.msra.mxu0 0
      %6018 = vmatprep.subr.bf16.mxu0 0
      %6019 = vmatpush1.bf16.msra.mxu0 0
      %6020 = vmatprep.subr.bf16.mxu0 0
      %6021 = vmatpush1.bf16.msra.mxu0 0
      %6022 = vmatprep.subr.bf16.mxu0 0
      %6023 = vmatpush1.bf16.msra.mxu0 0
      %6024 = vmatprep.subr.bf16.mxu0 0
      %6025 = vmatpush1.bf16.msra.mxu0 0
      %6026 = vmatprep.subr.bf16.mxu0 0
      %6027 = vmatpush1.bf16.msra.mxu0 0
      %6028 = vmatprep.subr.bf16.mxu0 0
      %6029 = vmatpush1.bf16.msra.mxu0 0
      %6030 = vmatprep.subr.bf16.mxu0 0
      %6031 = vmatpush1.bf16.msra.mxu0 %v6014
      %6032 = vmatprep.subr.bf16.mxu0 0
      %6033 = vmatpush2.bf16.msra.mxu0 0
      %6034 = vmatprep.subr.bf16.mxu0 0
      %6035 = vmatpush2.bf16.msra.mxu0 0
      %6036 = vmatprep.subr.bf16.mxu0 0
      %6037 = vmatpush2.bf16.msra.mxu0 0
      %6038 = vmatprep.subr.bf16.mxu0 0
      %6039 = vmatpush2.bf16.msra.mxu0 0
      %6040 = vmatprep.subr.bf16.mxu0 0
      %6041 = vmatpush2.bf16.msra.mxu0 0
      %6042 = vmatprep.subr.bf16.mxu0 0
      %6043 = vmatpush2.bf16.msra.mxu0 0
      %6044 = vmatprep.subr.bf16.mxu0 0
      %6045 = vmatpush2.bf16.msra.mxu0 0
      %6046 = vmatprep.subr.bf16.mxu0 0
      %6047 = vmatpush2.bf16.msra.mxu0 0
      %6048 = vmatprep.mubr.bf16.mxu0 0
      %6049 = vmatmul.mubr.bf16.gmra.mxu0 %v684
      %v6050 = vpop.f32.mrf.mxu0
      %v6051 = vadd.f32 0.0, %v6050
      %v6052 = vpop.f32.mrf.mxu0
      %v6053 = vpop.f32.mrf.mxu0
      %v6054 = vadd.f32 0.0, %v6053
      %v6055 = vpop.f32.mrf.mxu0
      %6056 = vmatprep.mubr.bf16.mxu0 0
      %6057 = vmatmul.mubr.bf16.gmra.mxu0 %v687
      %v6058 = vpop.f32.mrf.mxu0
      %v6059 = vadd.f32 0.0, %v6058
      %v6060 = vpop.f32.mrf.mxu0
      %v6061 = vpop.f32.mrf.mxu0
      %v6062 = vadd.f32 0.0, %v6061
      %v6063 = vpop.f32.mrf.mxu0
      %6064 = vmatprep.mubr.bf16.mxu0 0
      %6065 = vmatmul.mubr.bf16.gmra.mxu0 %v690
      %v6066 = vpop.f32.mrf.mxu0
      %v6067 = vadd.f32 0.0, %v6066
      %v6068 = vpop.f32.mrf.mxu0
      %v6069 = vpop.f32.mrf.mxu0
      %v6070 = vadd.f32 0.0, %v6069
      %v6071 = vpop.f32.mrf.mxu0
      %6072 = vmatprep.mubr.bf16.mxu0 0
      %6073 = vmatmul.mubr.bf16.gmra.mxu0 %v693
      %v6074 = vpop.f32.mrf.mxu0
      %v6075 = vadd.f32 0.0, %v6074
      %v6076 = vpop.f32.mrf.mxu0
      %v6077 = vpop.f32.mrf.mxu0
      %v6078 = vadd.f32 0.0, %v6077
      %v6079 = vpop.f32.mrf.mxu0
      %6080 = vmatprep.mubr.bf16.mxu0 0
      %6081 = vmatmul.mubr.bf16.gmra.mxu0 %v696
      %v6082 = vpop.f32.mrf.mxu0
      %v6083 = vadd.f32 0.0, %v6082
      %v6084 = vpop.f32.mrf.mxu0
      %v6085 = vpop.f32.mrf.mxu0
      %v6086 = vadd.f32 0.0, %v6085
      %v6087 = vpop.f32.mrf.mxu0
      %6088 = vmatprep.mubr.bf16.mxu0 0
      %6089 = vmatmul.mubr.bf16.gmra.mxu0 %v699
      %v6090 = vpop.f32.mrf.mxu0
      %v6091 = vadd.f32 0.0, %v6090
      %v6092 = vpop.f32.mrf.mxu0
      %v6093 = vpop.f32.mrf.mxu0
      %v6094 = vadd.f32 0.0, %v6093
      %v6095 = vpop.f32.mrf.mxu0
      %6096 = vmatprep.mubr.bf16.mxu0 0
      %6097 = vmatmul.mubr.bf16.gmra.mxu0 %v702
      %v6098 = vpop.f32.mrf.mxu0
      %v6099 = vadd.f32 0.0, %v6098
      %v6100 = vpop.f32.mrf.mxu0
      %v6101 = vpop.f32.mrf.mxu0
      %v6102 = vadd.f32 0.0, %v6101
      %v6103 = vpop.f32.mrf.mxu0
      %6104 = vmatprep.mubr.bf16.mxu0 0
      %6105 = vmatmul.mubr.bf16.gmra.mxu0 %v705
      %v6106 = vpop.f32.mrf.mxu0
      %v6107 = vadd.f32 0.0, %v6106
      %v6108 = vpop.f32.mrf.mxu0
      %v6109 = vpop.f32.mrf.mxu0
      %v6110 = vadd.f32 0.0, %v6109
      %v6111 = vpop.f32.mrf.mxu0
      %6112 = vmatprep.mubr.bf16.mxu0 0
      %6113 = vmatmul.mubr.bf16.gmra.mxu0 %v708
      %v6114 = vpop.f32.mrf.mxu0
      %v6115 = vadd.f32 0.0, %v6114
      %v6116 = vpop.f32.mrf.mxu0
      %v6117 = vpop.f32.mrf.mxu0
      %v6118 = vadd.f32 0.0, %v6117
      %v6119 = vpop.f32.mrf.mxu0
      %6120 = vmatprep.mubr.bf16.mxu0 0
      %6121 = vmatmul.mubr.bf16.gmra.mxu0 %v711
      %v6122 = vpop.f32.mrf.mxu0
      %v6123 = vadd.f32 0.0, %v6122
      %v6124 = vpop.f32.mrf.mxu0
      %v6125 = vpop.f32.mrf.mxu0
      %v6126 = vadd.f32 0.0, %v6125
      %v6127 = vpop.f32.mrf.mxu0
      %6128 = vmatprep.mubr.bf16.mxu0 0
      %6129 = vmatmul.mubr.bf16.gmra.mxu0 %v714
      %v6130 = vpop.f32.mrf.mxu0
      %v6131 = vadd.f32 0.0, %v6130
      %v6132 = vpop.f32.mrf.mxu0
      %v6133 = vpop.f32.mrf.mxu0
      %v6134 = vadd.f32 0.0, %v6133
      %v6135 = vpop.f32.mrf.mxu0
      %6136 = vmatprep.mubr.bf16.mxu0 0
      %6137 = vmatmul.mubr.bf16.gmra.mxu0 %v717
      %v6138 = vpop.f32.mrf.mxu0
      %v6139 = vadd.f32 0.0, %v6138
      %v6140 = vpop.f32.mrf.mxu0
      %v6141 = vpop.f32.mrf.mxu0
      %v6142 = vadd.f32 0.0, %v6141
      %v6143 = vpop.f32.mrf.mxu0
      %6144 = vmatprep.mubr.bf16.mxu0 0
      %6145 = vmatmul.mubr.bf16.gmra.mxu0 %v2783
      %v6146 = vpop.f32.mrf.mxu0
      %v6147 = vadd.f32 0.0, %v6146
      %v6148 = vpop.f32.mrf.mxu0
      %v6149 = vpop.f32.mrf.mxu0
      %v6150 = vadd.f32 0.0, %v6149
      %v6151 = vpop.f32.mrf.mxu0
      %6152 = vmatprep.mubr.bf16.mxu0 0
      %6153 = vmatmul.mubr.bf16.gmra.mxu0 %v3859
      %v6154 = vpop.f32.mrf.mxu0
      %v6155 = vadd.f32 0.0, %v6154
      %v6156 = vpop.f32.mrf.mxu0
      %v6157 = vpop.f32.mrf.mxu0
      %v6158 = vadd.f32 0.0, %v6157
      %v6159 = vpop.f32.mrf.mxu0
      %6160 = vmatprep.mubr.bf16.mxu0 0
      %6161 = vmatmul.mubr.bf16.gmra.mxu0 %v4935
      %v6162 = vpop.f32.mrf.mxu0
      %v6163 = vadd.f32 0.0, %v6162
      %v6164 = vpop.f32.mrf.mxu0
      %v6165 = vpop.f32.mrf.mxu0
      %v6166 = vadd.f32 0.0, %v6165
      %v6167 = vpop.f32.mrf.mxu0
      %6168 = vmatprep.mubr.bf16.mxu0 0
      %6169 = vmatmul.mubr.bf16.gmra.mxu0 %v6011
      %v6170 = vpop.f32.mrf.mxu0
      %v6171 = vadd.f32 0.0, %v6170
      %v6172 = vpop.f32.mrf.mxu0
      %v6173 = vpop.f32.mrf.mxu0
      %v6174 = vadd.f32 0.0, %v6173
      %v6175 = vpop.f32.mrf.mxu0
      %6176 = vdwg.mxu0
      %v6177 = vadd.f32 %v5949, %v6051
      %v6178 = vadd.f32 %v5950, %v6054
      %v6179 = vadd.f32 %v5951, %v6059
      %v6180 = vadd.f32 %v5952, %v6062
      %v6181 = vadd.f32 %v5953, %v6067
      %v6182 = vadd.f32 %v5954, %v6070
      %v6183 = vadd.f32 %v5955, %v6075
      %v6184 = vadd.f32 %v5956, %v6078
      %v6185 = vadd.f32 %v5957, %v6083
      %v6186 = vadd.f32 %v5958, %v6086
      %v6187 = vadd.f32 %v5959, %v6091
      %v6188 = vadd.f32 %v5960, %v6094
      %v6189 = vadd.f32 %v5961, %v6099
      %v6190 = vadd.f32 %v5962, %v6102
      %v6191 = vadd.f32 %v5963, %v6107
      %v6192 = vadd.f32 %v5964, %v6110
      %v6193 = vadd.f32 %v5965, %v6115
      %v6194 = vadd.f32 %v5966, %v6118
      %v6195 = vadd.f32 %v5967, %v6123
      %v6196 = vadd.f32 %v5968, %v6126
      %v6197 = vadd.f32 %v5969, %v6131
      %v6198 = vadd.f32 %v5970, %v6134
      %v6199 = vadd.f32 %v5971, %v6139
      %v6200 = vadd.f32 %v5972, %v6142
      %v6201 = vadd.f32 %v5973, %v6147
      %v6202 = vadd.f32 %v5974, %v6150
      %v6203 = vadd.f32 %v5975, %v6155
      %v6204 = vadd.f32 %v5976, %v6158
      %v6205 = vadd.f32 %v5977, %v6163
      %v6206 = vadd.f32 %v5978, %v6166
      %v6207 = vadd.f32 %v5979, %v6171
      %v6208 = vadd.f32 %v5980, %v6174
      %v6210 = vrot.slane %v229, 5
      %v6211 = vrot.slane %v6210, 4
      %v6212 = vrot.slane %v230, 5
      %v6213 = vsel %vm1194, %v6211, %v6212
      %v6214 = vrot.slane %v6212, 4
      %v6215 = vrot.slane %v231, 5
      %v6216 = vsel %vm1194, %v6214, %v6215
      %s6217 = scalar_lea.vmem %s1, 44
      %v6218 = vld [vmem:[%s6217] sm:$0x3]
      %v6219 = vunpack.c.l.b16 %v6213
      %v6220 = vunpack.c.l.b16 %v6216
      %v6221 = vpack.c.b16 %v6220, %v6219
      %v6223 = vsel %vm670, %v6221, 0
      %v6226 = vsel %vm719, %v6218, 0
      %6228 = vmatprep.subr.bf16.mxu0 0
      %6229 = vmatpush1.bf16.msra.mxu0 0
      %6230 = vmatprep.subr.bf16.mxu0 0
      %6231 = vmatpush1.bf16.msra.mxu0 0
      %6232 = vmatprep.subr.bf16.mxu0 0
      %6233 = vmatpush1.bf16.msra.mxu0 0
      %6234 = vmatprep.subr.bf16.mxu0 0
      %6235 = vmatpush1.bf16.msra.mxu0 0
      %6236 = vmatprep.subr.bf16.mxu0 0
      %6237 = vmatpush1.bf16.msra.mxu0 0
      %6238 = vmatprep.subr.bf16.mxu0 0
      %6239 = vmatpush1.bf16.msra.mxu0 0
      %6240 = vmatprep.subr.bf16.mxu0 0
      %6241 = vmatpush1.bf16.msra.mxu0 0
      %6242 = vmatprep.subr.bf16.mxu0 0
      %6243 = vmatpush1.bf16.msra.mxu0 %v6226
      %6244 = vmatprep.subr.bf16.mxu0 0
      %6245 = vmatpush2.bf16.msra.mxu0 0
      %6246 = vmatprep.subr.bf16.mxu0 0
      %6247 = vmatpush2.bf16.msra.mxu0 0
      %6248 = vmatprep.subr.bf16.mxu0 0
      %6249 = vmatpush2.bf16.msra.mxu0 0
      %6250 = vmatprep.subr.bf16.mxu0 0
      %6251 = vmatpush2.bf16.msra.mxu0 0
      %6252 = vmatprep.subr.bf16.mxu0 0
      %6253 = vmatpush2.bf16.msra.mxu0 0
      %6254 = vmatprep.subr.bf16.mxu0 0
      %6255 = vmatpush2.bf16.msra.mxu0 0
      %6256 = vmatprep.subr.bf16.mxu0 0
      %6257 = vmatpush2.bf16.msra.mxu0 0
      %6258 = vmatprep.subr.bf16.mxu0 0
      %6259 = vmatpush2.bf16.msra.mxu0 0
      %6260 = vmatprep.mubr.bf16.mxu0 0
      %6261 = vmatmul.mubr.bf16.gmra.mxu0 %v1370
      %v6262 = vpop.f32.mrf.mxu0
      %v6263 = vadd.f32 0.0, %v6262
      %v6264 = vpop.f32.mrf.mxu0
      %v6265 = vpop.f32.mrf.mxu0
      %v6266 = vadd.f32 0.0, %v6265
      %v6267 = vpop.f32.mrf.mxu0
      %6268 = vmatprep.mubr.bf16.mxu0 0
      %6269 = vmatmul.mubr.bf16.gmra.mxu0 %v1373
      %v6270 = vpop.f32.mrf.mxu0
      %v6271 = vadd.f32 0.0, %v6270
      %v6272 = vpop.f32.mrf.mxu0
      %v6273 = vpop.f32.mrf.mxu0
      %v6274 = vadd.f32 0.0, %v6273
      %v6275 = vpop.f32.mrf.mxu0
      %6276 = vmatprep.mubr.bf16.mxu0 0
      %6277 = vmatmul.mubr.bf16.gmra.mxu0 %v1376
      %v6278 = vpop.f32.mrf.mxu0
      %v6279 = vadd.f32 0.0, %v6278
      %v6280 = vpop.f32.mrf.mxu0
      %v6281 = vpop.f32.mrf.mxu0
      %v6282 = vadd.f32 0.0, %v6281
      %v6283 = vpop.f32.mrf.mxu0
      %6284 = vmatprep.mubr.bf16.mxu0 0
      %6285 = vmatmul.mubr.bf16.gmra.mxu0 %v1379
      %v6286 = vpop.f32.mrf.mxu0
      %v6287 = vadd.f32 0.0, %v6286
      %v6288 = vpop.f32.mrf.mxu0
      %v6289 = vpop.f32.mrf.mxu0
      %v6290 = vadd.f32 0.0, %v6289
      %v6291 = vpop.f32.mrf.mxu0
      %6292 = vmatprep.mubr.bf16.mxu0 0
      %6293 = vmatmul.mubr.bf16.gmra.mxu0 %v1382
      %v6294 = vpop.f32.mrf.mxu0
      %v6295 = vadd.f32 0.0, %v6294
      %v6296 = vpop.f32.mrf.mxu0
      %v6297 = vpop.f32.mrf.mxu0
      %v6298 = vadd.f32 0.0, %v6297
      %v6299 = vpop.f32.mrf.mxu0
      %6300 = vmatprep.mubr.bf16.mxu0 0
      %6301 = vmatmul.mubr.bf16.gmra.mxu0 %v1385
      %v6302 = vpop.f32.mrf.mxu0
      %v6303 = vadd.f32 0.0, %v6302
      %v6304 = vpop.f32.mrf.mxu0
      %v6305 = vpop.f32.mrf.mxu0
      %v6306 = vadd.f32 0.0, %v6305
      %v6307 = vpop.f32.mrf.mxu0
      %6308 = vmatprep.mubr.bf16.mxu0 0
      %6309 = vmatmul.mubr.bf16.gmra.mxu0 %v1388
      %v6310 = vpop.f32.mrf.mxu0
      %v6311 = vadd.f32 0.0, %v6310
      %v6312 = vpop.f32.mrf.mxu0
      %v6313 = vpop.f32.mrf.mxu0
      %v6314 = vadd.f32 0.0, %v6313
      %v6315 = vpop.f32.mrf.mxu0
      %6316 = vmatprep.mubr.bf16.mxu0 0
      %6317 = vmatmul.mubr.bf16.gmra.mxu0 %v1391
      %v6318 = vpop.f32.mrf.mxu0
      %v6319 = vadd.f32 0.0, %v6318
      %v6320 = vpop.f32.mrf.mxu0
      %v6321 = vpop.f32.mrf.mxu0
      %v6322 = vadd.f32 0.0, %v6321
      %v6323 = vpop.f32.mrf.mxu0
      %6324 = vmatprep.mubr.bf16.mxu0 0
      %6325 = vmatmul.mubr.bf16.gmra.mxu0 %v1394
      %v6326 = vpop.f32.mrf.mxu0
      %v6327 = vadd.f32 0.0, %v6326
      %v6328 = vpop.f32.mrf.mxu0
      %v6329 = vpop.f32.mrf.mxu0
      %v6330 = vadd.f32 0.0, %v6329
      %v6331 = vpop.f32.mrf.mxu0
      %6332 = vmatprep.mubr.bf16.mxu0 0
      %6333 = vmatmul.mubr.bf16.gmra.mxu0 %v1397
      %v6334 = vpop.f32.mrf.mxu0
      %v6335 = vadd.f32 0.0, %v6334
      %v6336 = vpop.f32.mrf.mxu0
      %v6337 = vpop.f32.mrf.mxu0
      %v6338 = vadd.f32 0.0, %v6337
      %v6339 = vpop.f32.mrf.mxu0
      %6340 = vmatprep.mubr.bf16.mxu0 0
      %6341 = vmatmul.mubr.bf16.gmra.mxu0 %v1400
      %v6342 = vpop.f32.mrf.mxu0
      %v6343 = vadd.f32 0.0, %v6342
      %v6344 = vpop.f32.mrf.mxu0
      %v6345 = vpop.f32.mrf.mxu0
      %v6346 = vadd.f32 0.0, %v6345
      %v6347 = vpop.f32.mrf.mxu0
      %6348 = vmatprep.mubr.bf16.mxu0 0
      %6349 = vmatmul.mubr.bf16.gmra.mxu0 %v1403
      %v6350 = vpop.f32.mrf.mxu0
      %v6351 = vadd.f32 0.0, %v6350
      %v6352 = vpop.f32.mrf.mxu0
      %v6353 = vpop.f32.mrf.mxu0
      %v6354 = vadd.f32 0.0, %v6353
      %v6355 = vpop.f32.mrf.mxu0
      %6356 = vmatprep.mubr.bf16.mxu0 0
      %6357 = vmatmul.mubr.bf16.gmra.mxu0 %v2995
      %v6358 = vpop.f32.mrf.mxu0
      %v6359 = vadd.f32 0.0, %v6358
      %v6360 = vpop.f32.mrf.mxu0
      %v6361 = vpop.f32.mrf.mxu0
      %v6362 = vadd.f32 0.0, %v6361
      %v6363 = vpop.f32.mrf.mxu0
      %6364 = vmatprep.mubr.bf16.mxu0 0
      %6365 = vmatmul.mubr.bf16.gmra.mxu0 %v4071
      %v6366 = vpop.f32.mrf.mxu0
      %v6367 = vadd.f32 0.0, %v6366
      %v6368 = vpop.f32.mrf.mxu0
      %v6369 = vpop.f32.mrf.mxu0
      %v6370 = vadd.f32 0.0, %v6369
      %v6371 = vpop.f32.mrf.mxu0
      %6372 = vmatprep.mubr.bf16.mxu0 0
      %6373 = vmatmul.mubr.bf16.gmra.mxu0 %v5147
      %v6374 = vpop.f32.mrf.mxu0
      %v6375 = vadd.f32 0.0, %v6374
      %v6376 = vpop.f32.mrf.mxu0
      %v6377 = vpop.f32.mrf.mxu0
      %v6378 = vadd.f32 0.0, %v6377
      %v6379 = vpop.f32.mrf.mxu0
      %6380 = vmatprep.mubr.bf16.mxu0 0
      %6381 = vmatmul.mubr.bf16.gmra.mxu0 %v6223
      %v6382 = vpop.f32.mrf.mxu0
      %v6383 = vadd.f32 0.0, %v6382
      %v6384 = vpop.f32.mrf.mxu0
      %v6385 = vpop.f32.mrf.mxu0
      %v6386 = vadd.f32 0.0, %v6385
      %v6387 = vpop.f32.mrf.mxu0
      %6388 = vdwg.mxu0
      %v6389 = vadd.f32 %v6177, %v6263
      %v6390 = vadd.f32 %v6178, %v6266
      %v6391 = vadd.f32 %v6179, %v6271
      %v6392 = vadd.f32 %v6180, %v6274
      %v6393 = vadd.f32 %v6181, %v6279
      %v6394 = vadd.f32 %v6182, %v6282
      %v6395 = vadd.f32 %v6183, %v6287
      %v6396 = vadd.f32 %v6184, %v6290
      %v6397 = vadd.f32 %v6185, %v6295
      %v6398 = vadd.f32 %v6186, %v6298
      %v6399 = vadd.f32 %v6187, %v6303
      %v6400 = vadd.f32 %v6188, %v6306
      %v6401 = vadd.f32 %v6189, %v6311
      %v6402 = vadd.f32 %v6190, %v6314
      %v6403 = vadd.f32 %v6191, %v6319
      %v6404 = vadd.f32 %v6192, %v6322
      %v6405 = vadd.f32 %v6193, %v6327
      %v6406 = vadd.f32 %v6194, %v6330
      %v6407 = vadd.f32 %v6195, %v6335
      %v6408 = vadd.f32 %v6196, %v6338
      %v6409 = vadd.f32 %v6197, %v6343
      %v6410 = vadd.f32 %v6198, %v6346
      %v6411 = vadd.f32 %v6199, %v6351
      %v6412 = vadd.f32 %v6200, %v6354
      %v6413 = vadd.f32 %v6201, %v6359
      %v6414 = vadd.f32 %v6202, %v6362
      %v6415 = vadd.f32 %v6203, %v6367
      %v6416 = vadd.f32 %v6204, %v6370
      %v6417 = vadd.f32 %v6205, %v6375
      %v6418 = vadd.f32 %v6206, %v6378
      %v6419 = vadd.f32 %v6207, %v6383
      %v6420 = vadd.f32 %v6208, %v6386
      %v6421 = vrot.slane %v5982, 5
      %v6422 = vrot.slane %v5985, 6
      %v6423 = vor.u32 %v6421, %v6422
      %v6424 = vrot.slane %v6423, 4
      %v6425 = vrot.slane %v5995, 5
      %v6426 = vrot.slane %v5991, 6
      %v6427 = vor.u32 %v6425, %v6426
      %v6428 = vsel %vm1603, %v6424, %v6427
      %v6429 = vrot.slane %v6427, 4
      %v6430 = vshrl.u32 %v231, 16
      %v6432 = vrot.slane %v6430, 5
      %v6433 = vrot.slane %v6001, 6
      %v6434 = vor.u32 %v6432, %v6433
      %v6435 = vsel %vm1603, %v6429, %v6434
      %s6436 = scalar_lea.vmem %s1, 46
      %v6437 = vld [vmem:[%s6436] sm:$0x3]
      %v6438 = vunpack.c.l.b16 %v6428
      %v6439 = vunpack.c.l.b16 %v6435
      %v6440 = vpack.c.b16 %v6439, %v6438
      %v6442 = vsel %vm670, %v6440, 0
      %v6445 = vsel %vm719, %v6437, 0
      %6447 = vmatprep.subr.bf16.mxu0 0
      %6448 = vmatpush1.bf16.msra.mxu0 0
      %6449 = vmatprep.subr.bf16.mxu0 0
      %6450 = vmatpush1.bf16.msra.mxu0 0
      %6451 = vmatprep.subr.bf16.mxu0 0
      %6452 = vmatpush1.bf16.msra.mxu0 0
      %6453 = vmatprep.subr.bf16.mxu0 0
      %6454 = vmatpush1.bf16.msra.mxu0 0
      %6455 = vmatprep.subr.bf16.mxu0 0
      %6456 = vmatpush1.bf16.msra.mxu0 0
      %6457 = vmatprep.subr.bf16.mxu0 0
      %6458 = vmatpush1.bf16.msra.mxu0 0
      %6459 = vmatprep.subr.bf16.mxu0 0
      %6460 = vmatpush1.bf16.msra.mxu0 0
      %6461 = vmatprep.subr.bf16.mxu0 0
      %6462 = vmatpush1.bf16.msra.mxu0 %v6445
      %6463 = vmatprep.subr.bf16.mxu0 0
      %6464 = vmatpush2.bf16.msra.mxu0 0
      %6465 = vmatprep.subr.bf16.mxu0 0
      %6466 = vmatpush2.bf16.msra.mxu0 0
      %6467 = vmatprep.subr.bf16.mxu0 0
      %6468 = vmatpush2.bf16.msra.mxu0 0
      %6469 = vmatprep.subr.bf16.mxu0 0
      %6470 = vmatpush2.bf16.msra.mxu0 0
      %6471 = vmatprep.subr.bf16.mxu0 0
      %6472 = vmatpush2.bf16.msra.mxu0 0
      %6473 = vmatprep.subr.bf16.mxu0 0
      %6474 = vmatpush2.bf16.msra.mxu0 0
      %6475 = vmatprep.subr.bf16.mxu0 0
      %6476 = vmatpush2.bf16.msra.mxu0 0
      %6477 = vmatprep.subr.bf16.mxu0 0
      %6478 = vmatpush2.bf16.msra.mxu0 0
      %6479 = vmatprep.mubr.bf16.mxu0 0
      %6480 = vmatmul.mubr.bf16.gmra.mxu0 %v1907
      %v6481 = vpop.f32.mrf.mxu0
      %v6482 = vadd.f32 0.0, %v6481
      %v6483 = vpop.f32.mrf.mxu0
      %v6484 = vpop.f32.mrf.mxu0
      %v6485 = vadd.f32 0.0, %v6484
      %v6486 = vpop.f32.mrf.mxu0
      %6487 = vmatprep.mubr.bf16.mxu0 0
      %6488 = vmatmul.mubr.bf16.gmra.mxu0 %v1910
      %v6489 = vpop.f32.mrf.mxu0
      %v6490 = vadd.f32 0.0, %v6489
      %v6491 = vpop.f32.mrf.mxu0
      %v6492 = vpop.f32.mrf.mxu0
      %v6493 = vadd.f32 0.0, %v6492
      %v6494 = vpop.f32.mrf.mxu0
      %6495 = vmatprep.mubr.bf16.mxu0 0
      %6496 = vmatmul.mubr.bf16.gmra.mxu0 %v1913
      %v6497 = vpop.f32.mrf.mxu0
      %v6498 = vadd.f32 0.0, %v6497
      %v6499 = vpop.f32.mrf.mxu0
      %v6500 = vpop.f32.mrf.mxu0
      %v6501 = vadd.f32 0.0, %v6500
      %v6502 = vpop.f32.mrf.mxu0
      %6503 = vmatprep.mubr.bf16.mxu0 0
      %6504 = vmatmul.mubr.bf16.gmra.mxu0 %v1916
      %v6505 = vpop.f32.mrf.mxu0
      %v6506 = vadd.f32 0.0, %v6505
      %v6507 = vpop.f32.mrf.mxu0
      %v6508 = vpop.f32.mrf.mxu0
      %v6509 = vadd.f32 0.0, %v6508
      %v6510 = vpop.f32.mrf.mxu0
      %6511 = vmatprep.mubr.bf16.mxu0 0
      %6512 = vmatmul.mubr.bf16.gmra.mxu0 %v1919
      %v6513 = vpop.f32.mrf.mxu0
      %v6514 = vadd.f32 0.0, %v6513
      %v6515 = vpop.f32.mrf.mxu0
      %v6516 = vpop.f32.mrf.mxu0
      %v6517 = vadd.f32 0.0, %v6516
      %v6518 = vpop.f32.mrf.mxu0
      %6519 = vmatprep.mubr.bf16.mxu0 0
      %6520 = vmatmul.mubr.bf16.gmra.mxu0 %v1922
      %v6521 = vpop.f32.mrf.mxu0
      %v6522 = vadd.f32 0.0, %v6521
      %v6523 = vpop.f32.mrf.mxu0
      %v6524 = vpop.f32.mrf.mxu0
      %v6525 = vadd.f32 0.0, %v6524
      %v6526 = vpop.f32.mrf.mxu0
      %6527 = vmatprep.mubr.bf16.mxu0 0
      %6528 = vmatmul.mubr.bf16.gmra.mxu0 %v1925
      %v6529 = vpop.f32.mrf.mxu0
      %v6530 = vadd.f32 0.0, %v6529
      %v6531 = vpop.f32.mrf.mxu0
      %v6532 = vpop.f32.mrf.mxu0
      %v6533 = vadd.f32 0.0, %v6532
      %v6534 = vpop.f32.mrf.mxu0
      %6535 = vmatprep.mubr.bf16.mxu0 0
      %6536 = vmatmul.mubr.bf16.gmra.mxu0 %v1928
      %v6537 = vpop.f32.mrf.mxu0
      %v6538 = vadd.f32 0.0, %v6537
      %v6539 = vpop.f32.mrf.mxu0
      %v6540 = vpop.f32.mrf.mxu0
      %v6541 = vadd.f32 0.0, %v6540
      %v6542 = vpop.f32.mrf.mxu0
      %6543 = vmatprep.mubr.bf16.mxu0 0
      %6544 = vmatmul.mubr.bf16.gmra.mxu0 %v1931
      %v6545 = vpop.f32.mrf.mxu0
      %v6546 = vadd.f32 0.0, %v6545
      %v6547 = vpop.f32.mrf.mxu0
      %v6548 = vpop.f32.mrf.mxu0
      %v6549 = vadd.f32 0.0, %v6548
      %v6550 = vpop.f32.mrf.mxu0
      %6551 = vmatprep.mubr.bf16.mxu0 0
      %6552 = vmatmul.mubr.bf16.gmra.mxu0 %v1934
      %v6553 = vpop.f32.mrf.mxu0
      %v6554 = vadd.f32 0.0, %v6553
      %v6555 = vpop.f32.mrf.mxu0
      %v6556 = vpop.f32.mrf.mxu0
      %v6557 = vadd.f32 0.0, %v6556
      %v6558 = vpop.f32.mrf.mxu0
      %6559 = vmatprep.mubr.bf16.mxu0 0
      %6560 = vmatmul.mubr.bf16.gmra.mxu0 %v1937
      %v6561 = vpop.f32.mrf.mxu0
      %v6562 = vadd.f32 0.0, %v6561
      %v6563 = vpop.f32.mrf.mxu0
      %v6564 = vpop.f32.mrf.mxu0
      %v6565 = vadd.f32 0.0, %v6564
      %v6566 = vpop.f32.mrf.mxu0
      %6567 = vmatprep.mubr.bf16.mxu0 0
      %6568 = vmatmul.mubr.bf16.gmra.mxu0 %v1940
      %v6569 = vpop.f32.mrf.mxu0
      %v6570 = vadd.f32 0.0, %v6569
      %v6571 = vpop.f32.mrf.mxu0
      %v6572 = vpop.f32.mrf.mxu0
      %v6573 = vadd.f32 0.0, %v6572
      %v6574 = vpop.f32.mrf.mxu0
      %6575 = vmatprep.mubr.bf16.mxu0 0
      %6576 = vmatmul.mubr.bf16.gmra.mxu0 %v3214
      %v6577 = vpop.f32.mrf.mxu0
      %v6578 = vadd.f32 0.0, %v6577
      %v6579 = vpop.f32.mrf.mxu0
      %v6580 = vpop.f32.mrf.mxu0
      %v6581 = vadd.f32 0.0, %v6580
      %v6582 = vpop.f32.mrf.mxu0
      %6583 = vmatprep.mubr.bf16.mxu0 0
      %6584 = vmatmul.mubr.bf16.gmra.mxu0 %v4290
      %v6585 = vpop.f32.mrf.mxu0
      %v6586 = vadd.f32 0.0, %v6585
      %v6587 = vpop.f32.mrf.mxu0
      %v6588 = vpop.f32.mrf.mxu0
      %v6589 = vadd.f32 0.0, %v6588
      %v6590 = vpop.f32.mrf.mxu0
      %6591 = vmatprep.mubr.bf16.mxu0 0
      %6592 = vmatmul.mubr.bf16.gmra.mxu0 %v5366
      %v6593 = vpop.f32.mrf.mxu0
      %v6594 = vadd.f32 0.0, %v6593
      %v6595 = vpop.f32.mrf.mxu0
      %v6596 = vpop.f32.mrf.mxu0
      %v6597 = vadd.f32 0.0, %v6596
      %v6598 = vpop.f32.mrf.mxu0
      %6599 = vmatprep.mubr.bf16.mxu0 0
      %6600 = vmatmul.mubr.bf16.gmra.mxu0 %v6442
      %v6601 = vpop.f32.mrf.mxu0
      %v6602 = vadd.f32 0.0, %v6601
      %v6603 = vpop.f32.mrf.mxu0
      %v6604 = vpop.f32.mrf.mxu0
      %v6605 = vadd.f32 0.0, %v6604
      %v6606 = vpop.f32.mrf.mxu0
      %6607 = vdwg.mxu0
      %v6608 = vadd.f32 %v6389, %v6482
      %v6609 = vadd.f32 %v6390, %v6485
      %v6610 = vadd.f32 %v6391, %v6490
      %v6611 = vadd.f32 %v6392, %v6493
      %v6612 = vadd.f32 %v6393, %v6498
      %v6613 = vadd.f32 %v6394, %v6501
      %v6614 = vadd.f32 %v6395, %v6506
      %v6615 = vadd.f32 %v6396, %v6509
      %v6616 = vadd.f32 %v6397, %v6514
      %v6617 = vadd.f32 %v6398, %v6517
      %v6618 = vadd.f32 %v6399, %v6522
      %v6619 = vadd.f32 %v6400, %v6525
      %v6620 = vadd.f32 %v6401, %v6530
      %v6621 = vadd.f32 %v6402, %v6533
      %v6622 = vadd.f32 %v6403, %v6538
      %v6623 = vadd.f32 %v6404, %v6541
      %v6624 = vadd.f32 %v6405, %v6546
      %v6625 = vadd.f32 %v6406, %v6549
      %v6626 = vadd.f32 %v6407, %v6554
      %v6627 = vadd.f32 %v6408, %v6557
      %v6628 = vadd.f32 %v6409, %v6562
      %v6629 = vadd.f32 %v6410, %v6565
      %v6630 = vadd.f32 %v6411, %v6570
      %v6631 = vadd.f32 %v6412, %v6573
      %v6632 = vadd.f32 %v6413, %v6578
      %v6633 = vadd.f32 %v6414, %v6581
      %v6634 = vadd.f32 %v6415, %v6586
      %v6635 = vadd.f32 %v6416, %v6589
      %v6636 = vadd.f32 %v6417, %v6594
      %v6637 = vadd.f32 %v6418, %v6597
      %v6638 = vadd.f32 %v6419, %v6602
      %v6639 = vadd.f32 %v6420, %v6605
      %v6640 = vrot.slane %v229, 6
      %v6641 = vrot.slane %v6640, 4
      %v6642 = vrot.slane %v230, 6
      %v6643 = vsel %vm2140, %v6641, %v6642
      %v6644 = vrot.slane %v6642, 4
      %v6645 = vrot.slane %v231, 6
      %v6646 = vsel %vm2140, %v6644, %v6645
      %s6647 = scalar_lea.vmem %s1, 48
      %v6648 = vld [vmem:[%s6647] sm:$0x3]
      %v6649 = vunpack.c.l.b16 %v6643
      %v6650 = vunpack.c.l.b16 %v6646
      %v6651 = vpack.c.b16 %v6650, %v6649
      %v6653 = vsel %vm670, %v6651, 0
      %v6656 = vsel %vm719, %v6648, 0
      %6658 = vmatprep.subr.bf16.mxu0 0
      %6659 = vmatpush1.bf16.msra.mxu0 0
      %6660 = vmatprep.subr.bf16.mxu0 0
      %6661 = vmatpush1.bf16.msra.mxu0 0
      %6662 = vmatprep.subr.bf16.mxu0 0
      %6663 = vmatpush1.bf16.msra.mxu0 0
      %6664 = vmatprep.subr.bf16.mxu0 0
      %6665 = vmatpush1.bf16.msra.mxu0 0
      %6666 = vmatprep.subr.bf16.mxu0 0
      %6667 = vmatpush1.bf16.msra.mxu0 0
      %6668 = vmatprep.subr.bf16.mxu0 0
      %6669 = vmatpush1.bf16.msra.mxu0 0
      %6670 = vmatprep.subr.bf16.mxu0 0
      %6671 = vmatpush1.bf16.msra.mxu0 0
      %6672 = vmatprep.subr.bf16.mxu0 0
      %6673 = vmatpush1.bf16.msra.mxu0 %v6656
      %6674 = vmatprep.subr.bf16.mxu0 0
      %6675 = vmatpush2.bf16.msra.mxu0 0
      %6676 = vmatprep.subr.bf16.mxu0 0
      %6677 = vmatpush2.bf16.msra.mxu0 0
      %6678 = vmatprep.subr.bf16.mxu0 0
      %6679 = vmatpush2.bf16.msra.mxu0 0
      %6680 = vmatprep.subr.bf16.mxu0 0
      %6681 = vmatpush2.bf16.msra.mxu0 0
      %6682 = vmatprep.subr.bf16.mxu0 0
      %6683 = vmatpush2.bf16.msra.mxu0 0
      %6684 = vmatprep.subr.bf16.mxu0 0
      %6685 = vmatpush2.bf16.msra.mxu0 0
      %6686 = vmatprep.subr.bf16.mxu0 0
      %6687 = vmatpush2.bf16.msra.mxu0 0
      %6688 = vmatprep.subr.bf16.mxu0 0
      %6689 = vmatpush2.bf16.msra.mxu0 0
      %6690 = vmatprep.mubr.bf16.mxu0 0
      %6691 = vmatmul.mubr.bf16.gmra.mxu0 %v2316
      %v6692 = vpop.f32.mrf.mxu0
      %v6693 = vadd.f32 0.0, %v6692
      %v6694 = vpop.f32.mrf.mxu0
      %v6695 = vpop.f32.mrf.mxu0
      %v6696 = vadd.f32 0.0, %v6695
      %v6697 = vpop.f32.mrf.mxu0
      %6698 = vmatprep.mubr.bf16.mxu0 0
      %6699 = vmatmul.mubr.bf16.gmra.mxu0 %v2319
      %v6700 = vpop.f32.mrf.mxu0
      %v6701 = vadd.f32 0.0, %v6700
      %v6702 = vpop.f32.mrf.mxu0
      %v6703 = vpop.f32.mrf.mxu0
      %v6704 = vadd.f32 0.0, %v6703
      %v6705 = vpop.f32.mrf.mxu0
      %6706 = vmatprep.mubr.bf16.mxu0 0
      %6707 = vmatmul.mubr.bf16.gmra.mxu0 %v2322
      %v6708 = vpop.f32.mrf.mxu0
      %v6709 = vadd.f32 0.0, %v6708
      %v6710 = vpop.f32.mrf.mxu0
      %v6711 = vpop.f32.mrf.mxu0
      %v6712 = vadd.f32 0.0, %v6711
      %v6713 = vpop.f32.mrf.mxu0
      %6714 = vmatprep.mubr.bf16.mxu0 0
      %6715 = vmatmul.mubr.bf16.gmra.mxu0 %v2325
      %v6716 = vpop.f32.mrf.mxu0
      %v6717 = vadd.f32 0.0, %v6716
      %v6718 = vpop.f32.mrf.mxu0
      %v6719 = vpop.f32.mrf.mxu0
      %v6720 = vadd.f32 0.0, %v6719
      %v6721 = vpop.f32.mrf.mxu0
      %6722 = vmatprep.mubr.bf16.mxu0 0
      %6723 = vmatmul.mubr.bf16.gmra.mxu0 %v2328
      %v6724 = vpop.f32.mrf.mxu0
      %v6725 = vadd.f32 0.0, %v6724
      %v6726 = vpop.f32.mrf.mxu0
      %v6727 = vpop.f32.mrf.mxu0
      %v6728 = vadd.f32 0.0, %v6727
      %v6729 = vpop.f32.mrf.mxu0
      %6730 = vmatprep.mubr.bf16.mxu0 0
      %6731 = vmatmul.mubr.bf16.gmra.mxu0 %v2331
      %v6732 = vpop.f32.mrf.mxu0
      %v6733 = vadd.f32 0.0, %v6732
      %v6734 = vpop.f32.mrf.mxu0
      %v6735 = vpop.f32.mrf.mxu0
      %v6736 = vadd.f32 0.0, %v6735
      %v6737 = vpop.f32.mrf.mxu0
      %6738 = vmatprep.mubr.bf16.mxu0 0
      %6739 = vmatmul.mubr.bf16.gmra.mxu0 %v2334
      %v6740 = vpop.f32.mrf.mxu0
      %v6741 = vadd.f32 0.0, %v6740
      %v6742 = vpop.f32.mrf.mxu0
      %v6743 = vpop.f32.mrf.mxu0
      %v6744 = vadd.f32 0.0, %v6743
      %v6745 = vpop.f32.mrf.mxu0
      %6746 = vmatprep.mubr.bf16.mxu0 0
      %6747 = vmatmul.mubr.bf16.gmra.mxu0 %v2337
      %v6748 = vpop.f32.mrf.mxu0
      %v6749 = vadd.f32 0.0, %v6748
      %v6750 = vpop.f32.mrf.mxu0
      %v6751 = vpop.f32.mrf.mxu0
      %v6752 = vadd.f32 0.0, %v6751
      %v6753 = vpop.f32.mrf.mxu0
      %6754 = vmatprep.mubr.bf16.mxu0 0
      %6755 = vmatmul.mubr.bf16.gmra.mxu0 %v2340
      %v6756 = vpop.f32.mrf.mxu0
      %v6757 = vadd.f32 0.0, %v6756
      %v6758 = vpop.f32.mrf.mxu0
      %v6759 = vpop.f32.mrf.mxu0
      %v6760 = vadd.f32 0.0, %v6759
      %v6761 = vpop.f32.mrf.mxu0
      %6762 = vmatprep.mubr.bf16.mxu0 0
      %6763 = vmatmul.mubr.bf16.gmra.mxu0 %v2343
      %v6764 = vpop.f32.mrf.mxu0
      %v6765 = vadd.f32 0.0, %v6764
      %v6766 = vpop.f32.mrf.mxu0
      %v6767 = vpop.f32.mrf.mxu0
      %v6768 = vadd.f32 0.0, %v6767
      %v6769 = vpop.f32.mrf.mxu0
      %6770 = vmatprep.mubr.bf16.mxu0 0
      %6771 = vmatmul.mubr.bf16.gmra.mxu0 %v2346
      %v6772 = vpop.f32.mrf.mxu0
      %v6773 = vadd.f32 0.0, %v6772
      %v6774 = vpop.f32.mrf.mxu0
      %v6775 = vpop.f32.mrf.mxu0
      %v6776 = vadd.f32 0.0, %v6775
      %v6777 = vpop.f32.mrf.mxu0
      %6778 = vmatprep.mubr.bf16.mxu0 0
      %6779 = vmatmul.mubr.bf16.gmra.mxu0 %v2349
      %v6780 = vpop.f32.mrf.mxu0
      %v6781 = vadd.f32 0.0, %v6780
      %v6782 = vpop.f32.mrf.mxu0
      %v6783 = vpop.f32.mrf.mxu0
      %v6784 = vadd.f32 0.0, %v6783
      %v6785 = vpop.f32.mrf.mxu0
      %6786 = vmatprep.mubr.bf16.mxu0 0
      %6787 = vmatmul.mubr.bf16.gmra.mxu0 %v3425
      %v6788 = vpop.f32.mrf.mxu0
      %v6789 = vadd.f32 0.0, %v6788
      %v6790 = vpop.f32.mrf.mxu0
      %v6791 = vpop.f32.mrf.mxu0
      %v6792 = vadd.f32 0.0, %v6791
      %v6793 = vpop.f32.mrf.mxu0
      %6794 = vmatprep.mubr.bf16.mxu0 0
      %6795 = vmatmul.mubr.bf16.gmra.mxu0 %v4501
      %v6796 = vpop.f32.mrf.mxu0
      %v6797 = vadd.f32 0.0, %v6796
      %v6798 = vpop.f32.mrf.mxu0
      %v6799 = vpop.f32.mrf.mxu0
      %v6800 = vadd.f32 0.0, %v6799
      %v6801 = vpop.f32.mrf.mxu0
      %6802 = vmatprep.mubr.bf16.mxu0 0
      %6803 = vmatmul.mubr.bf16.gmra.mxu0 %v5577
      %v6804 = vpop.f32.mrf.mxu0
      %v6805 = vadd.f32 0.0, %v6804
      %v6806 = vpop.f32.mrf.mxu0
      %v6807 = vpop.f32.mrf.mxu0
      %v6808 = vadd.f32 0.0, %v6807
      %v6809 = vpop.f32.mrf.mxu0
      %6810 = vmatprep.mubr.bf16.mxu0 0
      %6811 = vmatmul.mubr.bf16.gmra.mxu0 %v6653
      %v6812 = vpop.f32.mrf.mxu0
      %v6813 = vadd.f32 0.0, %v6812
      %v6814 = vpop.f32.mrf.mxu0
      %v6815 = vpop.f32.mrf.mxu0
      %v6816 = vadd.f32 0.0, %v6815
      %v6817 = vpop.f32.mrf.mxu0
      %6818 = vdwg.mxu0
      %v6819 = vadd.f32 %v6608, %v6693
      %v6820 = vadd.f32 %v6609, %v6696
      %v6821 = vadd.f32 %v6610, %v6701
      %v6822 = vadd.f32 %v6611, %v6704
      %v6823 = vadd.f32 %v6612, %v6709
      %v6824 = vadd.f32 %v6613, %v6712
      %v6825 = vadd.f32 %v6614, %v6717
      %v6826 = vadd.f32 %v6615, %v6720
      %v6827 = vadd.f32 %v6616, %v6725
      %v6828 = vadd.f32 %v6617, %v6728
      %v6829 = vadd.f32 %v6618, %v6733
      %v6830 = vadd.f32 %v6619, %v6736
      %v6831 = vadd.f32 %v6620, %v6741
      %v6832 = vadd.f32 %v6621, %v6744
      %v6833 = vadd.f32 %v6622, %v6749
      %v6834 = vadd.f32 %v6623, %v6752
      %v6835 = vadd.f32 %v6624, %v6757
      %v6836 = vadd.f32 %v6625, %v6760
      %v6837 = vadd.f32 %v6626, %v6765
      %v6838 = vadd.f32 %v6627, %v6768
      %v6839 = vadd.f32 %v6628, %v6773
      %v6840 = vadd.f32 %v6629, %v6776
      %v6841 = vadd.f32 %v6630, %v6781
      %v6842 = vadd.f32 %v6631, %v6784
      %v6843 = vadd.f32 %v6632, %v6789
      %v6844 = vadd.f32 %v6633, %v6792
      %v6845 = vadd.f32 %v6634, %v6797
      %v6846 = vadd.f32 %v6635, %v6800
      %v6847 = vadd.f32 %v6636, %v6805
      %v6848 = vadd.f32 %v6637, %v6808
      %v6849 = vadd.f32 %v6638, %v6813
      %v6850 = vadd.f32 %v6639, %v6816
      %v6851 = vld [vmem:[%s2] sm:$0x1]
      %v6853 = vlaneseq
      %v6854 = vshrl.u32 %v6853, 7
      %v6855 = vsub.s32 0, %v6854
      %v6856 = vrot.slane %v6851, %v6855
      %v6858 = vadd.f32 %v6819, %v6856
      %v6859 = vadd.f32 %v6820, %v6856
      %v6860 = vadd.f32 %v6821, %v6856
      %v6861 = vadd.f32 %v6822, %v6856
      %v6862 = vadd.f32 %v6823, %v6856
      %v6863 = vadd.f32 %v6824, %v6856
      %v6864 = vadd.f32 %v6825, %v6856
      %v6865 = vadd.f32 %v6826, %v6856
      %v6866 = vadd.f32 %v6827, %v6856
      %v6867 = vadd.f32 %v6828, %v6856
      %v6868 = vadd.f32 %v6829, %v6856
      %v6869 = vadd.f32 %v6830, %v6856
      %v6870 = vadd.f32 %v6831, %v6856
      %v6871 = vadd.f32 %v6832, %v6856
      %v6872 = vadd.f32 %v6833, %v6856
      %v6873 = vadd.f32 %v6834, %v6856
      %v6874 = vadd.f32 %v6835, %v6856
      %v6875 = vadd.f32 %v6836, %v6856
      %v6876 = vadd.f32 %v6837, %v6856
      %v6877 = vadd.f32 %v6838, %v6856
      %v6878 = vadd.f32 %v6839, %v6856
      %v6879 = vadd.f32 %v6840, %v6856
      %v6880 = vadd.f32 %v6841, %v6856
      %v6881 = vadd.f32 %v6842, %v6856
      %v6882 = vadd.f32 %v6843, %v6856
      %v6883 = vadd.f32 %v6844, %v6856
      %v6884 = vadd.f32 %v6845, %v6856
      %v6885 = vadd.f32 %v6846, %v6856
      %v6886 = vadd.f32 %v6847, %v6856
      %v6887 = vadd.f32 %v6848, %v6856
      %v6888 = vadd.f32 %v6849, %v6856
      %v6889 = vadd.f32 %v6850, %v6856
      %6890 = vst [vmem:[%s170] sm:$0xff] %v6858
      %6891 = vst [vmem:[%s170 + $0x8] sm:$0xff] %v6859
      %6892 = vst [vmem:[%s170 + $0x10] sm:$0xff] %v6860
      %6893 = vst [vmem:[%s170 + $0x18] sm:$0xff] %v6861
      %6894 = vst [vmem:[%s170 + $0x20] sm:$0xff] %v6862
      %6895 = vst [vmem:[%s170 + $0x28] sm:$0xff] %v6863
      %6896 = vst [vmem:[%s170 + $0x30] sm:$0xff] %v6864
      %6897 = vst [vmem:[%s170 + $0x38] sm:$0xff] %v6865
      %6898 = vst [vmem:[%s170 + $0x40] sm:$0xff] %v6866
      %6899 = vst [vmem:[%s170 + $0x48] sm:$0xff] %v6867
      %6900 = vst [vmem:[%s170 + $0x50] sm:$0xff] %v6868
      %6901 = vst [vmem:[%s170 + $0x58] sm:$0xff] %v6869
      %6902 = vst [vmem:[%s170 + $0x60] sm:$0xff] %v6870
      %6903 = vst [vmem:[%s170 + $0x68] sm:$0xff] %v6871
      %6904 = vst [vmem:[%s170 + $0x70] sm:$0xff] %v6872
      %6905 = vst [vmem:[%s170 + $0x78] sm:$0xff] %v6873
      %6906 = vst [vmem:[%s170 + $0x80] sm:$0xff] %v6874
      %6907 = vst [vmem:[%s170 + $0x88] sm:$0xff] %v6875
      %6908 = vst [vmem:[%s170 + $0x90] sm:$0xff] %v6876
      %6909 = vst [vmem:[%s170 + $0x98] sm:$0xff] %v6877
      %6910 = vst [vmem:[%s170 + $0xa0] sm:$0xff] %v6878
      %6911 = vst [vmem:[%s170 + $0xa8] sm:$0xff] %v6879
      %6912 = vst [vmem:[%s170 + $0xb0] sm:$0xff] %v6880
      %6913 = vst [vmem:[%s170 + $0xb8] sm:$0xff] %v6881
      %6914 = vst [vmem:[%s170 + $0xc0] sm:$0xff] %v6882
      %6915 = vst [vmem:[%s170 + $0xc8] sm:$0xff] %v6883
      %6916 = vst [vmem:[%s170 + $0xd0] sm:$0xff] %v6884
      %6917 = vst [vmem:[%s170 + $0xd8] sm:$0xff] %v6885
      %6918 = vst [vmem:[%s170 + $0xe0] sm:$0xff] %v6886
      %6919 = vst [vmem:[%s170 + $0xe8] sm:$0xff] %v6887
      %6920 = vst [vmem:[%s170 + $0xf0] sm:$0xff] %v6888
      %6921 = vst [vmem:[%s170 + $0xf8] sm:$0xff] %v6889
      %p6922 = scmp.lt.s32.totalorder %s14, 1
      %s6923 = scalar_select %p6922, %s14, 1
      %s6924 = smul.addr %s6923, 32
      %s6925 = smul.addr %s6924, 8
      %s6926 = scalar_lea.vmem %s3, %s6925
      // Predicated region
      $region33: #{_mixed_forward_impl.1} parent=31 // pred_check
        %p6927 = pneg %p100
      $region34: #{_mixed_forward_impl.1} parent=31 // pred_check_branch
        %6929 = sbr.rel (%p6927) target = $region36
      $region35: #{_mixed_forward_impl.1} parent=31 // pred_region
        _
      $region36: #{_mixed_forward_impl.1} parent=31 // pred_fallthru
        _
    $region32: #{_mixed_forward_impl.1} parent=5 // pred_fallthru
      _
    %p6930 = scmp.le.s32.totalorder 2, %s9
    // Predicated region
    $region37: #{_mixed_forward_impl.1} parent=5 // pred_check
      %p6931 = pneg %p6930
    $region38: #{_mixed_forward_impl.1} parent=5 // pred_check_branch
      %6933 = sbr.rel (%p6931) target = $region40
    $region39: #{_mixed_forward_impl.1} parent=5 // pred_region
      %s6934 = ssub.s32 %s9, 2
      // Predicated region
      $region41: #{_mixed_forward_impl.1} parent=39 // pred_check
        %p6935 = pneg %p106
      $region42: #{_mixed_forward_impl.1} parent=39 // pred_check_branch
        %6937 = sbr.rel (%p6935) target = $region44
      $region43: #{_mixed_forward_impl.1} parent=39 // pred_region
        %p6938 = scmp.lt.s32.totalorder %s15, 1
        %s6939 = scalar_select %p6938, %s15, 1
        %s6940 = smul.addr %s6939, 32
        %s6941 = smul.addr %s6940, 8
        %s6942 = scalar_lea.vmem %s3, %s6941
      $region44: #{_mixed_forward_impl.1} parent=39 // pred_fallthru
        _
    $region40: #{_mixed_forward_impl.1} parent=5 // pred_fallthru
      _
  $region6: #{_mixed_forward_impl.1} parent=0 // loop_footer
    %s13 = sadd.s32 1, %s9
  $region7: #{_mixed_forward_impl.1} parent=0 // loop_footer_branch
    %8 = sbr.rel target = $region3
  $region8: #{_mixed_forward_impl.1} parent=0 // loop_exit
    _

</llo_original>
